<compile_context>
chip_gen: v6e
topology: v6e:2x2x1
jax: 0.10.0
libtpu: 0.0.40
codegen_flags: <defaults>
</compile_context>

<pallas_src>
import functools
import math

import jax
import jax.numpy as jnp
from jax.experimental import pallas as pl
from jax.experimental.pallas import tpu as pltpu


def _gelu(x):
    # TODO(synk): PyTorch nn.GELU defaults to exact erf; tanh approximation
    # (jax.nn.gelu default) is used for TPU-friendly lowering.
    return jax.nn.gelu(x)


def _full_spec(shape):
    # Whole-array block, constant index map (weights resident across grid steps).
    return pl.BlockSpec(shape, lambda b, _n=len(shape): (0,) * _n)


# ----------------------------------------------------------------------------
# Kernel 1: positional-encoding add + simplified EnhancedS4Layer + residual
# ----------------------------------------------------------------------------

def _s4_block_kernel(x_ref, pe_ref, convw_ref, dskip_ref, wglu_ref, bglu_ref,
                     g_ref, b_ref, o_ref, *, channels, eps):
    C = channels
    x = x_ref[0].astype(jnp.float32) + pe_ref[...]              # fused PE add, (T, C)
    # Depthwise bidirectional long conv + D skip: y[t,c] = D[c]x[t,c] + sum_s W[s,t,c]x[s,c]
    # Single vectorized multiply-reduce over the source axis (no unrolled FMA chain).
    y = x * dskip_ref[...]
    y = y + jnp.sum(convw_ref[...] * x[:, None, :], axis=0)
    y = _gelu(y)
    # Pointwise output projection (C -> 2C) + GLU on the MXU.
    z = jnp.dot(y.astype(jnp.bfloat16), wglu_ref[...],
                preferred_element_type=jnp.float32) + bglu_ref[...]
    u = z[:, :C] * jax.nn.sigmoid(z[:, C:])
    # Inner residual + LayerNorm (S4 wrapper), then outer residual x + x_s4.
    h = u + x
    mu = jnp.mean(h, axis=-1, keepdims=True)
    var = jnp.mean(jnp.square(h - mu), axis=-1, keepdims=True)
    s4_out = (h - mu) * jax.lax.rsqrt(var + eps) * g_ref[...] + b_ref[...]
    o_ref[0] = (x + s4_out).astype(o_ref.dtype)


def s4_block(x_btc, pe, conv_w, sp, eps=1e-5):
    B, T, C = x_btc.shape
    kernel = functools.partial(_s4_block_kernel, channels=C, eps=eps)
    return pl.pallas_call(
        kernel,
        out_shape=jax.ShapeDtypeStruct((B, T, C), jnp.bfloat16),   # bf16 inter-kernel activation
        grid=(B,),
        in_specs=[
            pl.BlockSpec((1, T, C), lambda b: (b, 0, 0)),
            _full_spec((T, C)),
            # TODO(synk): O(T^2*C) dense conv weight — stream / FFT-conv for long T.
            _full_spec((T, T, C)),
            _full_spec((1, C)),
            _full_spec((C, 2 * C)),
            _full_spec((1, 2 * C)),
            _full_spec((1, C)),
            _full_spec((1, C)),
        ],
        out_specs=pl.BlockSpec((1, T, C), lambda b: (b, 0, 0)),
        compiler_params=pltpu.CompilerParams(dimension_semantics=("parallel",)),
    )(x_btc, pe, conv_w, sp["d_skip"], sp["w_glu"], sp["b_glu"],
      sp["ln_g"], sp["ln_b"])


# ----------------------------------------------------------------------------
# Kernel 2: ALL transformer layers fused (pre-LN, stacked per-layer weights)
# ----------------------------------------------------------------------------

def _transformer_kernel(h_ref, ln1g_ref, ln1b_ref, wqkv_ref, bqkv_ref,
                        wo_ref, bo_ref, ln2g_ref, ln2b_ref,
                        wff1_ref, bff1_ref, wff2_ref, bff2_ref, o_ref,
                        *, num_layers, num_heads, head_dim, eps):
    C = num_heads * head_dim
    x = h_ref[0].astype(jnp.float32)                           # (T, C) residual stream, f32

    def _ln(v, g, b):
        mu = jnp.mean(v, axis=-1, keepdims=True)
        var = jnp.mean(jnp.square(v - mu), axis=-1, keepdims=True)
        return (v - mu) * jax.lax.rsqrt(var + eps) * g + b

    scale = 1.0 / math.sqrt(head_dim)
    for l in range(num_layers):                                # static unroll; weights stay in VMEM
        # --- attention sublayer (pre-LN) ---
        hn = _ln(x, ln1g_ref[l], ln1b_ref[l])
        qkv = jnp.dot(hn.astype(jnp.bfloat16), wqkv_ref[l],
                      preferred_element_type=jnp.float32) + bqkv_ref[l]
        qkv_b = qkv.astype(jnp.bfloat16)                       # single cast for q, k and v
        heads = []
        for hd in range(num_heads):
            lo = hd * head_dim
            qh = qkv_b[:, lo:lo + head_dim]
            kh = qkv_b[:, C + lo:C + lo + head_dim]
            vh = qkv_b[:, 2 * C + lo:2 * C + lo + head_dim]
            s = jax.lax.dot_general(qh, kh, (((1,), (1,)), ((), ())),
                                    preferred_element_type=jnp.float32) * scale
            m = jnp.max(s, axis=-1, keepdims=True)
            p = jnp.exp(s - m)
            p = p * pl.reciprocal(jnp.sum(p, axis=-1, keepdims=True), approx=True)
            heads.append(jnp.dot(p.astype(jnp.bfloat16), vh,
                                 preferred_element_type=jnp.float32))
        attn = jnp.concatenate(heads, axis=-1)                 # (T, C) f32
        # W_O hoisted out of the head loop: ONE (T,C)@(C,C) matmul, K=128.
        attn = jnp.dot(attn.astype(jnp.bfloat16), wo_ref[l],
                       preferred_element_type=jnp.float32) + bo_ref[l]
        h1 = x + attn
        # --- feed-forward sublayer (pre-LN) ---
        hn2 = _ln(h1, ln2g_ref[l], ln2b_ref[l])
        ff = jnp.dot(hn2.astype(jnp.bfloat16), wff1_ref[l],
                     preferred_element_type=jnp.float32) + bff1_ref[l]
        ff = _gelu(ff)
        ff = jnp.dot(ff.astype(jnp.bfloat16), wff2_ref[l],
                     preferred_element_type=jnp.float32) + bff2_ref[l]
        x = h1 + ff
    o_ref[0] = x.astype(o_ref.dtype)


def transformer_block(h, tp, num_heads, eps=1e-5):
    B, T, C = h.shape
    L = tp["wqkv"].shape[0]
    D = C // num_heads
    dff = tp["wff1"].shape[-1]
    kernel = functools.partial(_transformer_kernel, num_layers=L,
                               num_heads=num_heads, head_dim=D, eps=eps)
    return pl.pallas_call(
        kernel,
        out_shape=jax.ShapeDtypeStruct((B, T, C), jnp.bfloat16),   # bf16 inter-kernel activation
        grid=(B,),
        in_specs=[
            pl.BlockSpec((1, T, C), lambda b: (b, 0, 0)),
            _full_spec((L, 1, C)), _full_spec((L, 1, C)),
            _full_spec((L, C, 3 * C)), _full_spec((L, 1, 3 * C)),
            _full_spec((L, C, C)), _full_spec((L, 1, C)),
            _full_spec((L, 1, C)), _full_spec((L, 1, C)),
            _full_spec((L, C, dff)), _full_spec((L, 1, dff)),
            _full_spec((L, dff, C)), _full_spec((L, 1, C)),
        ],
        out_specs=pl.BlockSpec((1, T, C), lambda b: (b, 0, 0)),
        compiler_params=pltpu.CompilerParams(dimension_semantics=("parallel",)),
    )(h, tp["ln1_g"], tp["ln1_b"], tp["wqkv"], tp["bqkv"], tp["wo"], tp["bo"],
      tp["ln2_g"], tp["ln2_b"], tp["wff1"], tp["bff1"], tp["wff2"], tp["bff2"])


# ----------------------------------------------------------------------------
# Kernel 3: tail = combination MLP (implicit concat) + FiLM (cond MLP folded
#           in) + final LayerNorm
# ----------------------------------------------------------------------------

def _tail_kernel(xs_ref, xt_ref, cond_ref, fw1_ref, fb1_ref, fw2_ref, fb2_ref,
                 w1a_ref, w1b_ref, b1_ref, w2_ref, b2_ref, fng_ref, fnb_ref,
                 o_ref, *, channels, eps):
    C = channels
    b_idx = pl.program_id(0)
    a = xs_ref[0]                                           # (T, C) bf16 (S4 residual path)
    t = xt_ref[0]                                           # (T, C) bf16 (transformer output)

    # FiLM condition MLP folded into this kernel (~KFLOPs; computed for all
    # batch rows, this step's row selected with an iota mask — no extra launch,
    # no gamma_beta HBM round trip).
    c = cond_ref[...].astype(jnp.bfloat16)                  # (B, 2*static_dim)
    g1 = _gelu(jnp.dot(c, fw1_ref[...], preferred_element_type=jnp.float32)
               + fb1_ref[...])
    gb_all = jnp.dot(g1.astype(jnp.bfloat16), fw2_ref[...],
                     preferred_element_type=jnp.float32) + fb2_ref[...]     # (B, 2C)
    rows = jax.lax.broadcasted_iota(jnp.int32, gb_all.shape, 0)
    gb = jnp.sum(jnp.where(rows == b_idx, gb_all, 0.0), axis=0, keepdims=True)  # (1, 2C)

    # combination Linear(2C->2C) on concat([a, t]) == a @ W1[:C] + t @ W1[C:]
    z = (jnp.dot(a, w1a_ref[...], preferred_element_type=jnp.float32)
         + jnp.dot(t, w1b_ref[...], preferred_element_type=jnp.float32)
         + b1_ref[...])
    z = _gelu(z)
    y = jnp.dot(z.astype(jnp.bfloat16), w2_ref[...],
                preferred_element_type=jnp.float32) + b2_ref[...]
    # FiLM: x * (1 + gamma) + beta (gamma/beta already layer-scaled)
    y = y * (1.0 + gb[:, :C]) + gb[:, C:]
    # final LayerNorm
    mu = jnp.mean(y, axis=-1, keepdims=True)
    var = jnp.mean(jnp.square(y - mu), axis=-1, keepdims=True)
    y = (y - mu) * jax.lax.rsqrt(var + eps) * fng_ref[...] + fnb_ref[...]
    o_ref[0] = y.astype(o_ref.dtype)


def combine_film_norm(x_s4, x_tr, cond, fw1, fb1, fw2, fb2, cp, fn_g, fn_b,
                      eps=1e-5):
    B, T, C = x_s4.shape
    Dc = cond.shape[-1]
    kernel = functools.partial(_tail_kernel, channels=C, eps=eps)
    return pl.pallas_call(
        kernel,
        out_shape=jax.ShapeDtypeStruct((B, T, C), jnp.float32),
        grid=(B,),
        in_specs=[
            pl.BlockSpec((1, T, C), lambda b: (b, 0, 0)),
            pl.BlockSpec((1, T, C), lambda b: (b, 0, 0)),
            _full_spec((B, Dc)),
            _full_spec((Dc, C)), _full_spec((1, C)),
            _full_spec((C, 2 * C)), _full_spec((1, 2 * C)),
            _full_spec((C, 2 * C)), _full_spec((C, 2 * C)), _full_spec((1, 2 * C)),
            _full_spec((2 * C, C)), _full_spec((1, C)),
            _full_spec((1, C)), _full_spec((1, C)),
        ],
        out_specs=pl.BlockSpec((1, T, C), lambda b: (b, 0, 0)),
        compiler_params=pltpu.CompilerParams(dimension_semantics=("parallel",)),
    )(x_s4, x_tr, cond, fw1, fb1, fw2, fb2,
      cp["w1a"], cp["w1b"], cp["b1"], cp["w2"], cp["b2"], fn_g, fn_b)


# ----------------------------------------------------------------------------
# JAX glue: positional encoding table, S4 depthwise-conv weight construction
# (parameter-only compute, done in XLA once per call)
# ----------------------------------------------------------------------------

def sinusoidal_pe(T, C):
    pos = jnp.arange(T, dtype=jnp.float32)[:, None]
    i = jnp.arange(0, C, 2, dtype=jnp.float32)
    div = jnp.exp(-math.log(10000.0) * i / C)
    pe = jnp.zeros((T, C), jnp.float32)
    pe = pe.at[:, 0::2].set(jnp.sin(pos * div))
    pe = pe.at[:, 1::2].set(jnp.cos(pos * div))
    return pe


def build_s4_conv_weights(sp, L):
    """Bidirectional depthwise long-conv weights W[s, t, c].
    TODO(synk): EnhancedS4Layer source not provided; diagonal-SSM approximation.
    The center tap (s == t) is taken from the forward kernel only (the backward
    direction excludes it) to avoid double counting on top of the D skip."""
    lr = jnp.arange(L, dtype=jnp.float32)

    def kern(log_dt, log_a, mix):
        dt = jnp.exp(log_dt)[:, None, None]                  # [C,1,1]
        a = jax.nn.softplus(log_a)[:, :, None]               # [C,N,1]
        basis = jnp.exp(-a * dt * lr[None, None, :])         # [C,N,L]
        return jnp.einsum("cn,cnl->cl", mix, basis)          # [C,L]

    k_f = kern(sp["log_dt_f"], sp["log_a_f"], sp["mix_f"])
    k_b = kern(sp["log_dt_b"], sp["log_a_b"], sp["mix_b"])
    t_idx = jnp.arange(L)[:, None]
    s_idx = jnp.arange(L)[None, :]
    delta = t_idx - s_idx                                     # [L_t, L_s]
    wf = jnp.where(delta >= 0, k_f[:, jnp.clip(delta, 0, L - 1)], 0.0)
    wb = jnp.where(delta < 0, k_b[:, jnp.clip(-delta, 0, L - 1)], 0.0)
    return jnp.transpose(wf + wb, (2, 1, 0))                  # [L_s, L_t, C]


# ----------------------------------------------------------------------------
# Parameter initialization (deterministic, synthetic; matmul weights bf16)
# ----------------------------------------------------------------------------

def init_params(key, channels, static_dim, seq_len, state_size, num_heads,
                num_layers=2, d_ff_mult=4):
    C = channels
    dff = C * d_ff_mult
    L = num_layers
    keys = jax.random.split(key, 32)
    kit = iter(keys)

    def w(shape):
        fan_in = shape[-2]
        return (jax.random.normal(next(kit), shape, jnp.float32)
                / math.sqrt(fan_in)).astype(jnp.bfloat16)

    def wf32(shape, scale=0.1):
        return jax.random.normal(next(kit), shape, jnp.float32) * scale

    ones = lambda *s: jnp.ones(s, jnp.float32)
    zeros = lambda *s: jnp.zeros(s, jnp.float32)

    p = {
        "s4": {
            "log_dt_f": math.log(0.1) * ones(C), "log_a_f": wf32((C, state_size)),
            "mix_f": wf32((C, state_size)) / state_size,
            "log_dt_b": math.log(0.1) * ones(C), "log_a_b": wf32((C, state_size)),
            "mix_b": wf32((C, state_size)) / state_size,
            "d_skip": ones(1, C),
            "w_glu": w((C, 2 * C)), "b_glu": zeros(1, 2 * C),
            "ln_g": ones(1, C), "ln_b": zeros(1, C),
        },
        "tr": {   # per-layer weights stacked on a leading num_layers axis
            "ln1_g": ones(L, 1, C), "ln1_b": zeros(L, 1, C),
            "wqkv": w((L, C, 3 * C)), "bqkv": zeros(L, 1, 3 * C),
            "wo": w((L, C, C)), "bo": zeros(L, 1, C),
            "ln2_g": ones(L, 1, C), "ln2_b": zeros(L, 1, C),
            "wff1": w((L, C, dff)), "bff1": zeros(L, 1, dff),
            "wff2": w((L, dff, C)), "bff2": zeros(L, 1, C),
        },
        "film": {
            "w1": w((2 * static_dim, C)), "b1": zeros(1, C),
            "w2": w((C, 2 * C)), "b2": zeros(1, 2 * C),
            "layer_scale": jnp.float32(0.1),
        },
        "comb": {   # combination Linear(2C->2C) stored split for implicit concat
            "w1a": w((C, 2 * C)), "w1b": w((C, 2 * C)), "b1": zeros(1, 2 * C),
            "w2": w((2 * C, C)), "b2": zeros(1, C),
        },
        "final_ln_g": ones(1, C), "final_ln_b": zeros(1, C),
    }
    return p


# ----------------------------------------------------------------------------
# Forward pass (BottleneckProcessor)
# ----------------------------------------------------------------------------

def bottleneck_forward(params, x, static_params, num_heads):
    # x: [B, C, L] (PyTorch NCL)  ->  channel-last [B, T, C] internally
    B, C, L = x.shape
    h_in = jnp.transpose(x, (0, 2, 1))                        # [B, T, C]

    # Kernel 1: PE add + EnhancedS4Layer + residual (x = x + x_s4)
    pe = sinusoidal_pe(L, C)
    conv_w = build_s4_conv_weights(params["s4"], L)
    h = s4_block(h_in, pe, conv_w, params["s4"])              # [B, T, C] bf16

    # Kernel 2: MultiLayerTransformerBlock (both layers fused, pre-LN)
    # TODO(synk): relative-position bias omitted (source not provided).
    ht = transformer_block(h, params["tr"], num_heads)        # [B, T, C] bf16

    # Kernel 3: combination + FiLM (cond MLP folded in) + final LayerNorm
    # TODO(synk): cond = concat(static, static); CFG path identity at scale=1.0.
    fp = params["film"]
    cond = jnp.concatenate([static_params, static_params], axis=-1)
    ls = fp["layer_scale"]
    fw2 = (fp["w2"].astype(jnp.float32) * ls).astype(jnp.bfloat16)   # fold layer scale
    fb2 = fp["b2"] * ls
    out = combine_film_norm(h, ht, cond, fp["w1"], fp["b1"], fw2, fb2,
                            params["comb"], params["final_ln_g"],
                            params["final_ln_b"])
    return jnp.transpose(out, (0, 2, 1))                      # [B, C, T]


# ----------------------------------------------------------------------------
# Main
# ----------------------------------------------------------------------------

if __name__ == "__main__":
    channels = 128          # lane-dense channel dim
    static_dim = 8
    sequence_length = 16
    num_heads = 8           # head_dim = 16
    s4_state_size = 16
    B = 2

    key = jax.random.PRNGKey(0)
    pkey, xkey, skey = jax.random.split(key, 3)

    params = init_params(pkey, channels, static_dim, sequence_length,
                         s4_state_size, num_heads)
    x = jax.random.normal(xkey, (B, channels, sequence_length), jnp.float32)
    static_params = jax.random.normal(skey, (B, static_dim), jnp.float32)

    fwd = jax.jit(lambda xx, sp: bottleneck_forward(params, xx, sp, num_heads))
    out = jax.block_until_ready(fwd(x, static_params))

    assert out.shape == (B, channels, sequence_length), out.shape
    assert bool(jnp.all(jnp.isfinite(out)))
    print("KERNEL_OK")
</pallas_src>

<mosaic_0001>
module attributes {stable_mosaic.version = 11 : i64} {
  func.func @_s4_block_kernel(%arg0: i32, %arg1: memref<1x16x128xf32, #tpu.memory_space<vmem>>, %arg2: memref<16x128xf32, #tpu.memory_space<vmem>>, %arg3: memref<16x16x128xf32, #tpu.memory_space<vmem>>, %arg4: memref<1x128xf32, #tpu.memory_space<vmem>>, %arg5: memref<128x256xbf16, #tpu.memory_space<vmem>>, %arg6: memref<1x256xf32, #tpu.memory_space<vmem>>, %arg7: memref<1x128xf32, #tpu.memory_space<vmem>>, %arg8: memref<1x128xf32, #tpu.memory_space<vmem>>, %arg9: memref<1x16x128xbf16, #tpu.memory_space<vmem>>) attributes {dimension_semantics = [#tpu.dimension_semantics<parallel>], iteration_bounds = array<i64: 2>, scalar_prefetch = 0 : i64, scratch_operands = 0 : i64, tpu.core_type = #tpu.core_type<tc>, window_params = [{transform_indices = @transform_0, window_bounds = array<i64: 1, 16, 128>}, {pipeline_mode = #tpu.pipeline_mode<synchronous>, transform_indices = @transform_1, window_bounds = array<i64: 16, 128>}, {pipeline_mode = #tpu.pipeline_mode<synchronous>, transform_indices = @transform_2, window_bounds = array<i64: 16, 16, 128>}, {pipeline_mode = #tpu.pipeline_mode<synchronous>, transform_indices = @transform_3, window_bounds = array<i64: 1, 128>}, {pipeline_mode = #tpu.pipeline_mode<synchronous>, transform_indices = @transform_4, window_bounds = array<i64: 128, 256>}, {pipeline_mode = #tpu.pipeline_mode<synchronous>, transform_indices = @transform_5, window_bounds = array<i64: 1, 256>}, {pipeline_mode = #tpu.pipeline_mode<synchronous>, transform_indices = @transform_6, window_bounds = array<i64: 1, 128>}, {pipeline_mode = #tpu.pipeline_mode<synchronous>, transform_indices = @transform_7, window_bounds = array<i64: 1, 128>}, {transform_indices = @transform_8, window_bounds = array<i64: 1, 16, 128>}]} {
    %c0 = arith.constant 0 : index
    %c0_0 = arith.constant 0 : index
    %c0_1 = arith.constant 0 : index
    %0 = vector.load %arg1[%c0, %c0_0, %c0_1] : memref<1x16x128xf32, #tpu.memory_space<vmem>>, vector<1x16x128xf32>
    %1 = vector.shape_cast %0 : vector<1x16x128xf32> to vector<16x128xf32>
    %c0_2 = arith.constant 0 : index
    %c0_3 = arith.constant 0 : index
    %2 = vector.load %arg2[%c0_2, %c0_3] : memref<16x128xf32, #tpu.memory_space<vmem>>, vector<16x128xf32>
    %3 = arith.addf %1, %2 : vector<16x128xf32>
    %c0_4 = arith.constant 0 : index
    %c0_5 = arith.constant 0 : index
    %4 = vector.load %arg4[%c0_4, %c0_5] : memref<1x128xf32, #tpu.memory_space<vmem>>, vector<1x128xf32>
    %5 = vector.broadcast %4 : vector<1x128xf32> to vector<16x128xf32>
    %6 = arith.mulf %3, %5 : vector<16x128xf32>
    %c0_6 = arith.constant 0 : index
    %c0_7 = arith.constant 0 : index
    %c0_8 = arith.constant 0 : index
    %7 = vector.load %arg3[%c0_6, %c0_7, %c0_8] : memref<16x16x128xf32, #tpu.memory_space<vmem>>, vector<16x16x128xf32>
    %8 = vector.shape_cast %3 : vector<16x128xf32> to vector<16x1x128xf32>
    %9 = vector.broadcast %8 : vector<16x1x128xf32> to vector<16x16x128xf32>
    %10 = arith.mulf %7, %9 : vector<16x16x128xf32>
    %cst = arith.constant dense<0.000000e+00> : vector<16x128xf32>
    %11 = vector.multi_reduction <add>, %10, %cst [0] : vector<16x16x128xf32> to vector<16x128xf32>
    %12 = arith.addf %6, %11 : vector<16x128xf32>
    %13 = arith.mulf %12, %12 : vector<16x128xf32>
    %14 = arith.mulf %12, %13 : vector<16x128xf32>
    %cst_9 = arith.constant 4.471500e-02 : f32
    %15 = vector.broadcast %cst_9 : f32 to vector<16x128xf32>
    %16 = arith.mulf %15, %14 : vector<16x128xf32>
    %17 = arith.addf %12, %16 : vector<16x128xf32>
    %cst_10 = arith.constant 0.797884583 : f32
    %18 = vector.broadcast %cst_10 : f32 to vector<16x128xf32>
    %19 = arith.mulf %18, %17 : vector<16x128xf32>
    %20 = math.tanh %19 : vector<16x128xf32>
    %cst_11 = arith.constant 1.000000e+00 : f32
    %21 = vector.broadcast %cst_11 : f32 to vector<16x128xf32>
    %22 = arith.addf %21, %20 : vector<16x128xf32>
    %cst_12 = arith.constant 5.000000e-01 : f32
    %23 = vector.broadcast %cst_12 : f32 to vector<16x128xf32>
    %24 = arith.mulf %23, %22 : vector<16x128xf32>
    %25 = arith.mulf %12, %24 : vector<16x128xf32>
    %26 = arith.truncf %25 : vector<16x128xf32> to vector<16x128xbf16>
    %c0_13 = arith.constant 0 : index
    %c0_14 = arith.constant 0 : index
    %27 = vector.load %arg5[%c0_13, %c0_14] : memref<128x256xbf16, #tpu.memory_space<vmem>>, vector<128x256xbf16>
    %cst_15 = arith.constant dense<0.000000e+00> : vector<16x256xf32>
    %28 = tpu.matmul %26, %27, %cst_15 {dimension_numbers = #tpu.dot_dimension_numbers<[1], [0], [0], [1], [0, 0, 1, 1], [], []>} : vector<16x128xbf16>, vector<128x256xbf16>, vector<16x256xf32> -> vector<16x256xf32>
    %c0_16 = arith.constant 0 : index
    %c0_17 = arith.constant 0 : index
    %29 = vector.load %arg6[%c0_16, %c0_17] : memref<1x256xf32, #tpu.memory_space<vmem>>, vector<1x256xf32>
    %30 = vector.broadcast %29 : vector<1x256xf32> to vector<16x256xf32>
    %31 = arith.addf %28, %30 : vector<16x256xf32>
    %32 = vector.extract_strided_slice %31 {offsets = [0, 0], sizes = [16, 128], strides = [1, 1]} : vector<16x256xf32> to vector<16x128xf32>
    %33 = vector.extract_strided_slice %31 {offsets = [0, 128], sizes = [16, 128], strides = [1, 1]} : vector<16x256xf32> to vector<16x128xf32>
    %34 = arith.negf %33 : vector<16x128xf32>
    %35 = math.exp %34 : vector<16x128xf32>
    %cst_18 = arith.constant 1.000000e+00 : f32
    %36 = vector.broadcast %cst_18 : f32 to vector<16x128xf32>
    %37 = arith.addf %36, %35 : vector<16x128xf32>
    %38 = arith.divf %36, %37 : vector<16x128xf32>
    %39 = arith.mulf %32, %38 : vector<16x128xf32>
    %40 = arith.addf %39, %3 : vector<16x128xf32>
    %cst_19 = arith.constant dense<0.000000e+00> : vector<16xf32>
    %41 = vector.multi_reduction <add>, %40, %cst_19 [1] : vector<16x128xf32> to vector<16xf32>
    %42 = vector.shape_cast %41 : vector<16xf32> to vector<16x1xf32>
    %cst_20 = arith.constant 1.280000e+02 : f32
    %43 = vector.broadcast %cst_20 : f32 to vector<16x1xf32>
    %44 = arith.divf %42, %43 : vector<16x1xf32>
    %45 = vector.broadcast %44 : vector<16x1xf32> to vector<16x128xf32>
    %46 = arith.subf %40, %45 : vector<16x128xf32>
    %47 = arith.mulf %46, %46 : vector<16x128xf32>
    %cst_21 = arith.constant dense<0.000000e+00> : vector<16xf32>
    %48 = vector.multi_reduction <add>, %47, %cst_21 [1] : vector<16x128xf32> to vector<16xf32>
    %49 = vector.shape_cast %48 : vector<16xf32> to vector<16x1xf32>
    %cst_22 = arith.constant 1.280000e+02 : f32
    %50 = vector.broadcast %cst_22 : f32 to vector<16x1xf32>
    %51 = arith.divf %49, %50 : vector<16x1xf32>
    %52 = vector.broadcast %44 : vector<16x1xf32> to vector<16x128xf32>
    %53 = arith.subf %40, %52 : vector<16x128xf32>
    %cst_23 = arith.constant 9.99999974E-6 : f32
    %54 = vector.broadcast %cst_23 : f32 to vector<16x1xf32>
    %55 = arith.addf %51, %54 : vector<16x1xf32>
    %56 = math.rsqrt %55 : vector<16x1xf32>
    %57 = vector.broadcast %56 : vector<16x1xf32> to vector<16x128xf32>
    %58 = arith.mulf %53, %57 : vector<16x128xf32>
    %c0_24 = arith.constant 0 : index
    %c0_25 = arith.constant 0 : index
    %59 = vector.load %arg7[%c0_24, %c0_25] : memref<1x128xf32, #tpu.memory_space<vmem>>, vector<1x128xf32>
    %60 = vector.broadcast %59 : vector<1x128xf32> to vector<16x128xf32>
    %61 = arith.mulf %58, %60 : vector<16x128xf32>
    %c0_26 = arith.constant 0 : index
    %c0_27 = arith.constant 0 : index
    %62 = vector.load %arg8[%c0_26, %c0_27] : memref<1x128xf32, #tpu.memory_space<vmem>>, vector<1x128xf32>
    %63 = vector.broadcast %62 : vector<1x128xf32> to vector<16x128xf32>
    %64 = arith.addf %61, %63 : vector<16x128xf32>
    %65 = arith.addf %3, %64 : vector<16x128xf32>
    %66 = arith.truncf %65 : vector<16x128xf32> to vector<16x128xbf16>
    %c0_28 = arith.constant 0 : index
    %c0_29 = arith.constant 0 : index
    %c0_30 = arith.constant 0 : index
    %67 = vector.load %arg9[%c0_28, %c0_29, %c0_30] : memref<1x16x128xbf16, #tpu.memory_space<vmem>>, vector<1x16x128xbf16>
    %68 = vector.shape_cast %67 : vector<1x16x128xbf16> to vector<16x128xbf16>
    %69 = vector.shape_cast %66 : vector<16x128xbf16> to vector<1x16x128xbf16>
    tpu.vector_store %arg9[%c0_28, %c0_29, %c0_30], %69 {strides = array<i32>} : memref<1x16x128xbf16, #tpu.memory_space<vmem>>, vector<1x16x128xbf16>,
    return
  }
  func.func @transform_0(%arg0: i32) -> (i32, i32, i32) {
    %c0_i32 = arith.constant 0 : i32
    %c0_i32_0 = arith.constant 0 : i32
    %c0_i32_1 = arith.constant 0 : i32
    return %arg0, %c0_i32, %c0_i32_0 : i32, i32, i32
  }
  func.func @transform_1(%arg0: i32) -> (i32, i32) {
    %c0_i32 = arith.constant 0 : i32
    %c0_i32_0 = arith.constant 0 : i32
    %c0_i32_1 = arith.constant 0 : i32
    return %c0_i32, %c0_i32_0 : i32, i32
  }
  func.func @transform_2(%arg0: i32) -> (i32, i32, i32) {
    %c0_i32 = arith.constant 0 : i32
    %c0_i32_0 = arith.constant 0 : i32
    %c0_i32_1 = arith.constant 0 : i32
    %c0_i32_2 = arith.constant 0 : i32
    return %c0_i32, %c0_i32_0, %c0_i32_1 : i32, i32, i32
  }
  func.func @transform_3(%arg0: i32) -> (i32, i32) {
    %c0_i32 = arith.constant 0 : i32
    %c0_i32_0 = arith.constant 0 : i32
    %c0_i32_1 = arith.constant 0 : i32
    return %c0_i32, %c0_i32_0 : i32, i32
  }
  func.func @transform_4(%arg0: i32) -> (i32, i32) {
    %c0_i32 = arith.constant 0 : i32
    %c0_i32_0 = arith.constant 0 : i32
    %c0_i32_1 = arith.constant 0 : i32
    return %c0_i32, %c0_i32_0 : i32, i32
  }
  func.func @transform_5(%arg0: i32) -> (i32, i32) {
    %c0_i32 = arith.constant 0 : i32
    %c0_i32_0 = arith.constant 0 : i32
    %c0_i32_1 = arith.constant 0 : i32
    return %c0_i32, %c0_i32_0 : i32, i32
  }
  func.func @transform_6(%arg0: i32) -> (i32, i32) {
    %c0_i32 = arith.constant 0 : i32
    %c0_i32_0 = arith.constant 0 : i32
    %c0_i32_1 = arith.constant 0 : i32
    return %c0_i32, %c0_i32_0 : i32, i32
  }
  func.func @transform_7(%arg0: i32) -> (i32, i32) {
    %c0_i32 = arith.constant 0 : i32
    %c0_i32_0 = arith.constant 0 : i32
    %c0_i32_1 = arith.constant 0 : i32
    return %c0_i32, %c0_i32_0 : i32, i32
  }
  func.func @transform_8(%arg0: i32) -> (i32, i32, i32) {
    %c0_i32 = arith.constant 0 : i32
    %c0_i32_0 = arith.constant 0 : i32
    %c0_i32_1 = arith.constant 0 : i32
    return %arg0, %c0_i32, %c0_i32_0 : i32, i32, i32
  }
}

module attributes {stable_mosaic.version = 11 : i64} {
  func.func @_transformer_kernel(%arg0: i32, %arg1: memref<1x16x128xbf16, #tpu.memory_space<vmem>>, %arg2: memref<2x1x128xf32, #tpu.memory_space<vmem>>, %arg3: memref<2x1x128xf32, #tpu.memory_space<vmem>>, %arg4: memref<2x128x384xbf16, #tpu.memory_space<vmem>>, %arg5: memref<2x1x384xf32, #tpu.memory_space<vmem>>, %arg6: memref<2x128x128xbf16, #tpu.memory_space<vmem>>, %arg7: memref<2x1x128xf32, #tpu.memory_space<vmem>>, %arg8: memref<2x1x128xf32, #tpu.memory_space<vmem>>, %arg9: memref<2x1x128xf32, #tpu.memory_space<vmem>>, %arg10: memref<2x128x512xbf16, #tpu.memory_space<vmem>>, %arg11: memref<2x1x512xf32, #tpu.memory_space<vmem>>, %arg12: memref<2x512x128xbf16, #tpu.memory_space<vmem>>, %arg13: memref<2x1x128xf32, #tpu.memory_space<vmem>>, %arg14: memref<1x16x128xbf16, #tpu.memory_space<vmem>>) attributes {dimension_semantics = [#tpu.dimension_semantics<parallel>], iteration_bounds = array<i64: 2>, scalar_prefetch = 0 : i64, scratch_operands = 0 : i64, tpu.core_type = #tpu.core_type<tc>, window_params = [{transform_indices = @transform_0, window_bounds = array<i64: 1, 16, 128>}, {pipeline_mode = #tpu.pipeline_mode<synchronous>, transform_indices = @transform_1, window_bounds = array<i64: 2, 1, 128>}, {pipeline_mode = #tpu.pipeline_mode<synchronous>, transform_indices = @transform_2, window_bounds = array<i64: 2, 1, 128>}, {pipeline_mode = #tpu.pipeline_mode<synchronous>, transform_indices = @transform_3, window_bounds = array<i64: 2, 128, 384>}, {pipeline_mode = #tpu.pipeline_mode<synchronous>, transform_indices = @transform_4, window_bounds = array<i64: 2, 1, 384>}, {pipeline_mode = #tpu.pipeline_mode<synchronous>, transform_indices = @transform_5, window_bounds = array<i64: 2, 128, 128>}, {pipeline_mode = #tpu.pipeline_mode<synchronous>, transform_indices = @transform_6, window_bounds = array<i64: 2, 1, 128>}, {pipeline_mode = #tpu.pipeline_mode<synchronous>, transform_indices = @transform_7, window_bounds = array<i64: 2, 1, 128>}, {pipeline_mode = #tpu.pipeline_mode<synchronous>, transform_indices = @transform_8, window_bounds = array<i64: 2, 1, 128>}, {pipeline_mode = #tpu.pipeline_mode<synchronous>, transform_indices = @transform_9, window_bounds = array<i64: 2, 128, 512>}, {pipeline_mode = #tpu.pipeline_mode<synchronous>, transform_indices = @transform_10, window_bounds = array<i64: 2, 1, 512>}, {pipeline_mode = #tpu.pipeline_mode<synchronous>, transform_indices = @transform_11, window_bounds = array<i64: 2, 512, 128>}, {pipeline_mode = #tpu.pipeline_mode<synchronous>, transform_indices = @transform_12, window_bounds = array<i64: 2, 1, 128>}, {transform_indices = @transform_13, window_bounds = array<i64: 1, 16, 128>}]} {
    %c0 = arith.constant 0 : index
    %c0_0 = arith.constant 0 : index
    %c0_1 = arith.constant 0 : index
    %0 = vector.load %arg1[%c0, %c0_0, %c0_1] : memref<1x16x128xbf16, #tpu.memory_space<vmem>>, vector<1x16x128xbf16>
    %1 = vector.shape_cast %0 : vector<1x16x128xbf16> to vector<16x128xbf16>
    %2 = arith.extf %1 : vector<16x128xbf16> to vector<16x128xf32>
    %c0_2 = arith.constant 0 : index
    %c0_3 = arith.constant 0 : index
    %c0_4 = arith.constant 0 : index
    %3 = vector.load %arg2[%c0_2, %c0_3, %c0_4] : memref<2x1x128xf32, #tpu.memory_space<vmem>>, vector<1x1x128xf32>
    %4 = vector.shape_cast %3 : vector<1x1x128xf32> to vector<1x128xf32>
    %c0_5 = arith.constant 0 : index
    %c0_6 = arith.constant 0 : index
    %c0_7 = arith.constant 0 : index
    %5 = vector.load %arg3[%c0_5, %c0_6, %c0_7] : memref<2x1x128xf32, #tpu.memory_space<vmem>>, vector<1x1x128xf32>
    %6 = vector.shape_cast %5 : vector<1x1x128xf32> to vector<1x128xf32>
    %cst = arith.constant dense<0.000000e+00> : vector<16xf32>
    %7 = vector.multi_reduction <add>, %2, %cst [1] : vector<16x128xf32> to vector<16xf32>
    %8 = vector.shape_cast %7 : vector<16xf32> to vector<16x1xf32>
    %cst_8 = arith.constant 1.280000e+02 : f32
    %9 = vector.broadcast %cst_8 : f32 to vector<16x1xf32>
    %10 = arith.divf %8, %9 : vector<16x1xf32>
    %11 = vector.broadcast %10 : vector<16x1xf32> to vector<16x128xf32>
    %12 = arith.subf %2, %11 : vector<16x128xf32>
    %13 = arith.mulf %12, %12 : vector<16x128xf32>
    %cst_9 = arith.constant dense<0.000000e+00> : vector<16xf32>
    %14 = vector.multi_reduction <add>, %13, %cst_9 [1] : vector<16x128xf32> to vector<16xf32>
    %15 = vector.shape_cast %14 : vector<16xf32> to vector<16x1xf32>
    %cst_10 = arith.constant 1.280000e+02 : f32
    %16 = vector.broadcast %cst_10 : f32 to vector<16x1xf32>
    %17 = arith.divf %15, %16 : vector<16x1xf32>
    %18 = vector.broadcast %10 : vector<16x1xf32> to vector<16x128xf32>
    %19 = arith.subf %2, %18 : vector<16x128xf32>
    %cst_11 = arith.constant 9.99999974E-6 : f32
    %20 = vector.broadcast %cst_11 : f32 to vector<16x1xf32>
    %21 = arith.addf %17, %20 : vector<16x1xf32>
    %22 = math.rsqrt %21 : vector<16x1xf32>
    %23 = vector.broadcast %22 : vector<16x1xf32> to vector<16x128xf32>
    %24 = arith.mulf %19, %23 : vector<16x128xf32>
    %25 = vector.broadcast %4 : vector<1x128xf32> to vector<16x128xf32>
    %26 = arith.mulf %24, %25 : vector<16x128xf32>
    %27 = vector.broadcast %6 : vector<1x128xf32> to vector<16x128xf32>
    %28 = arith.addf %26, %27 : vector<16x128xf32>
    %29 = arith.truncf %28 : vector<16x128xf32> to vector<16x128xbf16>
    %c0_12 = arith.constant 0 : index
    %c0_13 = arith.constant 0 : index
    %c0_14 = arith.constant 0 : index
    %30 = vector.load %arg4[%c0_12, %c0_13, %c0_14] : memref<2x128x384xbf16, #tpu.memory_space<vmem>>, vector<1x128x384xbf16>
    %31 = vector.shape_cast %30 : vector<1x128x384xbf16> to vector<128x384xbf16>
    %cst_15 = arith.constant dense<0.000000e+00> : vector<16x384xf32>
    %32 = tpu.matmul %29, %31, %cst_15 {dimension_numbers = #tpu.dot_dimension_numbers<[1], [0], [0], [1], [0, 0, 1, 1], [], []>} : vector<16x128xbf16>, vector<128x384xbf16>, vector<16x384xf32> -> vector<16x384xf32>
    %c0_16 = arith.constant 0 : index
    %c0_17 = arith.constant 0 : index
    %c0_18 = arith.constant 0 : index
    %33 = vector.load %arg5[%c0_16, %c0_17, %c0_18] : memref<2x1x384xf32, #tpu.memory_space<vmem>>, vector<1x1x384xf32>
    %34 = vector.shape_cast %33 : vector<1x1x384xf32> to vector<1x384xf32>
    %35 = vector.broadcast %34 : vector<1x384xf32> to vector<16x384xf32>
    %36 = arith.addf %32, %35 : vector<16x384xf32>
    %37 = arith.truncf %36 : vector<16x384xf32> to vector<16x384xbf16>
    %38 = vector.extract_strided_slice %37 {offsets = [0, 0], sizes = [16, 16], strides = [1, 1]} : vector<16x384xbf16> to vector<16x16xbf16>
    %39 = vector.extract_strided_slice %37 {offsets = [0, 128], sizes = [16, 16], strides = [1, 1]} : vector<16x384xbf16> to vector<16x16xbf16>
    %40 = vector.extract_strided_slice %37 {offsets = [0, 256], sizes = [16, 16], strides = [1, 1]} : vector<16x384xbf16> to vector<16x16xbf16>
    %cst_19 = arith.constant dense<0.000000e+00> : vector<16x16xf32>
    %41 = tpu.matmul %38, %39, %cst_19 {dimension_numbers = #tpu.dot_dimension_numbers<[1], [1], [0], [0], [0, 0, 1, 0], [], []>} : vector<16x16xbf16>, vector<16x16xbf16>, vector<16x16xf32> -> vector<16x16xf32>
    %cst_20 = arith.constant 2.500000e-01 : f32
    %42 = vector.broadcast %cst_20 : f32 to vector<16x16xf32>
    %43 = arith.mulf %41, %42 : vector<16x16xf32>
    %cst_21 = arith.constant dense<0xFF800000> : vector<16xf32>
    %44 = vector.multi_reduction <maximumf>, %43, %cst_21 [1] : vector<16x16xf32> to vector<16xf32>
    %45 = vector.shape_cast %44 : vector<16xf32> to vector<16x1xf32>
    %46 = vector.broadcast %45 : vector<16x1xf32> to vector<16x16xf32>
    %47 = arith.subf %43, %46 : vector<16x16xf32>
    %48 = math.exp %47 : vector<16x16xf32>
    %cst_22 = arith.constant dense<0.000000e+00> : vector<16xf32>
    %49 = vector.multi_reduction <add>, %48, %cst_22 [1] : vector<16x16xf32> to vector<16xf32>
    %50 = vector.shape_cast %49 : vector<16xf32> to vector<16x1xf32>
    %51 = tpu.reciprocal %50 {approx = true} : vector<16x1xf32> -> vector<16x1xf32>
    %52 = vector.broadcast %51 : vector<16x1xf32> to vector<16x16xf32>
    %53 = arith.mulf %48, %52 : vector<16x16xf32>
    %54 = arith.truncf %53 : vector<16x16xf32> to vector<16x16xbf16>
    %cst_23 = arith.constant dense<0.000000e+00> : vector<16x16xf32>
    %55 = tpu.matmul %54, %40, %cst_23 {dimension_numbers = #tpu.dot_dimension_numbers<[1], [0], [0], [1], [0, 0, 1, 1], [], []>} : vector<16x16xbf16>, vector<16x16xbf16>, vector<16x16xf32> -> vector<16x16xf32>
    %56 = vector.extract_strided_slice %37 {offsets = [0, 16], sizes = [16, 16], strides = [1, 1]} : vector<16x384xbf16> to vector<16x16xbf16>
    %57 = vector.extract_strided_slice %37 {offsets = [0, 144], sizes = [16, 16], strides = [1, 1]} : vector<16x384xbf16> to vector<16x16xbf16>
    %58 = vector.extract_strided_slice %37 {offsets = [0, 272], sizes = [16, 16], strides = [1, 1]} : vector<16x384xbf16> to vector<16x16xbf16>
    %cst_24 = arith.constant dense<0.000000e+00> : vector<16x16xf32>
    %59 = tpu.matmul %56, %57, %cst_24 {dimension_numbers = #tpu.dot_dimension_numbers<[1], [1], [0], [0], [0, 0, 1, 0], [], []>} : vector<16x16xbf16>, vector<16x16xbf16>, vector<16x16xf32> -> vector<16x16xf32>
    %cst_25 = arith.constant 2.500000e-01 : f32
    %60 = vector.broadcast %cst_25 : f32 to vector<16x16xf32>
    %61 = arith.mulf %59, %60 : vector<16x16xf32>
    %cst_26 = arith.constant dense<0xFF800000> : vector<16xf32>
    %62 = vector.multi_reduction <maximumf>, %61, %cst_26 [1] : vector<16x16xf32> to vector<16xf32>
    %63 = vector.shape_cast %62 : vector<16xf32> to vector<16x1xf32>
    %64 = vector.broadcast %63 : vector<16x1xf32> to vector<16x16xf32>
    %65 = arith.subf %61, %64 : vector<16x16xf32>
    %66 = math.exp %65 : vector<16x16xf32>
    %cst_27 = arith.constant dense<0.000000e+00> : vector<16xf32>
    %67 = vector.multi_reduction <add>, %66, %cst_27 [1] : vector<16x16xf32> to vector<16xf32>
    %68 = vector.shape_cast %67 : vector<16xf32> to vector<16x1xf32>
    %69 = tpu.reciprocal %68 {approx = true} : vector<16x1xf32> -> vector<16x1xf32>
    %70 = vector.broadcast %69 : vector<16x1xf32> to vector<16x16xf32>
    %71 = arith.mulf %66, %70 : vector<16x16xf32>
    %72 = arith.truncf %71 : vector<16x16xf32> to vector<16x16xbf16>
    %cst_28 = arith.constant dense<0.000000e+00> : vector<16x16xf32>
    %73 = tpu.matmul %72, %58, %cst_28 {dimension_numbers = #tpu.dot_dimension_numbers<[1], [0], [0], [1], [0, 0, 1, 1], [], []>} : vector<16x16xbf16>, vector<16x16xbf16>, vector<16x16xf32> -> vector<16x16xf32>
    %74 = vector.extract_strided_slice %37 {offsets = [0, 32], sizes = [16, 16], strides = [1, 1]} : vector<16x384xbf16> to vector<16x16xbf16>
    %75 = vector.extract_strided_slice %37 {offsets = [0, 160], sizes = [16, 16], strides = [1, 1]} : vector<16x384xbf16> to vector<16x16xbf16>
    %76 = vector.extract_strided_slice %37 {offsets = [0, 288], sizes = [16, 16], strides = [1, 1]} : vector<16x384xbf16> to vector<16x16xbf16>
    %cst_29 = arith.constant dense<0.000000e+00> : vector<16x16xf32>
    %77 = tpu.matmul %74, %75, %cst_29 {dimension_numbers = #tpu.dot_dimension_numbers<[1], [1], [0], [0], [0, 0, 1, 0], [], []>} : vector<16x16xbf16>, vector<16x16xbf16>, vector<16x16xf32> -> vector<16x16xf32>
    %cst_30 = arith.constant 2.500000e-01 : f32
    %78 = vector.broadcast %cst_30 : f32 to vector<16x16xf32>
    %79 = arith.mulf %77, %78 : vector<16x16xf32>
    %cst_31 = arith.constant dense<0xFF800000> : vector<16xf32>
    %80 = vector.multi_reduction <maximumf>, %79, %cst_31 [1] : vector<16x16xf32> to vector<16xf32>
    %81 = vector.shape_cast %80 : vector<16xf32> to vector<16x1xf32>
    %82 = vector.broadcast %81 : vector<16x1xf32> to vector<16x16xf32>
    %83 = arith.subf %79, %82 : vector<16x16xf32>
    %84 = math.exp %83 : vector<16x16xf32>
    %cst_32 = arith.constant dense<0.000000e+00> : vector<16xf32>
    %85 = vector.multi_reduction <add>, %84, %cst_32 [1] : vector<16x16xf32> to vector<16xf32>
    %86 = vector.shape_cast %85 : vector<16xf32> to vector<16x1xf32>
    %87 = tpu.reciprocal %86 {approx = true} : vector<16x1xf32> -> vector<16x1xf32>
    %88 = vector.broadcast %87 : vector<16x1xf32> to vector<16x16xf32>
    %89 = arith.mulf %84, %88 : vector<16x16xf32>
    %90 = arith.truncf %89 : vector<16x16xf32> to vector<16x16xbf16>
    %cst_33 = arith.constant dense<0.000000e+00> : vector<16x16xf32>
    %91 = tpu.matmul %90, %76, %cst_33 {dimension_numbers = #tpu.dot_dimension_numbers<[1], [0], [0], [1], [0, 0, 1, 1], [], []>} : vector<16x16xbf16>, vector<16x16xbf16>, vector<16x16xf32> -> vector<16x16xf32>
    %92 = vector.extract_strided_slice %37 {offsets = [0, 48], sizes = [16, 16], strides = [1, 1]} : vector<16x384xbf16> to vector<16x16xbf16>
    %93 = vector.extract_strided_slice %37 {offsets = [0, 176], sizes = [16, 16], strides = [1, 1]} : vector<16x384xbf16> to vector<16x16xbf16>
    %94 = vector.extract_strided_slice %37 {offsets = [0, 304], sizes = [16, 16], strides = [1, 1]} : vector<16x384xbf16> to vector<16x16xbf16>
    %cst_34 = arith.constant dense<0.000000e+00> : vector<16x16xf32>
    %95 = tpu.matmul %92, %93, %cst_34 {dimension_numbers = #tpu.dot_dimension_numbers<[1], [1], [0], [0], [0, 0, 1, 0], [], []>} : vector<16x16xbf16>, vector<16x16xbf16>, vector<16x16xf32> -> vector<16x16xf32>
    %cst_35 = arith.constant 2.500000e-01 : f32
    %96 = vector.broadcast %cst_35 : f32 to vector<16x16xf32>
    %97 = arith.mulf %95, %96 : vector<16x16xf32>
    %cst_36 = arith.constant dense<0xFF800000> : vector<16xf32>
    %98 = vector.multi_reduction <maximumf>, %97, %cst_36 [1] : vector<16x16xf32> to vector<16xf32>
    %99 = vector.shape_cast %98 : vector<16xf32> to vector<16x1xf32>
    %100 = vector.broadcast %99 : vector<16x1xf32> to vector<16x16xf32>
    %101 = arith.subf %97, %100 : vector<16x16xf32>
    %102 = math.exp %101 : vector<16x16xf32>
    %cst_37 = arith.constant dense<0.000000e+00> : vector<16xf32>
    %103 = vector.multi_reduction <add>, %102, %cst_37 [1] : vector<16x16xf32> to vector<16xf32>
    %104 = vector.shape_cast %103 : vector<16xf32> to vector<16x1xf32>
    %105 = tpu.reciprocal %104 {approx = true} : vector<16x1xf32> -> vector<16x1xf32>
    %106 = vector.broadcast %105 : vector<16x1xf32> to vector<16x16xf32>
    %107 = arith.mulf %102, %106 : vector<16x16xf32>
    %108 = arith.truncf %107 : vector<16x16xf32> to vector<16x16xbf16>
    %cst_38 = arith.constant dense<0.000000e+00> : vector<16x16xf32>
    %109 = tpu.matmul %108, %94, %cst_38 {dimension_numbers = #tpu.dot_dimension_numbers<[1], [0], [0], [1], [0, 0, 1, 1], [], []>} : vector<16x16xbf16>, vector<16x16xbf16>, vector<16x16xf32> -> vector<16x16xf32>
    %110 = vector.extract_strided_slice %37 {offsets = [0, 64], sizes = [16, 16], strides = [1, 1]} : vector<16x384xbf16> to vector<16x16xbf16>
    %111 = vector.extract_strided_slice %37 {offsets = [0, 192], sizes = [16, 16], strides = [1, 1]} : vector<16x384xbf16> to vector<16x16xbf16>
    %112 = vector.extract_strided_slice %37 {offsets = [0, 320], sizes = [16, 16], strides = [1, 1]} : vector<16x384xbf16> to vector<16x16xbf16>
    %cst_39 = arith.constant dense<0.000000e+00> : vector<16x16xf32>
    %113 = tpu.matmul %110, %111, %cst_39 {dimension_numbers = #tpu.dot_dimension_numbers<[1], [1], [0], [0], [0, 0, 1, 0], [], []>} : vector<16x16xbf16>, vector<16x16xbf16>, vector<16x16xf32> -> vector<16x16xf32>
    %cst_40 = arith.constant 2.500000e-01 : f32
    %114 = vector.broadcast %cst_40 : f32 to vector<16x16xf32>
    %115 = arith.mulf %113, %114 : vector<16x16xf32>
    %cst_41 = arith.constant dense<0xFF800000> : vector<16xf32>
    %116 = vector.multi_reduction <maximumf>, %115, %cst_41 [1] : vector<16x16xf32> to vector<16xf32>
    %117 = vector.shape_cast %116 : vector<16xf32> to vector<16x1xf32>
    %118 = vector.broadcast %117 : vector<16x1xf32> to vector<16x16xf32>
    %119 = arith.subf %115, %118 : vector<16x16xf32>
    %120 = math.exp %119 : vector<16x16xf32>
    %cst_42 = arith.constant dense<0.000000e+00> : vector<16xf32>
    %121 = vector.multi_reduction <add>, %120, %cst_42 [1] : vector<16x16xf32> to vector<16xf32>
    %122 = vector.shape_cast %121 : vector<16xf32> to vector<16x1xf32>
    %123 = tpu.reciprocal %122 {approx = true} : vector<16x1xf32> -> vector<16x1xf32>
    %124 = vector.broadcast %123 : vector<16x1xf32> to vector<16x16xf32>
    %125 = arith.mulf %120, %124 : vector<16x16xf32>
    %126 = arith.truncf %125 : vector<16x16xf32> to vector<16x16xbf16>
    %cst_43 = arith.constant dense<0.000000e+00> : vector<16x16xf32>
    %127 = tpu.matmul %126, %112, %cst_43 {dimension_numbers = #tpu.dot_dimension_numbers<[1], [0], [0], [1], [0, 0, 1, 1], [], []>} : vector<16x16xbf16>, vector<16x16xbf16>, vector<16x16xf32> -> vector<16x16xf32>
    %128 = vector.extract_strided_slice %37 {offsets = [0, 80], sizes = [16, 16], strides = [1, 1]} : vector<16x384xbf16> to vector<16x16xbf16>
    %129 = vector.extract_strided_slice %37 {offsets = [0, 208], sizes = [16, 16], strides = [1, 1]} : vector<16x384xbf16> to vector<16x16xbf16>
    %130 = vector.extract_strided_slice %37 {offsets = [0, 336], sizes = [16, 16], strides = [1, 1]} : vector<16x384xbf16> to vector<16x16xbf16>
    %cst_44 = arith.constant dense<0.000000e+00> : vector<16x16xf32>
    %131 = tpu.matmul %128, %129, %cst_44 {dimension_numbers = #tpu.dot_dimension_numbers<[1], [1], [0], [0], [0, 0, 1, 0], [], []>} : vector<16x16xbf16>, vector<16x16xbf16>, vector<16x16xf32> -> vector<16x16xf32>
    %cst_45 = arith.constant 2.500000e-01 : f32
    %132 = vector.broadcast %cst_45 : f32 to vector<16x16xf32>
    %133 = arith.mulf %131, %132 : vector<16x16xf32>
    %cst_46 = arith.constant dense<0xFF800000> : vector<16xf32>
    %134 = vector.multi_reduction <maximumf>, %133, %cst_46 [1] : vector<16x16xf32> to vector<16xf32>
    %135 = vector.shape_cast %134 : vector<16xf32> to vector<16x1xf32>
    %136 = vector.broadcast %135 : vector<16x1xf32> to vector<16x16xf32>
    %137 = arith.subf %133, %136 : vector<16x16xf32>
    %138 = math.exp %137 : vector<16x16xf32>
    %cst_47 = arith.constant dense<0.000000e+00> : vector<16xf32>
    %139 = vector.multi_reduction <add>, %138, %cst_47 [1] : vector<16x16xf32> to vector<16xf32>
    %140 = vector.shape_cast %139 : vector<16xf32> to vector<16x1xf32>
    %141 = tpu.reciprocal %140 {approx = true} : vector<16x1xf32> -> vector<16x1xf32>
    %142 = vector.broadcast %141 : vector<16x1xf32> to vector<16x16xf32>
    %143 = arith.mulf %138, %142 : vector<16x16xf32>
    %144 = arith.truncf %143 : vector<16x16xf32> to vector<16x16xbf16>
    %cst_48 = arith.constant dense<0.000000e+00> : vector<16x16xf32>
    %145 = tpu.matmul %144, %130, %cst_48 {dimension_numbers = #tpu.dot_dimension_numbers<[1], [0], [0], [1], [0, 0, 1, 1], [], []>} : vector<16x16xbf16>, vector<16x16xbf16>, vector<16x16xf32> -> vector<16x16xf32>
    %146 = vector.extract_strided_slice %37 {offsets = [0, 96], sizes = [16, 16], strides = [1, 1]} : vector<16x384xbf16> to vector<16x16xbf16>
    %147 = vector.extract_strided_slice %37 {offsets = [0, 224], sizes = [16, 16], strides = [1, 1]} : vector<16x384xbf16> to vector<16x16xbf16>
    %148 = vector.extract_strided_slice %37 {offsets = [0, 352], sizes = [16, 16], strides = [1, 1]} : vector<16x384xbf16> to vector<16x16xbf16>
    %cst_49 = arith.constant dense<0.000000e+00> : vector<16x16xf32>
    %149 = tpu.matmul %146, %147, %cst_49 {dimension_numbers = #tpu.dot_dimension_numbers<[1], [1], [0], [0], [0, 0, 1, 0], [], []>} : vector<16x16xbf16>, vector<16x16xbf16>, vector<16x16xf32> -> vector<16x16xf32>
    %cst_50 = arith.constant 2.500000e-01 : f32
    %150 = vector.broadcast %cst_50 : f32 to vector<16x16xf32>
    %151 = arith.mulf %149, %150 : vector<16x16xf32>
    %cst_51 = arith.constant dense<0xFF800000> : vector<16xf32>
    %152 = vector.multi_reduction <maximumf>, %151, %cst_51 [1] : vector<16x16xf32> to vector<16xf32>
    %153 = vector.shape_cast %152 : vector<16xf32> to vector<16x1xf32>
    %154 = vector.broadcast %153 : vector<16x1xf32> to vector<16x16xf32>
    %155 = arith.subf %151, %154 : vector<16x16xf32>
    %156 = math.exp %155 : vector<16x16xf32>
    %cst_52 = arith.constant dense<0.000000e+00> : vector<16xf32>
    %157 = vector.multi_reduction <add>, %156, %cst_52 [1] : vector<16x16xf32> to vector<16xf32>
    %158 = vector.shape_cast %157 : vector<16xf32> to vector<16x1xf32>
    %159 = tpu.reciprocal %158 {approx = true} : vector<16x1xf32> -> vector<16x1xf32>
    %160 = vector.broadcast %159 : vector<16x1xf32> to vector<16x16xf32>
    %161 = arith.mulf %156, %160 : vector<16x16xf32>
    %162 = arith.truncf %161 : vector<16x16xf32> to vector<16x16xbf16>
    %cst_53 = arith.constant dense<0.000000e+00> : vector<16x16xf32>
    %163 = tpu.matmul %162, %148, %cst_53 {dimension_numbers = #tpu.dot_dimension_numbers<[1], [0], [0], [1], [0, 0, 1, 1], [], []>} : vector<16x16xbf16>, vector<16x16xbf16>, vector<16x16xf32> -> vector<16x16xf32>
    %164 = vector.extract_strided_slice %37 {offsets = [0, 112], sizes = [16, 16], strides = [1, 1]} : vector<16x384xbf16> to vector<16x16xbf16>
    %165 = vector.extract_strided_slice %37 {offsets = [0, 240], sizes = [16, 16], strides = [1, 1]} : vector<16x384xbf16> to vector<16x16xbf16>
    %166 = vector.extract_strided_slice %37 {offsets = [0, 368], sizes = [16, 16], strides = [1, 1]} : vector<16x384xbf16> to vector<16x16xbf16>
    %cst_54 = arith.constant dense<0.000000e+00> : vector<16x16xf32>
    %167 = tpu.matmul %164, %165, %cst_54 {dimension_numbers = #tpu.dot_dimension_numbers<[1], [1], [0], [0], [0, 0, 1, 0], [], []>} : vector<16x16xbf16>, vector<16x16xbf16>, vector<16x16xf32> -> vector<16x16xf32>
    %cst_55 = arith.constant 2.500000e-01 : f32
    %168 = vector.broadcast %cst_55 : f32 to vector<16x16xf32>
    %169 = arith.mulf %167, %168 : vector<16x16xf32>
    %cst_56 = arith.constant dense<0xFF800000> : vector<16xf32>
    %170 = vector.multi_reduction <maximumf>, %169, %cst_56 [1] : vector<16x16xf32> to vector<16xf32>
    %171 = vector.shape_cast %170 : vector<16xf32> to vector<16x1xf32>
    %172 = vector.broadcast %171 : vector<16x1xf32> to vector<16x16xf32>
    %173 = arith.subf %169, %172 : vector<16x16xf32>
    %174 = math.exp %173 : vector<16x16xf32>
    %cst_57 = arith.constant dense<0.000000e+00> : vector<16xf32>
    %175 = vector.multi_reduction <add>, %174, %cst_57 [1] : vector<16x16xf32> to vector<16xf32>
    %176 = vector.shape_cast %175 : vector<16xf32> to vector<16x1xf32>
    %177 = tpu.reciprocal %176 {approx = true} : vector<16x1xf32> -> vector<16x1xf32>
    %178 = vector.broadcast %177 : vector<16x1xf32> to vector<16x16xf32>
    %179 = arith.mulf %174, %178 : vector<16x16xf32>
    %180 = arith.truncf %179 : vector<16x16xf32> to vector<16x16xbf16>
    %cst_58 = arith.constant dense<0.000000e+00> : vector<16x16xf32>
    %181 = tpu.matmul %180, %166, %cst_58 {dimension_numbers = #tpu.dot_dimension_numbers<[1], [0], [0], [1], [0, 0, 1, 1], [], []>} : vector<16x16xbf16>, vector<16x16xbf16>, vector<16x16xf32> -> vector<16x16xf32>
    %182 = tpu.concatenate %55, %73, %91, %109, %127, %145, %163, %181 in 1 : vector<16x16xf32>, vector<16x16xf32>, vector<16x16xf32>, vector<16x16xf32>, vector<16x16xf32>, vector<16x16xf32>, vector<16x16xf32>, vector<16x16xf32> -> vector<16x128xf32>
    %183 = arith.truncf %182 : vector<16x128xf32> to vector<16x128xbf16>
    %c0_59 = arith.constant 0 : index
    %c0_60 = arith.constant 0 : index
    %c0_61 = arith.constant 0 : index
    %184 = vector.load %arg6[%c0_59, %c0_60, %c0_61] : memref<2x128x128xbf16, #tpu.memory_space<vmem>>, vector<1x128x128xbf16>
    %185 = vector.shape_cast %184 : vector<1x128x128xbf16> to vector<128x128xbf16>
    %cst_62 = arith.constant dense<0.000000e+00> : vector<16x128xf32>
    %186 = tpu.matmul %183, %185, %cst_62 {dimension_numbers = #tpu.dot_dimension_numbers<[1], [0], [0], [1], [0, 0, 1, 1], [], []>} : vector<16x128xbf16>, vector<128x128xbf16>, vector<16x128xf32> -> vector<16x128xf32>
    %c0_63 = arith.constant 0 : index
    %c0_64 = arith.constant 0 : index
    %c0_65 = arith.constant 0 : index
    %187 = vector.load %arg7[%c0_63, %c0_64, %c0_65] : memref<2x1x128xf32, #tpu.memory_space<vmem>>, vector<1x1x128xf32>
    %188 = vector.shape_cast %187 : vector<1x1x128xf32> to vector<1x128xf32>
    %189 = vector.broadcast %188 : vector<1x128xf32> to vector<16x128xf32>
    %190 = arith.addf %186, %189 : vector<16x128xf32>
    %191 = arith.addf %2, %190 : vector<16x128xf32>
    %c0_66 = arith.constant 0 : index
    %c0_67 = arith.constant 0 : index
    %c0_68 = arith.constant 0 : index
    %192 = vector.load %arg8[%c0_66, %c0_67, %c0_68] : memref<2x1x128xf32, #tpu.memory_space<vmem>>, vector<1x1x128xf32>
    %193 = vector.shape_cast %192 : vector<1x1x128xf32> to vector<1x128xf32>
    %c0_69 = arith.constant 0 : index
    %c0_70 = arith.constant 0 : index
    %c0_71 = arith.constant 0 : index
    %194 = vector.load %arg9[%c0_69, %c0_70, %c0_71] : memref<2x1x128xf32, #tpu.memory_space<vmem>>, vector<1x1x128xf32>
    %195 = vector.shape_cast %194 : vector<1x1x128xf32> to vector<1x128xf32>
    %cst_72 = arith.constant dense<0.000000e+00> : vector<16xf32>
    %196 = vector.multi_reduction <add>, %191, %cst_72 [1] : vector<16x128xf32> to vector<16xf32>
    %197 = vector.shape_cast %196 : vector<16xf32> to vector<16x1xf32>
    %cst_73 = arith.constant 1.280000e+02 : f32
    %198 = vector.broadcast %cst_73 : f32 to vector<16x1xf32>
    %199 = arith.divf %197, %198 : vector<16x1xf32>
    %200 = vector.broadcast %199 : vector<16x1xf32> to vector<16x128xf32>
    %201 = arith.subf %191, %200 : vector<16x128xf32>
    %202 = arith.mulf %201, %201 : vector<16x128xf32>
    %cst_74 = arith.constant dense<0.000000e+00> : vector<16xf32>
    %203 = vector.multi_reduction <add>, %202, %cst_74 [1] : vector<16x128xf32> to vector<16xf32>
    %204 = vector.shape_cast %203 : vector<16xf32> to vector<16x1xf32>
    %cst_75 = arith.constant 1.280000e+02 : f32
    %205 = vector.broadcast %cst_75 : f32 to vector<16x1xf32>
    %206 = arith.divf %204, %205 : vector<16x1xf32>
    %207 = vector.broadcast %199 : vector<16x1xf32> to vector<16x128xf32>
    %208 = arith.subf %191, %207 : vector<16x128xf32>
    %cst_76 = arith.constant 9.99999974E-6 : f32
    %209 = vector.broadcast %cst_76 : f32 to vector<16x1xf32>
    %210 = arith.addf %206, %209 : vector<16x1xf32>
    %211 = math.rsqrt %210 : vector<16x1xf32>
    %212 = vector.broadcast %211 : vector<16x1xf32> to vector<16x128xf32>
    %213 = arith.mulf %208, %212 : vector<16x128xf32>
    %214 = vector.broadcast %193 : vector<1x128xf32> to vector<16x128xf32>
    %215 = arith.mulf %213, %214 : vector<16x128xf32>
    %216 = vector.broadcast %195 : vector<1x128xf32> to vector<16x128xf32>
    %217 = arith.addf %215, %216 : vector<16x128xf32>
    %218 = arith.truncf %217 : vector<16x128xf32> to vector<16x128xbf16>
    %c0_77 = arith.constant 0 : index
    %c0_78 = arith.constant 0 : index
    %c0_79 = arith.constant 0 : index
    %219 = vector.load %arg10[%c0_77, %c0_78, %c0_79] : memref<2x128x512xbf16, #tpu.memory_space<vmem>>, vector<1x128x512xbf16>
    %220 = vector.shape_cast %219 : vector<1x128x512xbf16> to vector<128x512xbf16>
    %cst_80 = arith.constant dense<0.000000e+00> : vector<16x512xf32>
    %221 = tpu.matmul %218, %220, %cst_80 {dimension_numbers = #tpu.dot_dimension_numbers<[1], [0], [0], [1], [0, 0, 1, 1], [], []>} : vector<16x128xbf16>, vector<128x512xbf16>, vector<16x512xf32> -> vector<16x512xf32>
    %c0_81 = arith.constant 0 : index
    %c0_82 = arith.constant 0 : index
    %c0_83 = arith.constant 0 : index
    %222 = vector.load %arg11[%c0_81, %c0_82, %c0_83] : memref<2x1x512xf32, #tpu.memory_space<vmem>>, vector<1x1x512xf32>
    %223 = vector.shape_cast %222 : vector<1x1x512xf32> to vector<1x512xf32>
    %224 = vector.broadcast %223 : vector<1x512xf32> to vector<16x512xf32>
    %225 = arith.addf %221, %224 : vector<16x512xf32>
    %226 = arith.mulf %225, %225 : vector<16x512xf32>
    %227 = arith.mulf %225, %226 : vector<16x512xf32>
    %cst_84 = arith.constant 4.471500e-02 : f32
    %228 = vector.broadcast %cst_84 : f32 to vector<16x512xf32>
    %229 = arith.mulf %228, %227 : vector<16x512xf32>
    %230 = arith.addf %225, %229 : vector<16x512xf32>
    %cst_85 = arith.constant 0.797884583 : f32
    %231 = vector.broadcast %cst_85 : f32 to vector<16x512xf32>
    %232 = arith.mulf %231, %230 : vector<16x512xf32>
    %233 = math.tanh %232 : vector<16x512xf32>
    %cst_86 = arith.constant 1.000000e+00 : f32
    %234 = vector.broadcast %cst_86 : f32 to vector<16x512xf32>
    %235 = arith.addf %234, %233 : vector<16x512xf32>
    %cst_87 = arith.constant 5.000000e-01 : f32
    %236 = vector.broadcast %cst_87 : f32 to vector<16x512xf32>
    %237 = arith.mulf %236, %235 : vector<16x512xf32>
    %238 = arith.mulf %225, %237 : vector<16x512xf32>
    %239 = arith.truncf %238 : vector<16x512xf32> to vector<16x512xbf16>
    %c0_88 = arith.constant 0 : index
    %c0_89 = arith.constant 0 : index
    %c0_90 = arith.constant 0 : index
    %240 = vector.load %arg12[%c0_88, %c0_89, %c0_90] : memref<2x512x128xbf16, #tpu.memory_space<vmem>>, vector<1x512x128xbf16>
    %241 = vector.shape_cast %240 : vector<1x512x128xbf16> to vector<512x128xbf16>
    %cst_91 = arith.constant dense<0.000000e+00> : vector<16x128xf32>
    %242 = tpu.matmul %239, %241, %cst_91 {dimension_numbers = #tpu.dot_dimension_numbers<[1], [0], [0], [1], [0, 0, 1, 1], [], []>} : vector<16x512xbf16>, vector<512x128xbf16>, vector<16x128xf32> -> vector<16x128xf32>
    %c0_92 = arith.constant 0 : index
    %c0_93 = arith.constant 0 : index
    %c0_94 = arith.constant 0 : index
    %243 = vector.load %arg13[%c0_92, %c0_93, %c0_94] : memref<2x1x128xf32, #tpu.memory_space<vmem>>, vector<1x1x128xf32>
    %244 = vector.shape_cast %243 : vector<1x1x128xf32> to vector<1x128xf32>
    %245 = vector.broadcast %244 : vector<1x128xf32> to vector<16x128xf32>
    %246 = arith.addf %242, %245 : vector<16x128xf32>
    %247 = arith.addf %191, %246 : vector<16x128xf32>
    %c1 = arith.constant 1 : index
    %c0_95 = arith.constant 0 : index
    %c0_96 = arith.constant 0 : index
    %248 = vector.load %arg2[%c1, %c0_95, %c0_96] : memref<2x1x128xf32, #tpu.memory_space<vmem>>, vector<1x1x128xf32>
    %249 = vector.shape_cast %248 : vector<1x1x128xf32> to vector<1x128xf32>
    %c1_97 = arith.constant 1 : index
    %c0_98 = arith.constant 0 : index
    %c0_99 = arith.constant 0 : index
    %250 = vector.load %arg3[%c1_97, %c0_98, %c0_99] : memref<2x1x128xf32, #tpu.memory_space<vmem>>, vector<1x1x128xf32>
    %251 = vector.shape_cast %250 : vector<1x1x128xf32> to vector<1x128xf32>
    %cst_100 = arith.constant dense<0.000000e+00> : vector<16xf32>
    %252 = vector.multi_reduction <add>, %247, %cst_100 [1] : vector<16x128xf32> to vector<16xf32>
    %253 = vector.shape_cast %252 : vector<16xf32> to vector<16x1xf32>
    %cst_101 = arith.constant 1.280000e+02 : f32
    %254 = vector.broadcast %cst_101 : f32 to vector<16x1xf32>
    %255 = arith.divf %253, %254 : vector<16x1xf32>
    %256 = vector.broadcast %255 : vector<16x1xf32> to vector<16x128xf32>
    %257 = arith.subf %247, %256 : vector<16x128xf32>
    %258 = arith.mulf %257, %257 : vector<16x128xf32>
    %cst_102 = arith.constant dense<0.000000e+00> : vector<16xf32>
    %259 = vector.multi_reduction <add>, %258, %cst_102 [1] : vector<16x128xf32> to vector<16xf32>
    %260 = vector.shape_cast %259 : vector<16xf32> to vector<16x1xf32>
    %cst_103 = arith.constant 1.280000e+02 : f32
    %261 = vector.broadcast %cst_103 : f32 to vector<16x1xf32>
    %262 = arith.divf %260, %261 : vector<16x1xf32>
    %263 = vector.broadcast %255 : vector<16x1xf32> to vector<16x128xf32>
    %264 = arith.subf %247, %263 : vector<16x128xf32>
    %cst_104 = arith.constant 9.99999974E-6 : f32
    %265 = vector.broadcast %cst_104 : f32 to vector<16x1xf32>
    %266 = arith.addf %262, %265 : vector<16x1xf32>
    %267 = math.rsqrt %266 : vector<16x1xf32>
    %268 = vector.broadcast %267 : vector<16x1xf32> to vector<16x128xf32>
    %269 = arith.mulf %264, %268 : vector<16x128xf32>
    %270 = vector.broadcast %249 : vector<1x128xf32> to vector<16x128xf32>
    %271 = arith.mulf %269, %270 : vector<16x128xf32>
    %272 = vector.broadcast %251 : vector<1x128xf32> to vector<16x128xf32>
    %273 = arith.addf %271, %272 : vector<16x128xf32>
    %274 = arith.truncf %273 : vector<16x128xf32> to vector<16x128xbf16>
    %c1_105 = arith.constant 1 : index
    %c0_106 = arith.constant 0 : index
    %c0_107 = arith.constant 0 : index
    %275 = vector.load %arg4[%c1_105, %c0_106, %c0_107] : memref<2x128x384xbf16, #tpu.memory_space<vmem>>, vector<1x128x384xbf16>
    %276 = vector.shape_cast %275 : vector<1x128x384xbf16> to vector<128x384xbf16>
    %cst_108 = arith.constant dense<0.000000e+00> : vector<16x384xf32>
    %277 = tpu.matmul %274, %276, %cst_108 {dimension_numbers = #tpu.dot_dimension_numbers<[1], [0], [0], [1], [0, 0, 1, 1], [], []>} : vector<16x128xbf16>, vector<128x384xbf16>, vector<16x384xf32> -> vector<16x384xf32>
    %c1_109 = arith.constant 1 : index
    %c0_110 = arith.constant 0 : index
    %c0_111 = arith.constant 0 : index
    %278 = vector.load %arg5[%c1_109, %c0_110, %c0_111] : memref<2x1x384xf32, #tpu.memory_space<vmem>>, vector<1x1x384xf32>
    %279 = vector.shape_cast %278 : vector<1x1x384xf32> to vector<1x384xf32>
    %280 = vector.broadcast %279 : vector<1x384xf32> to vector<16x384xf32>
    %281 = arith.addf %277, %280 : vector<16x384xf32>
    %282 = arith.truncf %281 : vector<16x384xf32> to vector<16x384xbf16>
    %283 = vector.extract_strided_slice %282 {offsets = [0, 0], sizes = [16, 16], strides = [1, 1]} : vector<16x384xbf16> to vector<16x16xbf16>
    %284 = vector.extract_strided_slice %282 {offsets = [0, 128], sizes = [16, 16], strides = [1, 1]} : vector<16x384xbf16> to vector<16x16xbf16>
    %285 = vector.extract_strided_slice %282 {offsets = [0, 256], sizes = [16, 16], strides = [1, 1]} : vector<16x384xbf16> to vector<16x16xbf16>
    %cst_112 = arith.constant dense<0.000000e+00> : vector<16x16xf32>
    %286 = tpu.matmul %283, %284, %cst_112 {dimension_numbers = #tpu.dot_dimension_numbers<[1], [1], [0], [0], [0, 0, 1, 0], [], []>} : vector<16x16xbf16>, vector<16x16xbf16>, vector<16x16xf32> -> vector<16x16xf32>
    %cst_113 = arith.constant 2.500000e-01 : f32
    %287 = vector.broadcast %cst_113 : f32 to vector<16x16xf32>
    %288 = arith.mulf %286, %287 : vector<16x16xf32>
    %cst_114 = arith.constant dense<0xFF800000> : vector<16xf32>
    %289 = vector.multi_reduction <maximumf>, %288, %cst_114 [1] : vector<16x16xf32> to vector<16xf32>
    %290 = vector.shape_cast %289 : vector<16xf32> to vector<16x1xf32>
    %291 = vector.broadcast %290 : vector<16x1xf32> to vector<16x16xf32>
    %292 = arith.subf %288, %291 : vector<16x16xf32>
    %293 = math.exp %292 : vector<16x16xf32>
    %cst_115 = arith.constant dense<0.000000e+00> : vector<16xf32>
    %294 = vector.multi_reduction <add>, %293, %cst_115 [1] : vector<16x16xf32> to vector<16xf32>
    %295 = vector.shape_cast %294 : vector<16xf32> to vector<16x1xf32>
    %296 = tpu.reciprocal %295 {approx = true} : vector<16x1xf32> -> vector<16x1xf32>
    %297 = vector.broadcast %296 : vector<16x1xf32> to vector<16x16xf32>
    %298 = arith.mulf %293, %297 : vector<16x16xf32>
    %299 = arith.truncf %298 : vector<16x16xf32> to vector<16x16xbf16>
    %cst_116 = arith.constant dense<0.000000e+00> : vector<16x16xf32>
    %300 = tpu.matmul %299, %285, %cst_116 {dimension_numbers = #tpu.dot_dimension_numbers<[1], [0], [0], [1], [0, 0, 1, 1], [], []>} : vector<16x16xbf16>, vector<16x16xbf16>, vector<16x16xf32> -> vector<16x16xf32>
    %301 = vector.extract_strided_slice %282 {offsets = [0, 16], sizes = [16, 16], strides = [1, 1]} : vector<16x384xbf16> to vector<16x16xbf16>
    %302 = vector.extract_strided_slice %282 {offsets = [0, 144], sizes = [16, 16], strides = [1, 1]} : vector<16x384xbf16> to vector<16x16xbf16>
    %303 = vector.extract_strided_slice %282 {offsets = [0, 272], sizes = [16, 16], strides = [1, 1]} : vector<16x384xbf16> to vector<16x16xbf16>
    %cst_117 = arith.constant dense<0.000000e+00> : vector<16x16xf32>
    %304 = tpu.matmul %301, %302, %cst_117 {dimension_numbers = #tpu.dot_dimension_numbers<[1], [1], [0], [0], [0, 0, 1, 0], [], []>} : vector<16x16xbf16>, vector<16x16xbf16>, vector<16x16xf32> -> vector<16x16xf32>
    %cst_118 = arith.constant 2.500000e-01 : f32
    %305 = vector.broadcast %cst_118 : f32 to vector<16x16xf32>
    %306 = arith.mulf %304, %305 : vector<16x16xf32>
    %cst_119 = arith.constant dense<0xFF800000> : vector<16xf32>
    %307 = vector.multi_reduction <maximumf>, %306, %cst_119 [1] : vector<16x16xf32> to vector<16xf32>
    %308 = vector.shape_cast %307 : vector<16xf32> to vector<16x1xf32>
    %309 = vector.broadcast %308 : vector<16x1xf32> to vector<16x16xf32>
    %310 = arith.subf %306, %309 : vector<16x16xf32>
    %311 = math.exp %310 : vector<16x16xf32>
    %cst_120 = arith.constant dense<0.000000e+00> : vector<16xf32>
    %312 = vector.multi_reduction <add>, %311, %cst_120 [1] : vector<16x16xf32> to vector<16xf32>
    %313 = vector.shape_cast %312 : vector<16xf32> to vector<16x1xf32>
    %314 = tpu.reciprocal %313 {approx = true} : vector<16x1xf32> -> vector<16x1xf32>
    %315 = vector.broadcast %314 : vector<16x1xf32> to vector<16x16xf32>
    %316 = arith.mulf %311, %315 : vector<16x16xf32>
    %317 = arith.truncf %316 : vector<16x16xf32> to vector<16x16xbf16>
    %cst_121 = arith.constant dense<0.000000e+00> : vector<16x16xf32>
    %318 = tpu.matmul %317, %303, %cst_121 {dimension_numbers = #tpu.dot_dimension_numbers<[1], [0], [0], [1], [0, 0, 1, 1], [], []>} : vector<16x16xbf16>, vector<16x16xbf16>, vector<16x16xf32> -> vector<16x16xf32>
    %319 = vector.extract_strided_slice %282 {offsets = [0, 32], sizes = [16, 16], strides = [1, 1]} : vector<16x384xbf16> to vector<16x16xbf16>
    %320 = vector.extract_strided_slice %282 {offsets = [0, 160], sizes = [16, 16], strides = [1, 1]} : vector<16x384xbf16> to vector<16x16xbf16>
    %321 = vector.extract_strided_slice %282 {offsets = [0, 288], sizes = [16, 16], strides = [1, 1]} : vector<16x384xbf16> to vector<16x16xbf16>
    %cst_122 = arith.constant dense<0.000000e+00> : vector<16x16xf32>
    %322 = tpu.matmul %319, %320, %cst_122 {dimension_numbers = #tpu.dot_dimension_numbers<[1], [1], [0], [0], [0, 0, 1, 0], [], []>} : vector<16x16xbf16>, vector<16x16xbf16>, vector<16x16xf32> -> vector<16x16xf32>
    %cst_123 = arith.constant 2.500000e-01 : f32
    %323 = vector.broadcast %cst_123 : f32 to vector<16x16xf32>
    %324 = arith.mulf %322, %323 : vector<16x16xf32>
    %cst_124 = arith.constant dense<0xFF800000> : vector<16xf32>
    %325 = vector.multi_reduction <maximumf>, %324, %cst_124 [1] : vector<16x16xf32> to vector<16xf32>
    %326 = vector.shape_cast %325 : vector<16xf32> to vector<16x1xf32>
    %327 = vector.broadcast %326 : vector<16x1xf32> to vector<16x16xf32>
    %328 = arith.subf %324, %327 : vector<16x16xf32>
    %329 = math.exp %328 : vector<16x16xf32>
    %cst_125 = arith.constant dense<0.000000e+00> : vector<16xf32>
    %330 = vector.multi_reduction <add>, %329, %cst_125 [1] : vector<16x16xf32> to vector<16xf32>
    %331 = vector.shape_cast %330 : vector<16xf32> to vector<16x1xf32>
    %332 = tpu.reciprocal %331 {approx = true} : vector<16x1xf32> -> vector<16x1xf32>
    %333 = vector.broadcast %332 : vector<16x1xf32> to vector<16x16xf32>
    %334 = arith.mulf %329, %333 : vector<16x16xf32>
    %335 = arith.truncf %334 : vector<16x16xf32> to vector<16x16xbf16>
    %cst_126 = arith.constant dense<0.000000e+00> : vector<16x16xf32>
    %336 = tpu.matmul %335, %321, %cst_126 {dimension_numbers = #tpu.dot_dimension_numbers<[1], [0], [0], [1], [0, 0, 1, 1], [], []>} : vector<16x16xbf16>, vector<16x16xbf16>, vector<16x16xf32> -> vector<16x16xf32>
    %337 = vector.extract_strided_slice %282 {offsets = [0, 48], sizes = [16, 16], strides = [1, 1]} : vector<16x384xbf16> to vector<16x16xbf16>
    %338 = vector.extract_strided_slice %282 {offsets = [0, 176], sizes = [16, 16], strides = [1, 1]} : vector<16x384xbf16> to vector<16x16xbf16>
    %339 = vector.extract_strided_slice %282 {offsets = [0, 304], sizes = [16, 16], strides = [1, 1]} : vector<16x384xbf16> to vector<16x16xbf16>
    %cst_127 = arith.constant dense<0.000000e+00> : vector<16x16xf32>
    %340 = tpu.matmul %337, %338, %cst_127 {dimension_numbers = #tpu.dot_dimension_numbers<[1], [1], [0], [0], [0, 0, 1, 0], [], []>} : vector<16x16xbf16>, vector<16x16xbf16>, vector<16x16xf32> -> vector<16x16xf32>
    %cst_128 = arith.constant 2.500000e-01 : f32
    %341 = vector.broadcast %cst_128 : f32 to vector<16x16xf32>
    %342 = arith.mulf %340, %341 : vector<16x16xf32>
    %cst_129 = arith.constant dense<0xFF800000> : vector<16xf32>
    %343 = vector.multi_reduction <maximumf>, %342, %cst_129 [1] : vector<16x16xf32> to vector<16xf32>
    %344 = vector.shape_cast %343 : vector<16xf32> to vector<16x1xf32>
    %345 = vector.broadcast %344 : vector<16x1xf32> to vector<16x16xf32>
    %346 = arith.subf %342, %345 : vector<16x16xf32>
    %347 = math.exp %346 : vector<16x16xf32>
    %cst_130 = arith.constant dense<0.000000e+00> : vector<16xf32>
    %348 = vector.multi_reduction <add>, %347, %cst_130 [1] : vector<16x16xf32> to vector<16xf32>
    %349 = vector.shape_cast %348 : vector<16xf32> to vector<16x1xf32>
    %350 = tpu.reciprocal %349 {approx = true} : vector<16x1xf32> -> vector<16x1xf32>
    %351 = vector.broadcast %350 : vector<16x1xf32> to vector<16x16xf32>
    %352 = arith.mulf %347, %351 : vector<16x16xf32>
    %353 = arith.truncf %352 : vector<16x16xf32> to vector<16x16xbf16>
    %cst_131 = arith.constant dense<0.000000e+00> : vector<16x16xf32>
    %354 = tpu.matmul %353, %339, %cst_131 {dimension_numbers = #tpu.dot_dimension_numbers<[1], [0], [0], [1], [0, 0, 1, 1], [], []>} : vector<16x16xbf16>, vector<16x16xbf16>, vector<16x16xf32> -> vector<16x16xf32>
    %355 = vector.extract_strided_slice %282 {offsets = [0, 64], sizes = [16, 16], strides = [1, 1]} : vector<16x384xbf16> to vector<16x16xbf16>
    %356 = vector.extract_strided_slice %282 {offsets = [0, 192], sizes = [16, 16], strides = [1, 1]} : vector<16x384xbf16> to vector<16x16xbf16>
    %357 = vector.extract_strided_slice %282 {offsets = [0, 320], sizes = [16, 16], strides = [1, 1]} : vector<16x384xbf16> to vector<16x16xbf16>
    %cst_132 = arith.constant dense<0.000000e+00> : vector<16x16xf32>
    %358 = tpu.matmul %355, %356, %cst_132 {dimension_numbers = #tpu.dot_dimension_numbers<[1], [1], [0], [0], [0, 0, 1, 0], [], []>} : vector<16x16xbf16>, vector<16x16xbf16>, vector<16x16xf32> -> vector<16x16xf32>
    %cst_133 = arith.constant 2.500000e-01 : f32
    %359 = vector.broadcast %cst_133 : f32 to vector<16x16xf32>
    %360 = arith.mulf %358, %359 : vector<16x16xf32>
    %cst_134 = arith.constant dense<0xFF800000> : vector<16xf32>
    %361 = vector.multi_reduction <maximumf>, %360, %cst_134 [1] : vector<16x16xf32> to vector<16xf32>
    %362 = vector.shape_cast %361 : vector<16xf32> to vector<16x1xf32>
    %363 = vector.broadcast %362 : vector<16x1xf32> to vector<16x16xf32>
    %364 = arith.subf %360, %363 : vector<16x16xf32>
    %365 = math.exp %364 : vector<16x16xf32>
    %cst_135 = arith.constant dense<0.000000e+00> : vector<16xf32>
    %366 = vector.multi_reduction <add>, %365, %cst_135 [1] : vector<16x16xf32> to vector<16xf32>
    %367 = vector.shape_cast %366 : vector<16xf32> to vector<16x1xf32>
    %368 = tpu.reciprocal %367 {approx = true} : vector<16x1xf32> -> vector<16x1xf32>
    %369 = vector.broadcast %368 : vector<16x1xf32> to vector<16x16xf32>
    %370 = arith.mulf %365, %369 : vector<16x16xf32>
    %371 = arith.truncf %370 : vector<16x16xf32> to vector<16x16xbf16>
    %cst_136 = arith.constant dense<0.000000e+00> : vector<16x16xf32>
    %372 = tpu.matmul %371, %357, %cst_136 {dimension_numbers = #tpu.dot_dimension_numbers<[1], [0], [0], [1], [0, 0, 1, 1], [], []>} : vector<16x16xbf16>, vector<16x16xbf16>, vector<16x16xf32> -> vector<16x16xf32>
    %373 = vector.extract_strided_slice %282 {offsets = [0, 80], sizes = [16, 16], strides = [1, 1]} : vector<16x384xbf16> to vector<16x16xbf16>
    %374 = vector.extract_strided_slice %282 {offsets = [0, 208], sizes = [16, 16], strides = [1, 1]} : vector<16x384xbf16> to vector<16x16xbf16>
    %375 = vector.extract_strided_slice %282 {offsets = [0, 336], sizes = [16, 16], strides = [1, 1]} : vector<16x384xbf16> to vector<16x16xbf16>
    %cst_137 = arith.constant dense<0.000000e+00> : vector<16x16xf32>
    %376 = tpu.matmul %373, %374, %cst_137 {dimension_numbers = #tpu.dot_dimension_numbers<[1], [1], [0], [0], [0, 0, 1, 0], [], []>} : vector<16x16xbf16>, vector<16x16xbf16>, vector<16x16xf32> -> vector<16x16xf32>
    %cst_138 = arith.constant 2.500000e-01 : f32
    %377 = vector.broadcast %cst_138 : f32 to vector<16x16xf32>
    %378 = arith.mulf %376, %377 : vector<16x16xf32>
    %cst_139 = arith.constant dense<0xFF800000> : vector<16xf32>
    %379 = vector.multi_reduction <maximumf>, %378, %cst_139 [1] : vector<16x16xf32> to vector<16xf32>
    %380 = vector.shape_cast %379 : vector<16xf32> to vector<16x1xf32>
    %381 = vector.broadcast %380 : vector<16x1xf32> to vector<16x16xf32>
    %382 = arith.subf %378, %381 : vector<16x16xf32>
    %383 = math.exp %382 : vector<16x16xf32>
    %cst_140 = arith.constant dense<0.000000e+00> : vector<16xf32>
    %384 = vector.multi_reduction <add>, %383, %cst_140 [1] : vector<16x16xf32> to vector<16xf32>
    %385 = vector.shape_cast %384 : vector<16xf32> to vector<16x1xf32>
    %386 = tpu.reciprocal %385 {approx = true} : vector<16x1xf32> -> vector<16x1xf32>
    %387 = vector.broadcast %386 : vector<16x1xf32> to vector<16x16xf32>
    %388 = arith.mulf %383, %387 : vector<16x16xf32>
    %389 = arith.truncf %388 : vector<16x16xf32> to vector<16x16xbf16>
    %cst_141 = arith.constant dense<0.000000e+00> : vector<16x16xf32>
    %390 = tpu.matmul %389, %375, %cst_141 {dimension_numbers = #tpu.dot_dimension_numbers<[1], [0], [0], [1], [0, 0, 1, 1], [], []>} : vector<16x16xbf16>, vector<16x16xbf16>, vector<16x16xf32> -> vector<16x16xf32>
    %391 = vector.extract_strided_slice %282 {offsets = [0, 96], sizes = [16, 16], strides = [1, 1]} : vector<16x384xbf16> to vector<16x16xbf16>
    %392 = vector.extract_strided_slice %282 {offsets = [0, 224], sizes = [16, 16], strides = [1, 1]} : vector<16x384xbf16> to vector<16x16xbf16>
    %393 = vector.extract_strided_slice %282 {offsets = [0, 352], sizes = [16, 16], strides = [1, 1]} : vector<16x384xbf16> to vector<16x16xbf16>
    %cst_142 = arith.constant dense<0.000000e+00> : vector<16x16xf32>
    %394 = tpu.matmul %391, %392, %cst_142 {dimension_numbers = #tpu.dot_dimension_numbers<[1], [1], [0], [0], [0, 0, 1, 0], [], []>} : vector<16x16xbf16>, vector<16x16xbf16>, vector<16x16xf32> -> vector<16x16xf32>
    %cst_143 = arith.constant 2.500000e-01 : f32
    %395 = vector.broadcast %cst_143 : f32 to vector<16x16xf32>
    %396 = arith.mulf %394, %395 : vector<16x16xf32>
    %cst_144 = arith.constant dense<0xFF800000> : vector<16xf32>
    %397 = vector.multi_reduction <maximumf>, %396, %cst_144 [1] : vector<16x16xf32> to vector<16xf32>
    %398 = vector.shape_cast %397 : vector<16xf32> to vector<16x1xf32>
    %399 = vector.broadcast %398 : vector<16x1xf32> to vector<16x16xf32>
    %400 = arith.subf %396, %399 : vector<16x16xf32>
    %401 = math.exp %400 : vector<16x16xf32>
    %cst_145 = arith.constant dense<0.000000e+00> : vector<16xf32>
    %402 = vector.multi_reduction <add>, %401, %cst_145 [1] : vector<16x16xf32> to vector<16xf32>
    %403 = vector.shape_cast %402 : vector<16xf32> to vector<16x1xf32>
    %404 = tpu.reciprocal %403 {approx = true} : vector<16x1xf32> -> vector<16x1xf32>
    %405 = vector.broadcast %404 : vector<16x1xf32> to vector<16x16xf32>
    %406 = arith.mulf %401, %405 : vector<16x16xf32>
    %407 = arith.truncf %406 : vector<16x16xf32> to vector<16x16xbf16>
    %cst_146 = arith.constant dense<0.000000e+00> : vector<16x16xf32>
    %408 = tpu.matmul %407, %393, %cst_146 {dimension_numbers = #tpu.dot_dimension_numbers<[1], [0], [0], [1], [0, 0, 1, 1], [], []>} : vector<16x16xbf16>, vector<16x16xbf16>, vector<16x16xf32> -> vector<16x16xf32>
    %409 = vector.extract_strided_slice %282 {offsets = [0, 112], sizes = [16, 16], strides = [1, 1]} : vector<16x384xbf16> to vector<16x16xbf16>
    %410 = vector.extract_strided_slice %282 {offsets = [0, 240], sizes = [16, 16], strides = [1, 1]} : vector<16x384xbf16> to vector<16x16xbf16>
    %411 = vector.extract_strided_slice %282 {offsets = [0, 368], sizes = [16, 16], strides = [1, 1]} : vector<16x384xbf16> to vector<16x16xbf16>
    %cst_147 = arith.constant dense<0.000000e+00> : vector<16x16xf32>
    %412 = tpu.matmul %409, %410, %cst_147 {dimension_numbers = #tpu.dot_dimension_numbers<[1], [1], [0], [0], [0, 0, 1, 0], [], []>} : vector<16x16xbf16>, vector<16x16xbf16>, vector<16x16xf32> -> vector<16x16xf32>
    %cst_148 = arith.constant 2.500000e-01 : f32
    %413 = vector.broadcast %cst_148 : f32 to vector<16x16xf32>
    %414 = arith.mulf %412, %413 : vector<16x16xf32>
    %cst_149 = arith.constant dense<0xFF800000> : vector<16xf32>
    %415 = vector.multi_reduction <maximumf>, %414, %cst_149 [1] : vector<16x16xf32> to vector<16xf32>
    %416 = vector.shape_cast %415 : vector<16xf32> to vector<16x1xf32>
    %417 = vector.broadcast %416 : vector<16x1xf32> to vector<16x16xf32>
    %418 = arith.subf %414, %417 : vector<16x16xf32>
    %419 = math.exp %418 : vector<16x16xf32>
    %cst_150 = arith.constant dense<0.000000e+00> : vector<16xf32>
    %420 = vector.multi_reduction <add>, %419, %cst_150 [1] : vector<16x16xf32> to vector<16xf32>
    %421 = vector.shape_cast %420 : vector<16xf32> to vector<16x1xf32>
    %422 = tpu.reciprocal %421 {approx = true} : vector<16x1xf32> -> vector<16x1xf32>
    %423 = vector.broadcast %422 : vector<16x1xf32> to vector<16x16xf32>
    %424 = arith.mulf %419, %423 : vector<16x16xf32>
    %425 = arith.truncf %424 : vector<16x16xf32> to vector<16x16xbf16>
    %cst_151 = arith.constant dense<0.000000e+00> : vector<16x16xf32>
    %426 = tpu.matmul %425, %411, %cst_151 {dimension_numbers = #tpu.dot_dimension_numbers<[1], [0], [0], [1], [0, 0, 1, 1], [], []>} : vector<16x16xbf16>, vector<16x16xbf16>, vector<16x16xf32> -> vector<16x16xf32>
    %427 = tpu.concatenate %300, %318, %336, %354, %372, %390, %408, %426 in 1 : vector<16x16xf32>, vector<16x16xf32>, vector<16x16xf32>, vector<16x16xf32>, vector<16x16xf32>, vector<16x16xf32>, vector<16x16xf32>, vector<16x16xf32> -> vector<16x128xf32>
    %428 = arith.truncf %427 : vector<16x128xf32> to vector<16x128xbf16>
    %c1_152 = arith.constant 1 : index
    %c0_153 = arith.constant 0 : index
    %c0_154 = arith.constant 0 : index
    %429 = vector.load %arg6[%c1_152, %c0_153, %c0_154] : memref<2x128x128xbf16, #tpu.memory_space<vmem>>, vector<1x128x128xbf16>
    %430 = vector.shape_cast %429 : vector<1x128x128xbf16> to vector<128x128xbf16>
    %cst_155 = arith.constant dense<0.000000e+00> : vector<16x128xf32>
    %431 = tpu.matmul %428, %430, %cst_155 {dimension_numbers = #tpu.dot_dimension_numbers<[1], [0], [0], [1], [0, 0, 1, 1], [], []>} : vector<16x128xbf16>, vector<128x128xbf16>, vector<16x128xf32> -> vector<16x128xf32>
    %c1_156 = arith.constant 1 : index
    %c0_157 = arith.constant 0 : index
    %c0_158 = arith.constant 0 : index
    %432 = vector.load %arg7[%c1_156, %c0_157, %c0_158] : memref<2x1x128xf32, #tpu.memory_space<vmem>>, vector<1x1x128xf32>
    %433 = vector.shape_cast %432 : vector<1x1x128xf32> to vector<1x128xf32>
    %434 = vector.broadcast %433 : vector<1x128xf32> to vector<16x128xf32>
    %435 = arith.addf %431, %434 : vector<16x128xf32>
    %436 = arith.addf %247, %435 : vector<16x128xf32>
    %c1_159 = arith.constant 1 : index
    %c0_160 = arith.constant 0 : index
    %c0_161 = arith.constant 0 : index
    %437 = vector.load %arg8[%c1_159, %c0_160, %c0_161] : memref<2x1x128xf32, #tpu.memory_space<vmem>>, vector<1x1x128xf32>
    %438 = vector.shape_cast %437 : vector<1x1x128xf32> to vector<1x128xf32>
    %c1_162 = arith.constant 1 : index
    %c0_163 = arith.constant 0 : index
    %c0_164 = arith.constant 0 : index
    %439 = vector.load %arg9[%c1_162, %c0_163, %c0_164] : memref<2x1x128xf32, #tpu.memory_space<vmem>>, vector<1x1x128xf32>
    %440 = vector.shape_cast %439 : vector<1x1x128xf32> to vector<1x128xf32>
    %cst_165 = arith.constant dense<0.000000e+00> : vector<16xf32>
    %441 = vector.multi_reduction <add>, %436, %cst_165 [1] : vector<16x128xf32> to vector<16xf32>
    %442 = vector.shape_cast %441 : vector<16xf32> to vector<16x1xf32>
    %cst_166 = arith.constant 1.280000e+02 : f32
    %443 = vector.broadcast %cst_166 : f32 to vector<16x1xf32>
    %444 = arith.divf %442, %443 : vector<16x1xf32>
    %445 = vector.broadcast %444 : vector<16x1xf32> to vector<16x128xf32>
    %446 = arith.subf %436, %445 : vector<16x128xf32>
    %447 = arith.mulf %446, %446 : vector<16x128xf32>
    %cst_167 = arith.constant dense<0.000000e+00> : vector<16xf32>
    %448 = vector.multi_reduction <add>, %447, %cst_167 [1] : vector<16x128xf32> to vector<16xf32>
    %449 = vector.shape_cast %448 : vector<16xf32> to vector<16x1xf32>
    %cst_168 = arith.constant 1.280000e+02 : f32
    %450 = vector.broadcast %cst_168 : f32 to vector<16x1xf32>
    %451 = arith.divf %449, %450 : vector<16x1xf32>
    %452 = vector.broadcast %444 : vector<16x1xf32> to vector<16x128xf32>
    %453 = arith.subf %436, %452 : vector<16x128xf32>
    %cst_169 = arith.constant 9.99999974E-6 : f32
    %454 = vector.broadcast %cst_169 : f32 to vector<16x1xf32>
    %455 = arith.addf %451, %454 : vector<16x1xf32>
    %456 = math.rsqrt %455 : vector<16x1xf32>
    %457 = vector.broadcast %456 : vector<16x1xf32> to vector<16x128xf32>
    %458 = arith.mulf %453, %457 : vector<16x128xf32>
    %459 = vector.broadcast %438 : vector<1x128xf32> to vector<16x128xf32>
    %460 = arith.mulf %458, %459 : vector<16x128xf32>
    %461 = vector.broadcast %440 : vector<1x128xf32> to vector<16x128xf32>
    %462 = arith.addf %460, %461 : vector<16x128xf32>
    %463 = arith.truncf %462 : vector<16x128xf32> to vector<16x128xbf16>
    %c1_170 = arith.constant 1 : index
    %c0_171 = arith.constant 0 : index
    %c0_172 = arith.constant 0 : index
    %464 = vector.load %arg10[%c1_170, %c0_171, %c0_172] : memref<2x128x512xbf16, #tpu.memory_space<vmem>>, vector<1x128x512xbf16>
    %465 = vector.shape_cast %464 : vector<1x128x512xbf16> to vector<128x512xbf16>
    %cst_173 = arith.constant dense<0.000000e+00> : vector<16x512xf32>
    %466 = tpu.matmul %463, %465, %cst_173 {dimension_numbers = #tpu.dot_dimension_numbers<[1], [0], [0], [1], [0, 0, 1, 1], [], []>} : vector<16x128xbf16>, vector<128x512xbf16>, vector<16x512xf32> -> vector<16x512xf32>
    %c1_174 = arith.constant 1 : index
    %c0_175 = arith.constant 0 : index
    %c0_176 = arith.constant 0 : index
    %467 = vector.load %arg11[%c1_174, %c0_175, %c0_176] : memref<2x1x512xf32, #tpu.memory_space<vmem>>, vector<1x1x512xf32>
    %468 = vector.shape_cast %467 : vector<1x1x512xf32> to vector<1x512xf32>
    %469 = vector.broadcast %468 : vector<1x512xf32> to vector<16x512xf32>
    %470 = arith.addf %466, %469 : vector<16x512xf32>
    %471 = arith.mulf %470, %470 : vector<16x512xf32>
    %472 = arith.mulf %470, %471 : vector<16x512xf32>
    %cst_177 = arith.constant 4.471500e-02 : f32
    %473 = vector.broadcast %cst_177 : f32 to vector<16x512xf32>
    %474 = arith.mulf %473, %472 : vector<16x512xf32>
    %475 = arith.addf %470, %474 : vector<16x512xf32>
    %cst_178 = arith.constant 0.797884583 : f32
    %476 = vector.broadcast %cst_178 : f32 to vector<16x512xf32>
    %477 = arith.mulf %476, %475 : vector<16x512xf32>
    %478 = math.tanh %477 : vector<16x512xf32>
    %cst_179 = arith.constant 1.000000e+00 : f32
    %479 = vector.broadcast %cst_179 : f32 to vector<16x512xf32>
    %480 = arith.addf %479, %478 : vector<16x512xf32>
    %cst_180 = arith.constant 5.000000e-01 : f32
    %481 = vector.broadcast %cst_180 : f32 to vector<16x512xf32>
    %482 = arith.mulf %481, %480 : vector<16x512xf32>
    %483 = arith.mulf %470, %482 : vector<16x512xf32>
    %484 = arith.truncf %483 : vector<16x512xf32> to vector<16x512xbf16>
    %c1_181 = arith.constant 1 : index
    %c0_182 = arith.constant 0 : index
    %c0_183 = arith.constant 0 : index
    %485 = vector.load %arg12[%c1_181, %c0_182, %c0_183] : memref<2x512x128xbf16, #tpu.memory_space<vmem>>, vector<1x512x128xbf16>
    %486 = vector.shape_cast %485 : vector<1x512x128xbf16> to vector<512x128xbf16>
    %cst_184 = arith.constant dense<0.000000e+00> : vector<16x128xf32>
    %487 = tpu.matmul %484, %486, %cst_184 {dimension_numbers = #tpu.dot_dimension_numbers<[1], [0], [0], [1], [0, 0, 1, 1], [], []>} : vector<16x512xbf16>, vector<512x128xbf16>, vector<16x128xf32> -> vector<16x128xf32>
    %c1_185 = arith.constant 1 : index
    %c0_186 = arith.constant 0 : index
    %c0_187 = arith.constant 0 : index
    %488 = vector.load %arg13[%c1_185, %c0_186, %c0_187] : memref<2x1x128xf32, #tpu.memory_space<vmem>>, vector<1x1x128xf32>
    %489 = vector.shape_cast %488 : vector<1x1x128xf32> to vector<1x128xf32>
    %490 = vector.broadcast %489 : vector<1x128xf32> to vector<16x128xf32>
    %491 = arith.addf %487, %490 : vector<16x128xf32>
    %492 = arith.addf %436, %491 : vector<16x128xf32>
    %493 = arith.truncf %492 : vector<16x128xf32> to vector<16x128xbf16>
    %c0_188 = arith.constant 0 : index
    %c0_189 = arith.constant 0 : index
    %c0_190 = arith.constant 0 : index
    %494 = vector.load %arg14[%c0_188, %c0_189, %c0_190] : memref<1x16x128xbf16, #tpu.memory_space<vmem>>, vector<1x16x128xbf16>
    %495 = vector.shape_cast %494 : vector<1x16x128xbf16> to vector<16x128xbf16>
    %496 = vector.shape_cast %493 : vector<16x128xbf16> to vector<1x16x128xbf16>
    tpu.vector_store %arg14[%c0_188, %c0_189, %c0_190], %496 {strides = array<i32>} : memref<1x16x128xbf16, #tpu.memory_space<vmem>>, vector<1x16x128xbf16>,
    return
  }
  func.func @transform_0(%arg0: i32) -> (i32, i32, i32) {
    %c0_i32 = arith.constant 0 : i32
    %c0_i32_0 = arith.constant 0 : i32
    %c0_i32_1 = arith.constant 0 : i32
    return %arg0, %c0_i32, %c0_i32_0 : i32, i32, i32
  }
  func.func @transform_1(%arg0: i32) -> (i32, i32, i32) {
    %c0_i32 = arith.constant 0 : i32
    %c0_i32_0 = arith.constant 0 : i32
    %c0_i32_1 = arith.constant 0 : i32
    %c0_i32_2 = arith.constant 0 : i32
    return %c0_i32, %c0_i32_0, %c0_i32_1 : i32, i32, i32
  }
  func.func @transform_2(%arg0: i32) -> (i32, i32, i32) {
    %c0_i32 = arith.constant 0 : i32
    %c0_i32_0 = arith.constant 0 : i32
    %c0_i32_1 = arith.constant 0 : i32
    %c0_i32_2 = arith.constant 0 : i32
    return %c0_i32, %c0_i32_0, %c0_i32_1 : i32, i32, i32
  }
  func.func @transform_3(%arg0: i32) -> (i32, i32, i32) {
    %c0_i32 = arith.constant 0 : i32
    %c0_i32_0 = arith.constant 0 : i32
    %c0_i32_1 = arith.constant 0 : i32
    %c0_i32_2 = arith.constant 0 : i32
    return %c0_i32, %c0_i32_0, %c0_i32_1 : i32, i32, i32
  }
  func.func @transform_4(%arg0: i32) -> (i32, i32, i32) {
    %c0_i32 = arith.constant 0 : i32
    %c0_i32_0 = arith.constant 0 : i32
    %c0_i32_1 = arith.constant 0 : i32
    %c0_i32_2 = arith.constant 0 : i32
    return %c0_i32, %c0_i32_0, %c0_i32_1 : i32, i32, i32
  }
  func.func @transform_5(%arg0: i32) -> (i32, i32, i32) {
    %c0_i32 = arith.constant 0 : i32
    %c0_i32_0 = arith.constant 0 : i32
    %c0_i32_1 = arith.constant 0 : i32
    %c0_i32_2 = arith.constant 0 : i32
    return %c0_i32, %c0_i32_0, %c0_i32_1 : i32, i32, i32
  }
  func.func @transform_6(%arg0: i32) -> (i32, i32, i32) {
    %c0_i32 = arith.constant 0 : i32
    %c0_i32_0 = arith.constant 0 : i32
    %c0_i32_1 = arith.constant 0 : i32
    %c0_i32_2 = arith.constant 0 : i32
    return %c0_i32, %c0_i32_0, %c0_i32_1 : i32, i32, i32
  }
  func.func @transform_7(%arg0: i32) -> (i32, i32, i32) {
    %c0_i32 = arith.constant 0 : i32
    %c0_i32_0 = arith.constant 0 : i32
    %c0_i32_1 = arith.constant 0 : i32
    %c0_i32_2 = arith.constant 0 : i32
    return %c0_i32, %c0_i32_0, %c0_i32_1 : i32, i32, i32
  }
  func.func @transform_8(%arg0: i32) -> (i32, i32, i32) {
    %c0_i32 = arith.constant 0 : i32
    %c0_i32_0 = arith.constant 0 : i32
    %c0_i32_1 = arith.constant 0 : i32
    %c0_i32_2 = arith.constant 0 : i32
    return %c0_i32, %c0_i32_0, %c0_i32_1 : i32, i32, i32
  }
  func.func @transform_9(%arg0: i32) -> (i32, i32, i32) {
    %c0_i32 = arith.constant 0 : i32
    %c0_i32_0 = arith.constant 0 : i32
    %c0_i32_1 = arith.constant 0 : i32
    %c0_i32_2 = arith.constant 0 : i32
    return %c0_i32, %c0_i32_0, %c0_i32_1 : i32, i32, i32
  }
  func.func @transform_10(%arg0: i32) -> (i32, i32, i32) {
    %c0_i32 = arith.constant 0 : i32
    %c0_i32_0 = arith.constant 0 : i32
    %c0_i32_1 = arith.constant 0 : i32
    %c0_i32_2 = arith.constant 0 : i32
    return %c0_i32, %c0_i32_0, %c0_i32_1 : i32, i32, i32
  }
  func.func @transform_11(%arg0: i32) -> (i32, i32, i32) {
    %c0_i32 = arith.constant 0 : i32
    %c0_i32_0 = arith.constant 0 : i32
    %c0_i32_1 = arith.constant 0 : i32
    %c0_i32_2 = arith.constant 0 : i32
    return %c0_i32, %c0_i32_0, %c0_i32_1 : i32, i32, i32
  }
  func.func @transform_12(%arg0: i32) -> (i32, i32, i32) {
    %c0_i32 = arith.constant 0 : i32
    %c0_i32_0 = arith.constant 0 : i32
    %c0_i32_1 = arith.constant 0 : i32
    %c0_i32_2 = arith.constant 0 : i32
    return %c0_i32, %c0_i32_0, %c0_i32_1 : i32, i32, i32
  }
  func.func @transform_13(%arg0: i32) -> (i32, i32, i32) {
    %c0_i32 = arith.constant 0 : i32
    %c0_i32_0 = arith.constant 0 : i32
    %c0_i32_1 = arith.constant 0 : i32
    return %arg0, %c0_i32, %c0_i32_0 : i32, i32, i32
  }
}

module attributes {stable_mosaic.version = 11 : i64} {
  func.func @_tail_kernel(%arg0: i32, %arg1: memref<1x16x128xbf16, #tpu.memory_space<vmem>>, %arg2: memref<1x16x128xbf16, #tpu.memory_space<vmem>>, %arg3: memref<2x16xf32, #tpu.memory_space<vmem>>, %arg4: memref<16x128xbf16, #tpu.memory_space<vmem>>, %arg5: memref<1x128xf32, #tpu.memory_space<vmem>>, %arg6: memref<128x256xbf16, #tpu.memory_space<vmem>>, %arg7: memref<1x256xf32, #tpu.memory_space<vmem>>, %arg8: memref<128x256xbf16, #tpu.memory_space<vmem>>, %arg9: memref<128x256xbf16, #tpu.memory_space<vmem>>, %arg10: memref<1x256xf32, #tpu.memory_space<vmem>>, %arg11: memref<256x128xbf16, #tpu.memory_space<vmem>>, %arg12: memref<1x128xf32, #tpu.memory_space<vmem>>, %arg13: memref<1x128xf32, #tpu.memory_space<vmem>>, %arg14: memref<1x128xf32, #tpu.memory_space<vmem>>, %arg15: memref<1x16x128xf32, #tpu.memory_space<vmem>>) attributes {dimension_semantics = [#tpu.dimension_semantics<parallel>], iteration_bounds = array<i64: 2>, scalar_prefetch = 0 : i64, scratch_operands = 0 : i64, tpu.core_type = #tpu.core_type<tc>, window_params = [{transform_indices = @transform_0, window_bounds = array<i64: 1, 16, 128>}, {transform_indices = @transform_1, window_bounds = array<i64: 1, 16, 128>}, {pipeline_mode = #tpu.pipeline_mode<synchronous>, transform_indices = @transform_2, window_bounds = array<i64: 2, 16>}, {pipeline_mode = #tpu.pipeline_mode<synchronous>, transform_indices = @transform_3, window_bounds = array<i64: 16, 128>}, {pipeline_mode = #tpu.pipeline_mode<synchronous>, transform_indices = @transform_4, window_bounds = array<i64: 1, 128>}, {pipeline_mode = #tpu.pipeline_mode<synchronous>, transform_indices = @transform_5, window_bounds = array<i64: 128, 256>}, {pipeline_mode = #tpu.pipeline_mode<synchronous>, transform_indices = @transform_6, window_bounds = array<i64: 1, 256>}, {pipeline_mode = #tpu.pipeline_mode<synchronous>, transform_indices = @transform_7, window_bounds = array<i64: 128, 256>}, {pipeline_mode = #tpu.pipeline_mode<synchronous>, transform_indices = @transform_8, window_bounds = array<i64: 128, 256>}, {pipeline_mode = #tpu.pipeline_mode<synchronous>, transform_indices = @transform_9, window_bounds = array<i64: 1, 256>}, {pipeline_mode = #tpu.pipeline_mode<synchronous>, transform_indices = @transform_10, window_bounds = array<i64: 256, 128>}, {pipeline_mode = #tpu.pipeline_mode<synchronous>, transform_indices = @transform_11, window_bounds = array<i64: 1, 128>}, {pipeline_mode = #tpu.pipeline_mode<synchronous>, transform_indices = @transform_12, window_bounds = array<i64: 1, 128>}, {pipeline_mode = #tpu.pipeline_mode<synchronous>, transform_indices = @transform_13, window_bounds = array<i64: 1, 128>}, {transform_indices = @transform_14, window_bounds = array<i64: 1, 16, 128>}]} {
    %c0 = arith.constant 0 : index
    %c0_0 = arith.constant 0 : index
    %c0_1 = arith.constant 0 : index
    %0 = vector.load %arg1[%c0, %c0_0, %c0_1] : memref<1x16x128xbf16, #tpu.memory_space<vmem>>, vector<1x16x128xbf16>
    %1 = vector.shape_cast %0 : vector<1x16x128xbf16> to vector<16x128xbf16>
    %c0_2 = arith.constant 0 : index
    %c0_3 = arith.constant 0 : index
    %c0_4 = arith.constant 0 : index
    %2 = vector.load %arg2[%c0_2, %c0_3, %c0_4] : memref<1x16x128xbf16, #tpu.memory_space<vmem>>, vector<1x16x128xbf16>
    %3 = vector.shape_cast %2 : vector<1x16x128xbf16> to vector<16x128xbf16>
    %c0_5 = arith.constant 0 : index
    %c0_6 = arith.constant 0 : index
    %4 = vector.load %arg3[%c0_5, %c0_6] : memref<2x16xf32, #tpu.memory_space<vmem>>, vector<2x16xf32>
    %5 = arith.truncf %4 : vector<2x16xf32> to vector<2x16xbf16>
    %c0_7 = arith.constant 0 : index
    %c0_8 = arith.constant 0 : index
    %6 = vector.load %arg4[%c0_7, %c0_8] : memref<16x128xbf16, #tpu.memory_space<vmem>>, vector<16x128xbf16>
    %cst = arith.constant dense<0.000000e+00> : vector<2x128xf32>
    %7 = tpu.matmul %5, %6, %cst {dimension_numbers = #tpu.dot_dimension_numbers<[1], [0], [0], [1], [0, 0, 1, 1], [], []>} : vector<2x16xbf16>, vector<16x128xbf16>, vector<2x128xf32> -> vector<2x128xf32>
    %c0_9 = arith.constant 0 : index
    %c0_10 = arith.constant 0 : index
    %8 = vector.load %arg5[%c0_9, %c0_10] : memref<1x128xf32, #tpu.memory_space<vmem>>, vector<1x128xf32>
    %9 = vector.broadcast %8 : vector<1x128xf32> to vector<2x128xf32>
    %10 = arith.addf %7, %9 : vector<2x128xf32>
    %11 = arith.mulf %10, %10 : vector<2x128xf32>
    %12 = arith.mulf %10, %11 : vector<2x128xf32>
    %cst_11 = arith.constant 4.471500e-02 : f32
    %13 = vector.broadcast %cst_11 : f32 to vector<2x128xf32>
    %14 = arith.mulf %13, %12 : vector<2x128xf32>
    %15 = arith.addf %10, %14 : vector<2x128xf32>
    %cst_12 = arith.constant 0.797884583 : f32
    %16 = vector.broadcast %cst_12 : f32 to vector<2x128xf32>
    %17 = arith.mulf %16, %15 : vector<2x128xf32>
    %18 = math.tanh %17 : vector<2x128xf32>
    %cst_13 = arith.constant 1.000000e+00 : f32
    %19 = vector.broadcast %cst_13 : f32 to vector<2x128xf32>
    %20 = arith.addf %19, %18 : vector<2x128xf32>
    %cst_14 = arith.constant 5.000000e-01 : f32
    %21 = vector.broadcast %cst_14 : f32 to vector<2x128xf32>
    %22 = arith.mulf %21, %20 : vector<2x128xf32>
    %23 = arith.mulf %10, %22 : vector<2x128xf32>
    %24 = arith.truncf %23 : vector<2x128xf32> to vector<2x128xbf16>
    %c0_15 = arith.constant 0 : index
    %c0_16 = arith.constant 0 : index
    %25 = vector.load %arg6[%c0_15, %c0_16] : memref<128x256xbf16, #tpu.memory_space<vmem>>, vector<128x256xbf16>
    %cst_17 = arith.constant dense<0.000000e+00> : vector<2x256xf32>
    %26 = tpu.matmul %24, %25, %cst_17 {dimension_numbers = #tpu.dot_dimension_numbers<[1], [0], [0], [1], [0, 0, 1, 1], [], []>} : vector<2x128xbf16>, vector<128x256xbf16>, vector<2x256xf32> -> vector<2x256xf32>
    %c0_18 = arith.constant 0 : index
    %c0_19 = arith.constant 0 : index
    %27 = vector.load %arg7[%c0_18, %c0_19] : memref<1x256xf32, #tpu.memory_space<vmem>>, vector<1x256xf32>
    %28 = vector.broadcast %27 : vector<1x256xf32> to vector<2x256xf32>
    %29 = arith.addf %26, %28 : vector<2x256xf32>
    %30 = tpu.iota {dimensions = array<i32: 0>} : vector<2x256xi32>
    %31 = vector.broadcast %arg0 : i32 to vector<2x256xi32>
    %32 = arith.cmpi eq, %30, %31 : vector<2x256xi32>
    %cst_20 = arith.constant 0.000000e+00 : f32
    %33 = vector.broadcast %cst_20 : f32 to vector<2x256xf32>
    %34 = arith.select %32, %29, %33 : vector<2x256xi1>, vector<2x256xf32>
    %cst_21 = arith.constant dense<0.000000e+00> : vector<256xf32>
    %35 = vector.multi_reduction <add>, %34, %cst_21 [0] : vector<2x256xf32> to vector<256xf32>
    %36 = vector.shape_cast %35 : vector<256xf32> to vector<1x256xf32>
    %c0_22 = arith.constant 0 : index
    %c0_23 = arith.constant 0 : index
    %37 = vector.load %arg8[%c0_22, %c0_23] : memref<128x256xbf16, #tpu.memory_space<vmem>>, vector<128x256xbf16>
    %cst_24 = arith.constant dense<0.000000e+00> : vector<16x256xf32>
    %38 = tpu.matmul %1, %37, %cst_24 {dimension_numbers = #tpu.dot_dimension_numbers<[1], [0], [0], [1], [0, 0, 1, 1], [], []>} : vector<16x128xbf16>, vector<128x256xbf16>, vector<16x256xf32> -> vector<16x256xf32>
    %c0_25 = arith.constant 0 : index
    %c0_26 = arith.constant 0 : index
    %39 = vector.load %arg9[%c0_25, %c0_26] : memref<128x256xbf16, #tpu.memory_space<vmem>>, vector<128x256xbf16>
    %cst_27 = arith.constant dense<0.000000e+00> : vector<16x256xf32>
    %40 = tpu.matmul %3, %39, %cst_27 {dimension_numbers = #tpu.dot_dimension_numbers<[1], [0], [0], [1], [0, 0, 1, 1], [], []>} : vector<16x128xbf16>, vector<128x256xbf16>, vector<16x256xf32> -> vector<16x256xf32>
    %41 = arith.addf %38, %40 : vector<16x256xf32>
    %c0_28 = arith.constant 0 : index
    %c0_29 = arith.constant 0 : index
    %42 = vector.load %arg10[%c0_28, %c0_29] : memref<1x256xf32, #tpu.memory_space<vmem>>, vector<1x256xf32>
    %43 = vector.broadcast %42 : vector<1x256xf32> to vector<16x256xf32>
    %44 = arith.addf %41, %43 : vector<16x256xf32>
    %45 = arith.mulf %44, %44 : vector<16x256xf32>
    %46 = arith.mulf %44, %45 : vector<16x256xf32>
    %cst_30 = arith.constant 4.471500e-02 : f32
    %47 = vector.broadcast %cst_30 : f32 to vector<16x256xf32>
    %48 = arith.mulf %47, %46 : vector<16x256xf32>
    %49 = arith.addf %44, %48 : vector<16x256xf32>
    %cst_31 = arith.constant 0.797884583 : f32
    %50 = vector.broadcast %cst_31 : f32 to vector<16x256xf32>
    %51 = arith.mulf %50, %49 : vector<16x256xf32>
    %52 = math.tanh %51 : vector<16x256xf32>
    %cst_32 = arith.constant 1.000000e+00 : f32
    %53 = vector.broadcast %cst_32 : f32 to vector<16x256xf32>
    %54 = arith.addf %53, %52 : vector<16x256xf32>
    %cst_33 = arith.constant 5.000000e-01 : f32
    %55 = vector.broadcast %cst_33 : f32 to vector<16x256xf32>
    %56 = arith.mulf %55, %54 : vector<16x256xf32>
    %57 = arith.mulf %44, %56 : vector<16x256xf32>
    %58 = arith.truncf %57 : vector<16x256xf32> to vector<16x256xbf16>
    %c0_34 = arith.constant 0 : index
    %c0_35 = arith.constant 0 : index
    %59 = vector.load %arg11[%c0_34, %c0_35] : memref<256x128xbf16, #tpu.memory_space<vmem>>, vector<256x128xbf16>
    %cst_36 = arith.constant dense<0.000000e+00> : vector<16x128xf32>
    %60 = tpu.matmul %58, %59, %cst_36 {dimension_numbers = #tpu.dot_dimension_numbers<[1], [0], [0], [1], [0, 0, 1, 1], [], []>} : vector<16x256xbf16>, vector<256x128xbf16>, vector<16x128xf32> -> vector<16x128xf32>
    %c0_37 = arith.constant 0 : index
    %c0_38 = arith.constant 0 : index
    %61 = vector.load %arg12[%c0_37, %c0_38] : memref<1x128xf32, #tpu.memory_space<vmem>>, vector<1x128xf32>
    %62 = vector.broadcast %61 : vector<1x128xf32> to vector<16x128xf32>
    %63 = arith.addf %60, %62 : vector<16x128xf32>
    %64 = vector.extract_strided_slice %36 {offsets = [0, 0], sizes = [1, 128], strides = [1, 1]} : vector<1x256xf32> to vector<1x128xf32>
    %cst_39 = arith.constant 1.000000e+00 : f32
    %65 = vector.broadcast %cst_39 : f32 to vector<1x128xf32>
    %66 = arith.addf %65, %64 : vector<1x128xf32>
    %67 = vector.broadcast %66 : vector<1x128xf32> to vector<16x128xf32>
    %68 = arith.mulf %63, %67 : vector<16x128xf32>
    %69 = vector.extract_strided_slice %36 {offsets = [0, 128], sizes = [1, 128], strides = [1, 1]} : vector<1x256xf32> to vector<1x128xf32>
    %70 = vector.broadcast %69 : vector<1x128xf32> to vector<16x128xf32>
    %71 = arith.addf %68, %70 : vector<16x128xf32>
    %cst_40 = arith.constant dense<0.000000e+00> : vector<16xf32>
    %72 = vector.multi_reduction <add>, %71, %cst_40 [1] : vector<16x128xf32> to vector<16xf32>
    %73 = vector.shape_cast %72 : vector<16xf32> to vector<16x1xf32>
    %cst_41 = arith.constant 1.280000e+02 : f32
    %74 = vector.broadcast %cst_41 : f32 to vector<16x1xf32>
    %75 = arith.divf %73, %74 : vector<16x1xf32>
    %76 = vector.broadcast %75 : vector<16x1xf32> to vector<16x128xf32>
    %77 = arith.subf %71, %76 : vector<16x128xf32>
    %78 = arith.mulf %77, %77 : vector<16x128xf32>
    %cst_42 = arith.constant dense<0.000000e+00> : vector<16xf32>
    %79 = vector.multi_reduction <add>, %78, %cst_42 [1] : vector<16x128xf32> to vector<16xf32>
    %80 = vector.shape_cast %79 : vector<16xf32> to vector<16x1xf32>
    %cst_43 = arith.constant 1.280000e+02 : f32
    %81 = vector.broadcast %cst_43 : f32 to vector<16x1xf32>
    %82 = arith.divf %80, %81 : vector<16x1xf32>
    %83 = vector.broadcast %75 : vector<16x1xf32> to vector<16x128xf32>
    %84 = arith.subf %71, %83 : vector<16x128xf32>
    %cst_44 = arith.constant 9.99999974E-6 : f32
    %85 = vector.broadcast %cst_44 : f32 to vector<16x1xf32>
    %86 = arith.addf %82, %85 : vector<16x1xf32>
    %87 = math.rsqrt %86 : vector<16x1xf32>
    %88 = vector.broadcast %87 : vector<16x1xf32> to vector<16x128xf32>
    %89 = arith.mulf %84, %88 : vector<16x128xf32>
    %c0_45 = arith.constant 0 : index
    %c0_46 = arith.constant 0 : index
    %90 = vector.load %arg13[%c0_45, %c0_46] : memref<1x128xf32, #tpu.memory_space<vmem>>, vector<1x128xf32>
    %91 = vector.broadcast %90 : vector<1x128xf32> to vector<16x128xf32>
    %92 = arith.mulf %89, %91 : vector<16x128xf32>
    %c0_47 = arith.constant 0 : index
    %c0_48 = arith.constant 0 : index
    %93 = vector.load %arg14[%c0_47, %c0_48] : memref<1x128xf32, #tpu.memory_space<vmem>>, vector<1x128xf32>
    %94 = vector.broadcast %93 : vector<1x128xf32> to vector<16x128xf32>
    %95 = arith.addf %92, %94 : vector<16x128xf32>
    %c0_49 = arith.constant 0 : index
    %c0_50 = arith.constant 0 : index
    %c0_51 = arith.constant 0 : index
    %96 = vector.load %arg15[%c0_49, %c0_50, %c0_51] : memref<1x16x128xf32, #tpu.memory_space<vmem>>, vector<1x16x128xf32>
    %97 = vector.shape_cast %96 : vector<1x16x128xf32> to vector<16x128xf32>
    %98 = vector.shape_cast %95 : vector<16x128xf32> to vector<1x16x128xf32>
    tpu.vector_store %arg15[%c0_49, %c0_50, %c0_51], %98 {strides = array<i32>} : memref<1x16x128xf32, #tpu.memory_space<vmem>>, vector<1x16x128xf32>,
    return
  }
  func.func @transform_0(%arg0: i32) -> (i32, i32, i32) {
    %c0_i32 = arith.constant 0 : i32
    %c0_i32_0 = arith.constant 0 : i32
    %c0_i32_1 = arith.constant 0 : i32
    return %arg0, %c0_i32, %c0_i32_0 : i32, i32, i32
  }
  func.func @transform_1(%arg0: i32) -> (i32, i32, i32) {
    %c0_i32 = arith.constant 0 : i32
    %c0_i32_0 = arith.constant 0 : i32
    %c0_i32_1 = arith.constant 0 : i32
    return %arg0, %c0_i32, %c0_i32_0 : i32, i32, i32
  }
  func.func @transform_2(%arg0: i32) -> (i32, i32) {
    %c0_i32 = arith.constant 0 : i32
    %c0_i32_0 = arith.constant 0 : i32
    %c0_i32_1 = arith.constant 0 : i32
    return %c0_i32, %c0_i32_0 : i32, i32
  }
  func.func @transform_3(%arg0: i32) -> (i32, i32) {
    %c0_i32 = arith.constant 0 : i32
    %c0_i32_0 = arith.constant 0 : i32
    %c0_i32_1 = arith.constant 0 : i32
    return %c0_i32, %c0_i32_0 : i32, i32
  }
  func.func @transform_4(%arg0: i32) -> (i32, i32) {
    %c0_i32 = arith.constant 0 : i32
    %c0_i32_0 = arith.constant 0 : i32
    %c0_i32_1 = arith.constant 0 : i32
    return %c0_i32, %c0_i32_0 : i32, i32
  }
  func.func @transform_5(%arg0: i32) -> (i32, i32) {
    %c0_i32 = arith.constant 0 : i32
    %c0_i32_0 = arith.constant 0 : i32
    %c0_i32_1 = arith.constant 0 : i32
    return %c0_i32, %c0_i32_0 : i32, i32
  }
  func.func @transform_6(%arg0: i32) -> (i32, i32) {
    %c0_i32 = arith.constant 0 : i32
    %c0_i32_0 = arith.constant 0 : i32
    %c0_i32_1 = arith.constant 0 : i32
    return %c0_i32, %c0_i32_0 : i32, i32
  }
  func.func @transform_7(%arg0: i32) -> (i32, i32) {
    %c0_i32 = arith.constant 0 : i32
    %c0_i32_0 = arith.constant 0 : i32
    %c0_i32_1 = arith.constant 0 : i32
    return %c0_i32, %c0_i32_0 : i32, i32
  }
  func.func @transform_8(%arg0: i32) -> (i32, i32) {
    %c0_i32 = arith.constant 0 : i32
    %c0_i32_0 = arith.constant 0 : i32
    %c0_i32_1 = arith.constant 0 : i32
    return %c0_i32, %c0_i32_0 : i32, i32
  }
  func.func @transform_9(%arg0: i32) -> (i32, i32) {
    %c0_i32 = arith.constant 0 : i32
    %c0_i32_0 = arith.constant 0 : i32
    %c0_i32_1 = arith.constant 0 : i32
    return %c0_i32, %c0_i32_0 : i32, i32
  }
  func.func @transform_10(%arg0: i32) -> (i32, i32) {
    %c0_i32 = arith.constant 0 : i32
    %c0_i32_0 = arith.constant 0 : i32
    %c0_i32_1 = arith.constant 0 : i32
    return %c0_i32, %c0_i32_0 : i32, i32
  }
  func.func @transform_11(%arg0: i32) -> (i32, i32) {
    %c0_i32 = arith.constant 0 : i32
    %c0_i32_0 = arith.constant 0 : i32
    %c0_i32_1 = arith.constant 0 : i32
    return %c0_i32, %c0_i32_0 : i32, i32
  }
  func.func @transform_12(%arg0: i32) -> (i32, i32) {
    %c0_i32 = arith.constant 0 : i32
    %c0_i32_0 = arith.constant 0 : i32
    %c0_i32_1 = arith.constant 0 : i32
    return %c0_i32, %c0_i32_0 : i32, i32
  }
  func.func @transform_13(%arg0: i32) -> (i32, i32) {
    %c0_i32 = arith.constant 0 : i32
    %c0_i32_0 = arith.constant 0 : i32
    %c0_i32_1 = arith.constant 0 : i32
    return %c0_i32, %c0_i32_0 : i32, i32
  }
  func.func @transform_14(%arg0: i32) -> (i32, i32, i32) {
    %c0_i32 = arith.constant 0 : i32
    %c0_i32_0 = arith.constant 0 : i32
    %c0_i32_1 = arith.constant 0 : i32
    return %arg0, %c0_i32, %c0_i32_0 : i32, i32, i32
  }
}

</mosaic_0001>

<llo_original>
// kernel: _lambda_.3
$region0: #{_lambda_.3}
  #allocation0 [shape = 'u32[]', space=smem, size = 0x4, offset = 0x4, fixed_abs, tag = 'smem constant byte address 0x4 - core index']
  #allocation1 [shape = 'u32[144,128]{1,0:T(1,128)}', space=vmem, size = 0x12000, scoped, tag = 'internal scratch']
  %s0 = inlined_call_operand.vmem [shape: f32[2,16,128], index: 0, kind: input, shape index: {}]
  %s1 = inlined_call_operand.vmem [shape: f32[16,128], index: 1, kind: input, shape index: {}]
  %s2 = inlined_call_operand.vmem [shape: f32[16,16,128], index: 2, kind: input, shape index: {}]
  %s3 = inlined_call_operand.vmem [shape: f32[1,128], index: 3, kind: input, shape index: {}, may-alias: {3,6}]
  %s4 = inlined_call_operand.vmem [shape: bf16[128,256], index: 4, kind: input, shape index: {}]
  %s5 = inlined_call_operand.vmem [shape: f32[1,256], index: 5, kind: input, shape index: {}]
  %s6 = inlined_call_operand.vmem [shape: f32[1,128], index: 6, kind: input, shape index: {}, may-alias: {3,6}]
  %s7 = inlined_call_operand.vmem [shape: f32[1,128], index: 7, kind: input, shape index: {}]
  %s8 = inlined_call_operand.vmem [shape: bf16[2,16,128], index: 8, kind: output, shape index: {}]
  %s9 = sld [smem:[#allocation0]]
  $region65: #{_lambda_.3} parent=0
    _
  %s11 = ssub.s32 1, %s9
  %s12 = scalar_select 0, %s11, %s9
  loop: start=0, step=1, limit=4
  $region2: #{_lambda_.3} parent=0 // loop_pre_header
    _
  $region3: #{_lambda_.3} parent=0 // loop_header
    %s14 = sphi 0, %s18
    %p15 = scmp.ge.s32.totalorder %s14, 4
    %s24 = sphi 0, %s26
    %s27 = sphi 0, %s24
    %s28 = sphi 0, %s27
    %s44 = sphi 0, %s28
    %s48 = sphi 0, %s48
    %s50 = sphi 0, %s48
    %s51 = sphi 0, %s50
    %s65 = sphi 0, %s51
    %s69 = sphi 0, %s69
    %s71 = sphi 0, %s69
    %s72 = sphi 0, %s71
    %s86 = sphi 0, %s72
    %s90 = sphi 0, %s90
    %s92 = sphi 0, %s90
    %s93 = sphi 0, %s92
    %s107 = sphi 0, %s93
    %s111 = sphi 0, %s111
    %s113 = sphi 0, %s111
    %s114 = sphi 0, %s113
    %s128 = sphi 0, %s114
    %s132 = sphi 0, %s132
    %s134 = sphi 0, %s132
    %s135 = sphi 0, %s134
    %s149 = sphi 0, %s135
    %s153 = sphi 0, %s153
    %s155 = sphi 0, %s153
    %s156 = sphi 0, %s155
    %s170 = sphi 0, %s156
    %s174 = sphi 0, %s174
    %s176 = sphi 0, %s174
    %s177 = sphi 0, %s176
    %s191 = sphi 0, %s177
    %s197 = sphi 0, %s199
    %s200 = sphi 0, %s197
    %s201 = sphi 0, %s200
    %s217 = sphi 0, %s201
  $region4: #{_lambda_.3} parent=0 // loop_header_branch
    %17 = sbr.rel (%p15) target = $region8
  $region5: #{_lambda_.3} parent=0 // loop_body
    %s19 = ssub.s32 %s14, 1
    %s20 = ssub.s32 %s14, 2
    %s21 = sadd.s32 %s14, 1
    %s22 = ssub.s32 %s14, %s21
    %p23 = scmp.eq.s32.totalorder %s22, 0
    %s25 = sadd.s32 %s24, 1
    %s26 = scalar_select %p23, %s24, %s25
    %p29 = pneg %p23
    %p30 = scmp.eq.s32.totalorder %s14, 1
    %p31 = por %p29, %p30
    %p32 = scmp.ne.s32.totalorder %s24, %s27
    %p33 = scmp.eq.s32.totalorder %s14, 0
    %p34 = por %p32, %p33
    %p35 = scmp.ne.s32.totalorder %s24, %s27
    %p36 = scmp.eq.s32.totalorder %s19, 1
    %p37 = por %p35, %p36
    %p38 = scmp.ne.s32.totalorder %s27, %s28
    %p39 = scmp.eq.s32.totalorder %s19, 0
    %p40 = por %p38, %p39
    %p41 = scmp.ne.s32.totalorder %s27, %s28
    %p42 = scmp.eq.s32.totalorder %s20, 1
    %p43 = por %p41, %p42
    %p45 = scmp.ne.s32.totalorder %s28, %s44
    %p46 = scmp.eq.s32.totalorder %s20, 0
    %p47 = por %p45, %p46
    %s49 = sadd.s32 %s48, 1
    %p52 = scmp.eq.s32.totalorder %s14, 1
    %p53 = scmp.ne.s32.totalorder %s48, %s50
    %p54 = scmp.eq.s32.totalorder %s14, 0
    %p55 = por %p53, %p54
    %p56 = scmp.ne.s32.totalorder %s48, %s50
    %p57 = scmp.eq.s32.totalorder %s19, 1
    %p58 = por %p56, %p57
    %p59 = scmp.ne.s32.totalorder %s50, %s51
    %p60 = scmp.eq.s32.totalorder %s19, 0
    %p61 = por %p59, %p60
    %p62 = scmp.ne.s32.totalorder %s50, %s51
    %p63 = scmp.eq.s32.totalorder %s20, 1
    %p64 = por %p62, %p63
    %p66 = scmp.ne.s32.totalorder %s51, %s65
    %p67 = scmp.eq.s32.totalorder %s20, 0
    %p68 = por %p66, %p67
    %s70 = sadd.s32 %s69, 1
    %p73 = scmp.eq.s32.totalorder %s14, 1
    %p74 = scmp.ne.s32.totalorder %s69, %s71
    %p75 = scmp.eq.s32.totalorder %s14, 0
    %p76 = por %p74, %p75
    %p77 = scmp.ne.s32.totalorder %s69, %s71
    %p78 = scmp.eq.s32.totalorder %s19, 1
    %p79 = por %p77, %p78
    %p80 = scmp.ne.s32.totalorder %s71, %s72
    %p81 = scmp.eq.s32.totalorder %s19, 0
    %p82 = por %p80, %p81
    %p83 = scmp.ne.s32.totalorder %s71, %s72
    %p84 = scmp.eq.s32.totalorder %s20, 1
    %p85 = por %p83, %p84
    %p87 = scmp.ne.s32.totalorder %s72, %s86
    %p88 = scmp.eq.s32.totalorder %s20, 0
    %p89 = por %p87, %p88
    %s91 = sadd.s32 %s90, 1
    %p94 = scmp.eq.s32.totalorder %s14, 1
    %p95 = scmp.ne.s32.totalorder %s90, %s92
    %p96 = scmp.eq.s32.totalorder %s14, 0
    %p97 = por %p95, %p96
    %p98 = scmp.ne.s32.totalorder %s90, %s92
    %p99 = scmp.eq.s32.totalorder %s19, 1
    %p100 = por %p98, %p99
    %p101 = scmp.ne.s32.totalorder %s92, %s93
    %p102 = scmp.eq.s32.totalorder %s19, 0
    %p103 = por %p101, %p102
    %p104 = scmp.ne.s32.totalorder %s92, %s93
    %p105 = scmp.eq.s32.totalorder %s20, 1
    %p106 = por %p104, %p105
    %p108 = scmp.ne.s32.totalorder %s93, %s107
    %p109 = scmp.eq.s32.totalorder %s20, 0
    %p110 = por %p108, %p109
    %s112 = sadd.s32 %s111, 1
    %p115 = scmp.eq.s32.totalorder %s14, 1
    %p116 = scmp.ne.s32.totalorder %s111, %s113
    %p117 = scmp.eq.s32.totalorder %s14, 0
    %p118 = por %p116, %p117
    %p119 = scmp.ne.s32.totalorder %s111, %s113
    %p120 = scmp.eq.s32.totalorder %s19, 1
    %p121 = por %p119, %p120
    %p122 = scmp.ne.s32.totalorder %s113, %s114
    %p123 = scmp.eq.s32.totalorder %s19, 0
    %p124 = por %p122, %p123
    %p125 = scmp.ne.s32.totalorder %s113, %s114
    %p126 = scmp.eq.s32.totalorder %s20, 1
    %p127 = por %p125, %p126
    %p129 = scmp.ne.s32.totalorder %s114, %s128
    %p130 = scmp.eq.s32.totalorder %s20, 0
    %p131 = por %p129, %p130
    %s133 = sadd.s32 %s132, 1
    %p136 = scmp.eq.s32.totalorder %s14, 1
    %p137 = scmp.ne.s32.totalorder %s132, %s134
    %p138 = scmp.eq.s32.totalorder %s14, 0
    %p139 = por %p137, %p138
    %p140 = scmp.ne.s32.totalorder %s132, %s134
    %p141 = scmp.eq.s32.totalorder %s19, 1
    %p142 = por %p140, %p141
    %p143 = scmp.ne.s32.totalorder %s134, %s135
    %p144 = scmp.eq.s32.totalorder %s19, 0
    %p145 = por %p143, %p144
    %p146 = scmp.ne.s32.totalorder %s134, %s135
    %p147 = scmp.eq.s32.totalorder %s20, 1
    %p148 = por %p146, %p147
    %p150 = scmp.ne.s32.totalorder %s135, %s149
    %p151 = scmp.eq.s32.totalorder %s20, 0
    %p152 = por %p150, %p151
    %s154 = sadd.s32 %s153, 1
    %p157 = scmp.eq.s32.totalorder %s14, 1
    %p158 = scmp.ne.s32.totalorder %s153, %s155
    %p159 = scmp.eq.s32.totalorder %s14, 0
    %p160 = por %p158, %p159
    %p161 = scmp.ne.s32.totalorder %s153, %s155
    %p162 = scmp.eq.s32.totalorder %s19, 1
    %p163 = por %p161, %p162
    %p164 = scmp.ne.s32.totalorder %s155, %s156
    %p165 = scmp.eq.s32.totalorder %s19, 0
    %p166 = por %p164, %p165
    %p167 = scmp.ne.s32.totalorder %s155, %s156
    %p168 = scmp.eq.s32.totalorder %s20, 1
    %p169 = por %p167, %p168
    %p171 = scmp.ne.s32.totalorder %s156, %s170
    %p172 = scmp.eq.s32.totalorder %s20, 0
    %p173 = por %p171, %p172
    %s175 = sadd.s32 %s174, 1
    %p178 = scmp.eq.s32.totalorder %s14, 1
    %p179 = scmp.ne.s32.totalorder %s174, %s176
    %p180 = scmp.eq.s32.totalorder %s14, 0
    %p181 = por %p179, %p180
    %p182 = scmp.ne.s32.totalorder %s174, %s176
    %p183 = scmp.eq.s32.totalorder %s19, 1
    %p184 = por %p182, %p183
    %p185 = scmp.ne.s32.totalorder %s176, %s177
    %p186 = scmp.eq.s32.totalorder %s19, 0
    %p187 = por %p185, %p186
    %p188 = scmp.ne.s32.totalorder %s176, %s177
    %p189 = scmp.eq.s32.totalorder %s20, 1
    %p190 = por %p188, %p189
    %p192 = scmp.ne.s32.totalorder %s177, %s191
    %p193 = scmp.eq.s32.totalorder %s20, 0
    %p194 = por %p192, %p193
    %s195 = ssub.s32 %s14, %s21
    %p196 = scmp.eq.s32.totalorder %s195, 0
    %s198 = sadd.s32 %s197, 1
    %s199 = scalar_select %p196, %s197, %s198
    %p202 = pneg %p196
    %p203 = scmp.eq.s32.totalorder %s14, 1
    %p204 = por %p202, %p203
    %p205 = scmp.ne.s32.totalorder %s197, %s200
    %p206 = scmp.eq.s32.totalorder %s14, 0
    %p207 = por %p205, %p206
    %p208 = scmp.ne.s32.totalorder %s197, %s200
    %p209 = scmp.eq.s32.totalorder %s19, 1
    %p210 = por %p208, %p209
    %p211 = scmp.ne.s32.totalorder %s200, %s201
    %p212 = scmp.eq.s32.totalorder %s19, 0
    %p213 = por %p211, %p212
    %p214 = scmp.ne.s32.totalorder %s200, %s201
    %p215 = scmp.eq.s32.totalorder %s20, 1
    %p216 = por %p214, %p215
    %p218 = scmp.ne.s32.totalorder %s201, %s217
    %p219 = scmp.eq.s32.totalorder %s20, 0
    %p220 = por %p218, %p219
    %p221 = scmp.le.s32.totalorder 1, %s14
    %p222 = scmp.lt.s32.totalorder %s14, 3
    %p223 = pnand %p221, %p222
    %p224 = pneg %p223
    // Predicated region
    $region9: #{_lambda_.3} parent=5 // pred_check
      _
    $region10: #{_lambda_.3} parent=5 // pred_check_branch
      %226 = sbr.rel (%p223) target = $region12
    $region11: #{_lambda_.3} parent=5 // pred_region
      %s227 = ssub.s32 %s14, 1
      // Predicated region
      $region13: #{_lambda_.3} parent=11 // pred_check
        %p228 = pneg %p61
      $region14: #{_lambda_.3} parent=11 // pred_check_branch
        %230 = sbr.rel (%p228) target = $region16
      $region15: #{_lambda_.3} parent=11 // pred_region
        _
      $region16: #{_lambda_.3} parent=11 // pred_fallthru
        _
      // Predicated region
      $region17: #{_lambda_.3} parent=11 // pred_check
        %p231 = pneg %p82
      $region18: #{_lambda_.3} parent=11 // pred_check_branch
        %233 = sbr.rel (%p231) target = $region20
      $region19: #{_lambda_.3} parent=11 // pred_region
        _
      $region20: #{_lambda_.3} parent=11 // pred_fallthru
        _
      // Predicated region
      $region21: #{_lambda_.3} parent=11 // pred_check
        %p234 = pneg %p103
      $region22: #{_lambda_.3} parent=11 // pred_check_branch
        %236 = sbr.rel (%p234) target = $region24
      $region23: #{_lambda_.3} parent=11 // pred_region
        _
      $region24: #{_lambda_.3} parent=11 // pred_fallthru
        _
      // Predicated region
      $region25: #{_lambda_.3} parent=11 // pred_check
        %p237 = pneg %p124
      $region26: #{_lambda_.3} parent=11 // pred_check_branch
        %239 = sbr.rel (%p237) target = $region28
      $region27: #{_lambda_.3} parent=11 // pred_region
        _
      $region28: #{_lambda_.3} parent=11 // pred_fallthru
        _
      // Predicated region
      $region29: #{_lambda_.3} parent=11 // pred_check
        %p240 = pneg %p145
      $region30: #{_lambda_.3} parent=11 // pred_check_branch
        %242 = sbr.rel (%p240) target = $region32
      $region31: #{_lambda_.3} parent=11 // pred_region
        _
      $region32: #{_lambda_.3} parent=11 // pred_fallthru
        _
      // Predicated region
      $region33: #{_lambda_.3} parent=11 // pred_check
        %p243 = pneg %p166
      $region34: #{_lambda_.3} parent=11 // pred_check_branch
        %245 = sbr.rel (%p243) target = $region36
      $region35: #{_lambda_.3} parent=11 // pred_region
        _
      $region36: #{_lambda_.3} parent=11 // pred_fallthru
        _
      // Predicated region
      $region37: #{_lambda_.3} parent=11 // pred_check
        %p246 = pneg %p187
      $region38: #{_lambda_.3} parent=11 // pred_check_branch
        %248 = sbr.rel (%p246) target = $region40
      $region39: #{_lambda_.3} parent=11 // pred_region
        _
      $region40: #{_lambda_.3} parent=11 // pred_fallthru
        _
    $region12: #{_lambda_.3} parent=5 // pred_fallthru
      _
    %p249 = scmp.lt.s32.totalorder %s14, 2
    // Predicated region
    $region41: #{_lambda_.3} parent=5 // pred_check
      %p250 = pneg %p249
    $region42: #{_lambda_.3} parent=5 // pred_check_branch
      %252 = sbr.rel (%p250) target = $region44
    $region43: #{_lambda_.3} parent=5 // pred_region
      // Predicated region
      $region45: #{_lambda_.3} parent=43 // pred_check
        %p253 = pneg %p34
      $region46: #{_lambda_.3} parent=43 // pred_check_branch
        %255 = sbr.rel (%p253) target = $region48
      $region47: #{_lambda_.3} parent=43 // pred_region
        %p256 = scmp.lt.s32.totalorder %s14, 1
        %s257 = scalar_select %p256, %s14, 1
        %s258 = smul.addr %s257, 2
        %s259 = smul.addr %s258, 8
        %s260 = scalar_lea.vmem %s0, %s259
      $region48: #{_lambda_.3} parent=43 // pred_fallthru
        _
    $region44: #{_lambda_.3} parent=5 // pred_fallthru
      _
    %p261 = scmp.le.s32.totalorder 1, %s14
    %p262 = scmp.lt.s32.totalorder %s14, 3
    %p263 = pnand %p261, %p262
    %p264 = pneg %p263
    // Predicated region
    $region49: #{_lambda_.3} parent=5 // pred_check
      _
    $region50: #{_lambda_.3} parent=5 // pred_check_branch
      %266 = sbr.rel (%p263) target = $region52
    $region51: #{_lambda_.3} parent=5 // pred_region
      %s267 = ssub.s32 %s14, 1
      %p268 = scmp.lt.s32.totalorder %s19, 1
      %s269 = scalar_select %p268, %s19, 1
      %s270 = smul.addr %s269, 2
      %s271 = smul.addr %s270, 8
      %s272 = scalar_lea.vmem %s0, %s271
      %p273 = pneg %p40
      %p274 = pneg %p37
      %p275 = pneg %p61
      %p276 = pneg %p58
      %p277 = pneg %p82
      %p278 = pneg %p79
      %p279 = pneg %p103
      %p280 = pneg %p100
      %p281 = pneg %p124
      %p282 = pneg %p121
      %p283 = pneg %p145
      %p284 = pneg %p142
      %p285 = pneg %p166
      %p286 = pneg %p163
      %p287 = pneg %p187
      %p288 = pneg %p184
      %p289 = pneg %p213
      %p290 = pneg %p210
      %p291 = scmp.lt.s32.totalorder %s19, 1
      %s292 = scalar_select %p291, %s19, 1
      %s293 = smul.addr %s292, 2
      %s294 = smul.addr %s293, 4
      %s295 = scalar_lea.vmem %s8, %s294
      %p296 = scmp.lt.s32.totalorder %s19, 1
      %s297 = scalar_select %p296, %s19, 1
      %s298 = smul.addr %s297, 2
      %s299 = smul.addr %s298, 8
      %s300 = scalar_lea.vmem %s0, %s299
      %p301 = scmp.lt.s32.totalorder %s19, 1
      %s302 = scalar_select %p301, %s19, 1
      %s303 = smul.addr %s302, 2
      %s304 = smul.addr %s303, 4
      %s305 = scalar_lea.vmem %s8, %s304
      %v307 = vld [vmem:[%s300] sm:$0xff]
      %v308 = vld [vmem:[%s300 + $0x8] sm:$0xff]
      %v309 = vld [vmem:[%s1] sm:$0xff]
      %v310 = vld [vmem:[%s1 + $0x8] sm:$0xff]
      %v311 = vadd.f32 %v307, %v309
      %v312 = vadd.f32 %v308, %v310
      %v313 = vld [vmem:[%s3] sm:$0x1]
      %v315 = vlaneseq
      %v316 = vshrl.u32 %v315, 7
      %v317 = vsub.s32 0, %v316
      %v318 = vrot.slane %v313, %v317
      %v320 = vmul.f32 %v311, %v318
      %v321 = vmul.f32 %v312, %v318
      %v322 = vld [vmem:[%s2] sm:$0xff]
      %v323 = vld [vmem:[%s2 + $0x8] sm:$0xff]
      %v324 = vld [vmem:[%s2 + $0x10] sm:$0xff]
      %v325 = vld [vmem:[%s2 + $0x18] sm:$0xff]
      %v326 = vld [vmem:[%s2 + $0x20] sm:$0xff]
      %v327 = vld [vmem:[%s2 + $0x28] sm:$0xff]
      %v328 = vld [vmem:[%s2 + $0x30] sm:$0xff]
      %v329 = vld [vmem:[%s2 + $0x38] sm:$0xff]
      %v330 = vld [vmem:[%s2 + $0x40] sm:$0xff]
      %v331 = vld [vmem:[%s2 + $0x48] sm:$0xff]
      %v332 = vld [vmem:[%s2 + $0x50] sm:$0xff]
      %v333 = vld [vmem:[%s2 + $0x58] sm:$0xff]
      %v334 = vld [vmem:[%s2 + $0x60] sm:$0xff]
      %v335 = vld [vmem:[%s2 + $0x68] sm:$0xff]
      %v336 = vld [vmem:[%s2 + $0x70] sm:$0xff]
      %v337 = vld [vmem:[%s2 + $0x78] sm:$0xff]
      %v338 = vld [vmem:[%s2 + $0x80] sm:$0xff]
      %v339 = vld [vmem:[%s2 + $0x88] sm:$0xff]
      %v340 = vld [vmem:[%s2 + $0x90] sm:$0xff]
      %v341 = vld [vmem:[%s2 + $0x98] sm:$0xff]
      %v342 = vld [vmem:[%s2 + $0xa0] sm:$0xff]
      %v343 = vld [vmem:[%s2 + $0xa8] sm:$0xff]
      %v344 = vld [vmem:[%s2 + $0xb0] sm:$0xff]
      %v345 = vld [vmem:[%s2 + $0xb8] sm:$0xff]
      %v346 = vld [vmem:[%s2 + $0xc0] sm:$0xff]
      %v347 = vld [vmem:[%s2 + $0xc8] sm:$0xff]
      %v348 = vld [vmem:[%s2 + $0xd0] sm:$0xff]
      %v349 = vld [vmem:[%s2 + $0xd8] sm:$0xff]
      %v350 = vld [vmem:[%s2 + $0xe0] sm:$0xff]
      %v351 = vld [vmem:[%s2 + $0xe8] sm:$0xff]
      %v352 = vld [vmem:[%s2 + $0xf0] sm:$0xff]
      %v353 = vld [vmem:[%s2 + $0xf8] sm:$0xff]
      %v356 = vcombine.high %v311, %v311
      %v358 = vunpack.c.l.s4 1966171168
      %v359 = vunpack.c.0.s8 %v358
      %v360 = vlaneseq
      %v361 = vshrl.u32 %v360, 7
      %v362 = vsub.s32 %v359, %v361
      %v363 = vrot.slane %v311, %v362
      %v365 = vunpack.c.l.s4 1966171168
      %v366 = vunpack.c.0.s8 %v365
      %v367 = vlaneseq
      %v368 = vshrl.u32 %v367, 7
      %v369 = vsub.s32 %v366, %v368
      %v370 = vrot.slane %v356, %v369
      %v371 = vcombine.high %v363, %v363
      %v372 = vcombine.high %v370, %v370
      %v374 = vunpack.c.l.s4 1966171168
      %v375 = vunpack.c.0.s8 %v374
      %v376 = vlaneseq
      %v377 = vshrl.u32 %v376, 7
      %v378 = vsub.s32 %v375, %v377
      %v379 = vrot.slane %v363, %v378
      %v381 = vunpack.c.l.s4 1966171168
      %v382 = vunpack.c.0.s8 %v381
      %v383 = vlaneseq
      %v384 = vshrl.u32 %v383, 7
      %v385 = vsub.s32 %v382, %v384
      %v386 = vrot.slane %v370, %v385
      %v388 = vunpack.c.l.s4 1966171168
      %v389 = vunpack.c.0.s8 %v388
      %v390 = vlaneseq
      %v391 = vshrl.u32 %v390, 7
      %v392 = vsub.s32 %v389, %v391
      %v393 = vrot.slane %v371, %v392
      %v395 = vunpack.c.l.s4 1966171168
      %v396 = vunpack.c.0.s8 %v395
      %v397 = vlaneseq
      %v398 = vshrl.u32 %v397, 7
      %v399 = vsub.s32 %v396, %v398
      %v400 = vrot.slane %v372, %v399
      %v401 = vcombine.high %v379, %v379
      %v402 = vcombine.high %v386, %v386
      %v403 = vcombine.high %v393, %v393
      %v404 = vcombine.high %v400, %v400
      %v405 = vcombine.high %v312, %v312
      %v407 = vunpack.c.l.s4 1966171168
      %v408 = vunpack.c.0.s8 %v407
      %v409 = vlaneseq
      %v410 = vshrl.u32 %v409, 7
      %v411 = vsub.s32 %v408, %v410
      %v412 = vrot.slane %v312, %v411
      %v414 = vunpack.c.l.s4 1966171168
      %v415 = vunpack.c.0.s8 %v414
      %v416 = vlaneseq
      %v417 = vshrl.u32 %v416, 7
      %v418 = vsub.s32 %v415, %v417
      %v419 = vrot.slane %v405, %v418
      %v420 = vcombine.high %v412, %v412
      %v421 = vcombine.high %v419, %v419
      %v423 = vunpack.c.l.s4 1966171168
      %v424 = vunpack.c.0.s8 %v423
      %v425 = vlaneseq
      %v426 = vshrl.u32 %v425, 7
      %v427 = vsub.s32 %v424, %v426
      %v428 = vrot.slane %v412, %v427
      %v430 = vunpack.c.l.s4 1966171168
      %v431 = vunpack.c.0.s8 %v430
      %v432 = vlaneseq
      %v433 = vshrl.u32 %v432, 7
      %v434 = vsub.s32 %v431, %v433
      %v435 = vrot.slane %v419, %v434
      %v437 = vunpack.c.l.s4 1966171168
      %v438 = vunpack.c.0.s8 %v437
      %v439 = vlaneseq
      %v440 = vshrl.u32 %v439, 7
      %v441 = vsub.s32 %v438, %v440
      %v442 = vrot.slane %v420, %v441
      %v444 = vunpack.c.l.s4 1966171168
      %v445 = vunpack.c.0.s8 %v444
      %v446 = vlaneseq
      %v447 = vshrl.u32 %v446, 7
      %v448 = vsub.s32 %v445, %v447
      %v449 = vrot.slane %v421, %v448
      %v450 = vcombine.high %v428, %v428
      %v451 = vcombine.high %v435, %v435
      %v452 = vcombine.high %v442, %v442
      %v453 = vcombine.high %v449, %v449
      %v454 = vlaneseq
      %v455 = vshrl.u32 %v454, 7
      %v456 = vsub.s32 0, %v455
      %v457 = vrot.slane %v379, %v456
      %v458 = vlaneseq
      %v459 = vshrl.u32 %v458, 7
      %v460 = vsub.s32 0, %v459
      %v461 = vrot.slane %v393, %v460
      %v462 = vlaneseq
      %v463 = vshrl.u32 %v462, 7
      %v464 = vsub.s32 0, %v463
      %v465 = vrot.slane %v401, %v464
      %v466 = vlaneseq
      %v467 = vshrl.u32 %v466, 7
      %v468 = vsub.s32 0, %v467
      %v469 = vrot.slane %v403, %v468
      %v470 = vlaneseq
      %v471 = vshrl.u32 %v470, 7
      %v472 = vsub.s32 0, %v471
      %v473 = vrot.slane %v386, %v472
      %v474 = vlaneseq
      %v475 = vshrl.u32 %v474, 7
      %v476 = vsub.s32 0, %v475
      %v477 = vrot.slane %v400, %v476
      %v478 = vlaneseq
      %v479 = vshrl.u32 %v478, 7
      %v480 = vsub.s32 0, %v479
      %v481 = vrot.slane %v402, %v480
      %v482 = vlaneseq
      %v483 = vshrl.u32 %v482, 7
      %v484 = vsub.s32 0, %v483
      %v485 = vrot.slane %v404, %v484
      %v486 = vlaneseq
      %v487 = vshrl.u32 %v486, 7
      %v488 = vsub.s32 0, %v487
      %v489 = vrot.slane %v428, %v488
      %v490 = vlaneseq
      %v491 = vshrl.u32 %v490, 7
      %v492 = vsub.s32 0, %v491
      %v493 = vrot.slane %v442, %v492
      %v494 = vlaneseq
      %v495 = vshrl.u32 %v494, 7
      %v496 = vsub.s32 0, %v495
      %v497 = vrot.slane %v450, %v496
      %v498 = vlaneseq
      %v499 = vshrl.u32 %v498, 7
      %v500 = vsub.s32 0, %v499
      %v501 = vrot.slane %v452, %v500
      %v502 = vlaneseq
      %v503 = vshrl.u32 %v502, 7
      %v504 = vsub.s32 0, %v503
      %v505 = vrot.slane %v435, %v504
      %v506 = vlaneseq
      %v507 = vshrl.u32 %v506, 7
      %v508 = vsub.s32 0, %v507
      %v509 = vrot.slane %v449, %v508
      %v510 = vlaneseq
      %v511 = vshrl.u32 %v510, 7
      %v512 = vsub.s32 0, %v511
      %v513 = vrot.slane %v451, %v512
      %v514 = vlaneseq
      %v515 = vshrl.u32 %v514, 7
      %v516 = vsub.s32 0, %v515
      %v517 = vrot.slane %v453, %v516
      %v534 = vmul.f32 %v322, %v457
      %v535 = vmul.f32 %v323, %v457
      %v536 = vmul.f32 %v324, %v461
      %v537 = vmul.f32 %v325, %v461
      %v538 = vmul.f32 %v326, %v465
      %v539 = vmul.f32 %v327, %v465
      %v540 = vmul.f32 %v328, %v469
      %v541 = vmul.f32 %v329, %v469
      %v542 = vmul.f32 %v330, %v473
      %v543 = vmul.f32 %v331, %v473
      %v544 = vmul.f32 %v332, %v477
      %v545 = vmul.f32 %v333, %v477
      %v546 = vmul.f32 %v334, %v481
      %v547 = vmul.f32 %v335, %v481
      %v548 = vmul.f32 %v336, %v485
      %v549 = vmul.f32 %v337, %v485
      %v550 = vmul.f32 %v338, %v489
      %v551 = vmul.f32 %v339, %v489
      %v552 = vmul.f32 %v340, %v493
      %v553 = vmul.f32 %v341, %v493
      %v554 = vmul.f32 %v342, %v497
      %v555 = vmul.f32 %v343, %v497
      %v556 = vmul.f32 %v344, %v501
      %v557 = vmul.f32 %v345, %v501
      %v558 = vmul.f32 %v346, %v505
      %v559 = vmul.f32 %v347, %v505
      %v560 = vmul.f32 %v348, %v509
      %v561 = vmul.f32 %v349, %v509
      %v562 = vmul.f32 %v350, %v513
      %v563 = vmul.f32 %v351, %v513
      %v564 = vmul.f32 %v352, %v517
      %v565 = vmul.f32 %v353, %v517
      %v566 = vadd.f32 %v534, %v536
      %v567 = vadd.f32 %v566, %v538
      %v568 = vadd.f32 %v567, %v540
      %v569 = vadd.f32 %v568, %v542
      %v570 = vadd.f32 %v569, %v544
      %v571 = vadd.f32 %v570, %v546
      %v572 = vadd.f32 %v571, %v548
      %v573 = vadd.f32 %v572, %v550
      %v574 = vadd.f32 %v573, %v552
      %v575 = vadd.f32 %v574, %v554
      %v576 = vadd.f32 %v575, %v556
      %v577 = vadd.f32 %v576, %v558
      %v578 = vadd.f32 %v577, %v560
      %v579 = vadd.f32 %v578, %v562
      %v580 = vadd.f32 %v579, %v564
      %v581 = vadd.f32 %v535, %v537
      %v582 = vadd.f32 %v581, %v539
      %v583 = vadd.f32 %v582, %v541
      %v584 = vadd.f32 %v583, %v543
      %v585 = vadd.f32 %v584, %v545
      %v586 = vadd.f32 %v585, %v547
      %v587 = vadd.f32 %v586, %v549
      %v588 = vadd.f32 %v587, %v551
      %v589 = vadd.f32 %v588, %v553
      %v590 = vadd.f32 %v589, %v555
      %v591 = vadd.f32 %v590, %v557
      %v592 = vadd.f32 %v591, %v559
      %v593 = vadd.f32 %v592, %v561
      %v594 = vadd.f32 %v593, %v563
      %v595 = vadd.f32 %v594, %v565
      %v596 = vadd.f32 %v320, %v580
      %v597 = vadd.f32 %v321, %v595
      %v598 = vmul.f32 %v596, %v596
      %v599 = vmul.f32 %v597, %v597
      %v600 = vmul.f32 %v596, %v598
      %v601 = vmul.f32 %v597, %v599
      %v602 = vmul.f32 %v600, 0.044715
      %v603 = vmul.f32 %v601, 0.044715
      %v604 = vadd.f32 %v596, %v602
      %v605 = vadd.f32 %v597, %v603
      %v606 = vmul.f32 %v604, 0.7978846
      %v607 = vmul.f32 %v605, 0.7978846
      %v608 = vtanh.pop %v606
      %v609 = vtanh.pop %v607
      %v610 = vadd.f32 %v608, 1.0
      %v611 = vadd.f32 %v609, 1.0
      %v612 = vmul.f32 %v610, 0.5
      %v613 = vmul.f32 %v611, 0.5
      %v614 = vmul.f32 %v596, %v612
      %v615 = vmul.f32 %v597, %v613
      %v616 = vpack.c.bf16 %v615, %v614
      %v617 = vld [vmem:[%s4] sm:$0xff]
      %v618 = vld [vmem:[%s4 + $0x8] sm:$0xff]
      %v619 = vld [vmem:[%s4 + $0x10] sm:$0xff]
      %v620 = vld [vmem:[%s4 + $0x18] sm:$0xff]
      %v621 = vld [vmem:[%s4 + $0x20] sm:$0xff]
      %v622 = vld [vmem:[%s4 + $0x28] sm:$0xff]
      %v623 = vld [vmem:[%s4 + $0x30] sm:$0xff]
      %v624 = vld [vmem:[%s4 + $0x38] sm:$0xff]
      %v625 = vld [vmem:[%s4 + $0x40] sm:$0xff]
      %v626 = vld [vmem:[%s4 + $0x48] sm:$0xff]
      %v627 = vld [vmem:[%s4 + $0x50] sm:$0xff]
      %v628 = vld [vmem:[%s4 + $0x58] sm:$0xff]
      %v629 = vld [vmem:[%s4 + $0x60] sm:$0xff]
      %v630 = vld [vmem:[%s4 + $0x68] sm:$0xff]
      %v631 = vld [vmem:[%s4 + $0x70] sm:$0xff]
      %v632 = vld [vmem:[%s4 + $0x78] sm:$0xff]
      %v633 = vld [vmem:[%s5] sm:$0x3]
      %v635 = vlaneseq
      %v636 = vshrl.u32 %v635, 7
      %v637 = vsub.s32 0, %v636
      %v638 = vrot.slane %v633, %v637
      %v639 = vlaneseq
      %v640 = vshrl.u32 %v639, 7
      %v641 = vsub.s32 1, %v640
      %v642 = vrot.slane %v633, %v641
      %v661 = vunpack.c.l.b16 %v617
      %v662 = vunpack.c.h.b16 %v617
      %v663 = vunpack.c.l.b16 %v618
      %v664 = vunpack.c.h.b16 %v618
      %v665 = vunpack.c.l.b16 %v619
      %v666 = vunpack.c.h.b16 %v619
      %v667 = vunpack.c.l.b16 %v620
      %v668 = vunpack.c.h.b16 %v620
      %v669 = vunpack.c.l.b16 %v621
      %v670 = vunpack.c.h.b16 %v621
      %v671 = vunpack.c.l.b16 %v622
      %v672 = vunpack.c.h.b16 %v622
      %v673 = vunpack.c.l.b16 %v623
      %v674 = vunpack.c.h.b16 %v623
      %v675 = vunpack.c.l.b16 %v624
      %v676 = vunpack.c.h.b16 %v624
      %v677 = vunpack.c.l.b16 %v625
      %v678 = vunpack.c.h.b16 %v625
      %v679 = vunpack.c.l.b16 %v626
      %v680 = vunpack.c.h.b16 %v626
      %v681 = vunpack.c.l.b16 %v627
      %v682 = vunpack.c.h.b16 %v627
      %v683 = vunpack.c.l.b16 %v628
      %v684 = vunpack.c.h.b16 %v628
      %v685 = vunpack.c.l.b16 %v629
      %v686 = vunpack.c.h.b16 %v629
      %v687 = vunpack.c.l.b16 %v630
      %v688 = vunpack.c.h.b16 %v630
      %v689 = vunpack.c.l.b16 %v631
      %v690 = vunpack.c.h.b16 %v631
      %v691 = vunpack.c.l.b16 %v632
      %v692 = vunpack.c.h.b16 %v632
      %v693 = vpack.c.b16 %v663, %v661
      %v694 = vpack.c.b16 %v664, %v662
      %v695 = vpack.c.b16 %v667, %v665
      %v696 = vpack.c.b16 %v668, %v666
      %v697 = vpack.c.b16 %v671, %v669
      %v698 = vpack.c.b16 %v672, %v670
      %v699 = vpack.c.b16 %v675, %v673
      %v700 = vpack.c.b16 %v676, %v674
      %v701 = vpack.c.b16 %v679, %v677
      %v702 = vpack.c.b16 %v680, %v678
      %v703 = vpack.c.b16 %v683, %v681
      %v704 = vpack.c.b16 %v684, %v682
      %v705 = vpack.c.b16 %v687, %v685
      %v706 = vpack.c.b16 %v688, %v686
      %v707 = vpack.c.b16 %v691, %v689
      %v708 = vpack.c.b16 %v692, %v690
      %725 = vmatprep.subr.bf16.mxu0 %v708
      %726 = vmatpush1.bf16.msra.mxu0 %v707
      %727 = vmatprep.subr.bf16.mxu0 %v706
      %728 = vmatpush1.bf16.msra.mxu0 %v705
      %729 = vmatprep.subr.bf16.mxu0 %v704
      %730 = vmatpush1.bf16.msra.mxu0 %v703
      %731 = vmatprep.subr.bf16.mxu0 %v702
      %732 = vmatpush1.bf16.msra.mxu0 %v701
      %733 = vmatprep.subr.bf16.mxu0 %v700
      %734 = vmatpush1.bf16.msra.mxu0 %v699
      %735 = vmatprep.subr.bf16.mxu0 %v698
      %736 = vmatpush1.bf16.msra.mxu0 %v697
      %737 = vmatprep.subr.bf16.mxu0 %v696
      %738 = vmatpush1.bf16.msra.mxu0 %v695
      %739 = vmatprep.subr.bf16.mxu0 %v694
      %740 = vmatpush1.bf16.msra.mxu0 %v693
      %741 = vmatprep.subr.bf16.mxu0 0
      %742 = vmatpush2.bf16.msra.mxu0 0
      %743 = vmatprep.subr.bf16.mxu0 0
      %744 = vmatpush2.bf16.msra.mxu0 0
      %745 = vmatprep.subr.bf16.mxu0 0
      %746 = vmatpush2.bf16.msra.mxu0 0
      %747 = vmatprep.subr.bf16.mxu0 0
      %748 = vmatpush2.bf16.msra.mxu0 0
      %749 = vmatprep.subr.bf16.mxu0 0
      %750 = vmatpush2.bf16.msra.mxu0 0
      %751 = vmatprep.subr.bf16.mxu0 0
      %752 = vmatpush2.bf16.msra.mxu0 0
      %753 = vmatprep.subr.bf16.mxu0 0
      %754 = vmatpush2.bf16.msra.mxu0 0
      %755 = vmatprep.subr.bf16.mxu0 0
      %756 = vmatpush2.bf16.msra.mxu0 0
      %757 = vmatprep.mubr.bf16.mxu0 0
      %758 = vmatmul.mubr.bf16.gmra.mxu0 %v616
      %v759 = vpop.f32.mrf.mxu0
      %v760 = vadd.f32 %v638, %v759
      %v761 = vpop.f32.mrf.mxu0
      %v762 = vadd.f32 %v642, %v761
      %v763 = vpop.f32.mrf.mxu0
      %v764 = vadd.f32 %v638, %v763
      %v765 = vpop.f32.mrf.mxu0
      %v766 = vadd.f32 %v642, %v765
      %767 = vdwg.mxu0
      %v768 = vxor.u32 %v762, 2147483648
      %v769 = vxor.u32 %v766, 2147483648
      %v770 = vmul.f32 %v768, 1.442695
      %v771 = vpow.pop %v770
      %v772 = vmul.f32 %v769, 1.442695
      %v773 = vpow.pop %v772
      %v774 = vadd.f32 %v771, 1.0
      %v775 = vadd.f32 %v773, 1.0
      %v776 = vrcp.pop %v774
      %v777 = vmul.f32 1.0, %v776
      %v778 = vrcp.pop %v775
      %v779 = vmul.f32 1.0, %v778
      %v780 = vmul.f32 %v760, %v777
      %v781 = vmul.f32 %v764, %v779
      %v782 = vadd.f32 %v780, %v311
      %v783 = vadd.f32 %v781, %v312
      %784 = vadd.xlane.f32.xlu0 %v782
      %v785 = vpop.xlane.xlu0 %784
      %786 = vadd.xlane.f32.xlu0 %v783
      %v787 = vpop.xlane.xlu0 %786
      %v788 = vrcp.pop 128.0
      %v789 = vmul.f32 %v785, %v788
      %v790 = vmul.f32 %v787, %v788
      %v791 = vsub.f32 %v782, %v789
      %v792 = vsub.f32 %v783, %v790
      %v793 = vmul.f32 %v791, %v791
      %v794 = vmul.f32 %v792, %v792
      %795 = vadd.xlane.f32.xlu0 %v793
      %v796 = vpop.xlane.xlu0 %795
      %797 = vadd.xlane.f32.xlu0 %v794
      %v798 = vpop.xlane.xlu0 %797
      %v799 = vmul.f32 %v796, %v788
      %v800 = vmul.f32 %v798, %v788
      %v801 = vadd.f32 %v799, 1e-05
      %v802 = vadd.f32 %v800, 1e-05
      %v803 = vrsqrt.pop %v801
      %v804 = vrsqrt.pop %v802
      %v805 = vmul.f32 %v791, %v803
      %v806 = vmul.f32 %v792, %v804
      %v807 = vld [vmem:[%s6] sm:$0x1]
      %v809 = vlaneseq
      %v810 = vshrl.u32 %v809, 7
      %v811 = vsub.s32 0, %v810
      %v812 = vrot.slane %v807, %v811
      %v814 = vmul.f32 %v805, %v812
      %v815 = vmul.f32 %v806, %v812
      %v816 = vld [vmem:[%s7] sm:$0x1]
      %v818 = vlaneseq
      %v819 = vshrl.u32 %v818, 7
      %v820 = vsub.s32 0, %v819
      %v821 = vrot.slane %v816, %v820
      %v823 = vadd.f32 %v814, %v821
      %v824 = vadd.f32 %v815, %v821
      %v825 = vadd.f32 %v311, %v823
      %v826 = vadd.f32 %v312, %v824
      %v827 = vpack.c.bf16 %v826, %v825
      %v829 = vunpack.c.l.b16 %v827
      %v830 = vunpack.c.h.b16 %v827
      %v831 = vpack.c.b16 %v829, %v829
      %v832 = vpack.c.b16 %v830, %v830
      %835 = vst [vmem:[%s305] sm:$0xf] %v831
      %836 = vst [vmem:[%s305 + $0x4] sm:$0xf] %v832
      %p837 = scmp.lt.s32.totalorder %s19, 1
      %s838 = scalar_select %p837, %s19, 1
      %s839 = smul.addr %s838, 2
      %s840 = smul.addr %s839, 4
      %s841 = scalar_lea.vmem %s8, %s840
      // Predicated region
      $region53: #{_lambda_.3} parent=51 // pred_check
        %p842 = pneg %p210
      $region54: #{_lambda_.3} parent=51 // pred_check_branch
        %844 = sbr.rel (%p842) target = $region56
      $region55: #{_lambda_.3} parent=51 // pred_region
        _
      $region56: #{_lambda_.3} parent=51 // pred_fallthru
        _
    $region52: #{_lambda_.3} parent=5 // pred_fallthru
      _
    %p845 = scmp.le.s32.totalorder 2, %s14
    // Predicated region
    $region57: #{_lambda_.3} parent=5 // pred_check
      %p846 = pneg %p845
    $region58: #{_lambda_.3} parent=5 // pred_check_branch
      %848 = sbr.rel (%p846) target = $region60
    $region59: #{_lambda_.3} parent=5 // pred_region
      %s849 = ssub.s32 %s14, 2
      // Predicated region
      $region61: #{_lambda_.3} parent=59 // pred_check
        %p850 = pneg %p216
      $region62: #{_lambda_.3} parent=59 // pred_check_branch
        %852 = sbr.rel (%p850) target = $region64
      $region63: #{_lambda_.3} parent=59 // pred_region
        %p853 = scmp.lt.s32.totalorder %s20, 1
        %s854 = scalar_select %p853, %s20, 1
        %s855 = smul.addr %s854, 2
        %s856 = smul.addr %s855, 4
        %s857 = scalar_lea.vmem %s8, %s856
      $region64: #{_lambda_.3} parent=59 // pred_fallthru
        _
    $region60: #{_lambda_.3} parent=5 // pred_fallthru
      _
  $region6: #{_lambda_.3} parent=0 // loop_footer
    %s18 = sadd.s32 1, %s14
  $region7: #{_lambda_.3} parent=0 // loop_footer_branch
    %13 = sbr.rel target = $region3
  $region8: #{_lambda_.3} parent=0 // loop_exit
    _

// kernel: _lambda_.5
$region0: #{_lambda_.5}
  #allocation0 [shape = 'u32[]', space=smem, size = 0x4, offset = 0x4, fixed_abs, tag = 'smem constant byte address 0x4 - core index']
  #allocation1 [shape = 'u32[144,128]{1,0:T(1,128)}', space=vmem, size = 0x12000, scoped, tag = 'internal scratch']
  %s0 = inlined_call_operand.vmem [shape: bf16[2,16,128], index: 0, kind: input, shape index: {}]
  %s1 = inlined_call_operand.vmem [shape: bf16[2,16,128], index: 1, kind: input, shape index: {}]
  %s2 = inlined_call_operand.vmem [shape: f32[2,16], index: 2, kind: input, shape index: {}]
  %s3 = inlined_call_operand.vmem [shape: bf16[16,128], index: 3, kind: input, shape index: {}]
  %s4 = inlined_call_operand.vmem [shape: f32[1,128], index: 4, kind: input, shape index: {}, may-alias: {4,11,13}]
  %s5 = inlined_call_operand.vmem [shape: bf16[128,256], index: 5, kind: input, shape index: {}]
  %s6 = inlined_call_operand.vmem [shape: f32[1,256], index: 6, kind: input, shape index: {}, may-alias: {6,9}]
  %s7 = inlined_call_operand.vmem [shape: bf16[128,256], index: 7, kind: input, shape index: {}]
  %s8 = inlined_call_operand.vmem [shape: bf16[128,256], index: 8, kind: input, shape index: {}]
  %s9 = inlined_call_operand.vmem [shape: f32[1,256], index: 9, kind: input, shape index: {}, may-alias: {6,9}]
  %s10 = inlined_call_operand.vmem [shape: bf16[256,128], index: 10, kind: input, shape index: {}]
  %s11 = inlined_call_operand.vmem [shape: f32[1,128], index: 11, kind: input, shape index: {}, may-alias: {4,11,13}]
  %s12 = inlined_call_operand.vmem [shape: f32[1,128], index: 12, kind: input, shape index: {}]
  %s13 = inlined_call_operand.vmem [shape: f32[1,128], index: 13, kind: input, shape index: {}, may-alias: {4,11,13}]
  %s14 = inlined_call_operand.hbm [shape: f32[2,16,128], index: 14, kind: output, shape index: {}]
  %s15 = sld [smem:[#allocation0]]
  $region89: #{_lambda_.5} parent=0
    _
  %s17 = ssub.s32 1, %s15
  %s18 = scalar_select 0, %s17, %s15
  $region1: #{_lambda_.5} parent=0
    #allocation2 [shape = 'u8[16384]{0}', space=vmem, size = 0x4000, scoped, tag = 'output window, operand 0']
    #allocation3 [shape = 's32[2]{0}', space=sflag, size = 0x8, scoped, tag = 'scoped memory for _lambda_.5']
    %19 = vsyncpa [#allocation3], 0
    %s20 = scalar_lea.sflag [#allocation3], 1
    %21 = vsyncpa %s20, 0
    loop: start=0, step=1, limit=4
    $region2: #{_lambda_.5} parent=1 // loop_pre_header
      _
    $region3: #{_lambda_.5} parent=1 // loop_header
      %s23 = sphi 0, %s27
      %p24 = scmp.ge.s32.totalorder %s23, 4
      %s33 = sphi 0, %s35
      %s36 = sphi 0, %s33
      %s37 = sphi 0, %s36
      %s53 = sphi 0, %s37
      %s59 = sphi 0, %s61
      %s62 = sphi 0, %s59
      %s63 = sphi 0, %s62
      %s79 = sphi 0, %s63
      %s83 = sphi 0, %s83
      %s85 = sphi 0, %s83
      %s86 = sphi 0, %s85
      %s100 = sphi 0, %s86
      %s104 = sphi 0, %s104
      %s106 = sphi 0, %s104
      %s107 = sphi 0, %s106
      %s121 = sphi 0, %s107
      %s125 = sphi 0, %s125
      %s127 = sphi 0, %s125
      %s128 = sphi 0, %s127
      %s142 = sphi 0, %s128
      %s146 = sphi 0, %s146
      %s148 = sphi 0, %s146
      %s149 = sphi 0, %s148
      %s163 = sphi 0, %s149
      %s167 = sphi 0, %s167
      %s169 = sphi 0, %s167
      %s170 = sphi 0, %s169
      %s184 = sphi 0, %s170
      %s188 = sphi 0, %s188
      %s190 = sphi 0, %s188
      %s191 = sphi 0, %s190
      %s205 = sphi 0, %s191
      %s209 = sphi 0, %s209
      %s211 = sphi 0, %s209
      %s212 = sphi 0, %s211
      %s226 = sphi 0, %s212
      %s230 = sphi 0, %s230
      %s232 = sphi 0, %s230
      %s233 = sphi 0, %s232
      %s247 = sphi 0, %s233
      %s251 = sphi 0, %s251
      %s253 = sphi 0, %s251
      %s254 = sphi 0, %s253
      %s268 = sphi 0, %s254
      %s272 = sphi 0, %s272
      %s274 = sphi 0, %s272
      %s275 = sphi 0, %s274
      %s289 = sphi 0, %s275
      %s293 = sphi 0, %s293
      %s295 = sphi 0, %s293
      %s296 = sphi 0, %s295
      %s310 = sphi 0, %s296
      %s314 = sphi 0, %s314
      %s316 = sphi 0, %s314
      %s317 = sphi 0, %s316
      %s331 = sphi 0, %s317
      %s337 = sphi 0, %s339
      %s340 = sphi 0, %s337
      %s341 = sphi 0, %s340
      %s357 = sphi 0, %s341
    $region4: #{_lambda_.5} parent=1 // loop_header_branch
      %26 = sbr.rel (%p24) target = $region8
    $region5: #{_lambda_.5} parent=1 // loop_body
      %s28 = ssub.s32 %s23, 1
      %s29 = ssub.s32 %s23, 2
      %s30 = sadd.s32 %s23, 1
      %s31 = ssub.s32 %s23, %s30
      %p32 = scmp.eq.s32.totalorder %s31, 0
      %s34 = sadd.s32 %s33, 1
      %s35 = scalar_select %p32, %s33, %s34
      %p38 = pneg %p32
      %p39 = scmp.eq.s32.totalorder %s23, 1
      %p40 = por %p38, %p39
      %p41 = scmp.ne.s32.totalorder %s33, %s36
      %p42 = scmp.eq.s32.totalorder %s23, 0
      %p43 = por %p41, %p42
      %p44 = scmp.ne.s32.totalorder %s33, %s36
      %p45 = scmp.eq.s32.totalorder %s28, 1
      %p46 = por %p44, %p45
      %p47 = scmp.ne.s32.totalorder %s36, %s37
      %p48 = scmp.eq.s32.totalorder %s28, 0
      %p49 = por %p47, %p48
      %p50 = scmp.ne.s32.totalorder %s36, %s37
      %p51 = scmp.eq.s32.totalorder %s29, 1
      %p52 = por %p50, %p51
      %p54 = scmp.ne.s32.totalorder %s37, %s53
      %p55 = scmp.eq.s32.totalorder %s29, 0
      %p56 = por %p54, %p55
      %s57 = ssub.s32 %s23, %s30
      %p58 = scmp.eq.s32.totalorder %s57, 0
      %s60 = sadd.s32 %s59, 1
      %s61 = scalar_select %p58, %s59, %s60
      %p64 = pneg %p58
      %p65 = scmp.eq.s32.totalorder %s23, 1
      %p66 = por %p64, %p65
      %p67 = scmp.ne.s32.totalorder %s59, %s62
      %p68 = scmp.eq.s32.totalorder %s23, 0
      %p69 = por %p67, %p68
      %p70 = scmp.ne.s32.totalorder %s59, %s62
      %p71 = scmp.eq.s32.totalorder %s28, 1
      %p72 = por %p70, %p71
      %p73 = scmp.ne.s32.totalorder %s62, %s63
      %p74 = scmp.eq.s32.totalorder %s28, 0
      %p75 = por %p73, %p74
      %p76 = scmp.ne.s32.totalorder %s62, %s63
      %p77 = scmp.eq.s32.totalorder %s29, 1
      %p78 = por %p76, %p77
      %p80 = scmp.ne.s32.totalorder %s63, %s79
      %p81 = scmp.eq.s32.totalorder %s29, 0
      %p82 = por %p80, %p81
      %s84 = sadd.s32 %s83, 1
      %p87 = scmp.eq.s32.totalorder %s23, 1
      %p88 = scmp.ne.s32.totalorder %s83, %s85
      %p89 = scmp.eq.s32.totalorder %s23, 0
      %p90 = por %p88, %p89
      %p91 = scmp.ne.s32.totalorder %s83, %s85
      %p92 = scmp.eq.s32.totalorder %s28, 1
      %p93 = por %p91, %p92
      %p94 = scmp.ne.s32.totalorder %s85, %s86
      %p95 = scmp.eq.s32.totalorder %s28, 0
      %p96 = por %p94, %p95
      %p97 = scmp.ne.s32.totalorder %s85, %s86
      %p98 = scmp.eq.s32.totalorder %s29, 1
      %p99 = por %p97, %p98
      %p101 = scmp.ne.s32.totalorder %s86, %s100
      %p102 = scmp.eq.s32.totalorder %s29, 0
      %p103 = por %p101, %p102
      %s105 = sadd.s32 %s104, 1
      %p108 = scmp.eq.s32.totalorder %s23, 1
      %p109 = scmp.ne.s32.totalorder %s104, %s106
      %p110 = scmp.eq.s32.totalorder %s23, 0
      %p111 = por %p109, %p110
      %p112 = scmp.ne.s32.totalorder %s104, %s106
      %p113 = scmp.eq.s32.totalorder %s28, 1
      %p114 = por %p112, %p113
      %p115 = scmp.ne.s32.totalorder %s106, %s107
      %p116 = scmp.eq.s32.totalorder %s28, 0
      %p117 = por %p115, %p116
      %p118 = scmp.ne.s32.totalorder %s106, %s107
      %p119 = scmp.eq.s32.totalorder %s29, 1
      %p120 = por %p118, %p119
      %p122 = scmp.ne.s32.totalorder %s107, %s121
      %p123 = scmp.eq.s32.totalorder %s29, 0
      %p124 = por %p122, %p123
      %s126 = sadd.s32 %s125, 1
      %p129 = scmp.eq.s32.totalorder %s23, 1
      %p130 = scmp.ne.s32.totalorder %s125, %s127
      %p131 = scmp.eq.s32.totalorder %s23, 0
      %p132 = por %p130, %p131
      %p133 = scmp.ne.s32.totalorder %s125, %s127
      %p134 = scmp.eq.s32.totalorder %s28, 1
      %p135 = por %p133, %p134
      %p136 = scmp.ne.s32.totalorder %s127, %s128
      %p137 = scmp.eq.s32.totalorder %s28, 0
      %p138 = por %p136, %p137
      %p139 = scmp.ne.s32.totalorder %s127, %s128
      %p140 = scmp.eq.s32.totalorder %s29, 1
      %p141 = por %p139, %p140
      %p143 = scmp.ne.s32.totalorder %s128, %s142
      %p144 = scmp.eq.s32.totalorder %s29, 0
      %p145 = por %p143, %p144
      %s147 = sadd.s32 %s146, 1
      %p150 = scmp.eq.s32.totalorder %s23, 1
      %p151 = scmp.ne.s32.totalorder %s146, %s148
      %p152 = scmp.eq.s32.totalorder %s23, 0
      %p153 = por %p151, %p152
      %p154 = scmp.ne.s32.totalorder %s146, %s148
      %p155 = scmp.eq.s32.totalorder %s28, 1
      %p156 = por %p154, %p155
      %p157 = scmp.ne.s32.totalorder %s148, %s149
      %p158 = scmp.eq.s32.totalorder %s28, 0
      %p159 = por %p157, %p158
      %p160 = scmp.ne.s32.totalorder %s148, %s149
      %p161 = scmp.eq.s32.totalorder %s29, 1
      %p162 = por %p160, %p161
      %p164 = scmp.ne.s32.totalorder %s149, %s163
      %p165 = scmp.eq.s32.totalorder %s29, 0
      %p166 = por %p164, %p165
      %s168 = sadd.s32 %s167, 1
      %p171 = scmp.eq.s32.totalorder %s23, 1
      %p172 = scmp.ne.s32.totalorder %s167, %s169
      %p173 = scmp.eq.s32.totalorder %s23, 0
      %p174 = por %p172, %p173
      %p175 = scmp.ne.s32.totalorder %s167, %s169
      %p176 = scmp.eq.s32.totalorder %s28, 1
      %p177 = por %p175, %p176
      %p178 = scmp.ne.s32.totalorder %s169, %s170
      %p179 = scmp.eq.s32.totalorder %s28, 0
      %p180 = por %p178, %p179
      %p181 = scmp.ne.s32.totalorder %s169, %s170
      %p182 = scmp.eq.s32.totalorder %s29, 1
      %p183 = por %p181, %p182
      %p185 = scmp.ne.s32.totalorder %s170, %s184
      %p186 = scmp.eq.s32.totalorder %s29, 0
      %p187 = por %p185, %p186
      %s189 = sadd.s32 %s188, 1
      %p192 = scmp.eq.s32.totalorder %s23, 1
      %p193 = scmp.ne.s32.totalorder %s188, %s190
      %p194 = scmp.eq.s32.totalorder %s23, 0
      %p195 = por %p193, %p194
      %p196 = scmp.ne.s32.totalorder %s188, %s190
      %p197 = scmp.eq.s32.totalorder %s28, 1
      %p198 = por %p196, %p197
      %p199 = scmp.ne.s32.totalorder %s190, %s191
      %p200 = scmp.eq.s32.totalorder %s28, 0
      %p201 = por %p199, %p200
      %p202 = scmp.ne.s32.totalorder %s190, %s191
      %p203 = scmp.eq.s32.totalorder %s29, 1
      %p204 = por %p202, %p203
      %p206 = scmp.ne.s32.totalorder %s191, %s205
      %p207 = scmp.eq.s32.totalorder %s29, 0
      %p208 = por %p206, %p207
      %s210 = sadd.s32 %s209, 1
      %p213 = scmp.eq.s32.totalorder %s23, 1
      %p214 = scmp.ne.s32.totalorder %s209, %s211
      %p215 = scmp.eq.s32.totalorder %s23, 0
      %p216 = por %p214, %p215
      %p217 = scmp.ne.s32.totalorder %s209, %s211
      %p218 = scmp.eq.s32.totalorder %s28, 1
      %p219 = por %p217, %p218
      %p220 = scmp.ne.s32.totalorder %s211, %s212
      %p221 = scmp.eq.s32.totalorder %s28, 0
      %p222 = por %p220, %p221
      %p223 = scmp.ne.s32.totalorder %s211, %s212
      %p224 = scmp.eq.s32.totalorder %s29, 1
      %p225 = por %p223, %p224
      %p227 = scmp.ne.s32.totalorder %s212, %s226
      %p228 = scmp.eq.s32.totalorder %s29, 0
      %p229 = por %p227, %p228
      %s231 = sadd.s32 %s230, 1
      %p234 = scmp.eq.s32.totalorder %s23, 1
      %p235 = scmp.ne.s32.totalorder %s230, %s232
      %p236 = scmp.eq.s32.totalorder %s23, 0
      %p237 = por %p235, %p236
      %p238 = scmp.ne.s32.totalorder %s230, %s232
      %p239 = scmp.eq.s32.totalorder %s28, 1
      %p240 = por %p238, %p239
      %p241 = scmp.ne.s32.totalorder %s232, %s233
      %p242 = scmp.eq.s32.totalorder %s28, 0
      %p243 = por %p241, %p242
      %p244 = scmp.ne.s32.totalorder %s232, %s233
      %p245 = scmp.eq.s32.totalorder %s29, 1
      %p246 = por %p244, %p245
      %p248 = scmp.ne.s32.totalorder %s233, %s247
      %p249 = scmp.eq.s32.totalorder %s29, 0
      %p250 = por %p248, %p249
      %s252 = sadd.s32 %s251, 1
      %p255 = scmp.eq.s32.totalorder %s23, 1
      %p256 = scmp.ne.s32.totalorder %s251, %s253
      %p257 = scmp.eq.s32.totalorder %s23, 0
      %p258 = por %p256, %p257
      %p259 = scmp.ne.s32.totalorder %s251, %s253
      %p260 = scmp.eq.s32.totalorder %s28, 1
      %p261 = por %p259, %p260
      %p262 = scmp.ne.s32.totalorder %s253, %s254
      %p263 = scmp.eq.s32.totalorder %s28, 0
      %p264 = por %p262, %p263
      %p265 = scmp.ne.s32.totalorder %s253, %s254
      %p266 = scmp.eq.s32.totalorder %s29, 1
      %p267 = por %p265, %p266
      %p269 = scmp.ne.s32.totalorder %s254, %s268
      %p270 = scmp.eq.s32.totalorder %s29, 0
      %p271 = por %p269, %p270
      %s273 = sadd.s32 %s272, 1
      %p276 = scmp.eq.s32.totalorder %s23, 1
      %p277 = scmp.ne.s32.totalorder %s272, %s274
      %p278 = scmp.eq.s32.totalorder %s23, 0
      %p279 = por %p277, %p278
      %p280 = scmp.ne.s32.totalorder %s272, %s274
      %p281 = scmp.eq.s32.totalorder %s28, 1
      %p282 = por %p280, %p281
      %p283 = scmp.ne.s32.totalorder %s274, %s275
      %p284 = scmp.eq.s32.totalorder %s28, 0
      %p285 = por %p283, %p284
      %p286 = scmp.ne.s32.totalorder %s274, %s275
      %p287 = scmp.eq.s32.totalorder %s29, 1
      %p288 = por %p286, %p287
      %p290 = scmp.ne.s32.totalorder %s275, %s289
      %p291 = scmp.eq.s32.totalorder %s29, 0
      %p292 = por %p290, %p291
      %s294 = sadd.s32 %s293, 1
      %p297 = scmp.eq.s32.totalorder %s23, 1
      %p298 = scmp.ne.s32.totalorder %s293, %s295
      %p299 = scmp.eq.s32.totalorder %s23, 0
      %p300 = por %p298, %p299
      %p301 = scmp.ne.s32.totalorder %s293, %s295
      %p302 = scmp.eq.s32.totalorder %s28, 1
      %p303 = por %p301, %p302
      %p304 = scmp.ne.s32.totalorder %s295, %s296
      %p305 = scmp.eq.s32.totalorder %s28, 0
      %p306 = por %p304, %p305
      %p307 = scmp.ne.s32.totalorder %s295, %s296
      %p308 = scmp.eq.s32.totalorder %s29, 1
      %p309 = por %p307, %p308
      %p311 = scmp.ne.s32.totalorder %s296, %s310
      %p312 = scmp.eq.s32.totalorder %s29, 0
      %p313 = por %p311, %p312
      %s315 = sadd.s32 %s314, 1
      %p318 = scmp.eq.s32.totalorder %s23, 1
      %p319 = scmp.ne.s32.totalorder %s314, %s316
      %p320 = scmp.eq.s32.totalorder %s23, 0
      %p321 = por %p319, %p320
      %p322 = scmp.ne.s32.totalorder %s314, %s316
      %p323 = scmp.eq.s32.totalorder %s28, 1
      %p324 = por %p322, %p323
      %p325 = scmp.ne.s32.totalorder %s316, %s317
      %p326 = scmp.eq.s32.totalorder %s28, 0
      %p327 = por %p325, %p326
      %p328 = scmp.ne.s32.totalorder %s316, %s317
      %p329 = scmp.eq.s32.totalorder %s29, 1
      %p330 = por %p328, %p329
      %p332 = scmp.ne.s32.totalorder %s317, %s331
      %p333 = scmp.eq.s32.totalorder %s29, 0
      %p334 = por %p332, %p333
      %s335 = ssub.s32 %s23, %s30
      %p336 = scmp.eq.s32.totalorder %s335, 0
      %s338 = sadd.s32 %s337, 1
      %s339 = scalar_select %p336, %s337, %s338
      %p342 = pneg %p336
      %p343 = scmp.eq.s32.totalorder %s23, 1
      %p344 = por %p342, %p343
      %p345 = scmp.ne.s32.totalorder %s337, %s340
      %p346 = scmp.eq.s32.totalorder %s23, 0
      %p347 = por %p345, %p346
      %p348 = scmp.ne.s32.totalorder %s337, %s340
      %p349 = scmp.eq.s32.totalorder %s28, 1
      %p350 = por %p348, %p349
      %p351 = scmp.ne.s32.totalorder %s340, %s341
      %p352 = scmp.eq.s32.totalorder %s28, 0
      %p353 = por %p351, %p352
      %p354 = scmp.ne.s32.totalorder %s340, %s341
      %p355 = scmp.eq.s32.totalorder %s29, 1
      %p356 = por %p354, %p355
      %p358 = scmp.ne.s32.totalorder %s341, %s357
      %p359 = scmp.eq.s32.totalorder %s29, 0
      %p360 = por %p358, %p359
      %p361 = scmp.le.s32.totalorder 1, %s23
      %p362 = scmp.lt.s32.totalorder %s23, 3
      %p363 = pnand %p361, %p362
      %p364 = pneg %p363
      // Predicated region
      $region9: #{_lambda_.5} parent=5 // pred_check
        _
      $region10: #{_lambda_.5} parent=5 // pred_check_branch
        %366 = sbr.rel (%p363) target = $region12
      $region11: #{_lambda_.5} parent=5 // pred_region
        %s367 = ssub.s32 %s23, 1
        // Predicated region
        $region13: #{_lambda_.5} parent=11 // pred_check
          %p368 = pneg %p96
        $region14: #{_lambda_.5} parent=11 // pred_check_branch
          %370 = sbr.rel (%p368) target = $region16
        $region15: #{_lambda_.5} parent=11 // pred_region
          _
        $region16: #{_lambda_.5} parent=11 // pred_fallthru
          _
        // Predicated region
        $region17: #{_lambda_.5} parent=11 // pred_check
          %p371 = pneg %p117
        $region18: #{_lambda_.5} parent=11 // pred_check_branch
          %373 = sbr.rel (%p371) target = $region20
        $region19: #{_lambda_.5} parent=11 // pred_region
          _
        $region20: #{_lambda_.5} parent=11 // pred_fallthru
          _
        // Predicated region
        $region21: #{_lambda_.5} parent=11 // pred_check
          %p374 = pneg %p138
        $region22: #{_lambda_.5} parent=11 // pred_check_branch
          %376 = sbr.rel (%p374) target = $region24
        $region23: #{_lambda_.5} parent=11 // pred_region
          _
        $region24: #{_lambda_.5} parent=11 // pred_fallthru
          _
        // Predicated region
        $region25: #{_lambda_.5} parent=11 // pred_check
          %p377 = pneg %p159
        $region26: #{_lambda_.5} parent=11 // pred_check_branch
          %379 = sbr.rel (%p377) target = $region28
        $region27: #{_lambda_.5} parent=11 // pred_region
          _
        $region28: #{_lambda_.5} parent=11 // pred_fallthru
          _
        // Predicated region
        $region29: #{_lambda_.5} parent=11 // pred_check
          %p380 = pneg %p180
        $region30: #{_lambda_.5} parent=11 // pred_check_branch
          %382 = sbr.rel (%p380) target = $region32
        $region31: #{_lambda_.5} parent=11 // pred_region
          _
        $region32: #{_lambda_.5} parent=11 // pred_fallthru
          _
        // Predicated region
        $region33: #{_lambda_.5} parent=11 // pred_check
          %p383 = pneg %p201
        $region34: #{_lambda_.5} parent=11 // pred_check_branch
          %385 = sbr.rel (%p383) target = $region36
        $region35: #{_lambda_.5} parent=11 // pred_region
          _
        $region36: #{_lambda_.5} parent=11 // pred_fallthru
          _
        // Predicated region
        $region37: #{_lambda_.5} parent=11 // pred_check
          %p386 = pneg %p222
        $region38: #{_lambda_.5} parent=11 // pred_check_branch
          %388 = sbr.rel (%p386) target = $region40
        $region39: #{_lambda_.5} parent=11 // pred_region
          _
        $region40: #{_lambda_.5} parent=11 // pred_fallthru
          _
        // Predicated region
        $region41: #{_lambda_.5} parent=11 // pred_check
          %p389 = pneg %p243
        $region42: #{_lambda_.5} parent=11 // pred_check_branch
          %391 = sbr.rel (%p389) target = $region44
        $region43: #{_lambda_.5} parent=11 // pred_region
          _
        $region44: #{_lambda_.5} parent=11 // pred_fallthru
          _
        // Predicated region
        $region45: #{_lambda_.5} parent=11 // pred_check
          %p392 = pneg %p264
        $region46: #{_lambda_.5} parent=11 // pred_check_branch
          %394 = sbr.rel (%p392) target = $region48
        $region47: #{_lambda_.5} parent=11 // pred_region
          _
        $region48: #{_lambda_.5} parent=11 // pred_fallthru
          _
        // Predicated region
        $region49: #{_lambda_.5} parent=11 // pred_check
          %p395 = pneg %p285
        $region50: #{_lambda_.5} parent=11 // pred_check_branch
          %397 = sbr.rel (%p395) target = $region52
        $region51: #{_lambda_.5} parent=11 // pred_region
          _
        $region52: #{_lambda_.5} parent=11 // pred_fallthru
          _
        // Predicated region
        $region53: #{_lambda_.5} parent=11 // pred_check
          %p398 = pneg %p306
        $region54: #{_lambda_.5} parent=11 // pred_check_branch
          %400 = sbr.rel (%p398) target = $region56
        $region55: #{_lambda_.5} parent=11 // pred_region
          _
        $region56: #{_lambda_.5} parent=11 // pred_fallthru
          _
        // Predicated region
        $region57: #{_lambda_.5} parent=11 // pred_check
          %p401 = pneg %p327
        $region58: #{_lambda_.5} parent=11 // pred_check_branch
          %403 = sbr.rel (%p401) target = $region60
        $region59: #{_lambda_.5} parent=11 // pred_region
          _
        $region60: #{_lambda_.5} parent=11 // pred_fallthru
          _
      $region12: #{_lambda_.5} parent=5 // pred_fallthru
        _
      %p404 = scmp.lt.s32.totalorder %s23, 2
      // Predicated region
      $region61: #{_lambda_.5} parent=5 // pred_check
        %p405 = pneg %p404
      $region62: #{_lambda_.5} parent=5 // pred_check_branch
        %407 = sbr.rel (%p405) target = $region64
      $region63: #{_lambda_.5} parent=5 // pred_region
        // Predicated region
        $region65: #{_lambda_.5} parent=63 // pred_check
          %p408 = pneg %p43
        $region66: #{_lambda_.5} parent=63 // pred_check_branch
          %410 = sbr.rel (%p408) target = $region68
        $region67: #{_lambda_.5} parent=63 // pred_region
          %p411 = scmp.lt.s32.totalorder %s23, 1
          %s412 = scalar_select %p411, %s23, 1
          %s413 = smul.addr %s412, 2
          %s414 = smul.addr %s413, 4
          %s415 = scalar_lea.vmem %s0, %s414
        $region68: #{_lambda_.5} parent=63 // pred_fallthru
          _
        // Predicated region
        $region69: #{_lambda_.5} parent=63 // pred_check
          %p416 = pneg %p69
        $region70: #{_lambda_.5} parent=63 // pred_check_branch
          %418 = sbr.rel (%p416) target = $region72
        $region71: #{_lambda_.5} parent=63 // pred_region
          %p419 = scmp.lt.s32.totalorder %s23, 1
          %s420 = scalar_select %p419, %s23, 1
          %s421 = smul.addr %s420, 2
          %s422 = smul.addr %s421, 4
          %s423 = scalar_lea.vmem %s1, %s422
        $region72: #{_lambda_.5} parent=63 // pred_fallthru
          _
      $region64: #{_lambda_.5} parent=5 // pred_fallthru
        _
      %p424 = scmp.le.s32.totalorder 1, %s23
      %p425 = scmp.lt.s32.totalorder %s23, 3
      %p426 = pnand %p424, %p425
      %p427 = pneg %p426
      // Predicated region
      $region73: #{_lambda_.5} parent=5 // pred_check
        _
      $region74: #{_lambda_.5} parent=5 // pred_check_branch
        %429 = sbr.rel (%p426) target = $region76
      $region75: #{_lambda_.5} parent=5 // pred_region
        %s430 = ssub.s32 %s23, 1
        %p431 = scmp.lt.s32.totalorder %s28, 1
        %s432 = scalar_select %p431, %s28, 1
        %s433 = smul.addr %s432, 2
        %s434 = smul.addr %s433, 4
        %s435 = scalar_lea.vmem %s0, %s434
        %p436 = pneg %p49
        %p437 = pneg %p46
        %p438 = scmp.lt.s32.totalorder %s28, 1
        %s439 = scalar_select %p438, %s28, 1
        %s440 = smul.addr %s439, 2
        %s441 = smul.addr %s440, 4
        %s442 = scalar_lea.vmem %s1, %s441
        %p443 = pneg %p75
        %p444 = pneg %p72
        %p445 = pneg %p96
        %p446 = pneg %p93
        %p447 = pneg %p117
        %p448 = pneg %p114
        %p449 = pneg %p138
        %p450 = pneg %p135
        %p451 = pneg %p159
        %p452 = pneg %p156
        %p453 = pneg %p180
        %p454 = pneg %p177
        %p455 = pneg %p201
        %p456 = pneg %p198
        %p457 = pneg %p222
        %p458 = pneg %p219
        %p459 = pneg %p243
        %p460 = pneg %p240
        %p461 = pneg %p264
        %p462 = pneg %p261
        %p463 = pneg %p285
        %p464 = pneg %p282
        %p465 = pneg %p306
        %p466 = pneg %p303
        %p467 = pneg %p327
        %p468 = pneg %p324
        %p469 = pneg %p353
        %p470 = pneg %p350
        %s471 = sand.u32 %s340, 1
        %s472 = scalar_lea.sflag [#allocation3], %s471
        %s473 = sand.u32 %s340, 1
        %s474 = smul.addr %s473, 16
        %s475 = scalar_lea.vmem [#allocation2], %s474
        %p476 = scmp.lt.s32.totalorder %s28, 1
        %s477 = scalar_select %p476, %s28, 1
        %s478 = smul.addr %s477, 2
        %s479 = smul.addr %s478, 4
        %s480 = scalar_lea.vmem %s0, %s479
        %p481 = scmp.lt.s32.totalorder %s28, 1
        %s482 = scalar_select %p481, %s28, 1
        %s483 = smul.addr %s482, 2
        %s484 = smul.addr %s483, 4
        %s485 = scalar_lea.vmem %s1, %s484
        %v487 = vld [vmem:[%s480] sm:$0xf]
        %v488 = vld [vmem:[%s480 + $0x4] sm:$0xf]
        %v489 = vld [vmem:[%s485] sm:$0xf]
        %v490 = vld [vmem:[%s485 + $0x4] sm:$0xf]
        %v491 = vld [vmem:[%s2] sm:$0x3]
        %v492 = vpack.c.bf16 %v491, %v491
        %v493 = vld [vmem:[%s3] sm:$0xf]
        %v494 = vld [vmem:[%s3 + $0x4] sm:$0xf]
        %v495 = vld [vmem:[%s4] sm:$0x1]
        %v497 = vlaneseq
        %v498 = vshrl.u32 %v497, 7
        %v499 = vsub.s32 0, %v498
        %v500 = vrot.slane %v495, %v499
        %v504 = vunpack.c.l.b16 %v493
        %v505 = vunpack.c.l.b16 %v494
        %v506 = vpack.c.b16 %v505, %v504
        %vm508 = vcmask 130048
        %v510 = vsel %vm508, %v492, 0
        %512 = vmatprep.subr.bf16.mxu0 0
        %513 = vmatpush1.bf16.msra.mxu0 0
        %514 = vmatprep.subr.bf16.mxu0 0
        %515 = vmatpush1.bf16.msra.mxu0 0
        %516 = vmatprep.subr.bf16.mxu0 0
        %517 = vmatpush1.bf16.msra.mxu0 0
        %518 = vmatprep.subr.bf16.mxu0 0
        %519 = vmatpush1.bf16.msra.mxu0 0
        %520 = vmatprep.subr.bf16.mxu0 0
        %521 = vmatpush1.bf16.msra.mxu0 0
        %522 = vmatprep.subr.bf16.mxu0 0
        %523 = vmatpush1.bf16.msra.mxu0 0
        %524 = vmatprep.subr.bf16.mxu0 0
        %525 = vmatpush1.bf16.msra.mxu0 0
        %526 = vmatprep.subr.bf16.mxu0 0
        %527 = vmatpush1.bf16.msra.mxu0 %v506
        %528 = vmatprep.subr.bf16.mxu0 0
        %529 = vmatpush2.bf16.msra.mxu0 0
        %530 = vmatprep.subr.bf16.mxu0 0
        %531 = vmatpush2.bf16.msra.mxu0 0
        %532 = vmatprep.subr.bf16.mxu0 0
        %533 = vmatpush2.bf16.msra.mxu0 0
        %534 = vmatprep.subr.bf16.mxu0 0
        %535 = vmatpush2.bf16.msra.mxu0 0
        %536 = vmatprep.subr.bf16.mxu0 0
        %537 = vmatpush2.bf16.msra.mxu0 0
        %538 = vmatprep.subr.bf16.mxu0 0
        %539 = vmatpush2.bf16.msra.mxu0 0
        %540 = vmatprep.subr.bf16.mxu0 0
        %541 = vmatpush2.bf16.msra.mxu0 0
        %542 = vmatprep.subr.bf16.mxu0 0
        %543 = vmatpush2.bf16.msra.mxu0 0
        %544 = vmatprep.mubr.bf16.mxu0 0
        %545 = vmatmul.mubr.bf16.gmra.mxu0 %v510
        %v546 = vpop.f32.mrf.mxu0
        %v547 = vadd.f32 %v500, %v546
        %v548 = vpop.f32.mrf.mxu0
        %v549 = vpop.f32.mrf.mxu0
        %v550 = vpop.f32.mrf.mxu0
        %551 = vdwg.mxu0
        %v552 = vmul.f32 %v547, %v547
        %v553 = vmul.f32 %v547, %v552
        %v554 = vmul.f32 %v553, 0.044715
        %v555 = vadd.f32 %v547, %v554
        %v556 = vmul.f32 %v555, 0.7978846
        %v557 = vtanh.pop %v556
        %v558 = vadd.f32 %v557, 1.0
        %v559 = vmul.f32 %v558, 0.5
        %v560 = vmul.f32 %v547, %v559
        %v561 = vpack.c.bf16 %v560, %v560
        %v562 = vld [vmem:[%s5] sm:$0xff]
        %v563 = vld [vmem:[%s5 + $0x8] sm:$0xff]
        %v564 = vld [vmem:[%s5 + $0x10] sm:$0xff]
        %v565 = vld [vmem:[%s5 + $0x18] sm:$0xff]
        %v566 = vld [vmem:[%s5 + $0x20] sm:$0xff]
        %v567 = vld [vmem:[%s5 + $0x28] sm:$0xff]
        %v568 = vld [vmem:[%s5 + $0x30] sm:$0xff]
        %v569 = vld [vmem:[%s5 + $0x38] sm:$0xff]
        %v570 = vld [vmem:[%s5 + $0x40] sm:$0xff]
        %v571 = vld [vmem:[%s5 + $0x48] sm:$0xff]
        %v572 = vld [vmem:[%s5 + $0x50] sm:$0xff]
        %v573 = vld [vmem:[%s5 + $0x58] sm:$0xff]
        %v574 = vld [vmem:[%s5 + $0x60] sm:$0xff]
        %v575 = vld [vmem:[%s5 + $0x68] sm:$0xff]
        %v576 = vld [vmem:[%s5 + $0x70] sm:$0xff]
        %v577 = vld [vmem:[%s5 + $0x78] sm:$0xff]
        %v578 = vld [vmem:[%s6] sm:$0x3]
        %v580 = vlaneseq
        %v581 = vshrl.u32 %v580, 7
        %v582 = vsub.s32 0, %v581
        %v583 = vrot.slane %v578, %v582
        %v584 = vlaneseq
        %v585 = vshrl.u32 %v584, 7
        %v586 = vsub.s32 1, %v585
        %v587 = vrot.slane %v578, %v586
        %v606 = vunpack.c.l.b16 %v562
        %v607 = vunpack.c.h.b16 %v562
        %v608 = vunpack.c.l.b16 %v563
        %v609 = vunpack.c.h.b16 %v563
        %v610 = vunpack.c.l.b16 %v564
        %v611 = vunpack.c.h.b16 %v564
        %v612 = vunpack.c.l.b16 %v565
        %v613 = vunpack.c.h.b16 %v565
        %v614 = vunpack.c.l.b16 %v566
        %v615 = vunpack.c.h.b16 %v566
        %v616 = vunpack.c.l.b16 %v567
        %v617 = vunpack.c.h.b16 %v567
        %v618 = vunpack.c.l.b16 %v568
        %v619 = vunpack.c.h.b16 %v568
        %v620 = vunpack.c.l.b16 %v569
        %v621 = vunpack.c.h.b16 %v569
        %v622 = vunpack.c.l.b16 %v570
        %v623 = vunpack.c.h.b16 %v570
        %v624 = vunpack.c.l.b16 %v571
        %v625 = vunpack.c.h.b16 %v571
        %v626 = vunpack.c.l.b16 %v572
        %v627 = vunpack.c.h.b16 %v572
        %v628 = vunpack.c.l.b16 %v573
        %v629 = vunpack.c.h.b16 %v573
        %v630 = vunpack.c.l.b16 %v574
        %v631 = vunpack.c.h.b16 %v574
        %v632 = vunpack.c.l.b16 %v575
        %v633 = vunpack.c.h.b16 %v575
        %v634 = vunpack.c.l.b16 %v576
        %v635 = vunpack.c.h.b16 %v576
        %v636 = vunpack.c.l.b16 %v577
        %v637 = vunpack.c.h.b16 %v577
        %v638 = vpack.c.b16 %v608, %v606
        %v639 = vpack.c.b16 %v609, %v607
        %v640 = vpack.c.b16 %v612, %v610
        %v641 = vpack.c.b16 %v613, %v611
        %v642 = vpack.c.b16 %v616, %v614
        %v643 = vpack.c.b16 %v617, %v615
        %v644 = vpack.c.b16 %v620, %v618
        %v645 = vpack.c.b16 %v621, %v619
        %v646 = vpack.c.b16 %v624, %v622
        %v647 = vpack.c.b16 %v625, %v623
        %v648 = vpack.c.b16 %v628, %v626
        %v649 = vpack.c.b16 %v629, %v627
        %v650 = vpack.c.b16 %v632, %v630
        %v651 = vpack.c.b16 %v633, %v631
        %v652 = vpack.c.b16 %v636, %v634
        %v653 = vpack.c.b16 %v637, %v635
        %670 = vmatprep.subr.bf16.mxu0 %v653
        %671 = vmatpush1.bf16.msra.mxu0 %v652
        %672 = vmatprep.subr.bf16.mxu0 %v651
        %673 = vmatpush1.bf16.msra.mxu0 %v650
        %674 = vmatprep.subr.bf16.mxu0 %v649
        %675 = vmatpush1.bf16.msra.mxu0 %v648
        %676 = vmatprep.subr.bf16.mxu0 %v647
        %677 = vmatpush1.bf16.msra.mxu0 %v646
        %678 = vmatprep.subr.bf16.mxu0 %v645
        %679 = vmatpush1.bf16.msra.mxu0 %v644
        %680 = vmatprep.subr.bf16.mxu0 %v643
        %681 = vmatpush1.bf16.msra.mxu0 %v642
        %682 = vmatprep.subr.bf16.mxu0 %v641
        %683 = vmatpush1.bf16.msra.mxu0 %v640
        %684 = vmatprep.subr.bf16.mxu0 %v639
        %685 = vmatpush1.bf16.msra.mxu0 %v638
        %686 = vmatprep.subr.bf16.mxu0 0
        %687 = vmatpush2.bf16.msra.mxu0 0
        %688 = vmatprep.subr.bf16.mxu0 0
        %689 = vmatpush2.bf16.msra.mxu0 0
        %690 = vmatprep.subr.bf16.mxu0 0
        %691 = vmatpush2.bf16.msra.mxu0 0
        %692 = vmatprep.subr.bf16.mxu0 0
        %693 = vmatpush2.bf16.msra.mxu0 0
        %694 = vmatprep.subr.bf16.mxu0 0
        %695 = vmatpush2.bf16.msra.mxu0 0
        %696 = vmatprep.subr.bf16.mxu0 0
        %697 = vmatpush2.bf16.msra.mxu0 0
        %698 = vmatprep.subr.bf16.mxu0 0
        %699 = vmatpush2.bf16.msra.mxu0 0
        %700 = vmatprep.subr.bf16.mxu0 0
        %701 = vmatpush2.bf16.msra.mxu0 0
        %702 = vmatprep.mubr.bf16.mxu0 0
        %703 = vmatmul.mubr.bf16.gmra.mxu0 %v561
        %v704 = vpop.f32.mrf.mxu0
        %v705 = vadd.f32 %v583, %v704
        %v706 = vpop.f32.mrf.mxu0
        %v707 = vadd.f32 %v587, %v706
        %v708 = vpop.f32.mrf.mxu0
        %v709 = vpop.f32.mrf.mxu0
        %710 = vdwg.mxu0
        %v711 = vlaneseq
        %v712 = vshrl.u32 %v711, 7
        %v713 = vstv %s28
        %vm714 = vcmp.eq.s32.totalorder %v712, %v713
        %v715 = vsel %vm714, %v705, 0.0
        %v716 = vsel %vm714, %v707, 0.0
        %vm717 = vcmask 1041408
        %v718 = vsel %vm717, %v715, 0.0
        %v719 = vrot.slane %v718, 4
        %v720 = vadd.f32 %v718, %v719
        %v721 = vrot.slane %v720, 2
        %v722 = vadd.f32 %v720, %v721
        %v723 = vrot.slane %v722, 1
        %v724 = vadd.f32 %v722, %v723
        %v725 = vsel %vm717, %v716, 0.0
        %v726 = vrot.slane %v725, 4
        %v727 = vadd.f32 %v725, %v726
        %v728 = vrot.slane %v727, 2
        %v729 = vadd.f32 %v727, %v728
        %v730 = vrot.slane %v729, 1
        %v731 = vadd.f32 %v729, %v730
        %v732 = vld [vmem:[%s7] sm:$0xff]
        %v733 = vld [vmem:[%s7 + $0x8] sm:$0xff]
        %v734 = vld [vmem:[%s7 + $0x10] sm:$0xff]
        %v735 = vld [vmem:[%s7 + $0x18] sm:$0xff]
        %v736 = vld [vmem:[%s7 + $0x20] sm:$0xff]
        %v737 = vld [vmem:[%s7 + $0x28] sm:$0xff]
        %v738 = vld [vmem:[%s7 + $0x30] sm:$0xff]
        %v739 = vld [vmem:[%s7 + $0x38] sm:$0xff]
        %v740 = vld [vmem:[%s7 + $0x40] sm:$0xff]
        %v741 = vld [vmem:[%s7 + $0x48] sm:$0xff]
        %v742 = vld [vmem:[%s7 + $0x50] sm:$0xff]
        %v743 = vld [vmem:[%s7 + $0x58] sm:$0xff]
        %v744 = vld [vmem:[%s7 + $0x60] sm:$0xff]
        %v745 = vld [vmem:[%s7 + $0x68] sm:$0xff]
        %v746 = vld [vmem:[%s7 + $0x70] sm:$0xff]
        %v747 = vld [vmem:[%s7 + $0x78] sm:$0xff]
        %v748 = vld [vmem:[%s8] sm:$0xff]
        %v749 = vld [vmem:[%s8 + $0x8] sm:$0xff]
        %v750 = vld [vmem:[%s8 + $0x10] sm:$0xff]
        %v751 = vld [vmem:[%s8 + $0x18] sm:$0xff]
        %v752 = vld [vmem:[%s8 + $0x20] sm:$0xff]
        %v753 = vld [vmem:[%s8 + $0x28] sm:$0xff]
        %v754 = vld [vmem:[%s8 + $0x30] sm:$0xff]
        %v755 = vld [vmem:[%s8 + $0x38] sm:$0xff]
        %v756 = vld [vmem:[%s8 + $0x40] sm:$0xff]
        %v757 = vld [vmem:[%s8 + $0x48] sm:$0xff]
        %v758 = vld [vmem:[%s8 + $0x50] sm:$0xff]
        %v759 = vld [vmem:[%s8 + $0x58] sm:$0xff]
        %v760 = vld [vmem:[%s8 + $0x60] sm:$0xff]
        %v761 = vld [vmem:[%s8 + $0x68] sm:$0xff]
        %v762 = vld [vmem:[%s8 + $0x70] sm:$0xff]
        %v763 = vld [vmem:[%s8 + $0x78] sm:$0xff]
        %v766 = vunpack.c.l.b16 %v489
        %v767 = vunpack.c.l.b16 %v490
        %v768 = vpack.c.b16 %v767, %v766
        %v786 = vunpack.c.l.b16 %v748
        %v787 = vunpack.c.h.b16 %v748
        %v788 = vunpack.c.l.b16 %v749
        %v789 = vunpack.c.h.b16 %v749
        %v790 = vunpack.c.l.b16 %v750
        %v791 = vunpack.c.h.b16 %v750
        %v792 = vunpack.c.l.b16 %v751
        %v793 = vunpack.c.h.b16 %v751
        %v794 = vunpack.c.l.b16 %v752
        %v795 = vunpack.c.h.b16 %v752
        %v796 = vunpack.c.l.b16 %v753
        %v797 = vunpack.c.h.b16 %v753
        %v798 = vunpack.c.l.b16 %v754
        %v799 = vunpack.c.h.b16 %v754
        %v800 = vunpack.c.l.b16 %v755
        %v801 = vunpack.c.h.b16 %v755
        %v802 = vunpack.c.l.b16 %v756
        %v803 = vunpack.c.h.b16 %v756
        %v804 = vunpack.c.l.b16 %v757
        %v805 = vunpack.c.h.b16 %v757
        %v806 = vunpack.c.l.b16 %v758
        %v807 = vunpack.c.h.b16 %v758
        %v808 = vunpack.c.l.b16 %v759
        %v809 = vunpack.c.h.b16 %v759
        %v810 = vunpack.c.l.b16 %v760
        %v811 = vunpack.c.h.b16 %v760
        %v812 = vunpack.c.l.b16 %v761
        %v813 = vunpack.c.h.b16 %v761
        %v814 = vunpack.c.l.b16 %v762
        %v815 = vunpack.c.h.b16 %v762
        %v816 = vunpack.c.l.b16 %v763
        %v817 = vunpack.c.h.b16 %v763
        %v818 = vpack.c.b16 %v788, %v786
        %v819 = vpack.c.b16 %v789, %v787
        %v820 = vpack.c.b16 %v792, %v790
        %v821 = vpack.c.b16 %v793, %v791
        %v822 = vpack.c.b16 %v796, %v794
        %v823 = vpack.c.b16 %v797, %v795
        %v824 = vpack.c.b16 %v800, %v798
        %v825 = vpack.c.b16 %v801, %v799
        %v826 = vpack.c.b16 %v804, %v802
        %v827 = vpack.c.b16 %v805, %v803
        %v828 = vpack.c.b16 %v808, %v806
        %v829 = vpack.c.b16 %v809, %v807
        %v830 = vpack.c.b16 %v812, %v810
        %v831 = vpack.c.b16 %v813, %v811
        %v832 = vpack.c.b16 %v816, %v814
        %v833 = vpack.c.b16 %v817, %v815
        %850 = vmatprep.subr.bf16.mxu0 %v833
        %851 = vmatpush1.bf16.msra.mxu0 %v832
        %852 = vmatprep.subr.bf16.mxu0 %v831
        %853 = vmatpush1.bf16.msra.mxu0 %v830
        %854 = vmatprep.subr.bf16.mxu0 %v829
        %855 = vmatpush1.bf16.msra.mxu0 %v828
        %856 = vmatprep.subr.bf16.mxu0 %v827
        %857 = vmatpush1.bf16.msra.mxu0 %v826
        %858 = vmatprep.subr.bf16.mxu0 %v825
        %859 = vmatpush1.bf16.msra.mxu0 %v824
        %860 = vmatprep.subr.bf16.mxu0 %v823
        %861 = vmatpush1.bf16.msra.mxu0 %v822
        %862 = vmatprep.subr.bf16.mxu0 %v821
        %863 = vmatpush1.bf16.msra.mxu0 %v820
        %864 = vmatprep.subr.bf16.mxu0 %v819
        %865 = vmatpush1.bf16.msra.mxu0 %v818
        %866 = vmatprep.subr.bf16.mxu0 0
        %867 = vmatpush2.bf16.msra.mxu0 0
        %868 = vmatprep.subr.bf16.mxu0 0
        %869 = vmatpush2.bf16.msra.mxu0 0
        %870 = vmatprep.subr.bf16.mxu0 0
        %871 = vmatpush2.bf16.msra.mxu0 0
        %872 = vmatprep.subr.bf16.mxu0 0
        %873 = vmatpush2.bf16.msra.mxu0 0
        %874 = vmatprep.subr.bf16.mxu0 0
        %875 = vmatpush2.bf16.msra.mxu0 0
        %876 = vmatprep.subr.bf16.mxu0 0
        %877 = vmatpush2.bf16.msra.mxu0 0
        %878 = vmatprep.subr.bf16.mxu0 0
        %879 = vmatpush2.bf16.msra.mxu0 0
        %880 = vmatprep.subr.bf16.mxu0 0
        %881 = vmatpush2.bf16.msra.mxu0 0
        %882 = vmatprep.mubr.bf16.mxu0 0
        %883 = vmatmul.mubr.bf16.gmra.mxu0 %v768
        %v884 = vpop.f32.mrf.mxu0
        %v885 = vadd.f32 0.0, %v884
        %v886 = vpop.f32.mrf.mxu0
        %v887 = vadd.f32 0.0, %v886
        %v888 = vpop.f32.mrf.mxu0
        %v889 = vadd.f32 0.0, %v888
        %v890 = vpop.f32.mrf.mxu0
        %v891 = vadd.f32 0.0, %v890
        %892 = vdwg.mxu0
        %v895 = vunpack.c.l.b16 %v487
        %v896 = vunpack.c.l.b16 %v488
        %v897 = vpack.c.b16 %v896, %v895
        %v915 = vunpack.c.l.b16 %v732
        %v916 = vunpack.c.h.b16 %v732
        %v917 = vunpack.c.l.b16 %v733
        %v918 = vunpack.c.h.b16 %v733
        %v919 = vunpack.c.l.b16 %v734
        %v920 = vunpack.c.h.b16 %v734
        %v921 = vunpack.c.l.b16 %v735
        %v922 = vunpack.c.h.b16 %v735
        %v923 = vunpack.c.l.b16 %v736
        %v924 = vunpack.c.h.b16 %v736
        %v925 = vunpack.c.l.b16 %v737
        %v926 = vunpack.c.h.b16 %v737
        %v927 = vunpack.c.l.b16 %v738
        %v928 = vunpack.c.h.b16 %v738
        %v929 = vunpack.c.l.b16 %v739
        %v930 = vunpack.c.h.b16 %v739
        %v931 = vunpack.c.l.b16 %v740
        %v932 = vunpack.c.h.b16 %v740
        %v933 = vunpack.c.l.b16 %v741
        %v934 = vunpack.c.h.b16 %v741
        %v935 = vunpack.c.l.b16 %v742
        %v936 = vunpack.c.h.b16 %v742
        %v937 = vunpack.c.l.b16 %v743
        %v938 = vunpack.c.h.b16 %v743
        %v939 = vunpack.c.l.b16 %v744
        %v940 = vunpack.c.h.b16 %v744
        %v941 = vunpack.c.l.b16 %v745
        %v942 = vunpack.c.h.b16 %v745
        %v943 = vunpack.c.l.b16 %v746
        %v944 = vunpack.c.h.b16 %v746
        %v945 = vunpack.c.l.b16 %v747
        %v946 = vunpack.c.h.b16 %v747
        %v947 = vpack.c.b16 %v917, %v915
        %v948 = vpack.c.b16 %v918, %v916
        %v949 = vpack.c.b16 %v921, %v919
        %v950 = vpack.c.b16 %v922, %v920
        %v951 = vpack.c.b16 %v925, %v923
        %v952 = vpack.c.b16 %v926, %v924
        %v953 = vpack.c.b16 %v929, %v927
        %v954 = vpack.c.b16 %v930, %v928
        %v955 = vpack.c.b16 %v933, %v931
        %v956 = vpack.c.b16 %v934, %v932
        %v957 = vpack.c.b16 %v937, %v935
        %v958 = vpack.c.b16 %v938, %v936
        %v959 = vpack.c.b16 %v941, %v939
        %v960 = vpack.c.b16 %v942, %v940
        %v961 = vpack.c.b16 %v945, %v943
        %v962 = vpack.c.b16 %v946, %v944
        %979 = vmatprep.subr.bf16.mxu0 %v962
        %980 = vmatpush1.bf16.msra.mxu0 %v961
        %981 = vmatprep.subr.bf16.mxu0 %v960
        %982 = vmatpush1.bf16.msra.mxu0 %v959
        %983 = vmatprep.subr.bf16.mxu0 %v958
        %984 = vmatpush1.bf16.msra.mxu0 %v957
        %985 = vmatprep.subr.bf16.mxu0 %v956
        %986 = vmatpush1.bf16.msra.mxu0 %v955
        %987 = vmatprep.subr.bf16.mxu0 %v954
        %988 = vmatpush1.bf16.msra.mxu0 %v953
        %989 = vmatprep.subr.bf16.mxu0 %v952
        %990 = vmatpush1.bf16.msra.mxu0 %v951
        %991 = vmatprep.subr.bf16.mxu0 %v950
        %992 = vmatpush1.bf16.msra.mxu0 %v949
        %993 = vmatprep.subr.bf16.mxu0 %v948
        %994 = vmatpush1.bf16.msra.mxu0 %v947
        %995 = vmatprep.subr.bf16.mxu0 0
        %996 = vmatpush2.bf16.msra.mxu0 0
        %997 = vmatprep.subr.bf16.mxu0 0
        %998 = vmatpush2.bf16.msra.mxu0 0
        %999 = vmatprep.subr.bf16.mxu0 0
        %1000 = vmatpush2.bf16.msra.mxu0 0
        %1001 = vmatprep.subr.bf16.mxu0 0
        %1002 = vmatpush2.bf16.msra.mxu0 0
        %1003 = vmatprep.subr.bf16.mxu0 0
        %1004 = vmatpush2.bf16.msra.mxu0 0
        %1005 = vmatprep.subr.bf16.mxu0 0
        %1006 = vmatpush2.bf16.msra.mxu0 0
        %1007 = vmatprep.subr.bf16.mxu0 0
        %1008 = vmatpush2.bf16.msra.mxu0 0
        %1009 = vmatprep.subr.bf16.mxu0 0
        %1010 = vmatpush2.bf16.msra.mxu0 0
        %1011 = vmatprep.mubr.bf16.mxu0 0
        %1012 = vmatmul.mubr.bf16.gmra.mxu0 %v897
        %v1013 = vpop.f32.mrf.mxu0
        %v1014 = vadd.f32 %v885, %v1013
        %v1015 = vpop.f32.mrf.mxu0
        %v1016 = vadd.f32 %v887, %v1015
        %v1017 = vpop.f32.mrf.mxu0
        %v1018 = vadd.f32 %v889, %v1017
        %v1019 = vpop.f32.mrf.mxu0
        %v1020 = vadd.f32 %v891, %v1019
        %1021 = vdwg.mxu0
        %v1022 = vld [vmem:[%s9] sm:$0x3]
        %v1024 = vlaneseq
        %v1025 = vshrl.u32 %v1024, 7
        %v1026 = vsub.s32 0, %v1025
        %v1027 = vrot.slane %v1022, %v1026
        %v1028 = vlaneseq
        %v1029 = vshrl.u32 %v1028, 7
        %v1030 = vsub.s32 1, %v1029
        %v1031 = vrot.slane %v1022, %v1030
        %v1034 = vadd.f32 %v1014, %v1027
        %v1035 = vadd.f32 %v1016, %v1031
        %v1036 = vadd.f32 %v1018, %v1027
        %v1037 = vadd.f32 %v1020, %v1031
        %v1038 = vmul.f32 %v1034, %v1034
        %v1039 = vmul.f32 %v1035, %v1035
        %v1040 = vmul.f32 %v1036, %v1036
        %v1041 = vmul.f32 %v1037, %v1037
        %v1042 = vmul.f32 %v1034, %v1038
        %v1043 = vmul.f32 %v1035, %v1039
        %v1044 = vmul.f32 %v1036, %v1040
        %v1045 = vmul.f32 %v1037, %v1041
        %v1046 = vmul.f32 %v1042, 0.044715
        %v1047 = vmul.f32 %v1043, 0.044715
        %v1048 = vmul.f32 %v1044, 0.044715
        %v1049 = vmul.f32 %v1045, 0.044715
        %v1050 = vadd.f32 %v1034, %v1046
        %v1051 = vadd.f32 %v1035, %v1047
        %v1052 = vadd.f32 %v1036, %v1048
        %v1053 = vadd.f32 %v1037, %v1049
        %v1054 = vmul.f32 %v1050, 0.7978846
        %v1055 = vmul.f32 %v1051, 0.7978846
        %v1056 = vmul.f32 %v1052, 0.7978846
        %v1057 = vmul.f32 %v1053, 0.7978846
        %v1058 = vtanh.pop %v1054
        %v1059 = vtanh.pop %v1055
        %v1060 = vtanh.pop %v1056
        %v1061 = vtanh.pop %v1057
        %v1062 = vadd.f32 %v1058, 1.0
        %v1063 = vadd.f32 %v1059, 1.0
        %v1064 = vadd.f32 %v1060, 1.0
        %v1065 = vadd.f32 %v1061, 1.0
        %v1066 = vmul.f32 %v1062, 0.5
        %v1067 = vmul.f32 %v1063, 0.5
        %v1068 = vmul.f32 %v1064, 0.5
        %v1069 = vmul.f32 %v1065, 0.5
        %v1070 = vmul.f32 %v1034, %v1066
        %v1071 = vmul.f32 %v1035, %v1067
        %v1072 = vmul.f32 %v1036, %v1068
        %v1073 = vmul.f32 %v1037, %v1069
        %v1074 = vpack.c.bf16 %v1072, %v1070
        %v1075 = vpack.c.bf16 %v1073, %v1071
        %v1076 = vld [vmem:[%s10] sm:$0xf]
        %v1077 = vld [vmem:[%s10 + $0x4] sm:$0xf]
        %v1078 = vld [vmem:[%s10 + $0x8] sm:$0xf]
        %v1079 = vld [vmem:[%s10 + $0xc] sm:$0xf]
        %v1080 = vld [vmem:[%s10 + $0x10] sm:$0xf]
        %v1081 = vld [vmem:[%s10 + $0x14] sm:$0xf]
        %v1082 = vld [vmem:[%s10 + $0x18] sm:$0xf]
        %v1083 = vld [vmem:[%s10 + $0x1c] sm:$0xf]
        %v1084 = vld [vmem:[%s10 + $0x20] sm:$0xf]
        %v1085 = vld [vmem:[%s10 + $0x24] sm:$0xf]
        %v1086 = vld [vmem:[%s10 + $0x28] sm:$0xf]
        %v1087 = vld [vmem:[%s10 + $0x2c] sm:$0xf]
        %v1088 = vld [vmem:[%s10 + $0x30] sm:$0xf]
        %v1089 = vld [vmem:[%s10 + $0x34] sm:$0xf]
        %v1090 = vld [vmem:[%s10 + $0x38] sm:$0xf]
        %v1091 = vld [vmem:[%s10 + $0x3c] sm:$0xf]
        %v1092 = vld [vmem:[%s10 + $0x40] sm:$0xf]
        %v1093 = vld [vmem:[%s10 + $0x44] sm:$0xf]
        %v1094 = vld [vmem:[%s10 + $0x48] sm:$0xf]
        %v1095 = vld [vmem:[%s10 + $0x4c] sm:$0xf]
        %v1096 = vld [vmem:[%s10 + $0x50] sm:$0xf]
        %v1097 = vld [vmem:[%s10 + $0x54] sm:$0xf]
        %v1098 = vld [vmem:[%s10 + $0x58] sm:$0xf]
        %v1099 = vld [vmem:[%s10 + $0x5c] sm:$0xf]
        %v1100 = vld [vmem:[%s10 + $0x60] sm:$0xf]
        %v1101 = vld [vmem:[%s10 + $0x64] sm:$0xf]
        %v1102 = vld [vmem:[%s10 + $0x68] sm:$0xf]
        %v1103 = vld [vmem:[%s10 + $0x6c] sm:$0xf]
        %v1104 = vld [vmem:[%s10 + $0x70] sm:$0xf]
        %v1105 = vld [vmem:[%s10 + $0x74] sm:$0xf]
        %v1106 = vld [vmem:[%s10 + $0x78] sm:$0xf]
        %v1107 = vld [vmem:[%s10 + $0x7c] sm:$0xf]
        %v1108 = vld [vmem:[%s11] sm:$0x1]
        %v1110 = vlaneseq
        %v1111 = vshrl.u32 %v1110, 7
        %v1112 = vsub.s32 0, %v1111
        %v1113 = vrot.slane %v1108, %v1112
        %v1147 = vunpack.c.l.b16 %v1076
        %v1148 = vunpack.c.l.b16 %v1077
        %v1149 = vunpack.c.l.b16 %v1078
        %v1150 = vunpack.c.l.b16 %v1079
        %v1151 = vunpack.c.l.b16 %v1080
        %v1152 = vunpack.c.l.b16 %v1081
        %v1153 = vunpack.c.l.b16 %v1082
        %v1154 = vunpack.c.l.b16 %v1083
        %v1155 = vunpack.c.l.b16 %v1084
        %v1156 = vunpack.c.l.b16 %v1085
        %v1157 = vunpack.c.l.b16 %v1086
        %v1158 = vunpack.c.l.b16 %v1087
        %v1159 = vunpack.c.l.b16 %v1088
        %v1160 = vunpack.c.l.b16 %v1089
        %v1161 = vunpack.c.l.b16 %v1090
        %v1162 = vunpack.c.l.b16 %v1091
        %v1163 = vunpack.c.l.b16 %v1092
        %v1164 = vunpack.c.l.b16 %v1093
        %v1165 = vunpack.c.l.b16 %v1094
        %v1166 = vunpack.c.l.b16 %v1095
        %v1167 = vunpack.c.l.b16 %v1096
        %v1168 = vunpack.c.l.b16 %v1097
        %v1169 = vunpack.c.l.b16 %v1098
        %v1170 = vunpack.c.l.b16 %v1099
        %v1171 = vunpack.c.l.b16 %v1100
        %v1172 = vunpack.c.l.b16 %v1101
        %v1173 = vunpack.c.l.b16 %v1102
        %v1174 = vunpack.c.l.b16 %v1103
        %v1175 = vunpack.c.l.b16 %v1104
        %v1176 = vunpack.c.l.b16 %v1105
        %v1177 = vunpack.c.l.b16 %v1106
        %v1178 = vunpack.c.l.b16 %v1107
        %v1179 = vpack.c.b16 %v1148, %v1147
        %v1180 = vpack.c.b16 %v1150, %v1149
        %v1181 = vpack.c.b16 %v1152, %v1151
        %v1182 = vpack.c.b16 %v1154, %v1153
        %v1183 = vpack.c.b16 %v1156, %v1155
        %v1184 = vpack.c.b16 %v1158, %v1157
        %v1185 = vpack.c.b16 %v1160, %v1159
        %v1186 = vpack.c.b16 %v1162, %v1161
        %v1187 = vpack.c.b16 %v1164, %v1163
        %v1188 = vpack.c.b16 %v1166, %v1165
        %v1189 = vpack.c.b16 %v1168, %v1167
        %v1190 = vpack.c.b16 %v1170, %v1169
        %v1191 = vpack.c.b16 %v1172, %v1171
        %v1192 = vpack.c.b16 %v1174, %v1173
        %v1193 = vpack.c.b16 %v1176, %v1175
        %v1194 = vpack.c.b16 %v1178, %v1177
        %1211 = vmatprep.subr.bf16.mxu0 0
        %1212 = vmatpush1.bf16.msra.mxu0 %v1186
        %1213 = vmatprep.subr.bf16.mxu0 0
        %1214 = vmatpush1.bf16.msra.mxu0 %v1185
        %1215 = vmatprep.subr.bf16.mxu0 0
        %1216 = vmatpush1.bf16.msra.mxu0 %v1184
        %1217 = vmatprep.subr.bf16.mxu0 0
        %1218 = vmatpush1.bf16.msra.mxu0 %v1183
        %1219 = vmatprep.subr.bf16.mxu0 0
        %1220 = vmatpush1.bf16.msra.mxu0 %v1182
        %1221 = vmatprep.subr.bf16.mxu0 0
        %1222 = vmatpush1.bf16.msra.mxu0 %v1181
        %1223 = vmatprep.subr.bf16.mxu0 0
        %1224 = vmatpush1.bf16.msra.mxu0 %v1180
        %1225 = vmatprep.subr.bf16.mxu0 0
        %1226 = vmatpush1.bf16.msra.mxu0 %v1179
        %1227 = vmatprep.subr.bf16.mxu0 0
        %1228 = vmatpush2.bf16.msra.mxu0 %v1194
        %1229 = vmatprep.subr.bf16.mxu0 0
        %1230 = vmatpush2.bf16.msra.mxu0 %v1193
        %1231 = vmatprep.subr.bf16.mxu0 0
        %1232 = vmatpush2.bf16.msra.mxu0 %v1192
        %1233 = vmatprep.subr.bf16.mxu0 0
        %1234 = vmatpush2.bf16.msra.mxu0 %v1191
        %1235 = vmatprep.subr.bf16.mxu0 0
        %1236 = vmatpush2.bf16.msra.mxu0 %v1190
        %1237 = vmatprep.subr.bf16.mxu0 0
        %1238 = vmatpush2.bf16.msra.mxu0 %v1189
        %1239 = vmatprep.subr.bf16.mxu0 0
        %1240 = vmatpush2.bf16.msra.mxu0 %v1188
        %1241 = vmatprep.subr.bf16.mxu0 0
        %1242 = vmatpush2.bf16.msra.mxu0 %v1187
        %1243 = vmatprep.mubr.bf16.mxu0 %v1075
        %1244 = vmatmul.mubr.bf16.gmra.mxu0 %v1074
        %v1245 = vpop.f32.mrf.mxu0
        %v1246 = vadd.f32 %v1113, %v1245
        %v1247 = vpop.f32.mrf.mxu0
        %v1248 = vpop.f32.mrf.mxu0
        %v1249 = vadd.f32 %v1113, %v1248
        %v1250 = vpop.f32.mrf.mxu0
        %1251 = vdwg.mxu0
        %v1252 = vadd.f32 %v724, 1.0
        %v1253 = vmul.f32 %v1246, %v1252
        %v1254 = vmul.f32 %v1249, %v1252
        %v1255 = vadd.f32 %v1253, %v731
        %v1256 = vadd.f32 %v1254, %v731
        %1257 = vadd.xlane.f32.xlu0 %v1255
        %v1258 = vpop.xlane.xlu0 %1257
        %1259 = vadd.xlane.f32.xlu0 %v1256
        %v1260 = vpop.xlane.xlu0 %1259
        %v1261 = vrcp.pop 128.0
        %v1262 = vmul.f32 %v1258, %v1261
        %v1263 = vmul.f32 %v1260, %v1261
        %v1264 = vsub.f32 %v1255, %v1262
        %v1265 = vsub.f32 %v1256, %v1263
        %v1266 = vmul.f32 %v1264, %v1264
        %v1267 = vmul.f32 %v1265, %v1265
        %1268 = vadd.xlane.f32.xlu0 %v1266
        %v1269 = vpop.xlane.xlu0 %1268
        %1270 = vadd.xlane.f32.xlu0 %v1267
        %v1271 = vpop.xlane.xlu0 %1270
        %v1272 = vmul.f32 %v1269, %v1261
        %v1273 = vmul.f32 %v1271, %v1261
        %v1274 = vadd.f32 %v1272, 1e-05
        %v1275 = vadd.f32 %v1273, 1e-05
        %v1276 = vrsqrt.pop %v1274
        %v1277 = vrsqrt.pop %v1275
        %v1278 = vmul.f32 %v1264, %v1276
        %v1279 = vmul.f32 %v1265, %v1277
        %v1280 = vld [vmem:[%s12] sm:$0x1]
        %v1282 = vlaneseq
        %v1283 = vshrl.u32 %v1282, 7
        %v1284 = vsub.s32 0, %v1283
        %v1285 = vrot.slane %v1280, %v1284
        %v1287 = vmul.f32 %v1278, %v1285
        %v1288 = vmul.f32 %v1279, %v1285
        %v1289 = vld [vmem:[%s13] sm:$0x1]
        %v1291 = vlaneseq
        %v1292 = vshrl.u32 %v1291, 7
        %v1293 = vsub.s32 0, %v1292
        %v1294 = vrot.slane %v1289, %v1293
        %v1296 = vadd.f32 %v1287, %v1294
        %v1297 = vadd.f32 %v1288, %v1294
        %1298 = vst [vmem:[%s475] sm:$0xff] %v1296
        %1299 = vst [vmem:[%s475 + $0x8] sm:$0xff] %v1297
        %s1300 = sand.u32 %s340, 1
        %s1301 = scalar_lea.sflag [#allocation3], %s1300
        %s1302 = sand.u32 %s340, 1
        %s1303 = smul.addr %s1302, 16
        %s1304 = scalar_lea.vmem [#allocation2], %s1303
        // Predicated region
        $region77: #{_lambda_.5} parent=75 // pred_check
          %p1305 = pneg %p350
        $region78: #{_lambda_.5} parent=75 // pred_check_branch
          %1307 = sbr.rel (%p1305) target = $region80
        $region79: #{_lambda_.5} parent=75 // pred_region
          %s1309 = ssub.s32 256, 256
          %1310 = vsyncadd %s1301, %s1309
          %s1311 = smul.addr %s28, 2
          %s1312 = smul.addr %s1311, 128
          %s1313 = scalar_lea.hbm %s14, %s1312
          %s1314 = sshll.u32 %s1304, 4
          %s1315 = int_to_ptr.vmem [resolvable:$true] %s1314
          %1320 = dma.vmem_to_hbm [thread:$0]  %s1315, 256, %s1313, %s1301, 128, 128, 8
        $region80: #{_lambda_.5} parent=75 // pred_fallthru
          _
      $region76: #{_lambda_.5} parent=5 // pred_fallthru
        _
      %p1321 = scmp.le.s32.totalorder 2, %s23
      // Predicated region
      $region81: #{_lambda_.5} parent=5 // pred_check
        %p1322 = pneg %p1321
      $region82: #{_lambda_.5} parent=5 // pred_check_branch
        %1324 = sbr.rel (%p1322) target = $region84
      $region83: #{_lambda_.5} parent=5 // pred_region
        %s1325 = ssub.s32 %s23, 2
        // Predicated region
        $region85: #{_lambda_.5} parent=83 // pred_check
          %p1326 = pneg %p356
        $region86: #{_lambda_.5} parent=83 // pred_check_branch
          %1328 = sbr.rel (%p1326) target = $region88
        $region87: #{_lambda_.5} parent=83 // pred_region
          %s1329 = sand.u32 %s341, 1
          %s1330 = scalar_lea.sflag [#allocation3], %s1329
          %s1331 = sand.u32 %s341, 1
          %s1332 = smul.addr %s1331, 16
          %s1333 = scalar_lea.vmem [#allocation2], %s1332
          %1334 = dma.done %s1330, 256
        $region88: #{_lambda_.5} parent=83 // pred_fallthru
          _
      $region84: #{_lambda_.5} parent=5 // pred_fallthru
        _
    $region6: #{_lambda_.5} parent=1 // loop_footer
      %s27 = sadd.s32 1, %s23
    $region7: #{_lambda_.5} parent=1 // loop_footer_branch
      %22 = sbr.rel target = $region3
    $region8: #{_lambda_.5} parent=1 // loop_exit
      _
    %1335 = vsyncpa [#allocation3], 1
    %s1336 = scalar_lea.sflag [#allocation3], 1
    %1337 = vsyncpa %s1336, 1

// kernel: _lambda_.4
$region0: #{_lambda_.4}
  #allocation0 [shape = 'u32[]', space=smem, size = 0x4, offset = 0x4, fixed_abs, tag = 'smem constant byte address 0x4 - core index']
  #allocation1 [shape = 'u32[144,128]{1,0:T(1,128)}', space=vmem, size = 0x12000, scoped, tag = 'internal scratch']
  %s0 = inlined_call_operand.vmem [shape: bf16[2,16,128], index: 0, kind: input, shape index: {}]
  %s1 = inlined_call_operand.vmem [shape: f32[2,1,128], index: 1, kind: input, shape index: {}, may-alias: {1,7}]
  %s2 = inlined_call_operand.vmem [shape: f32[2,1,128], index: 2, kind: input, shape index: {}, may-alias: {2,6,8,12}]
  %s3 = inlined_call_operand.vmem [shape: bf16[2,128,384], index: 3, kind: input, shape index: {}]
  %s4 = inlined_call_operand.vmem [shape: f32[2,1,384], index: 4, kind: input, shape index: {}]
  %s5 = inlined_call_operand.vmem [shape: bf16[2,128,128], index: 5, kind: input, shape index: {}]
  %s6 = inlined_call_operand.vmem [shape: f32[2,1,128], index: 6, kind: input, shape index: {}, may-alias: {2,6,8,12}]
  %s7 = inlined_call_operand.vmem [shape: f32[2,1,128], index: 7, kind: input, shape index: {}, may-alias: {1,7}]
  %s8 = inlined_call_operand.vmem [shape: f32[2,1,128], index: 8, kind: input, shape index: {}, may-alias: {2,6,8,12}]
  %s9 = inlined_call_operand.vmem [shape: bf16[2,128,512], index: 9, kind: input, shape index: {}]
  %s10 = inlined_call_operand.vmem [shape: f32[2,1,512], index: 10, kind: input, shape index: {}]
  %s11 = inlined_call_operand.vmem [shape: bf16[2,512,128], index: 11, kind: input, shape index: {}]
  %s12 = inlined_call_operand.vmem [shape: f32[2,1,128], index: 12, kind: input, shape index: {}, may-alias: {2,6,8,12}]
  %s13 = inlined_call_operand.vmem [shape: bf16[2,16,128], index: 13, kind: output, shape index: {}]
  %s14 = sld [smem:[#allocation0]]
  $region85: #{_lambda_.4} parent=0
    _
  %s16 = ssub.s32 1, %s14
  %s17 = scalar_select 0, %s16, %s14
  loop: start=0, step=1, limit=4
  $region2: #{_lambda_.4} parent=0 // loop_pre_header
    _
  $region3: #{_lambda_.4} parent=0 // loop_header
    %s19 = sphi 0, %s23
    %p20 = scmp.ge.s32.totalorder %s19, 4
    %s29 = sphi 0, %s31
    %s32 = sphi 0, %s29
    %s33 = sphi 0, %s32
    %s49 = sphi 0, %s33
    %s53 = sphi 0, %s53
    %s55 = sphi 0, %s53
    %s56 = sphi 0, %s55
    %s70 = sphi 0, %s56
    %s74 = sphi 0, %s74
    %s76 = sphi 0, %s74
    %s77 = sphi 0, %s76
    %s91 = sphi 0, %s77
    %s95 = sphi 0, %s95
    %s97 = sphi 0, %s95
    %s98 = sphi 0, %s97
    %s112 = sphi 0, %s98
    %s116 = sphi 0, %s116
    %s118 = sphi 0, %s116
    %s119 = sphi 0, %s118
    %s133 = sphi 0, %s119
    %s137 = sphi 0, %s137
    %s139 = sphi 0, %s137
    %s140 = sphi 0, %s139
    %s154 = sphi 0, %s140
    %s158 = sphi 0, %s158
    %s160 = sphi 0, %s158
    %s161 = sphi 0, %s160
    %s175 = sphi 0, %s161
    %s179 = sphi 0, %s179
    %s181 = sphi 0, %s179
    %s182 = sphi 0, %s181
    %s196 = sphi 0, %s182
    %s200 = sphi 0, %s200
    %s202 = sphi 0, %s200
    %s203 = sphi 0, %s202
    %s217 = sphi 0, %s203
    %s221 = sphi 0, %s221
    %s223 = sphi 0, %s221
    %s224 = sphi 0, %s223
    %s238 = sphi 0, %s224
    %s242 = sphi 0, %s242
    %s244 = sphi 0, %s242
    %s245 = sphi 0, %s244
    %s259 = sphi 0, %s245
    %s263 = sphi 0, %s263
    %s265 = sphi 0, %s263
    %s266 = sphi 0, %s265
    %s280 = sphi 0, %s266
    %s284 = sphi 0, %s284
    %s286 = sphi 0, %s284
    %s287 = sphi 0, %s286
    %s301 = sphi 0, %s287
    %s307 = sphi 0, %s309
    %s310 = sphi 0, %s307
    %s311 = sphi 0, %s310
    %s327 = sphi 0, %s311
  $region4: #{_lambda_.4} parent=0 // loop_header_branch
    %22 = sbr.rel (%p20) target = $region8
  $region5: #{_lambda_.4} parent=0 // loop_body
    %s24 = ssub.s32 %s19, 1
    %s25 = ssub.s32 %s19, 2
    %s26 = sadd.s32 %s19, 1
    %s27 = ssub.s32 %s19, %s26
    %p28 = scmp.eq.s32.totalorder %s27, 0
    %s30 = sadd.s32 %s29, 1
    %s31 = scalar_select %p28, %s29, %s30
    %p34 = pneg %p28
    %p35 = scmp.eq.s32.totalorder %s19, 1
    %p36 = por %p34, %p35
    %p37 = scmp.ne.s32.totalorder %s29, %s32
    %p38 = scmp.eq.s32.totalorder %s19, 0
    %p39 = por %p37, %p38
    %p40 = scmp.ne.s32.totalorder %s29, %s32
    %p41 = scmp.eq.s32.totalorder %s24, 1
    %p42 = por %p40, %p41
    %p43 = scmp.ne.s32.totalorder %s32, %s33
    %p44 = scmp.eq.s32.totalorder %s24, 0
    %p45 = por %p43, %p44
    %p46 = scmp.ne.s32.totalorder %s32, %s33
    %p47 = scmp.eq.s32.totalorder %s25, 1
    %p48 = por %p46, %p47
    %p50 = scmp.ne.s32.totalorder %s33, %s49
    %p51 = scmp.eq.s32.totalorder %s25, 0
    %p52 = por %p50, %p51
    %s54 = sadd.s32 %s53, 1
    %p57 = scmp.eq.s32.totalorder %s19, 1
    %p58 = scmp.ne.s32.totalorder %s53, %s55
    %p59 = scmp.eq.s32.totalorder %s19, 0
    %p60 = por %p58, %p59
    %p61 = scmp.ne.s32.totalorder %s53, %s55
    %p62 = scmp.eq.s32.totalorder %s24, 1
    %p63 = por %p61, %p62
    %p64 = scmp.ne.s32.totalorder %s55, %s56
    %p65 = scmp.eq.s32.totalorder %s24, 0
    %p66 = por %p64, %p65
    %p67 = scmp.ne.s32.totalorder %s55, %s56
    %p68 = scmp.eq.s32.totalorder %s25, 1
    %p69 = por %p67, %p68
    %p71 = scmp.ne.s32.totalorder %s56, %s70
    %p72 = scmp.eq.s32.totalorder %s25, 0
    %p73 = por %p71, %p72
    %s75 = sadd.s32 %s74, 1
    %p78 = scmp.eq.s32.totalorder %s19, 1
    %p79 = scmp.ne.s32.totalorder %s74, %s76
    %p80 = scmp.eq.s32.totalorder %s19, 0
    %p81 = por %p79, %p80
    %p82 = scmp.ne.s32.totalorder %s74, %s76
    %p83 = scmp.eq.s32.totalorder %s24, 1
    %p84 = por %p82, %p83
    %p85 = scmp.ne.s32.totalorder %s76, %s77
    %p86 = scmp.eq.s32.totalorder %s24, 0
    %p87 = por %p85, %p86
    %p88 = scmp.ne.s32.totalorder %s76, %s77
    %p89 = scmp.eq.s32.totalorder %s25, 1
    %p90 = por %p88, %p89
    %p92 = scmp.ne.s32.totalorder %s77, %s91
    %p93 = scmp.eq.s32.totalorder %s25, 0
    %p94 = por %p92, %p93
    %s96 = sadd.s32 %s95, 1
    %p99 = scmp.eq.s32.totalorder %s19, 1
    %p100 = scmp.ne.s32.totalorder %s95, %s97
    %p101 = scmp.eq.s32.totalorder %s19, 0
    %p102 = por %p100, %p101
    %p103 = scmp.ne.s32.totalorder %s95, %s97
    %p104 = scmp.eq.s32.totalorder %s24, 1
    %p105 = por %p103, %p104
    %p106 = scmp.ne.s32.totalorder %s97, %s98
    %p107 = scmp.eq.s32.totalorder %s24, 0
    %p108 = por %p106, %p107
    %p109 = scmp.ne.s32.totalorder %s97, %s98
    %p110 = scmp.eq.s32.totalorder %s25, 1
    %p111 = por %p109, %p110
    %p113 = scmp.ne.s32.totalorder %s98, %s112
    %p114 = scmp.eq.s32.totalorder %s25, 0
    %p115 = por %p113, %p114
    %s117 = sadd.s32 %s116, 1
    %p120 = scmp.eq.s32.totalorder %s19, 1
    %p121 = scmp.ne.s32.totalorder %s116, %s118
    %p122 = scmp.eq.s32.totalorder %s19, 0
    %p123 = por %p121, %p122
    %p124 = scmp.ne.s32.totalorder %s116, %s118
    %p125 = scmp.eq.s32.totalorder %s24, 1
    %p126 = por %p124, %p125
    %p127 = scmp.ne.s32.totalorder %s118, %s119
    %p128 = scmp.eq.s32.totalorder %s24, 0
    %p129 = por %p127, %p128
    %p130 = scmp.ne.s32.totalorder %s118, %s119
    %p131 = scmp.eq.s32.totalorder %s25, 1
    %p132 = por %p130, %p131
    %p134 = scmp.ne.s32.totalorder %s119, %s133
    %p135 = scmp.eq.s32.totalorder %s25, 0
    %p136 = por %p134, %p135
    %s138 = sadd.s32 %s137, 1
    %p141 = scmp.eq.s32.totalorder %s19, 1
    %p142 = scmp.ne.s32.totalorder %s137, %s139
    %p143 = scmp.eq.s32.totalorder %s19, 0
    %p144 = por %p142, %p143
    %p145 = scmp.ne.s32.totalorder %s137, %s139
    %p146 = scmp.eq.s32.totalorder %s24, 1
    %p147 = por %p145, %p146
    %p148 = scmp.ne.s32.totalorder %s139, %s140
    %p149 = scmp.eq.s32.totalorder %s24, 0
    %p150 = por %p148, %p149
    %p151 = scmp.ne.s32.totalorder %s139, %s140
    %p152 = scmp.eq.s32.totalorder %s25, 1
    %p153 = por %p151, %p152
    %p155 = scmp.ne.s32.totalorder %s140, %s154
    %p156 = scmp.eq.s32.totalorder %s25, 0
    %p157 = por %p155, %p156
    %s159 = sadd.s32 %s158, 1
    %p162 = scmp.eq.s32.totalorder %s19, 1
    %p163 = scmp.ne.s32.totalorder %s158, %s160
    %p164 = scmp.eq.s32.totalorder %s19, 0
    %p165 = por %p163, %p164
    %p166 = scmp.ne.s32.totalorder %s158, %s160
    %p167 = scmp.eq.s32.totalorder %s24, 1
    %p168 = por %p166, %p167
    %p169 = scmp.ne.s32.totalorder %s160, %s161
    %p170 = scmp.eq.s32.totalorder %s24, 0
    %p171 = por %p169, %p170
    %p172 = scmp.ne.s32.totalorder %s160, %s161
    %p173 = scmp.eq.s32.totalorder %s25, 1
    %p174 = por %p172, %p173
    %p176 = scmp.ne.s32.totalorder %s161, %s175
    %p177 = scmp.eq.s32.totalorder %s25, 0
    %p178 = por %p176, %p177
    %s180 = sadd.s32 %s179, 1
    %p183 = scmp.eq.s32.totalorder %s19, 1
    %p184 = scmp.ne.s32.totalorder %s179, %s181
    %p185 = scmp.eq.s32.totalorder %s19, 0
    %p186 = por %p184, %p185
    %p187 = scmp.ne.s32.totalorder %s179, %s181
    %p188 = scmp.eq.s32.totalorder %s24, 1
    %p189 = por %p187, %p188
    %p190 = scmp.ne.s32.totalorder %s181, %s182
    %p191 = scmp.eq.s32.totalorder %s24, 0
    %p192 = por %p190, %p191
    %p193 = scmp.ne.s32.totalorder %s181, %s182
    %p194 = scmp.eq.s32.totalorder %s25, 1
    %p195 = por %p193, %p194
    %p197 = scmp.ne.s32.totalorder %s182, %s196
    %p198 = scmp.eq.s32.totalorder %s25, 0
    %p199 = por %p197, %p198
    %s201 = sadd.s32 %s200, 1
    %p204 = scmp.eq.s32.totalorder %s19, 1
    %p205 = scmp.ne.s32.totalorder %s200, %s202
    %p206 = scmp.eq.s32.totalorder %s19, 0
    %p207 = por %p205, %p206
    %p208 = scmp.ne.s32.totalorder %s200, %s202
    %p209 = scmp.eq.s32.totalorder %s24, 1
    %p210 = por %p208, %p209
    %p211 = scmp.ne.s32.totalorder %s202, %s203
    %p212 = scmp.eq.s32.totalorder %s24, 0
    %p213 = por %p211, %p212
    %p214 = scmp.ne.s32.totalorder %s202, %s203
    %p215 = scmp.eq.s32.totalorder %s25, 1
    %p216 = por %p214, %p215
    %p218 = scmp.ne.s32.totalorder %s203, %s217
    %p219 = scmp.eq.s32.totalorder %s25, 0
    %p220 = por %p218, %p219
    %s222 = sadd.s32 %s221, 1
    %p225 = scmp.eq.s32.totalorder %s19, 1
    %p226 = scmp.ne.s32.totalorder %s221, %s223
    %p227 = scmp.eq.s32.totalorder %s19, 0
    %p228 = por %p226, %p227
    %p229 = scmp.ne.s32.totalorder %s221, %s223
    %p230 = scmp.eq.s32.totalorder %s24, 1
    %p231 = por %p229, %p230
    %p232 = scmp.ne.s32.totalorder %s223, %s224
    %p233 = scmp.eq.s32.totalorder %s24, 0
    %p234 = por %p232, %p233
    %p235 = scmp.ne.s32.totalorder %s223, %s224
    %p236 = scmp.eq.s32.totalorder %s25, 1
    %p237 = por %p235, %p236
    %p239 = scmp.ne.s32.totalorder %s224, %s238
    %p240 = scmp.eq.s32.totalorder %s25, 0
    %p241 = por %p239, %p240
    %s243 = sadd.s32 %s242, 1
    %p246 = scmp.eq.s32.totalorder %s19, 1
    %p247 = scmp.ne.s32.totalorder %s242, %s244
    %p248 = scmp.eq.s32.totalorder %s19, 0
    %p249 = por %p247, %p248
    %p250 = scmp.ne.s32.totalorder %s242, %s244
    %p251 = scmp.eq.s32.totalorder %s24, 1
    %p252 = por %p250, %p251
    %p253 = scmp.ne.s32.totalorder %s244, %s245
    %p254 = scmp.eq.s32.totalorder %s24, 0
    %p255 = por %p253, %p254
    %p256 = scmp.ne.s32.totalorder %s244, %s245
    %p257 = scmp.eq.s32.totalorder %s25, 1
    %p258 = por %p256, %p257
    %p260 = scmp.ne.s32.totalorder %s245, %s259
    %p261 = scmp.eq.s32.totalorder %s25, 0
    %p262 = por %p260, %p261
    %s264 = sadd.s32 %s263, 1
    %p267 = scmp.eq.s32.totalorder %s19, 1
    %p268 = scmp.ne.s32.totalorder %s263, %s265
    %p269 = scmp.eq.s32.totalorder %s19, 0
    %p270 = por %p268, %p269
    %p271 = scmp.ne.s32.totalorder %s263, %s265
    %p272 = scmp.eq.s32.totalorder %s24, 1
    %p273 = por %p271, %p272
    %p274 = scmp.ne.s32.totalorder %s265, %s266
    %p275 = scmp.eq.s32.totalorder %s24, 0
    %p276 = por %p274, %p275
    %p277 = scmp.ne.s32.totalorder %s265, %s266
    %p278 = scmp.eq.s32.totalorder %s25, 1
    %p279 = por %p277, %p278
    %p281 = scmp.ne.s32.totalorder %s266, %s280
    %p282 = scmp.eq.s32.totalorder %s25, 0
    %p283 = por %p281, %p282
    %s285 = sadd.s32 %s284, 1
    %p288 = scmp.eq.s32.totalorder %s19, 1
    %p289 = scmp.ne.s32.totalorder %s284, %s286
    %p290 = scmp.eq.s32.totalorder %s19, 0
    %p291 = por %p289, %p290
    %p292 = scmp.ne.s32.totalorder %s284, %s286
    %p293 = scmp.eq.s32.totalorder %s24, 1
    %p294 = por %p292, %p293
    %p295 = scmp.ne.s32.totalorder %s286, %s287
    %p296 = scmp.eq.s32.totalorder %s24, 0
    %p297 = por %p295, %p296
    %p298 = scmp.ne.s32.totalorder %s286, %s287
    %p299 = scmp.eq.s32.totalorder %s25, 1
    %p300 = por %p298, %p299
    %p302 = scmp.ne.s32.totalorder %s287, %s301
    %p303 = scmp.eq.s32.totalorder %s25, 0
    %p304 = por %p302, %p303
    %s305 = ssub.s32 %s19, %s26
    %p306 = scmp.eq.s32.totalorder %s305, 0
    %s308 = sadd.s32 %s307, 1
    %s309 = scalar_select %p306, %s307, %s308
    %p312 = pneg %p306
    %p313 = scmp.eq.s32.totalorder %s19, 1
    %p314 = por %p312, %p313
    %p315 = scmp.ne.s32.totalorder %s307, %s310
    %p316 = scmp.eq.s32.totalorder %s19, 0
    %p317 = por %p315, %p316
    %p318 = scmp.ne.s32.totalorder %s307, %s310
    %p319 = scmp.eq.s32.totalorder %s24, 1
    %p320 = por %p318, %p319
    %p321 = scmp.ne.s32.totalorder %s310, %s311
    %p322 = scmp.eq.s32.totalorder %s24, 0
    %p323 = por %p321, %p322
    %p324 = scmp.ne.s32.totalorder %s310, %s311
    %p325 = scmp.eq.s32.totalorder %s25, 1
    %p326 = por %p324, %p325
    %p328 = scmp.ne.s32.totalorder %s311, %s327
    %p329 = scmp.eq.s32.totalorder %s25, 0
    %p330 = por %p328, %p329
    %p331 = scmp.le.s32.totalorder 1, %s19
    %p332 = scmp.lt.s32.totalorder %s19, 3
    %p333 = pnand %p331, %p332
    %p334 = pneg %p333
    // Predicated region
    $region9: #{_lambda_.4} parent=5 // pred_check
      _
    $region10: #{_lambda_.4} parent=5 // pred_check_branch
      %336 = sbr.rel (%p333) target = $region12
    $region11: #{_lambda_.4} parent=5 // pred_region
      %s337 = ssub.s32 %s19, 1
      // Predicated region
      $region13: #{_lambda_.4} parent=11 // pred_check
        %p338 = pneg %p66
      $region14: #{_lambda_.4} parent=11 // pred_check_branch
        %340 = sbr.rel (%p338) target = $region16
      $region15: #{_lambda_.4} parent=11 // pred_region
        _
      $region16: #{_lambda_.4} parent=11 // pred_fallthru
        _
      // Predicated region
      $region17: #{_lambda_.4} parent=11 // pred_check
        %p341 = pneg %p87
      $region18: #{_lambda_.4} parent=11 // pred_check_branch
        %343 = sbr.rel (%p341) target = $region20
      $region19: #{_lambda_.4} parent=11 // pred_region
        _
      $region20: #{_lambda_.4} parent=11 // pred_fallthru
        _
      // Predicated region
      $region21: #{_lambda_.4} parent=11 // pred_check
        %p344 = pneg %p108
      $region22: #{_lambda_.4} parent=11 // pred_check_branch
        %346 = sbr.rel (%p344) target = $region24
      $region23: #{_lambda_.4} parent=11 // pred_region
        _
      $region24: #{_lambda_.4} parent=11 // pred_fallthru
        _
      // Predicated region
      $region25: #{_lambda_.4} parent=11 // pred_check
        %p347 = pneg %p129
      $region26: #{_lambda_.4} parent=11 // pred_check_branch
        %349 = sbr.rel (%p347) target = $region28
      $region27: #{_lambda_.4} parent=11 // pred_region
        _
      $region28: #{_lambda_.4} parent=11 // pred_fallthru
        _
      // Predicated region
      $region29: #{_lambda_.4} parent=11 // pred_check
        %p350 = pneg %p150
      $region30: #{_lambda_.4} parent=11 // pred_check_branch
        %352 = sbr.rel (%p350) target = $region32
      $region31: #{_lambda_.4} parent=11 // pred_region
        _
      $region32: #{_lambda_.4} parent=11 // pred_fallthru
        _
      // Predicated region
      $region33: #{_lambda_.4} parent=11 // pred_check
        %p353 = pneg %p171
      $region34: #{_lambda_.4} parent=11 // pred_check_branch
        %355 = sbr.rel (%p353) target = $region36
      $region35: #{_lambda_.4} parent=11 // pred_region
        _
      $region36: #{_lambda_.4} parent=11 // pred_fallthru
        _
      // Predicated region
      $region37: #{_lambda_.4} parent=11 // pred_check
        %p356 = pneg %p192
      $region38: #{_lambda_.4} parent=11 // pred_check_branch
        %358 = sbr.rel (%p356) target = $region40
      $region39: #{_lambda_.4} parent=11 // pred_region
        _
      $region40: #{_lambda_.4} parent=11 // pred_fallthru
        _
      // Predicated region
      $region41: #{_lambda_.4} parent=11 // pred_check
        %p359 = pneg %p213
      $region42: #{_lambda_.4} parent=11 // pred_check_branch
        %361 = sbr.rel (%p359) target = $region44
      $region43: #{_lambda_.4} parent=11 // pred_region
        _
      $region44: #{_lambda_.4} parent=11 // pred_fallthru
        _
      // Predicated region
      $region45: #{_lambda_.4} parent=11 // pred_check
        %p362 = pneg %p234
      $region46: #{_lambda_.4} parent=11 // pred_check_branch
        %364 = sbr.rel (%p362) target = $region48
      $region47: #{_lambda_.4} parent=11 // pred_region
        _
      $region48: #{_lambda_.4} parent=11 // pred_fallthru
        _
      // Predicated region
      $region49: #{_lambda_.4} parent=11 // pred_check
        %p365 = pneg %p255
      $region50: #{_lambda_.4} parent=11 // pred_check_branch
        %367 = sbr.rel (%p365) target = $region52
      $region51: #{_lambda_.4} parent=11 // pred_region
        _
      $region52: #{_lambda_.4} parent=11 // pred_fallthru
        _
      // Predicated region
      $region53: #{_lambda_.4} parent=11 // pred_check
        %p368 = pneg %p276
      $region54: #{_lambda_.4} parent=11 // pred_check_branch
        %370 = sbr.rel (%p368) target = $region56
      $region55: #{_lambda_.4} parent=11 // pred_region
        _
      $region56: #{_lambda_.4} parent=11 // pred_fallthru
        _
      // Predicated region
      $region57: #{_lambda_.4} parent=11 // pred_check
        %p371 = pneg %p297
      $region58: #{_lambda_.4} parent=11 // pred_check_branch
        %373 = sbr.rel (%p371) target = $region60
      $region59: #{_lambda_.4} parent=11 // pred_region
        _
      $region60: #{_lambda_.4} parent=11 // pred_fallthru
        _
    $region12: #{_lambda_.4} parent=5 // pred_fallthru
      _
    %p374 = scmp.lt.s32.totalorder %s19, 2
    // Predicated region
    $region61: #{_lambda_.4} parent=5 // pred_check
      %p375 = pneg %p374
    $region62: #{_lambda_.4} parent=5 // pred_check_branch
      %377 = sbr.rel (%p375) target = $region64
    $region63: #{_lambda_.4} parent=5 // pred_region
      // Predicated region
      $region65: #{_lambda_.4} parent=63 // pred_check
        %p378 = pneg %p39
      $region66: #{_lambda_.4} parent=63 // pred_check_branch
        %380 = sbr.rel (%p378) target = $region68
      $region67: #{_lambda_.4} parent=63 // pred_region
        %p381 = scmp.lt.s32.totalorder %s19, 1
        %s382 = scalar_select %p381, %s19, 1
        %s383 = smul.addr %s382, 2
        %s384 = smul.addr %s383, 4
        %s385 = scalar_lea.vmem %s0, %s384
      $region68: #{_lambda_.4} parent=63 // pred_fallthru
        _
    $region64: #{_lambda_.4} parent=5 // pred_fallthru
      _
    %p386 = scmp.le.s32.totalorder 1, %s19
    %p387 = scmp.lt.s32.totalorder %s19, 3
    %p388 = pnand %p386, %p387
    %p389 = pneg %p388
    // Predicated region
    $region69: #{_lambda_.4} parent=5 // pred_check
      _
    $region70: #{_lambda_.4} parent=5 // pred_check_branch
      %391 = sbr.rel (%p388) target = $region72
    $region71: #{_lambda_.4} parent=5 // pred_region
      %s392 = ssub.s32 %s19, 1
      %p393 = scmp.lt.s32.totalorder %s24, 1
      %s394 = scalar_select %p393, %s24, 1
      %s395 = smul.addr %s394, 2
      %s396 = smul.addr %s395, 4
      %s397 = scalar_lea.vmem %s0, %s396
      %p398 = pneg %p45
      %p399 = pneg %p42
      %p400 = pneg %p66
      %p401 = pneg %p63
      %p402 = pneg %p87
      %p403 = pneg %p84
      %p404 = pneg %p108
      %p405 = pneg %p105
      %p406 = pneg %p129
      %p407 = pneg %p126
      %p408 = pneg %p150
      %p409 = pneg %p147
      %p410 = pneg %p171
      %p411 = pneg %p168
      %p412 = pneg %p192
      %p413 = pneg %p189
      %p414 = pneg %p213
      %p415 = pneg %p210
      %p416 = pneg %p234
      %p417 = pneg %p231
      %p418 = pneg %p255
      %p419 = pneg %p252
      %p420 = pneg %p276
      %p421 = pneg %p273
      %p422 = pneg %p297
      %p423 = pneg %p294
      %p424 = pneg %p323
      %p425 = pneg %p320
      %p426 = scmp.lt.s32.totalorder %s24, 1
      %s427 = scalar_select %p426, %s24, 1
      %s428 = smul.addr %s427, 2
      %s429 = smul.addr %s428, 4
      %s430 = scalar_lea.vmem %s13, %s429
      %p431 = scmp.lt.s32.totalorder %s24, 1
      %s432 = scalar_select %p431, %s24, 1
      %s433 = smul.addr %s432, 2
      %s434 = smul.addr %s433, 4
      %s435 = scalar_lea.vmem %s0, %s434
      %p436 = scmp.lt.s32.totalorder %s24, 1
      %s437 = scalar_select %p436, %s24, 1
      %s438 = smul.addr %s437, 2
      %s439 = smul.addr %s438, 4
      %s440 = scalar_lea.vmem %s13, %s439
      %v442 = vld [vmem:[%s435] sm:$0xf]
      %v443 = vld [vmem:[%s435 + $0x4] sm:$0xf]
      %v444 = vunpack.c.l.bf16 %v442
      %v445 = vunpack.c.l.bf16 %v443
      %v446 = vld [vmem:[%s1] sm:$0x1]
      %v447 = vld [vmem:[%s2] sm:$0x1]
      %448 = vadd.xlane.f32.xlu0 %v444
      %v449 = vpop.xlane.xlu0 %448
      %450 = vadd.xlane.f32.xlu0 %v445
      %v451 = vpop.xlane.xlu0 %450
      %v452 = vrcp.pop 128.0
      %v453 = vmul.f32 %v449, %v452
      %v454 = vmul.f32 %v451, %v452
      %v455 = vsub.f32 %v444, %v453
      %v456 = vsub.f32 %v445, %v454
      %v457 = vmul.f32 %v455, %v455
      %v458 = vmul.f32 %v456, %v456
      %459 = vadd.xlane.f32.xlu0 %v457
      %v460 = vpop.xlane.xlu0 %459
      %461 = vadd.xlane.f32.xlu0 %v458
      %v462 = vpop.xlane.xlu0 %461
      %v463 = vmul.f32 %v460, %v452
      %v464 = vmul.f32 %v462, %v452
      %v465 = vadd.f32 %v463, 1e-05
      %v466 = vadd.f32 %v464, 1e-05
      %v467 = vrsqrt.pop %v465
      %v468 = vrsqrt.pop %v466
      %v469 = vmul.f32 %v455, %v467
      %v470 = vmul.f32 %v456, %v468
      %v472 = vlaneseq
      %v473 = vshrl.u32 %v472, 7
      %v474 = vsub.s32 0, %v473
      %v475 = vrot.slane %v446, %v474
      %v477 = vmul.f32 %v469, %v475
      %v478 = vmul.f32 %v470, %v475
      %v480 = vlaneseq
      %v481 = vshrl.u32 %v480, 7
      %v482 = vsub.s32 0, %v481
      %v483 = vrot.slane %v447, %v482
      %v485 = vadd.f32 %v477, %v483
      %v486 = vadd.f32 %v478, %v483
      %v487 = vpack.c.bf16 %v486, %v485
      %v488 = vld [vmem:[%s3] sm:$0xff]
      %v489 = vld [vmem:[%s3 + $0x8] sm:$0xf]
      %v490 = vld [vmem:[%s3 + $0xc] sm:$0xff]
      %v491 = vld [vmem:[%s3 + $0x14] sm:$0xf]
      %v492 = vld [vmem:[%s3 + $0x18] sm:$0xff]
      %v493 = vld [vmem:[%s3 + $0x20] sm:$0xf]
      %v494 = vld [vmem:[%s3 + $0x24] sm:$0xff]
      %v495 = vld [vmem:[%s3 + $0x2c] sm:$0xf]
      %v496 = vld [vmem:[%s3 + $0x30] sm:$0xff]
      %v497 = vld [vmem:[%s3 + $0x38] sm:$0xf]
      %v498 = vld [vmem:[%s3 + $0x3c] sm:$0xff]
      %v499 = vld [vmem:[%s3 + $0x44] sm:$0xf]
      %v500 = vld [vmem:[%s3 + $0x48] sm:$0xff]
      %v501 = vld [vmem:[%s3 + $0x50] sm:$0xf]
      %v502 = vld [vmem:[%s3 + $0x54] sm:$0xff]
      %v503 = vld [vmem:[%s3 + $0x5c] sm:$0xf]
      %v504 = vld [vmem:[%s3 + $0x60] sm:$0xff]
      %v505 = vld [vmem:[%s3 + $0x68] sm:$0xf]
      %v506 = vld [vmem:[%s3 + $0x6c] sm:$0xff]
      %v507 = vld [vmem:[%s3 + $0x74] sm:$0xf]
      %v508 = vld [vmem:[%s3 + $0x78] sm:$0xff]
      %v509 = vld [vmem:[%s3 + $0x80] sm:$0xf]
      %v510 = vld [vmem:[%s3 + $0x84] sm:$0xff]
      %v511 = vld [vmem:[%s3 + $0x8c] sm:$0xf]
      %v512 = vld [vmem:[%s3 + $0x90] sm:$0xff]
      %v513 = vld [vmem:[%s3 + $0x98] sm:$0xf]
      %v514 = vld [vmem:[%s3 + $0x9c] sm:$0xff]
      %v515 = vld [vmem:[%s3 + $0xa4] sm:$0xf]
      %v516 = vld [vmem:[%s3 + $0xa8] sm:$0xff]
      %v517 = vld [vmem:[%s3 + $0xb0] sm:$0xf]
      %v518 = vld [vmem:[%s3 + $0xb4] sm:$0xff]
      %v519 = vld [vmem:[%s3 + $0xbc] sm:$0xf]
      %v520 = vld [vmem:[%s4] sm:$0x7]
      %v522 = vlaneseq
      %v523 = vshrl.u32 %v522, 7
      %v524 = vsub.s32 0, %v523
      %v525 = vrot.slane %v520, %v524
      %v526 = vlaneseq
      %v527 = vshrl.u32 %v526, 7
      %v528 = vsub.s32 1, %v527
      %v529 = vrot.slane %v520, %v528
      %v530 = vlaneseq
      %v531 = vshrl.u32 %v530, 7
      %v532 = vsub.s32 2, %v531
      %v533 = vrot.slane %v520, %v532
      %v569 = vunpack.c.l.b16 %v488
      %v570 = vunpack.c.h.b16 %v488
      %v571 = vunpack.c.l.b16 %v489
      %v572 = vunpack.c.l.b16 %v490
      %v573 = vunpack.c.h.b16 %v490
      %v574 = vunpack.c.l.b16 %v491
      %v575 = vunpack.c.l.b16 %v492
      %v576 = vunpack.c.h.b16 %v492
      %v577 = vunpack.c.l.b16 %v493
      %v578 = vunpack.c.l.b16 %v494
      %v579 = vunpack.c.h.b16 %v494
      %v580 = vunpack.c.l.b16 %v495
      %v581 = vunpack.c.l.b16 %v496
      %v582 = vunpack.c.h.b16 %v496
      %v583 = vunpack.c.l.b16 %v497
      %v584 = vunpack.c.l.b16 %v498
      %v585 = vunpack.c.h.b16 %v498
      %v586 = vunpack.c.l.b16 %v499
      %v587 = vunpack.c.l.b16 %v500
      %v588 = vunpack.c.h.b16 %v500
      %v589 = vunpack.c.l.b16 %v501
      %v590 = vunpack.c.l.b16 %v502
      %v591 = vunpack.c.h.b16 %v502
      %v592 = vunpack.c.l.b16 %v503
      %v593 = vunpack.c.l.b16 %v504
      %v594 = vunpack.c.h.b16 %v504
      %v595 = vunpack.c.l.b16 %v505
      %v596 = vunpack.c.l.b16 %v506
      %v597 = vunpack.c.h.b16 %v506
      %v598 = vunpack.c.l.b16 %v507
      %v599 = vunpack.c.l.b16 %v508
      %v600 = vunpack.c.h.b16 %v508
      %v601 = vunpack.c.l.b16 %v509
      %v602 = vunpack.c.l.b16 %v510
      %v603 = vunpack.c.h.b16 %v510
      %v604 = vunpack.c.l.b16 %v511
      %v605 = vunpack.c.l.b16 %v512
      %v606 = vunpack.c.h.b16 %v512
      %v607 = vunpack.c.l.b16 %v513
      %v608 = vunpack.c.l.b16 %v514
      %v609 = vunpack.c.h.b16 %v514
      %v610 = vunpack.c.l.b16 %v515
      %v611 = vunpack.c.l.b16 %v516
      %v612 = vunpack.c.h.b16 %v516
      %v613 = vunpack.c.l.b16 %v517
      %v614 = vunpack.c.l.b16 %v518
      %v615 = vunpack.c.h.b16 %v518
      %v616 = vunpack.c.l.b16 %v519
      %v617 = vpack.c.b16 %v572, %v569
      %v618 = vpack.c.b16 %v573, %v570
      %v619 = vpack.c.b16 %v574, %v571
      %v620 = vpack.c.b16 %v578, %v575
      %v621 = vpack.c.b16 %v579, %v576
      %v622 = vpack.c.b16 %v580, %v577
      %v623 = vpack.c.b16 %v584, %v581
      %v624 = vpack.c.b16 %v585, %v582
      %v625 = vpack.c.b16 %v586, %v583
      %v626 = vpack.c.b16 %v590, %v587
      %v627 = vpack.c.b16 %v591, %v588
      %v628 = vpack.c.b16 %v592, %v589
      %v629 = vpack.c.b16 %v596, %v593
      %v630 = vpack.c.b16 %v597, %v594
      %v631 = vpack.c.b16 %v598, %v595
      %v632 = vpack.c.b16 %v602, %v599
      %v633 = vpack.c.b16 %v603, %v600
      %v634 = vpack.c.b16 %v604, %v601
      %v635 = vpack.c.b16 %v608, %v605
      %v636 = vpack.c.b16 %v609, %v606
      %v637 = vpack.c.b16 %v610, %v607
      %v638 = vpack.c.b16 %v614, %v611
      %v639 = vpack.c.b16 %v615, %v612
      %v640 = vpack.c.b16 %v616, %v613
      %665 = vmatprep.subr.bf16.mxu0 %v639
      %666 = vmatpush1.bf16.msra.mxu0 %v638
      %667 = vmatprep.subr.bf16.mxu0 %v636
      %668 = vmatpush1.bf16.msra.mxu0 %v635
      %669 = vmatprep.subr.bf16.mxu0 %v633
      %670 = vmatpush1.bf16.msra.mxu0 %v632
      %671 = vmatprep.subr.bf16.mxu0 %v630
      %672 = vmatpush1.bf16.msra.mxu0 %v629
      %673 = vmatprep.subr.bf16.mxu0 %v627
      %674 = vmatpush1.bf16.msra.mxu0 %v626
      %675 = vmatprep.subr.bf16.mxu0 %v624
      %676 = vmatpush1.bf16.msra.mxu0 %v623
      %677 = vmatprep.subr.bf16.mxu0 %v621
      %678 = vmatpush1.bf16.msra.mxu0 %v620
      %679 = vmatprep.subr.bf16.mxu0 %v618
      %680 = vmatpush1.bf16.msra.mxu0 %v617
      %681 = vmatprep.subr.bf16.mxu0 0
      %682 = vmatpush2.bf16.msra.mxu0 0
      %683 = vmatprep.subr.bf16.mxu0 0
      %684 = vmatpush2.bf16.msra.mxu0 0
      %685 = vmatprep.subr.bf16.mxu0 0
      %686 = vmatpush2.bf16.msra.mxu0 0
      %687 = vmatprep.subr.bf16.mxu0 0
      %688 = vmatpush2.bf16.msra.mxu0 0
      %689 = vmatprep.subr.bf16.mxu0 0
      %690 = vmatpush2.bf16.msra.mxu0 0
      %691 = vmatprep.subr.bf16.mxu0 0
      %692 = vmatpush2.bf16.msra.mxu0 0
      %693 = vmatprep.subr.bf16.mxu0 0
      %694 = vmatpush2.bf16.msra.mxu0 0
      %695 = vmatprep.subr.bf16.mxu0 0
      %696 = vmatpush2.bf16.msra.mxu0 0
      %697 = vmatprep.mubr.bf16.mxu0 0
      %698 = vmatmul.mubr.bf16.gmra.mxu0 %v487
      %v699 = vpop.f32.mrf.mxu0
      %v700 = vadd.f32 %v525, %v699
      %v701 = vpop.f32.mrf.mxu0
      %v702 = vadd.f32 %v529, %v701
      %v703 = vpop.f32.mrf.mxu0
      %v704 = vadd.f32 %v525, %v703
      %v705 = vpop.f32.mrf.mxu0
      %v706 = vadd.f32 %v529, %v705
      %707 = vdwg.mxu0
      %708 = vmatprep.subr.bf16.mxu0 0
      %709 = vmatpush1.bf16.msra.mxu0 %v640
      %710 = vmatprep.subr.bf16.mxu0 0
      %711 = vmatpush1.bf16.msra.mxu0 %v637
      %712 = vmatprep.subr.bf16.mxu0 0
      %713 = vmatpush1.bf16.msra.mxu0 %v634
      %714 = vmatprep.subr.bf16.mxu0 0
      %715 = vmatpush1.bf16.msra.mxu0 %v631
      %716 = vmatprep.subr.bf16.mxu0 0
      %717 = vmatpush1.bf16.msra.mxu0 %v628
      %718 = vmatprep.subr.bf16.mxu0 0
      %719 = vmatpush1.bf16.msra.mxu0 %v625
      %720 = vmatprep.subr.bf16.mxu0 0
      %721 = vmatpush1.bf16.msra.mxu0 %v622
      %722 = vmatprep.subr.bf16.mxu0 0
      %723 = vmatpush1.bf16.msra.mxu0 %v619
      %724 = vmatprep.subr.bf16.mxu0 0
      %725 = vmatpush2.bf16.msra.mxu0 0
      %726 = vmatprep.subr.bf16.mxu0 0
      %727 = vmatpush2.bf16.msra.mxu0 0
      %728 = vmatprep.subr.bf16.mxu0 0
      %729 = vmatpush2.bf16.msra.mxu0 0
      %730 = vmatprep.subr.bf16.mxu0 0
      %731 = vmatpush2.bf16.msra.mxu0 0
      %732 = vmatprep.subr.bf16.mxu0 0
      %733 = vmatpush2.bf16.msra.mxu0 0
      %734 = vmatprep.subr.bf16.mxu0 0
      %735 = vmatpush2.bf16.msra.mxu0 0
      %736 = vmatprep.subr.bf16.mxu0 0
      %737 = vmatpush2.bf16.msra.mxu0 0
      %738 = vmatprep.subr.bf16.mxu0 0
      %739 = vmatpush2.bf16.msra.mxu0 0
      %740 = vmatprep.mubr.bf16.mxu0 0
      %741 = vmatmul.mubr.bf16.gmra.mxu0 %v487
      %v742 = vpop.f32.mrf.mxu0
      %v743 = vadd.f32 %v533, %v742
      %v744 = vpop.f32.mrf.mxu0
      %v745 = vpop.f32.mrf.mxu0
      %v746 = vadd.f32 %v533, %v745
      %v747 = vpop.f32.mrf.mxu0
      %748 = vdwg.mxu0
      %v749 = vpack.c.bf16 %v704, %v700
      %v750 = vpack.c.bf16 %v706, %v702
      %v751 = vpack.c.bf16 %v746, %v743
      %vm752 = vcmask 130048
      %v754 = vsel %vm752, %v749, 0
      %v757 = vsel %vm752, %v750, 0
      %759 = vmatprep.subr.bf16.mxu0 0
      %760 = vmatpush1.bf16.xpose.msra.mxu0 0
      %761 = vmatprep.subr.bf16.mxu0 0
      %762 = vmatpush1.bf16.xpose.msra.mxu0 0
      %763 = vmatprep.subr.bf16.mxu0 0
      %764 = vmatpush1.bf16.xpose.msra.mxu0 0
      %765 = vmatprep.subr.bf16.mxu0 0
      %766 = vmatpush1.bf16.xpose.msra.mxu0 0
      %767 = vmatprep.subr.bf16.mxu0 0
      %768 = vmatpush1.bf16.xpose.msra.mxu0 0
      %769 = vmatprep.subr.bf16.mxu0 0
      %770 = vmatpush1.bf16.xpose.msra.mxu0 0
      %771 = vmatprep.subr.bf16.mxu0 0
      %772 = vmatpush1.bf16.xpose.msra.mxu0 0
      %773 = vmatprep.subr.bf16.mxu0 0
      %774 = vmatpush1.bf16.xpose.msra.mxu0 %v757
      %775 = vmatprep.subr.bf16.mxu0 0
      %776 = vmatpush2.bf16.xpose.msra.mxu0 0
      %777 = vmatprep.subr.bf16.mxu0 0
      %778 = vmatpush2.bf16.xpose.msra.mxu0 0
      %779 = vmatprep.subr.bf16.mxu0 0
      %780 = vmatpush2.bf16.xpose.msra.mxu0 0
      %781 = vmatprep.subr.bf16.mxu0 0
      %782 = vmatpush2.bf16.xpose.msra.mxu0 0
      %783 = vmatprep.subr.bf16.mxu0 0
      %784 = vmatpush2.bf16.xpose.msra.mxu0 0
      %785 = vmatprep.subr.bf16.mxu0 0
      %786 = vmatpush2.bf16.xpose.msra.mxu0 0
      %787 = vmatprep.subr.bf16.mxu0 0
      %788 = vmatpush2.bf16.xpose.msra.mxu0 0
      %789 = vmatprep.subr.bf16.mxu0 0
      %790 = vmatpush2.bf16.xpose.msra.mxu0 0
      %791 = vmatprep.mubr.bf16.mxu0 0
      %792 = vmatmul.mubr.bf16.gmra.mxu0 %v754
      %v793 = vpop.f32.mrf.mxu0
      %v794 = vadd.f32 0.0, %v793
      %v795 = vpop.f32.mrf.mxu0
      %v796 = vpop.f32.mrf.mxu0
      %v797 = vadd.f32 0.0, %v796
      %v798 = vpop.f32.mrf.mxu0
      %799 = vdwg.mxu0
      %v800 = vmul.f32 %v794, 0.25
      %v801 = vmul.f32 %v797, 0.25
      %v802 = vsel %vm752, %v800, -inf
      %803 = vmax.xlane.f32.xlu0 %v802
      %v804 = vpop.xlane.xlu0 %803
      %v805 = vsel %vm752, %v801, -inf
      %806 = vmax.xlane.f32.xlu0 %v805
      %v807 = vpop.xlane.xlu0 %806
      %v808 = vsub.f32 %v800, %v804
      %v809 = vsub.f32 %v801, %v807
      %v810 = vmul.f32 %v808, 1.442695
      %v811 = vpow.pop %v810
      %v812 = vmul.f32 %v809, 1.442695
      %v813 = vpow.pop %v812
      %v814 = vsel %vm752, %v811, 0.0
      %815 = vadd.xlane.f32.xlu0 %v814
      %v816 = vpop.xlane.xlu0 %815
      %v817 = vsel %vm752, %v813, 0.0
      %818 = vadd.xlane.f32.xlu0 %v817
      %v819 = vpop.xlane.xlu0 %818
      %v820 = vrcp.pop %v816
      %v821 = vrcp.pop %v819
      %v822 = vmul.f32 %v811, %v820
      %v823 = vmul.f32 %v813, %v821
      %v824 = vpack.c.bf16 %v823, %v822
      %v826 = vsel %vm752, %v824, 0
      %828 = vmatprep.subr.bf16.mxu0 0
      %829 = vmatpush1.bf16.msra.mxu0 0
      %830 = vmatprep.subr.bf16.mxu0 0
      %831 = vmatpush1.bf16.msra.mxu0 0
      %832 = vmatprep.subr.bf16.mxu0 0
      %833 = vmatpush1.bf16.msra.mxu0 0
      %834 = vmatprep.subr.bf16.mxu0 0
      %835 = vmatpush1.bf16.msra.mxu0 0
      %836 = vmatprep.subr.bf16.mxu0 0
      %837 = vmatpush1.bf16.msra.mxu0 0
      %838 = vmatprep.subr.bf16.mxu0 0
      %839 = vmatpush1.bf16.msra.mxu0 0
      %840 = vmatprep.subr.bf16.mxu0 0
      %841 = vmatpush1.bf16.msra.mxu0 0
      %842 = vmatprep.subr.bf16.mxu0 0
      %843 = vmatpush1.bf16.msra.mxu0 %v751
      %844 = vmatprep.subr.bf16.mxu0 0
      %845 = vmatpush2.bf16.msra.mxu0 0
      %846 = vmatprep.subr.bf16.mxu0 0
      %847 = vmatpush2.bf16.msra.mxu0 0
      %848 = vmatprep.subr.bf16.mxu0 0
      %849 = vmatpush2.bf16.msra.mxu0 0
      %850 = vmatprep.subr.bf16.mxu0 0
      %851 = vmatpush2.bf16.msra.mxu0 0
      %852 = vmatprep.subr.bf16.mxu0 0
      %853 = vmatpush2.bf16.msra.mxu0 0
      %854 = vmatprep.subr.bf16.mxu0 0
      %855 = vmatpush2.bf16.msra.mxu0 0
      %856 = vmatprep.subr.bf16.mxu0 0
      %857 = vmatpush2.bf16.msra.mxu0 0
      %858 = vmatprep.subr.bf16.mxu0 0
      %859 = vmatpush2.bf16.msra.mxu0 0
      %860 = vmatprep.mubr.bf16.mxu0 0
      %861 = vmatmul.mubr.bf16.gmra.mxu0 %v826
      %v862 = vpop.f32.mrf.mxu0
      %v863 = vadd.f32 0.0, %v862
      %v864 = vpop.f32.mrf.mxu0
      %v865 = vpop.f32.mrf.mxu0
      %v866 = vadd.f32 0.0, %v865
      %v867 = vpop.f32.mrf.mxu0
      %868 = vdwg.mxu0
      %870 = vrot.lane.b32.xlu0 %v749, 112
      %v871 = vpop.permute.xlu0 %870
      %873 = vrot.lane.b32.xlu0 %v750, 112
      %v874 = vpop.permute.xlu0 %873
      %v876 = vsel %vm752, %v871, 0
      %v879 = vsel %vm752, %v874, 0
      %881 = vmatprep.subr.bf16.mxu0 0
      %882 = vmatpush1.bf16.xpose.msra.mxu0 0
      %883 = vmatprep.subr.bf16.mxu0 0
      %884 = vmatpush1.bf16.xpose.msra.mxu0 0
      %885 = vmatprep.subr.bf16.mxu0 0
      %886 = vmatpush1.bf16.xpose.msra.mxu0 0
      %887 = vmatprep.subr.bf16.mxu0 0
      %888 = vmatpush1.bf16.xpose.msra.mxu0 0
      %889 = vmatprep.subr.bf16.mxu0 0
      %890 = vmatpush1.bf16.xpose.msra.mxu0 0
      %891 = vmatprep.subr.bf16.mxu0 0
      %892 = vmatpush1.bf16.xpose.msra.mxu0 0
      %893 = vmatprep.subr.bf16.mxu0 0
      %894 = vmatpush1.bf16.xpose.msra.mxu0 0
      %895 = vmatprep.subr.bf16.mxu0 0
      %896 = vmatpush1.bf16.xpose.msra.mxu0 %v879
      %897 = vmatprep.subr.bf16.mxu0 0
      %898 = vmatpush2.bf16.xpose.msra.mxu0 0
      %899 = vmatprep.subr.bf16.mxu0 0
      %900 = vmatpush2.bf16.xpose.msra.mxu0 0
      %901 = vmatprep.subr.bf16.mxu0 0
      %902 = vmatpush2.bf16.xpose.msra.mxu0 0
      %903 = vmatprep.subr.bf16.mxu0 0
      %904 = vmatpush2.bf16.xpose.msra.mxu0 0
      %905 = vmatprep.subr.bf16.mxu0 0
      %906 = vmatpush2.bf16.xpose.msra.mxu0 0
      %907 = vmatprep.subr.bf16.mxu0 0
      %908 = vmatpush2.bf16.xpose.msra.mxu0 0
      %909 = vmatprep.subr.bf16.mxu0 0
      %910 = vmatpush2.bf16.xpose.msra.mxu0 0
      %911 = vmatprep.subr.bf16.mxu0 0
      %912 = vmatpush2.bf16.xpose.msra.mxu0 0
      %913 = vmatprep.mubr.bf16.mxu0 0
      %914 = vmatmul.mubr.bf16.gmra.mxu0 %v876
      %v915 = vpop.f32.mrf.mxu0
      %v916 = vadd.f32 0.0, %v915
      %v917 = vpop.f32.mrf.mxu0
      %v918 = vpop.f32.mrf.mxu0
      %v919 = vadd.f32 0.0, %v918
      %v920 = vpop.f32.mrf.mxu0
      %921 = vdwg.mxu0
      %v922 = vmul.f32 %v916, 0.25
      %v923 = vmul.f32 %v919, 0.25
      %v924 = vsel %vm752, %v922, -inf
      %925 = vmax.xlane.f32.xlu0 %v924
      %v926 = vpop.xlane.xlu0 %925
      %v927 = vsel %vm752, %v923, -inf
      %928 = vmax.xlane.f32.xlu0 %v927
      %v929 = vpop.xlane.xlu0 %928
      %v930 = vsub.f32 %v922, %v926
      %v931 = vsub.f32 %v923, %v929
      %v932 = vmul.f32 %v930, 1.442695
      %v933 = vpow.pop %v932
      %v934 = vmul.f32 %v931, 1.442695
      %v935 = vpow.pop %v934
      %v936 = vsel %vm752, %v933, 0.0
      %937 = vadd.xlane.f32.xlu0 %v936
      %v938 = vpop.xlane.xlu0 %937
      %v939 = vsel %vm752, %v935, 0.0
      %940 = vadd.xlane.f32.xlu0 %v939
      %v941 = vpop.xlane.xlu0 %940
      %v942 = vrcp.pop %v938
      %v943 = vrcp.pop %v941
      %v944 = vmul.f32 %v933, %v942
      %v945 = vmul.f32 %v935, %v943
      %v946 = vpack.c.bf16 %v945, %v944
      %948 = vrot.lane.b32.xlu0 %v751, 112
      %v949 = vpop.permute.xlu0 %948
      %v952 = vsel %vm752, %v946, 0
      %954 = vmatprep.subr.bf16.mxu0 0
      %955 = vmatpush1.bf16.msra.mxu0 0
      %956 = vmatprep.subr.bf16.mxu0 0
      %957 = vmatpush1.bf16.msra.mxu0 0
      %958 = vmatprep.subr.bf16.mxu0 0
      %959 = vmatpush1.bf16.msra.mxu0 0
      %960 = vmatprep.subr.bf16.mxu0 0
      %961 = vmatpush1.bf16.msra.mxu0 0
      %962 = vmatprep.subr.bf16.mxu0 0
      %963 = vmatpush1.bf16.msra.mxu0 0
      %964 = vmatprep.subr.bf16.mxu0 0
      %965 = vmatpush1.bf16.msra.mxu0 0
      %966 = vmatprep.subr.bf16.mxu0 0
      %967 = vmatpush1.bf16.msra.mxu0 0
      %968 = vmatprep.subr.bf16.mxu0 0
      %969 = vmatpush1.bf16.msra.mxu0 %v949
      %970 = vmatprep.subr.bf16.mxu0 0
      %971 = vmatpush2.bf16.msra.mxu0 0
      %972 = vmatprep.subr.bf16.mxu0 0
      %973 = vmatpush2.bf16.msra.mxu0 0
      %974 = vmatprep.subr.bf16.mxu0 0
      %975 = vmatpush2.bf16.msra.mxu0 0
      %976 = vmatprep.subr.bf16.mxu0 0
      %977 = vmatpush2.bf16.msra.mxu0 0
      %978 = vmatprep.subr.bf16.mxu0 0
      %979 = vmatpush2.bf16.msra.mxu0 0
      %980 = vmatprep.subr.bf16.mxu0 0
      %981 = vmatpush2.bf16.msra.mxu0 0
      %982 = vmatprep.subr.bf16.mxu0 0
      %983 = vmatpush2.bf16.msra.mxu0 0
      %984 = vmatprep.subr.bf16.mxu0 0
      %985 = vmatpush2.bf16.msra.mxu0 0
      %986 = vmatprep.mubr.bf16.mxu0 0
      %987 = vmatmul.mubr.bf16.gmra.mxu0 %v952
      %v988 = vpop.f32.mrf.mxu0
      %v989 = vadd.f32 0.0, %v988
      %v990 = vpop.f32.mrf.mxu0
      %v991 = vpop.f32.mrf.mxu0
      %v992 = vadd.f32 0.0, %v991
      %v993 = vpop.f32.mrf.mxu0
      %994 = vdwg.mxu0
      %995 = vrot.lane.b32.xlu0 %v749, 96
      %v996 = vpop.permute.xlu0 %995
      %997 = vrot.lane.b32.xlu0 %v750, 96
      %v998 = vpop.permute.xlu0 %997
      %v1000 = vsel %vm752, %v996, 0
      %v1003 = vsel %vm752, %v998, 0
      %1005 = vmatprep.subr.bf16.mxu0 0
      %1006 = vmatpush1.bf16.xpose.msra.mxu0 0
      %1007 = vmatprep.subr.bf16.mxu0 0
      %1008 = vmatpush1.bf16.xpose.msra.mxu0 0
      %1009 = vmatprep.subr.bf16.mxu0 0
      %1010 = vmatpush1.bf16.xpose.msra.mxu0 0
      %1011 = vmatprep.subr.bf16.mxu0 0
      %1012 = vmatpush1.bf16.xpose.msra.mxu0 0
      %1013 = vmatprep.subr.bf16.mxu0 0
      %1014 = vmatpush1.bf16.xpose.msra.mxu0 0
      %1015 = vmatprep.subr.bf16.mxu0 0
      %1016 = vmatpush1.bf16.xpose.msra.mxu0 0
      %1017 = vmatprep.subr.bf16.mxu0 0
      %1018 = vmatpush1.bf16.xpose.msra.mxu0 0
      %1019 = vmatprep.subr.bf16.mxu0 0
      %1020 = vmatpush1.bf16.xpose.msra.mxu0 %v1003
      %1021 = vmatprep.subr.bf16.mxu0 0
      %1022 = vmatpush2.bf16.xpose.msra.mxu0 0
      %1023 = vmatprep.subr.bf16.mxu0 0
      %1024 = vmatpush2.bf16.xpose.msra.mxu0 0
      %1025 = vmatprep.subr.bf16.mxu0 0
      %1026 = vmatpush2.bf16.xpose.msra.mxu0 0
      %1027 = vmatprep.subr.bf16.mxu0 0
      %1028 = vmatpush2.bf16.xpose.msra.mxu0 0
      %1029 = vmatprep.subr.bf16.mxu0 0
      %1030 = vmatpush2.bf16.xpose.msra.mxu0 0
      %1031 = vmatprep.subr.bf16.mxu0 0
      %1032 = vmatpush2.bf16.xpose.msra.mxu0 0
      %1033 = vmatprep.subr.bf16.mxu0 0
      %1034 = vmatpush2.bf16.xpose.msra.mxu0 0
      %1035 = vmatprep.subr.bf16.mxu0 0
      %1036 = vmatpush2.bf16.xpose.msra.mxu0 0
      %1037 = vmatprep.mubr.bf16.mxu0 0
      %1038 = vmatmul.mubr.bf16.gmra.mxu0 %v1000
      %v1039 = vpop.f32.mrf.mxu0
      %v1040 = vadd.f32 0.0, %v1039
      %v1041 = vpop.f32.mrf.mxu0
      %v1042 = vpop.f32.mrf.mxu0
      %v1043 = vadd.f32 0.0, %v1042
      %v1044 = vpop.f32.mrf.mxu0
      %1045 = vdwg.mxu0
      %v1046 = vmul.f32 %v1040, 0.25
      %v1047 = vmul.f32 %v1043, 0.25
      %v1048 = vsel %vm752, %v1046, -inf
      %1049 = vmax.xlane.f32.xlu0 %v1048
      %v1050 = vpop.xlane.xlu0 %1049
      %v1051 = vsel %vm752, %v1047, -inf
      %1052 = vmax.xlane.f32.xlu0 %v1051
      %v1053 = vpop.xlane.xlu0 %1052
      %v1054 = vsub.f32 %v1046, %v1050
      %v1055 = vsub.f32 %v1047, %v1053
      %v1056 = vmul.f32 %v1054, 1.442695
      %v1057 = vpow.pop %v1056
      %v1058 = vmul.f32 %v1055, 1.442695
      %v1059 = vpow.pop %v1058
      %v1060 = vsel %vm752, %v1057, 0.0
      %1061 = vadd.xlane.f32.xlu0 %v1060
      %v1062 = vpop.xlane.xlu0 %1061
      %v1063 = vsel %vm752, %v1059, 0.0
      %1064 = vadd.xlane.f32.xlu0 %v1063
      %v1065 = vpop.xlane.xlu0 %1064
      %v1066 = vrcp.pop %v1062
      %v1067 = vrcp.pop %v1065
      %v1068 = vmul.f32 %v1057, %v1066
      %v1069 = vmul.f32 %v1059, %v1067
      %v1070 = vpack.c.bf16 %v1069, %v1068
      %1071 = vrot.lane.b32.xlu0 %v751, 96
      %v1072 = vpop.permute.xlu0 %1071
      %v1075 = vsel %vm752, %v1070, 0
      %1077 = vmatprep.subr.bf16.mxu0 0
      %1078 = vmatpush1.bf16.msra.mxu0 0
      %1079 = vmatprep.subr.bf16.mxu0 0
      %1080 = vmatpush1.bf16.msra.mxu0 0
      %1081 = vmatprep.subr.bf16.mxu0 0
      %1082 = vmatpush1.bf16.msra.mxu0 0
      %1083 = vmatprep.subr.bf16.mxu0 0
      %1084 = vmatpush1.bf16.msra.mxu0 0
      %1085 = vmatprep.subr.bf16.mxu0 0
      %1086 = vmatpush1.bf16.msra.mxu0 0
      %1087 = vmatprep.subr.bf16.mxu0 0
      %1088 = vmatpush1.bf16.msra.mxu0 0
      %1089 = vmatprep.subr.bf16.mxu0 0
      %1090 = vmatpush1.bf16.msra.mxu0 0
      %1091 = vmatprep.subr.bf16.mxu0 0
      %1092 = vmatpush1.bf16.msra.mxu0 %v1072
      %1093 = vmatprep.subr.bf16.mxu0 0
      %1094 = vmatpush2.bf16.msra.mxu0 0
      %1095 = vmatprep.subr.bf16.mxu0 0
      %1096 = vmatpush2.bf16.msra.mxu0 0
      %1097 = vmatprep.subr.bf16.mxu0 0
      %1098 = vmatpush2.bf16.msra.mxu0 0
      %1099 = vmatprep.subr.bf16.mxu0 0
      %1100 = vmatpush2.bf16.msra.mxu0 0
      %1101 = vmatprep.subr.bf16.mxu0 0
      %1102 = vmatpush2.bf16.msra.mxu0 0
      %1103 = vmatprep.subr.bf16.mxu0 0
      %1104 = vmatpush2.bf16.msra.mxu0 0
      %1105 = vmatprep.subr.bf16.mxu0 0
      %1106 = vmatpush2.bf16.msra.mxu0 0
      %1107 = vmatprep.subr.bf16.mxu0 0
      %1108 = vmatpush2.bf16.msra.mxu0 0
      %1109 = vmatprep.mubr.bf16.mxu0 0
      %1110 = vmatmul.mubr.bf16.gmra.mxu0 %v1075
      %v1111 = vpop.f32.mrf.mxu0
      %v1112 = vadd.f32 0.0, %v1111
      %v1113 = vpop.f32.mrf.mxu0
      %v1114 = vpop.f32.mrf.mxu0
      %v1115 = vadd.f32 0.0, %v1114
      %v1116 = vpop.f32.mrf.mxu0
      %1117 = vdwg.mxu0
      %1118 = vrot.lane.b32.xlu0 %v749, 80
      %v1119 = vpop.permute.xlu0 %1118
      %1120 = vrot.lane.b32.xlu0 %v750, 80
      %v1121 = vpop.permute.xlu0 %1120
      %v1123 = vsel %vm752, %v1119, 0
      %v1126 = vsel %vm752, %v1121, 0
      %1128 = vmatprep.subr.bf16.mxu0 0
      %1129 = vmatpush1.bf16.xpose.msra.mxu0 0
      %1130 = vmatprep.subr.bf16.mxu0 0
      %1131 = vmatpush1.bf16.xpose.msra.mxu0 0
      %1132 = vmatprep.subr.bf16.mxu0 0
      %1133 = vmatpush1.bf16.xpose.msra.mxu0 0
      %1134 = vmatprep.subr.bf16.mxu0 0
      %1135 = vmatpush1.bf16.xpose.msra.mxu0 0
      %1136 = vmatprep.subr.bf16.mxu0 0
      %1137 = vmatpush1.bf16.xpose.msra.mxu0 0
      %1138 = vmatprep.subr.bf16.mxu0 0
      %1139 = vmatpush1.bf16.xpose.msra.mxu0 0
      %1140 = vmatprep.subr.bf16.mxu0 0
      %1141 = vmatpush1.bf16.xpose.msra.mxu0 0
      %1142 = vmatprep.subr.bf16.mxu0 0
      %1143 = vmatpush1.bf16.xpose.msra.mxu0 %v1126
      %1144 = vmatprep.subr.bf16.mxu0 0
      %1145 = vmatpush2.bf16.xpose.msra.mxu0 0
      %1146 = vmatprep.subr.bf16.mxu0 0
      %1147 = vmatpush2.bf16.xpose.msra.mxu0 0
      %1148 = vmatprep.subr.bf16.mxu0 0
      %1149 = vmatpush2.bf16.xpose.msra.mxu0 0
      %1150 = vmatprep.subr.bf16.mxu0 0
      %1151 = vmatpush2.bf16.xpose.msra.mxu0 0
      %1152 = vmatprep.subr.bf16.mxu0 0
      %1153 = vmatpush2.bf16.xpose.msra.mxu0 0
      %1154 = vmatprep.subr.bf16.mxu0 0
      %1155 = vmatpush2.bf16.xpose.msra.mxu0 0
      %1156 = vmatprep.subr.bf16.mxu0 0
      %1157 = vmatpush2.bf16.xpose.msra.mxu0 0
      %1158 = vmatprep.subr.bf16.mxu0 0
      %1159 = vmatpush2.bf16.xpose.msra.mxu0 0
      %1160 = vmatprep.mubr.bf16.mxu0 0
      %1161 = vmatmul.mubr.bf16.gmra.mxu0 %v1123
      %v1162 = vpop.f32.mrf.mxu0
      %v1163 = vadd.f32 0.0, %v1162
      %v1164 = vpop.f32.mrf.mxu0
      %v1165 = vpop.f32.mrf.mxu0
      %v1166 = vadd.f32 0.0, %v1165
      %v1167 = vpop.f32.mrf.mxu0
      %1168 = vdwg.mxu0
      %v1169 = vmul.f32 %v1163, 0.25
      %v1170 = vmul.f32 %v1166, 0.25
      %v1171 = vsel %vm752, %v1169, -inf
      %1172 = vmax.xlane.f32.xlu0 %v1171
      %v1173 = vpop.xlane.xlu0 %1172
      %v1174 = vsel %vm752, %v1170, -inf
      %1175 = vmax.xlane.f32.xlu0 %v1174
      %v1176 = vpop.xlane.xlu0 %1175
      %v1177 = vsub.f32 %v1169, %v1173
      %v1178 = vsub.f32 %v1170, %v1176
      %v1179 = vmul.f32 %v1177, 1.442695
      %v1180 = vpow.pop %v1179
      %v1181 = vmul.f32 %v1178, 1.442695
      %v1182 = vpow.pop %v1181
      %v1183 = vsel %vm752, %v1180, 0.0
      %1184 = vadd.xlane.f32.xlu0 %v1183
      %v1185 = vpop.xlane.xlu0 %1184
      %v1186 = vsel %vm752, %v1182, 0.0
      %1187 = vadd.xlane.f32.xlu0 %v1186
      %v1188 = vpop.xlane.xlu0 %1187
      %v1189 = vrcp.pop %v1185
      %v1190 = vrcp.pop %v1188
      %v1191 = vmul.f32 %v1180, %v1189
      %v1192 = vmul.f32 %v1182, %v1190
      %v1193 = vpack.c.bf16 %v1192, %v1191
      %1194 = vrot.lane.b32.xlu0 %v751, 80
      %v1195 = vpop.permute.xlu0 %1194
      %v1198 = vsel %vm752, %v1193, 0
      %1200 = vmatprep.subr.bf16.mxu0 0
      %1201 = vmatpush1.bf16.msra.mxu0 0
      %1202 = vmatprep.subr.bf16.mxu0 0
      %1203 = vmatpush1.bf16.msra.mxu0 0
      %1204 = vmatprep.subr.bf16.mxu0 0
      %1205 = vmatpush1.bf16.msra.mxu0 0
      %1206 = vmatprep.subr.bf16.mxu0 0
      %1207 = vmatpush1.bf16.msra.mxu0 0
      %1208 = vmatprep.subr.bf16.mxu0 0
      %1209 = vmatpush1.bf16.msra.mxu0 0
      %1210 = vmatprep.subr.bf16.mxu0 0
      %1211 = vmatpush1.bf16.msra.mxu0 0
      %1212 = vmatprep.subr.bf16.mxu0 0
      %1213 = vmatpush1.bf16.msra.mxu0 0
      %1214 = vmatprep.subr.bf16.mxu0 0
      %1215 = vmatpush1.bf16.msra.mxu0 %v1195
      %1216 = vmatprep.subr.bf16.mxu0 0
      %1217 = vmatpush2.bf16.msra.mxu0 0
      %1218 = vmatprep.subr.bf16.mxu0 0
      %1219 = vmatpush2.bf16.msra.mxu0 0
      %1220 = vmatprep.subr.bf16.mxu0 0
      %1221 = vmatpush2.bf16.msra.mxu0 0
      %1222 = vmatprep.subr.bf16.mxu0 0
      %1223 = vmatpush2.bf16.msra.mxu0 0
      %1224 = vmatprep.subr.bf16.mxu0 0
      %1225 = vmatpush2.bf16.msra.mxu0 0
      %1226 = vmatprep.subr.bf16.mxu0 0
      %1227 = vmatpush2.bf16.msra.mxu0 0
      %1228 = vmatprep.subr.bf16.mxu0 0
      %1229 = vmatpush2.bf16.msra.mxu0 0
      %1230 = vmatprep.subr.bf16.mxu0 0
      %1231 = vmatpush2.bf16.msra.mxu0 0
      %1232 = vmatprep.mubr.bf16.mxu0 0
      %1233 = vmatmul.mubr.bf16.gmra.mxu0 %v1198
      %v1234 = vpop.f32.mrf.mxu0
      %v1235 = vadd.f32 0.0, %v1234
      %v1236 = vpop.f32.mrf.mxu0
      %v1237 = vpop.f32.mrf.mxu0
      %v1238 = vadd.f32 0.0, %v1237
      %v1239 = vpop.f32.mrf.mxu0
      %1240 = vdwg.mxu0
      %1241 = vrot.lane.b32.xlu0 %v749, 64
      %v1242 = vpop.permute.xlu0 %1241
      %1243 = vrot.lane.b32.xlu0 %v750, 64
      %v1244 = vpop.permute.xlu0 %1243
      %v1246 = vsel %vm752, %v1242, 0
      %v1249 = vsel %vm752, %v1244, 0
      %1251 = vmatprep.subr.bf16.mxu0 0
      %1252 = vmatpush1.bf16.xpose.msra.mxu0 0
      %1253 = vmatprep.subr.bf16.mxu0 0
      %1254 = vmatpush1.bf16.xpose.msra.mxu0 0
      %1255 = vmatprep.subr.bf16.mxu0 0
      %1256 = vmatpush1.bf16.xpose.msra.mxu0 0
      %1257 = vmatprep.subr.bf16.mxu0 0
      %1258 = vmatpush1.bf16.xpose.msra.mxu0 0
      %1259 = vmatprep.subr.bf16.mxu0 0
      %1260 = vmatpush1.bf16.xpose.msra.mxu0 0
      %1261 = vmatprep.subr.bf16.mxu0 0
      %1262 = vmatpush1.bf16.xpose.msra.mxu0 0
      %1263 = vmatprep.subr.bf16.mxu0 0
      %1264 = vmatpush1.bf16.xpose.msra.mxu0 0
      %1265 = vmatprep.subr.bf16.mxu0 0
      %1266 = vmatpush1.bf16.xpose.msra.mxu0 %v1249
      %1267 = vmatprep.subr.bf16.mxu0 0
      %1268 = vmatpush2.bf16.xpose.msra.mxu0 0
      %1269 = vmatprep.subr.bf16.mxu0 0
      %1270 = vmatpush2.bf16.xpose.msra.mxu0 0
      %1271 = vmatprep.subr.bf16.mxu0 0
      %1272 = vmatpush2.bf16.xpose.msra.mxu0 0
      %1273 = vmatprep.subr.bf16.mxu0 0
      %1274 = vmatpush2.bf16.xpose.msra.mxu0 0
      %1275 = vmatprep.subr.bf16.mxu0 0
      %1276 = vmatpush2.bf16.xpose.msra.mxu0 0
      %1277 = vmatprep.subr.bf16.mxu0 0
      %1278 = vmatpush2.bf16.xpose.msra.mxu0 0
      %1279 = vmatprep.subr.bf16.mxu0 0
      %1280 = vmatpush2.bf16.xpose.msra.mxu0 0
      %1281 = vmatprep.subr.bf16.mxu0 0
      %1282 = vmatpush2.bf16.xpose.msra.mxu0 0
      %1283 = vmatprep.mubr.bf16.mxu0 0
      %1284 = vmatmul.mubr.bf16.gmra.mxu0 %v1246
      %v1285 = vpop.f32.mrf.mxu0
      %v1286 = vadd.f32 0.0, %v1285
      %v1287 = vpop.f32.mrf.mxu0
      %v1288 = vpop.f32.mrf.mxu0
      %v1289 = vadd.f32 0.0, %v1288
      %v1290 = vpop.f32.mrf.mxu0
      %1291 = vdwg.mxu0
      %v1292 = vmul.f32 %v1286, 0.25
      %v1293 = vmul.f32 %v1289, 0.25
      %v1294 = vsel %vm752, %v1292, -inf
      %1295 = vmax.xlane.f32.xlu0 %v1294
      %v1296 = vpop.xlane.xlu0 %1295
      %v1297 = vsel %vm752, %v1293, -inf
      %1298 = vmax.xlane.f32.xlu0 %v1297
      %v1299 = vpop.xlane.xlu0 %1298
      %v1300 = vsub.f32 %v1292, %v1296
      %v1301 = vsub.f32 %v1293, %v1299
      %v1302 = vmul.f32 %v1300, 1.442695
      %v1303 = vpow.pop %v1302
      %v1304 = vmul.f32 %v1301, 1.442695
      %v1305 = vpow.pop %v1304
      %v1306 = vsel %vm752, %v1303, 0.0
      %1307 = vadd.xlane.f32.xlu0 %v1306
      %v1308 = vpop.xlane.xlu0 %1307
      %v1309 = vsel %vm752, %v1305, 0.0
      %1310 = vadd.xlane.f32.xlu0 %v1309
      %v1311 = vpop.xlane.xlu0 %1310
      %v1312 = vrcp.pop %v1308
      %v1313 = vrcp.pop %v1311
      %v1314 = vmul.f32 %v1303, %v1312
      %v1315 = vmul.f32 %v1305, %v1313
      %v1316 = vpack.c.bf16 %v1315, %v1314
      %1317 = vrot.lane.b32.xlu0 %v751, 64
      %v1318 = vpop.permute.xlu0 %1317
      %v1321 = vsel %vm752, %v1316, 0
      %1323 = vmatprep.subr.bf16.mxu0 0
      %1324 = vmatpush1.bf16.msra.mxu0 0
      %1325 = vmatprep.subr.bf16.mxu0 0
      %1326 = vmatpush1.bf16.msra.mxu0 0
      %1327 = vmatprep.subr.bf16.mxu0 0
      %1328 = vmatpush1.bf16.msra.mxu0 0
      %1329 = vmatprep.subr.bf16.mxu0 0
      %1330 = vmatpush1.bf16.msra.mxu0 0
      %1331 = vmatprep.subr.bf16.mxu0 0
      %1332 = vmatpush1.bf16.msra.mxu0 0
      %1333 = vmatprep.subr.bf16.mxu0 0
      %1334 = vmatpush1.bf16.msra.mxu0 0
      %1335 = vmatprep.subr.bf16.mxu0 0
      %1336 = vmatpush1.bf16.msra.mxu0 0
      %1337 = vmatprep.subr.bf16.mxu0 0
      %1338 = vmatpush1.bf16.msra.mxu0 %v1318
      %1339 = vmatprep.subr.bf16.mxu0 0
      %1340 = vmatpush2.bf16.msra.mxu0 0
      %1341 = vmatprep.subr.bf16.mxu0 0
      %1342 = vmatpush2.bf16.msra.mxu0 0
      %1343 = vmatprep.subr.bf16.mxu0 0
      %1344 = vmatpush2.bf16.msra.mxu0 0
      %1345 = vmatprep.subr.bf16.mxu0 0
      %1346 = vmatpush2.bf16.msra.mxu0 0
      %1347 = vmatprep.subr.bf16.mxu0 0
      %1348 = vmatpush2.bf16.msra.mxu0 0
      %1349 = vmatprep.subr.bf16.mxu0 0
      %1350 = vmatpush2.bf16.msra.mxu0 0
      %1351 = vmatprep.subr.bf16.mxu0 0
      %1352 = vmatpush2.bf16.msra.mxu0 0
      %1353 = vmatprep.subr.bf16.mxu0 0
      %1354 = vmatpush2.bf16.msra.mxu0 0
      %1355 = vmatprep.mubr.bf16.mxu0 0
      %1356 = vmatmul.mubr.bf16.gmra.mxu0 %v1321
      %v1357 = vpop.f32.mrf.mxu0
      %v1358 = vadd.f32 0.0, %v1357
      %v1359 = vpop.f32.mrf.mxu0
      %v1360 = vpop.f32.mrf.mxu0
      %v1361 = vadd.f32 0.0, %v1360
      %v1362 = vpop.f32.mrf.mxu0
      %1363 = vdwg.mxu0
      %1364 = vrot.lane.b32.xlu0 %v749, 48
      %v1365 = vpop.permute.xlu0 %1364
      %1366 = vrot.lane.b32.xlu0 %v750, 48
      %v1367 = vpop.permute.xlu0 %1366
      %v1369 = vsel %vm752, %v1365, 0
      %v1372 = vsel %vm752, %v1367, 0
      %1374 = vmatprep.subr.bf16.mxu0 0
      %1375 = vmatpush1.bf16.xpose.msra.mxu0 0
      %1376 = vmatprep.subr.bf16.mxu0 0
      %1377 = vmatpush1.bf16.xpose.msra.mxu0 0
      %1378 = vmatprep.subr.bf16.mxu0 0
      %1379 = vmatpush1.bf16.xpose.msra.mxu0 0
      %1380 = vmatprep.subr.bf16.mxu0 0
      %1381 = vmatpush1.bf16.xpose.msra.mxu0 0
      %1382 = vmatprep.subr.bf16.mxu0 0
      %1383 = vmatpush1.bf16.xpose.msra.mxu0 0
      %1384 = vmatprep.subr.bf16.mxu0 0
      %1385 = vmatpush1.bf16.xpose.msra.mxu0 0
      %1386 = vmatprep.subr.bf16.mxu0 0
      %1387 = vmatpush1.bf16.xpose.msra.mxu0 0
      %1388 = vmatprep.subr.bf16.mxu0 0
      %1389 = vmatpush1.bf16.xpose.msra.mxu0 %v1372
      %1390 = vmatprep.subr.bf16.mxu0 0
      %1391 = vmatpush2.bf16.xpose.msra.mxu0 0
      %1392 = vmatprep.subr.bf16.mxu0 0
      %1393 = vmatpush2.bf16.xpose.msra.mxu0 0
      %1394 = vmatprep.subr.bf16.mxu0 0
      %1395 = vmatpush2.bf16.xpose.msra.mxu0 0
      %1396 = vmatprep.subr.bf16.mxu0 0
      %1397 = vmatpush2.bf16.xpose.msra.mxu0 0
      %1398 = vmatprep.subr.bf16.mxu0 0
      %1399 = vmatpush2.bf16.xpose.msra.mxu0 0
      %1400 = vmatprep.subr.bf16.mxu0 0
      %1401 = vmatpush2.bf16.xpose.msra.mxu0 0
      %1402 = vmatprep.subr.bf16.mxu0 0
      %1403 = vmatpush2.bf16.xpose.msra.mxu0 0
      %1404 = vmatprep.subr.bf16.mxu0 0
      %1405 = vmatpush2.bf16.xpose.msra.mxu0 0
      %1406 = vmatprep.mubr.bf16.mxu0 0
      %1407 = vmatmul.mubr.bf16.gmra.mxu0 %v1369
      %v1408 = vpop.f32.mrf.mxu0
      %v1409 = vadd.f32 0.0, %v1408
      %v1410 = vpop.f32.mrf.mxu0
      %v1411 = vpop.f32.mrf.mxu0
      %v1412 = vadd.f32 0.0, %v1411
      %v1413 = vpop.f32.mrf.mxu0
      %1414 = vdwg.mxu0
      %v1415 = vmul.f32 %v1409, 0.25
      %v1416 = vmul.f32 %v1412, 0.25
      %v1417 = vsel %vm752, %v1415, -inf
      %1418 = vmax.xlane.f32.xlu0 %v1417
      %v1419 = vpop.xlane.xlu0 %1418
      %v1420 = vsel %vm752, %v1416, -inf
      %1421 = vmax.xlane.f32.xlu0 %v1420
      %v1422 = vpop.xlane.xlu0 %1421
      %v1423 = vsub.f32 %v1415, %v1419
      %v1424 = vsub.f32 %v1416, %v1422
      %v1425 = vmul.f32 %v1423, 1.442695
      %v1426 = vpow.pop %v1425
      %v1427 = vmul.f32 %v1424, 1.442695
      %v1428 = vpow.pop %v1427
      %v1429 = vsel %vm752, %v1426, 0.0
      %1430 = vadd.xlane.f32.xlu0 %v1429
      %v1431 = vpop.xlane.xlu0 %1430
      %v1432 = vsel %vm752, %v1428, 0.0
      %1433 = vadd.xlane.f32.xlu0 %v1432
      %v1434 = vpop.xlane.xlu0 %1433
      %v1435 = vrcp.pop %v1431
      %v1436 = vrcp.pop %v1434
      %v1437 = vmul.f32 %v1426, %v1435
      %v1438 = vmul.f32 %v1428, %v1436
      %v1439 = vpack.c.bf16 %v1438, %v1437
      %1440 = vrot.lane.b32.xlu0 %v751, 48
      %v1441 = vpop.permute.xlu0 %1440
      %v1444 = vsel %vm752, %v1439, 0
      %1446 = vmatprep.subr.bf16.mxu0 0
      %1447 = vmatpush1.bf16.msra.mxu0 0
      %1448 = vmatprep.subr.bf16.mxu0 0
      %1449 = vmatpush1.bf16.msra.mxu0 0
      %1450 = vmatprep.subr.bf16.mxu0 0
      %1451 = vmatpush1.bf16.msra.mxu0 0
      %1452 = vmatprep.subr.bf16.mxu0 0
      %1453 = vmatpush1.bf16.msra.mxu0 0
      %1454 = vmatprep.subr.bf16.mxu0 0
      %1455 = vmatpush1.bf16.msra.mxu0 0
      %1456 = vmatprep.subr.bf16.mxu0 0
      %1457 = vmatpush1.bf16.msra.mxu0 0
      %1458 = vmatprep.subr.bf16.mxu0 0
      %1459 = vmatpush1.bf16.msra.mxu0 0
      %1460 = vmatprep.subr.bf16.mxu0 0
      %1461 = vmatpush1.bf16.msra.mxu0 %v1441
      %1462 = vmatprep.subr.bf16.mxu0 0
      %1463 = vmatpush2.bf16.msra.mxu0 0
      %1464 = vmatprep.subr.bf16.mxu0 0
      %1465 = vmatpush2.bf16.msra.mxu0 0
      %1466 = vmatprep.subr.bf16.mxu0 0
      %1467 = vmatpush2.bf16.msra.mxu0 0
      %1468 = vmatprep.subr.bf16.mxu0 0
      %1469 = vmatpush2.bf16.msra.mxu0 0
      %1470 = vmatprep.subr.bf16.mxu0 0
      %1471 = vmatpush2.bf16.msra.mxu0 0
      %1472 = vmatprep.subr.bf16.mxu0 0
      %1473 = vmatpush2.bf16.msra.mxu0 0
      %1474 = vmatprep.subr.bf16.mxu0 0
      %1475 = vmatpush2.bf16.msra.mxu0 0
      %1476 = vmatprep.subr.bf16.mxu0 0
      %1477 = vmatpush2.bf16.msra.mxu0 0
      %1478 = vmatprep.mubr.bf16.mxu0 0
      %1479 = vmatmul.mubr.bf16.gmra.mxu0 %v1444
      %v1480 = vpop.f32.mrf.mxu0
      %v1481 = vadd.f32 0.0, %v1480
      %v1482 = vpop.f32.mrf.mxu0
      %v1483 = vpop.f32.mrf.mxu0
      %v1484 = vadd.f32 0.0, %v1483
      %v1485 = vpop.f32.mrf.mxu0
      %1486 = vdwg.mxu0
      %1487 = vrot.lane.b32.xlu0 %v749, 32
      %v1488 = vpop.permute.xlu0 %1487
      %1489 = vrot.lane.b32.xlu0 %v750, 32
      %v1490 = vpop.permute.xlu0 %1489
      %v1492 = vsel %vm752, %v1488, 0
      %v1495 = vsel %vm752, %v1490, 0
      %1497 = vmatprep.subr.bf16.mxu0 0
      %1498 = vmatpush1.bf16.xpose.msra.mxu0 0
      %1499 = vmatprep.subr.bf16.mxu0 0
      %1500 = vmatpush1.bf16.xpose.msra.mxu0 0
      %1501 = vmatprep.subr.bf16.mxu0 0
      %1502 = vmatpush1.bf16.xpose.msra.mxu0 0
      %1503 = vmatprep.subr.bf16.mxu0 0
      %1504 = vmatpush1.bf16.xpose.msra.mxu0 0
      %1505 = vmatprep.subr.bf16.mxu0 0
      %1506 = vmatpush1.bf16.xpose.msra.mxu0 0
      %1507 = vmatprep.subr.bf16.mxu0 0
      %1508 = vmatpush1.bf16.xpose.msra.mxu0 0
      %1509 = vmatprep.subr.bf16.mxu0 0
      %1510 = vmatpush1.bf16.xpose.msra.mxu0 0
      %1511 = vmatprep.subr.bf16.mxu0 0
      %1512 = vmatpush1.bf16.xpose.msra.mxu0 %v1495
      %1513 = vmatprep.subr.bf16.mxu0 0
      %1514 = vmatpush2.bf16.xpose.msra.mxu0 0
      %1515 = vmatprep.subr.bf16.mxu0 0
      %1516 = vmatpush2.bf16.xpose.msra.mxu0 0
      %1517 = vmatprep.subr.bf16.mxu0 0
      %1518 = vmatpush2.bf16.xpose.msra.mxu0 0
      %1519 = vmatprep.subr.bf16.mxu0 0
      %1520 = vmatpush2.bf16.xpose.msra.mxu0 0
      %1521 = vmatprep.subr.bf16.mxu0 0
      %1522 = vmatpush2.bf16.xpose.msra.mxu0 0
      %1523 = vmatprep.subr.bf16.mxu0 0
      %1524 = vmatpush2.bf16.xpose.msra.mxu0 0
      %1525 = vmatprep.subr.bf16.mxu0 0
      %1526 = vmatpush2.bf16.xpose.msra.mxu0 0
      %1527 = vmatprep.subr.bf16.mxu0 0
      %1528 = vmatpush2.bf16.xpose.msra.mxu0 0
      %1529 = vmatprep.mubr.bf16.mxu0 0
      %1530 = vmatmul.mubr.bf16.gmra.mxu0 %v1492
      %v1531 = vpop.f32.mrf.mxu0
      %v1532 = vadd.f32 0.0, %v1531
      %v1533 = vpop.f32.mrf.mxu0
      %v1534 = vpop.f32.mrf.mxu0
      %v1535 = vadd.f32 0.0, %v1534
      %v1536 = vpop.f32.mrf.mxu0
      %1537 = vdwg.mxu0
      %v1538 = vmul.f32 %v1532, 0.25
      %v1539 = vmul.f32 %v1535, 0.25
      %v1540 = vsel %vm752, %v1538, -inf
      %1541 = vmax.xlane.f32.xlu0 %v1540
      %v1542 = vpop.xlane.xlu0 %1541
      %v1543 = vsel %vm752, %v1539, -inf
      %1544 = vmax.xlane.f32.xlu0 %v1543
      %v1545 = vpop.xlane.xlu0 %1544
      %v1546 = vsub.f32 %v1538, %v1542
      %v1547 = vsub.f32 %v1539, %v1545
      %v1548 = vmul.f32 %v1546, 1.442695
      %v1549 = vpow.pop %v1548
      %v1550 = vmul.f32 %v1547, 1.442695
      %v1551 = vpow.pop %v1550
      %v1552 = vsel %vm752, %v1549, 0.0
      %1553 = vadd.xlane.f32.xlu0 %v1552
      %v1554 = vpop.xlane.xlu0 %1553
      %v1555 = vsel %vm752, %v1551, 0.0
      %1556 = vadd.xlane.f32.xlu0 %v1555
      %v1557 = vpop.xlane.xlu0 %1556
      %v1558 = vrcp.pop %v1554
      %v1559 = vrcp.pop %v1557
      %v1560 = vmul.f32 %v1549, %v1558
      %v1561 = vmul.f32 %v1551, %v1559
      %v1562 = vpack.c.bf16 %v1561, %v1560
      %1563 = vrot.lane.b32.xlu0 %v751, 32
      %v1564 = vpop.permute.xlu0 %1563
      %v1567 = vsel %vm752, %v1562, 0
      %1569 = vmatprep.subr.bf16.mxu0 0
      %1570 = vmatpush1.bf16.msra.mxu0 0
      %1571 = vmatprep.subr.bf16.mxu0 0
      %1572 = vmatpush1.bf16.msra.mxu0 0
      %1573 = vmatprep.subr.bf16.mxu0 0
      %1574 = vmatpush1.bf16.msra.mxu0 0
      %1575 = vmatprep.subr.bf16.mxu0 0
      %1576 = vmatpush1.bf16.msra.mxu0 0
      %1577 = vmatprep.subr.bf16.mxu0 0
      %1578 = vmatpush1.bf16.msra.mxu0 0
      %1579 = vmatprep.subr.bf16.mxu0 0
      %1580 = vmatpush1.bf16.msra.mxu0 0
      %1581 = vmatprep.subr.bf16.mxu0 0
      %1582 = vmatpush1.bf16.msra.mxu0 0
      %1583 = vmatprep.subr.bf16.mxu0 0
      %1584 = vmatpush1.bf16.msra.mxu0 %v1564
      %1585 = vmatprep.subr.bf16.mxu0 0
      %1586 = vmatpush2.bf16.msra.mxu0 0
      %1587 = vmatprep.subr.bf16.mxu0 0
      %1588 = vmatpush2.bf16.msra.mxu0 0
      %1589 = vmatprep.subr.bf16.mxu0 0
      %1590 = vmatpush2.bf16.msra.mxu0 0
      %1591 = vmatprep.subr.bf16.mxu0 0
      %1592 = vmatpush2.bf16.msra.mxu0 0
      %1593 = vmatprep.subr.bf16.mxu0 0
      %1594 = vmatpush2.bf16.msra.mxu0 0
      %1595 = vmatprep.subr.bf16.mxu0 0
      %1596 = vmatpush2.bf16.msra.mxu0 0
      %1597 = vmatprep.subr.bf16.mxu0 0
      %1598 = vmatpush2.bf16.msra.mxu0 0
      %1599 = vmatprep.subr.bf16.mxu0 0
      %1600 = vmatpush2.bf16.msra.mxu0 0
      %1601 = vmatprep.mubr.bf16.mxu0 0
      %1602 = vmatmul.mubr.bf16.gmra.mxu0 %v1567
      %v1603 = vpop.f32.mrf.mxu0
      %v1604 = vadd.f32 0.0, %v1603
      %v1605 = vpop.f32.mrf.mxu0
      %v1606 = vpop.f32.mrf.mxu0
      %v1607 = vadd.f32 0.0, %v1606
      %v1608 = vpop.f32.mrf.mxu0
      %1609 = vdwg.mxu0
      %1610 = vrot.lane.b32.xlu0 %v749, 16
      %v1611 = vpop.permute.xlu0 %1610
      %1612 = vrot.lane.b32.xlu0 %v750, 16
      %v1613 = vpop.permute.xlu0 %1612
      %v1615 = vsel %vm752, %v1611, 0
      %v1618 = vsel %vm752, %v1613, 0
      %1620 = vmatprep.subr.bf16.mxu0 0
      %1621 = vmatpush1.bf16.xpose.msra.mxu0 0
      %1622 = vmatprep.subr.bf16.mxu0 0
      %1623 = vmatpush1.bf16.xpose.msra.mxu0 0
      %1624 = vmatprep.subr.bf16.mxu0 0
      %1625 = vmatpush1.bf16.xpose.msra.mxu0 0
      %1626 = vmatprep.subr.bf16.mxu0 0
      %1627 = vmatpush1.bf16.xpose.msra.mxu0 0
      %1628 = vmatprep.subr.bf16.mxu0 0
      %1629 = vmatpush1.bf16.xpose.msra.mxu0 0
      %1630 = vmatprep.subr.bf16.mxu0 0
      %1631 = vmatpush1.bf16.xpose.msra.mxu0 0
      %1632 = vmatprep.subr.bf16.mxu0 0
      %1633 = vmatpush1.bf16.xpose.msra.mxu0 0
      %1634 = vmatprep.subr.bf16.mxu0 0
      %1635 = vmatpush1.bf16.xpose.msra.mxu0 %v1618
      %1636 = vmatprep.subr.bf16.mxu0 0
      %1637 = vmatpush2.bf16.xpose.msra.mxu0 0
      %1638 = vmatprep.subr.bf16.mxu0 0
      %1639 = vmatpush2.bf16.xpose.msra.mxu0 0
      %1640 = vmatprep.subr.bf16.mxu0 0
      %1641 = vmatpush2.bf16.xpose.msra.mxu0 0
      %1642 = vmatprep.subr.bf16.mxu0 0
      %1643 = vmatpush2.bf16.xpose.msra.mxu0 0
      %1644 = vmatprep.subr.bf16.mxu0 0
      %1645 = vmatpush2.bf16.xpose.msra.mxu0 0
      %1646 = vmatprep.subr.bf16.mxu0 0
      %1647 = vmatpush2.bf16.xpose.msra.mxu0 0
      %1648 = vmatprep.subr.bf16.mxu0 0
      %1649 = vmatpush2.bf16.xpose.msra.mxu0 0
      %1650 = vmatprep.subr.bf16.mxu0 0
      %1651 = vmatpush2.bf16.xpose.msra.mxu0 0
      %1652 = vmatprep.mubr.bf16.mxu0 0
      %1653 = vmatmul.mubr.bf16.gmra.mxu0 %v1615
      %v1654 = vpop.f32.mrf.mxu0
      %v1655 = vadd.f32 0.0, %v1654
      %v1656 = vpop.f32.mrf.mxu0
      %v1657 = vpop.f32.mrf.mxu0
      %v1658 = vadd.f32 0.0, %v1657
      %v1659 = vpop.f32.mrf.mxu0
      %1660 = vdwg.mxu0
      %v1661 = vmul.f32 %v1655, 0.25
      %v1662 = vmul.f32 %v1658, 0.25
      %v1663 = vsel %vm752, %v1661, -inf
      %1664 = vmax.xlane.f32.xlu0 %v1663
      %v1665 = vpop.xlane.xlu0 %1664
      %v1666 = vsel %vm752, %v1662, -inf
      %1667 = vmax.xlane.f32.xlu0 %v1666
      %v1668 = vpop.xlane.xlu0 %1667
      %v1669 = vsub.f32 %v1661, %v1665
      %v1670 = vsub.f32 %v1662, %v1668
      %v1671 = vmul.f32 %v1669, 1.442695
      %v1672 = vpow.pop %v1671
      %v1673 = vmul.f32 %v1670, 1.442695
      %v1674 = vpow.pop %v1673
      %v1675 = vsel %vm752, %v1672, 0.0
      %1676 = vadd.xlane.f32.xlu0 %v1675
      %v1677 = vpop.xlane.xlu0 %1676
      %v1678 = vsel %vm752, %v1674, 0.0
      %1679 = vadd.xlane.f32.xlu0 %v1678
      %v1680 = vpop.xlane.xlu0 %1679
      %v1681 = vrcp.pop %v1677
      %v1682 = vrcp.pop %v1680
      %v1683 = vmul.f32 %v1672, %v1681
      %v1684 = vmul.f32 %v1674, %v1682
      %v1685 = vpack.c.bf16 %v1684, %v1683
      %1686 = vrot.lane.b32.xlu0 %v751, 16
      %v1687 = vpop.permute.xlu0 %1686
      %v1690 = vsel %vm752, %v1685, 0
      %1692 = vmatprep.subr.bf16.mxu0 0
      %1693 = vmatpush1.bf16.msra.mxu0 0
      %1694 = vmatprep.subr.bf16.mxu0 0
      %1695 = vmatpush1.bf16.msra.mxu0 0
      %1696 = vmatprep.subr.bf16.mxu0 0
      %1697 = vmatpush1.bf16.msra.mxu0 0
      %1698 = vmatprep.subr.bf16.mxu0 0
      %1699 = vmatpush1.bf16.msra.mxu0 0
      %1700 = vmatprep.subr.bf16.mxu0 0
      %1701 = vmatpush1.bf16.msra.mxu0 0
      %1702 = vmatprep.subr.bf16.mxu0 0
      %1703 = vmatpush1.bf16.msra.mxu0 0
      %1704 = vmatprep.subr.bf16.mxu0 0
      %1705 = vmatpush1.bf16.msra.mxu0 0
      %1706 = vmatprep.subr.bf16.mxu0 0
      %1707 = vmatpush1.bf16.msra.mxu0 %v1687
      %1708 = vmatprep.subr.bf16.mxu0 0
      %1709 = vmatpush2.bf16.msra.mxu0 0
      %1710 = vmatprep.subr.bf16.mxu0 0
      %1711 = vmatpush2.bf16.msra.mxu0 0
      %1712 = vmatprep.subr.bf16.mxu0 0
      %1713 = vmatpush2.bf16.msra.mxu0 0
      %1714 = vmatprep.subr.bf16.mxu0 0
      %1715 = vmatpush2.bf16.msra.mxu0 0
      %1716 = vmatprep.subr.bf16.mxu0 0
      %1717 = vmatpush2.bf16.msra.mxu0 0
      %1718 = vmatprep.subr.bf16.mxu0 0
      %1719 = vmatpush2.bf16.msra.mxu0 0
      %1720 = vmatprep.subr.bf16.mxu0 0
      %1721 = vmatpush2.bf16.msra.mxu0 0
      %1722 = vmatprep.subr.bf16.mxu0 0
      %1723 = vmatpush2.bf16.msra.mxu0 0
      %1724 = vmatprep.mubr.bf16.mxu0 0
      %1725 = vmatmul.mubr.bf16.gmra.mxu0 %v1690
      %v1726 = vpop.f32.mrf.mxu0
      %v1727 = vadd.f32 0.0, %v1726
      %v1728 = vpop.f32.mrf.mxu0
      %v1729 = vpop.f32.mrf.mxu0
      %v1730 = vadd.f32 0.0, %v1729
      %v1731 = vpop.f32.mrf.mxu0
      %1732 = vdwg.mxu0
      %1735 = vrot.lane.b32.xlu0 %v989, 16
      %v1736 = vpop.permute.xlu0 %1735
      %1737 = vrot.lane.b32.xlu0 %v992, 16
      %v1738 = vpop.permute.xlu0 %1737
      %1743 = vrot.lane.b32.xlu0 %v1112, 32
      %v1744 = vpop.permute.xlu0 %1743
      %1745 = vrot.lane.b32.xlu0 %v1115, 32
      %v1746 = vpop.permute.xlu0 %1745
      %1751 = vrot.lane.b32.xlu0 %v1235, 48
      %v1752 = vpop.permute.xlu0 %1751
      %1753 = vrot.lane.b32.xlu0 %v1238, 48
      %v1754 = vpop.permute.xlu0 %1753
      %1759 = vrot.lane.b32.xlu0 %v1358, 64
      %v1760 = vpop.permute.xlu0 %1759
      %1761 = vrot.lane.b32.xlu0 %v1361, 64
      %v1762 = vpop.permute.xlu0 %1761
      %1767 = vrot.lane.b32.xlu0 %v1481, 80
      %v1768 = vpop.permute.xlu0 %1767
      %1769 = vrot.lane.b32.xlu0 %v1484, 80
      %v1770 = vpop.permute.xlu0 %1769
      %1775 = vrot.lane.b32.xlu0 %v1604, 96
      %v1776 = vpop.permute.xlu0 %1775
      %1777 = vrot.lane.b32.xlu0 %v1607, 96
      %v1778 = vpop.permute.xlu0 %1777
      %1783 = vrot.lane.b32.xlu0 %v1727, 112
      %v1784 = vpop.permute.xlu0 %1783
      %1785 = vrot.lane.b32.xlu0 %v1730, 112
      %v1786 = vpop.permute.xlu0 %1785
      %v1789 = vsel %vm752, %v863, %v1736
      %v1790 = vsel %vm752, %v866, %v1738
      %vm1791 = vcmask 261120
      %v1792 = vsel %vm1791, %v1789, %v1744
      %v1793 = vsel %vm1791, %v1790, %v1746
      %vm1794 = vcmask 392192
      %v1795 = vsel %vm1794, %v1792, %v1752
      %v1796 = vsel %vm1794, %v1793, %v1754
      %vm1797 = vcmask 523264
      %v1798 = vsel %vm1797, %v1795, %v1760
      %v1799 = vsel %vm1797, %v1796, %v1762
      %vm1800 = vcmask 654336
      %v1801 = vsel %vm1800, %v1798, %v1768
      %v1802 = vsel %vm1800, %v1799, %v1770
      %vm1803 = vcmask 785408
      %v1804 = vsel %vm1803, %v1801, %v1776
      %v1805 = vsel %vm1803, %v1802, %v1778
      %vm1806 = vcmask 916480
      %v1807 = vsel %vm1806, %v1804, %v1784
      %v1808 = vsel %vm1806, %v1805, %v1786
      %v1809 = vpack.c.bf16 %v1808, %v1807
      %v1810 = vld [vmem:[%s5] sm:$0xf]
      %v1811 = vld [vmem:[%s5 + $0x4] sm:$0xf]
      %v1812 = vld [vmem:[%s5 + $0x8] sm:$0xf]
      %v1813 = vld [vmem:[%s5 + $0xc] sm:$0xf]
      %v1814 = vld [vmem:[%s5 + $0x10] sm:$0xf]
      %v1815 = vld [vmem:[%s5 + $0x14] sm:$0xf]
      %v1816 = vld [vmem:[%s5 + $0x18] sm:$0xf]
      %v1817 = vld [vmem:[%s5 + $0x1c] sm:$0xf]
      %v1818 = vld [vmem:[%s5 + $0x20] sm:$0xf]
      %v1819 = vld [vmem:[%s5 + $0x24] sm:$0xf]
      %v1820 = vld [vmem:[%s5 + $0x28] sm:$0xf]
      %v1821 = vld [vmem:[%s5 + $0x2c] sm:$0xf]
      %v1822 = vld [vmem:[%s5 + $0x30] sm:$0xf]
      %v1823 = vld [vmem:[%s5 + $0x34] sm:$0xf]
      %v1824 = vld [vmem:[%s5 + $0x38] sm:$0xf]
      %v1825 = vld [vmem:[%s5 + $0x3c] sm:$0xf]
      %v1826 = vld [vmem:[%s6] sm:$0x1]
      %v1828 = vlaneseq
      %v1829 = vshrl.u32 %v1828, 7
      %v1830 = vsub.s32 0, %v1829
      %v1831 = vrot.slane %v1826, %v1830
      %v1849 = vunpack.c.l.b16 %v1810
      %v1850 = vunpack.c.l.b16 %v1811
      %v1851 = vunpack.c.l.b16 %v1812
      %v1852 = vunpack.c.l.b16 %v1813
      %v1853 = vunpack.c.l.b16 %v1814
      %v1854 = vunpack.c.l.b16 %v1815
      %v1855 = vunpack.c.l.b16 %v1816
      %v1856 = vunpack.c.l.b16 %v1817
      %v1857 = vunpack.c.l.b16 %v1818
      %v1858 = vunpack.c.l.b16 %v1819
      %v1859 = vunpack.c.l.b16 %v1820
      %v1860 = vunpack.c.l.b16 %v1821
      %v1861 = vunpack.c.l.b16 %v1822
      %v1862 = vunpack.c.l.b16 %v1823
      %v1863 = vunpack.c.l.b16 %v1824
      %v1864 = vunpack.c.l.b16 %v1825
      %v1865 = vpack.c.b16 %v1850, %v1849
      %v1866 = vpack.c.b16 %v1852, %v1851
      %v1867 = vpack.c.b16 %v1854, %v1853
      %v1868 = vpack.c.b16 %v1856, %v1855
      %v1869 = vpack.c.b16 %v1858, %v1857
      %v1870 = vpack.c.b16 %v1860, %v1859
      %v1871 = vpack.c.b16 %v1862, %v1861
      %v1872 = vpack.c.b16 %v1864, %v1863
      %1881 = vmatprep.subr.bf16.mxu0 0
      %1882 = vmatpush1.bf16.msra.mxu0 %v1872
      %1883 = vmatprep.subr.bf16.mxu0 0
      %1884 = vmatpush1.bf16.msra.mxu0 %v1871
      %1885 = vmatprep.subr.bf16.mxu0 0
      %1886 = vmatpush1.bf16.msra.mxu0 %v1870
      %1887 = vmatprep.subr.bf16.mxu0 0
      %1888 = vmatpush1.bf16.msra.mxu0 %v1869
      %1889 = vmatprep.subr.bf16.mxu0 0
      %1890 = vmatpush1.bf16.msra.mxu0 %v1868
      %1891 = vmatprep.subr.bf16.mxu0 0
      %1892 = vmatpush1.bf16.msra.mxu0 %v1867
      %1893 = vmatprep.subr.bf16.mxu0 0
      %1894 = vmatpush1.bf16.msra.mxu0 %v1866
      %1895 = vmatprep.subr.bf16.mxu0 0
      %1896 = vmatpush1.bf16.msra.mxu0 %v1865
      %1897 = vmatprep.subr.bf16.mxu0 0
      %1898 = vmatpush2.bf16.msra.mxu0 0
      %1899 = vmatprep.subr.bf16.mxu0 0
      %1900 = vmatpush2.bf16.msra.mxu0 0
      %1901 = vmatprep.subr.bf16.mxu0 0
      %1902 = vmatpush2.bf16.msra.mxu0 0
      %1903 = vmatprep.subr.bf16.mxu0 0
      %1904 = vmatpush2.bf16.msra.mxu0 0
      %1905 = vmatprep.subr.bf16.mxu0 0
      %1906 = vmatpush2.bf16.msra.mxu0 0
      %1907 = vmatprep.subr.bf16.mxu0 0
      %1908 = vmatpush2.bf16.msra.mxu0 0
      %1909 = vmatprep.subr.bf16.mxu0 0
      %1910 = vmatpush2.bf16.msra.mxu0 0
      %1911 = vmatprep.subr.bf16.mxu0 0
      %1912 = vmatpush2.bf16.msra.mxu0 0
      %1913 = vmatprep.mubr.bf16.mxu0 0
      %1914 = vmatmul.mubr.bf16.gmra.mxu0 %v1809
      %v1915 = vpop.f32.mrf.mxu0
      %v1916 = vadd.f32 %v1831, %v1915
      %v1917 = vpop.f32.mrf.mxu0
      %v1918 = vpop.f32.mrf.mxu0
      %v1919 = vadd.f32 %v1831, %v1918
      %v1920 = vpop.f32.mrf.mxu0
      %1921 = vdwg.mxu0
      %v1922 = vadd.f32 %v444, %v1916
      %v1923 = vadd.f32 %v445, %v1919
      %v1924 = vld [vmem:[%s7] sm:$0x1]
      %v1925 = vld [vmem:[%s8] sm:$0x1]
      %1926 = vadd.xlane.f32.xlu0 %v1922
      %v1927 = vpop.xlane.xlu0 %1926
      %1928 = vadd.xlane.f32.xlu0 %v1923
      %v1929 = vpop.xlane.xlu0 %1928
      %v1930 = vmul.f32 %v1927, %v452
      %v1931 = vmul.f32 %v1929, %v452
      %v1932 = vsub.f32 %v1922, %v1930
      %v1933 = vsub.f32 %v1923, %v1931
      %v1934 = vmul.f32 %v1932, %v1932
      %v1935 = vmul.f32 %v1933, %v1933
      %1936 = vadd.xlane.f32.xlu0 %v1934
      %v1937 = vpop.xlane.xlu0 %1936
      %1938 = vadd.xlane.f32.xlu0 %v1935
      %v1939 = vpop.xlane.xlu0 %1938
      %v1940 = vmul.f32 %v1937, %v452
      %v1941 = vmul.f32 %v1939, %v452
      %v1942 = vadd.f32 %v1940, 1e-05
      %v1943 = vadd.f32 %v1941, 1e-05
      %v1944 = vrsqrt.pop %v1942
      %v1945 = vrsqrt.pop %v1943
      %v1946 = vmul.f32 %v1932, %v1944
      %v1947 = vmul.f32 %v1933, %v1945
      %v1949 = vlaneseq
      %v1950 = vshrl.u32 %v1949, 7
      %v1951 = vsub.s32 0, %v1950
      %v1952 = vrot.slane %v1924, %v1951
      %v1954 = vmul.f32 %v1946, %v1952
      %v1955 = vmul.f32 %v1947, %v1952
      %v1957 = vlaneseq
      %v1958 = vshrl.u32 %v1957, 7
      %v1959 = vsub.s32 0, %v1958
      %v1960 = vrot.slane %v1925, %v1959
      %v1962 = vadd.f32 %v1954, %v1960
      %v1963 = vadd.f32 %v1955, %v1960
      %v1964 = vpack.c.bf16 %v1963, %v1962
      %v1965 = vld [vmem:[%s9] sm:$0xff]
      %v1966 = vld [vmem:[%s9 + $0x8] sm:$0xff]
      %v1967 = vld [vmem:[%s9 + $0x10] sm:$0xff]
      %v1968 = vld [vmem:[%s9 + $0x18] sm:$0xff]
      %v1969 = vld [vmem:[%s9 + $0x20] sm:$0xff]
      %v1970 = vld [vmem:[%s9 + $0x28] sm:$0xff]
      %v1971 = vld [vmem:[%s9 + $0x30] sm:$0xff]
      %v1972 = vld [vmem:[%s9 + $0x38] sm:$0xff]
      %v1973 = vld [vmem:[%s9 + $0x40] sm:$0xff]
      %v1974 = vld [vmem:[%s9 + $0x48] sm:$0xff]
      %v1975 = vld [vmem:[%s9 + $0x50] sm:$0xff]
      %v1976 = vld [vmem:[%s9 + $0x58] sm:$0xff]
      %v1977 = vld [vmem:[%s9 + $0x60] sm:$0xff]
      %v1978 = vld [vmem:[%s9 + $0x68] sm:$0xff]
      %v1979 = vld [vmem:[%s9 + $0x70] sm:$0xff]
      %v1980 = vld [vmem:[%s9 + $0x78] sm:$0xff]
      %v1981 = vld [vmem:[%s9 + $0x80] sm:$0xff]
      %v1982 = vld [vmem:[%s9 + $0x88] sm:$0xff]
      %v1983 = vld [vmem:[%s9 + $0x90] sm:$0xff]
      %v1984 = vld [vmem:[%s9 + $0x98] sm:$0xff]
      %v1985 = vld [vmem:[%s9 + $0xa0] sm:$0xff]
      %v1986 = vld [vmem:[%s9 + $0xa8] sm:$0xff]
      %v1987 = vld [vmem:[%s9 + $0xb0] sm:$0xff]
      %v1988 = vld [vmem:[%s9 + $0xb8] sm:$0xff]
      %v1989 = vld [vmem:[%s9 + $0xc0] sm:$0xff]
      %v1990 = vld [vmem:[%s9 + $0xc8] sm:$0xff]
      %v1991 = vld [vmem:[%s9 + $0xd0] sm:$0xff]
      %v1992 = vld [vmem:[%s9 + $0xd8] sm:$0xff]
      %v1993 = vld [vmem:[%s9 + $0xe0] sm:$0xff]
      %v1994 = vld [vmem:[%s9 + $0xe8] sm:$0xff]
      %v1995 = vld [vmem:[%s9 + $0xf0] sm:$0xff]
      %v1996 = vld [vmem:[%s9 + $0xf8] sm:$0xff]
      %v1997 = vld [vmem:[%s10] sm:$0xf]
      %v1999 = vlaneseq
      %v2000 = vshrl.u32 %v1999, 7
      %v2001 = vsub.s32 0, %v2000
      %v2002 = vrot.slane %v1997, %v2001
      %v2003 = vlaneseq
      %v2004 = vshrl.u32 %v2003, 7
      %v2005 = vsub.s32 1, %v2004
      %v2006 = vrot.slane %v1997, %v2005
      %v2007 = vlaneseq
      %v2008 = vshrl.u32 %v2007, 7
      %v2009 = vsub.s32 2, %v2008
      %v2010 = vrot.slane %v1997, %v2009
      %v2011 = vlaneseq
      %v2012 = vshrl.u32 %v2011, 7
      %v2013 = vsub.s32 3, %v2012
      %v2014 = vrot.slane %v1997, %v2013
      %v2051 = vunpack.c.l.b16 %v1965
      %v2052 = vunpack.c.h.b16 %v1965
      %v2053 = vunpack.c.l.b16 %v1966
      %v2054 = vunpack.c.h.b16 %v1966
      %v2055 = vunpack.c.l.b16 %v1967
      %v2056 = vunpack.c.h.b16 %v1967
      %v2057 = vunpack.c.l.b16 %v1968
      %v2058 = vunpack.c.h.b16 %v1968
      %v2059 = vunpack.c.l.b16 %v1969
      %v2060 = vunpack.c.h.b16 %v1969
      %v2061 = vunpack.c.l.b16 %v1970
      %v2062 = vunpack.c.h.b16 %v1970
      %v2063 = vunpack.c.l.b16 %v1971
      %v2064 = vunpack.c.h.b16 %v1971
      %v2065 = vunpack.c.l.b16 %v1972
      %v2066 = vunpack.c.h.b16 %v1972
      %v2067 = vunpack.c.l.b16 %v1973
      %v2068 = vunpack.c.h.b16 %v1973
      %v2069 = vunpack.c.l.b16 %v1974
      %v2070 = vunpack.c.h.b16 %v1974
      %v2071 = vunpack.c.l.b16 %v1975
      %v2072 = vunpack.c.h.b16 %v1975
      %v2073 = vunpack.c.l.b16 %v1976
      %v2074 = vunpack.c.h.b16 %v1976
      %v2075 = vunpack.c.l.b16 %v1977
      %v2076 = vunpack.c.h.b16 %v1977
      %v2077 = vunpack.c.l.b16 %v1978
      %v2078 = vunpack.c.h.b16 %v1978
      %v2079 = vunpack.c.l.b16 %v1979
      %v2080 = vunpack.c.h.b16 %v1979
      %v2081 = vunpack.c.l.b16 %v1980
      %v2082 = vunpack.c.h.b16 %v1980
      %v2083 = vunpack.c.l.b16 %v1981
      %v2084 = vunpack.c.h.b16 %v1981
      %v2085 = vunpack.c.l.b16 %v1982
      %v2086 = vunpack.c.h.b16 %v1982
      %v2087 = vunpack.c.l.b16 %v1983
      %v2088 = vunpack.c.h.b16 %v1983
      %v2089 = vunpack.c.l.b16 %v1984
      %v2090 = vunpack.c.h.b16 %v1984
      %v2091 = vunpack.c.l.b16 %v1985
      %v2092 = vunpack.c.h.b16 %v1985
      %v2093 = vunpack.c.l.b16 %v1986
      %v2094 = vunpack.c.h.b16 %v1986
      %v2095 = vunpack.c.l.b16 %v1987
      %v2096 = vunpack.c.h.b16 %v1987
      %v2097 = vunpack.c.l.b16 %v1988
      %v2098 = vunpack.c.h.b16 %v1988
      %v2099 = vunpack.c.l.b16 %v1989
      %v2100 = vunpack.c.h.b16 %v1989
      %v2101 = vunpack.c.l.b16 %v1990
      %v2102 = vunpack.c.h.b16 %v1990
      %v2103 = vunpack.c.l.b16 %v1991
      %v2104 = vunpack.c.h.b16 %v1991
      %v2105 = vunpack.c.l.b16 %v1992
      %v2106 = vunpack.c.h.b16 %v1992
      %v2107 = vunpack.c.l.b16 %v1993
      %v2108 = vunpack.c.h.b16 %v1993
      %v2109 = vunpack.c.l.b16 %v1994
      %v2110 = vunpack.c.h.b16 %v1994
      %v2111 = vunpack.c.l.b16 %v1995
      %v2112 = vunpack.c.h.b16 %v1995
      %v2113 = vunpack.c.l.b16 %v1996
      %v2114 = vunpack.c.h.b16 %v1996
      %v2115 = vpack.c.b16 %v2055, %v2051
      %v2116 = vpack.c.b16 %v2056, %v2052
      %v2117 = vpack.c.b16 %v2057, %v2053
      %v2118 = vpack.c.b16 %v2058, %v2054
      %v2119 = vpack.c.b16 %v2063, %v2059
      %v2120 = vpack.c.b16 %v2064, %v2060
      %v2121 = vpack.c.b16 %v2065, %v2061
      %v2122 = vpack.c.b16 %v2066, %v2062
      %v2123 = vpack.c.b16 %v2071, %v2067
      %v2124 = vpack.c.b16 %v2072, %v2068
      %v2125 = vpack.c.b16 %v2073, %v2069
      %v2126 = vpack.c.b16 %v2074, %v2070
      %v2127 = vpack.c.b16 %v2079, %v2075
      %v2128 = vpack.c.b16 %v2080, %v2076
      %v2129 = vpack.c.b16 %v2081, %v2077
      %v2130 = vpack.c.b16 %v2082, %v2078
      %v2131 = vpack.c.b16 %v2087, %v2083
      %v2132 = vpack.c.b16 %v2088, %v2084
      %v2133 = vpack.c.b16 %v2089, %v2085
      %v2134 = vpack.c.b16 %v2090, %v2086
      %v2135 = vpack.c.b16 %v2095, %v2091
      %v2136 = vpack.c.b16 %v2096, %v2092
      %v2137 = vpack.c.b16 %v2097, %v2093
      %v2138 = vpack.c.b16 %v2098, %v2094
      %v2139 = vpack.c.b16 %v2103, %v2099
      %v2140 = vpack.c.b16 %v2104, %v2100
      %v2141 = vpack.c.b16 %v2105, %v2101
      %v2142 = vpack.c.b16 %v2106, %v2102
      %v2143 = vpack.c.b16 %v2111, %v2107
      %v2144 = vpack.c.b16 %v2112, %v2108
      %v2145 = vpack.c.b16 %v2113, %v2109
      %v2146 = vpack.c.b16 %v2114, %v2110
      %2179 = vmatprep.subr.bf16.mxu0 %v2144
      %2180 = vmatpush1.bf16.msra.mxu0 %v2143
      %2181 = vmatprep.subr.bf16.mxu0 %v2140
      %2182 = vmatpush1.bf16.msra.mxu0 %v2139
      %2183 = vmatprep.subr.bf16.mxu0 %v2136
      %2184 = vmatpush1.bf16.msra.mxu0 %v2135
      %2185 = vmatprep.subr.bf16.mxu0 %v2132
      %2186 = vmatpush1.bf16.msra.mxu0 %v2131
      %2187 = vmatprep.subr.bf16.mxu0 %v2128
      %2188 = vmatpush1.bf16.msra.mxu0 %v2127
      %2189 = vmatprep.subr.bf16.mxu0 %v2124
      %2190 = vmatpush1.bf16.msra.mxu0 %v2123
      %2191 = vmatprep.subr.bf16.mxu0 %v2120
      %2192 = vmatpush1.bf16.msra.mxu0 %v2119
      %2193 = vmatprep.subr.bf16.mxu0 %v2116
      %2194 = vmatpush1.bf16.msra.mxu0 %v2115
      %2195 = vmatprep.subr.bf16.mxu0 0
      %2196 = vmatpush2.bf16.msra.mxu0 0
      %2197 = vmatprep.subr.bf16.mxu0 0
      %2198 = vmatpush2.bf16.msra.mxu0 0
      %2199 = vmatprep.subr.bf16.mxu0 0
      %2200 = vmatpush2.bf16.msra.mxu0 0
      %2201 = vmatprep.subr.bf16.mxu0 0
      %2202 = vmatpush2.bf16.msra.mxu0 0
      %2203 = vmatprep.subr.bf16.mxu0 0
      %2204 = vmatpush2.bf16.msra.mxu0 0
      %2205 = vmatprep.subr.bf16.mxu0 0
      %2206 = vmatpush2.bf16.msra.mxu0 0
      %2207 = vmatprep.subr.bf16.mxu0 0
      %2208 = vmatpush2.bf16.msra.mxu0 0
      %2209 = vmatprep.subr.bf16.mxu0 0
      %2210 = vmatpush2.bf16.msra.mxu0 0
      %2211 = vmatprep.mubr.bf16.mxu0 0
      %2212 = vmatmul.mubr.bf16.gmra.mxu0 %v1964
      %v2213 = vpop.f32.mrf.mxu0
      %v2214 = vadd.f32 %v2002, %v2213
      %v2215 = vpop.f32.mrf.mxu0
      %v2216 = vadd.f32 %v2006, %v2215
      %v2217 = vpop.f32.mrf.mxu0
      %v2218 = vadd.f32 %v2002, %v2217
      %v2219 = vpop.f32.mrf.mxu0
      %v2220 = vadd.f32 %v2006, %v2219
      %2221 = vdwg.mxu0
      %2222 = vmatprep.subr.bf16.mxu0 %v2146
      %2223 = vmatpush1.bf16.msra.mxu0 %v2145
      %2224 = vmatprep.subr.bf16.mxu0 %v2142
      %2225 = vmatpush1.bf16.msra.mxu0 %v2141
      %2226 = vmatprep.subr.bf16.mxu0 %v2138
      %2227 = vmatpush1.bf16.msra.mxu0 %v2137
      %2228 = vmatprep.subr.bf16.mxu0 %v2134
      %2229 = vmatpush1.bf16.msra.mxu0 %v2133
      %2230 = vmatprep.subr.bf16.mxu0 %v2130
      %2231 = vmatpush1.bf16.msra.mxu0 %v2129
      %2232 = vmatprep.subr.bf16.mxu0 %v2126
      %2233 = vmatpush1.bf16.msra.mxu0 %v2125
      %2234 = vmatprep.subr.bf16.mxu0 %v2122
      %2235 = vmatpush1.bf16.msra.mxu0 %v2121
      %2236 = vmatprep.subr.bf16.mxu0 %v2118
      %2237 = vmatpush1.bf16.msra.mxu0 %v2117
      %2238 = vmatprep.subr.bf16.mxu0 0
      %2239 = vmatpush2.bf16.msra.mxu0 0
      %2240 = vmatprep.subr.bf16.mxu0 0
      %2241 = vmatpush2.bf16.msra.mxu0 0
      %2242 = vmatprep.subr.bf16.mxu0 0
      %2243 = vmatpush2.bf16.msra.mxu0 0
      %2244 = vmatprep.subr.bf16.mxu0 0
      %2245 = vmatpush2.bf16.msra.mxu0 0
      %2246 = vmatprep.subr.bf16.mxu0 0
      %2247 = vmatpush2.bf16.msra.mxu0 0
      %2248 = vmatprep.subr.bf16.mxu0 0
      %2249 = vmatpush2.bf16.msra.mxu0 0
      %2250 = vmatprep.subr.bf16.mxu0 0
      %2251 = vmatpush2.bf16.msra.mxu0 0
      %2252 = vmatprep.subr.bf16.mxu0 0
      %2253 = vmatpush2.bf16.msra.mxu0 0
      %2254 = vmatprep.mubr.bf16.mxu0 0
      %2255 = vmatmul.mubr.bf16.gmra.mxu0 %v1964
      %v2256 = vpop.f32.mrf.mxu0
      %v2257 = vadd.f32 %v2010, %v2256
      %v2258 = vpop.f32.mrf.mxu0
      %v2259 = vadd.f32 %v2014, %v2258
      %v2260 = vpop.f32.mrf.mxu0
      %v2261 = vadd.f32 %v2010, %v2260
      %v2262 = vpop.f32.mrf.mxu0
      %v2263 = vadd.f32 %v2014, %v2262
      %2264 = vdwg.mxu0
      %v2265 = vmul.f32 %v2214, %v2214
      %v2266 = vmul.f32 %v2216, %v2216
      %v2267 = vmul.f32 %v2257, %v2257
      %v2268 = vmul.f32 %v2259, %v2259
      %v2269 = vmul.f32 %v2218, %v2218
      %v2270 = vmul.f32 %v2220, %v2220
      %v2271 = vmul.f32 %v2261, %v2261
      %v2272 = vmul.f32 %v2263, %v2263
      %v2273 = vmul.f32 %v2214, %v2265
      %v2274 = vmul.f32 %v2216, %v2266
      %v2275 = vmul.f32 %v2257, %v2267
      %v2276 = vmul.f32 %v2259, %v2268
      %v2277 = vmul.f32 %v2218, %v2269
      %v2278 = vmul.f32 %v2220, %v2270
      %v2279 = vmul.f32 %v2261, %v2271
      %v2280 = vmul.f32 %v2263, %v2272
      %v2281 = vmul.f32 %v2273, 0.044715
      %v2282 = vmul.f32 %v2274, 0.044715
      %v2283 = vmul.f32 %v2275, 0.044715
      %v2284 = vmul.f32 %v2276, 0.044715
      %v2285 = vmul.f32 %v2277, 0.044715
      %v2286 = vmul.f32 %v2278, 0.044715
      %v2287 = vmul.f32 %v2279, 0.044715
      %v2288 = vmul.f32 %v2280, 0.044715
      %v2289 = vadd.f32 %v2214, %v2281
      %v2290 = vadd.f32 %v2216, %v2282
      %v2291 = vadd.f32 %v2257, %v2283
      %v2292 = vadd.f32 %v2259, %v2284
      %v2293 = vadd.f32 %v2218, %v2285
      %v2294 = vadd.f32 %v2220, %v2286
      %v2295 = vadd.f32 %v2261, %v2287
      %v2296 = vadd.f32 %v2263, %v2288
      %v2297 = vmul.f32 %v2289, 0.7978846
      %v2298 = vmul.f32 %v2290, 0.7978846
      %v2299 = vmul.f32 %v2291, 0.7978846
      %v2300 = vmul.f32 %v2292, 0.7978846
      %v2301 = vmul.f32 %v2293, 0.7978846
      %v2302 = vmul.f32 %v2294, 0.7978846
      %v2303 = vmul.f32 %v2295, 0.7978846
      %v2304 = vmul.f32 %v2296, 0.7978846
      %v2305 = vtanh.pop %v2297
      %v2306 = vtanh.pop %v2298
      %v2307 = vtanh.pop %v2299
      %v2308 = vtanh.pop %v2300
      %v2309 = vtanh.pop %v2301
      %v2310 = vtanh.pop %v2302
      %v2311 = vtanh.pop %v2303
      %v2312 = vtanh.pop %v2304
      %v2313 = vadd.f32 %v2305, 1.0
      %v2314 = vadd.f32 %v2306, 1.0
      %v2315 = vadd.f32 %v2307, 1.0
      %v2316 = vadd.f32 %v2308, 1.0
      %v2317 = vadd.f32 %v2309, 1.0
      %v2318 = vadd.f32 %v2310, 1.0
      %v2319 = vadd.f32 %v2311, 1.0
      %v2320 = vadd.f32 %v2312, 1.0
      %v2321 = vmul.f32 %v2313, 0.5
      %v2322 = vmul.f32 %v2314, 0.5
      %v2323 = vmul.f32 %v2315, 0.5
      %v2324 = vmul.f32 %v2316, 0.5
      %v2325 = vmul.f32 %v2317, 0.5
      %v2326 = vmul.f32 %v2318, 0.5
      %v2327 = vmul.f32 %v2319, 0.5
      %v2328 = vmul.f32 %v2320, 0.5
      %v2329 = vmul.f32 %v2214, %v2321
      %v2330 = vmul.f32 %v2216, %v2322
      %v2331 = vmul.f32 %v2257, %v2323
      %v2332 = vmul.f32 %v2259, %v2324
      %v2333 = vmul.f32 %v2218, %v2325
      %v2334 = vmul.f32 %v2220, %v2326
      %v2335 = vmul.f32 %v2261, %v2327
      %v2336 = vmul.f32 %v2263, %v2328
      %v2337 = vpack.c.bf16 %v2333, %v2329
      %v2338 = vpack.c.bf16 %v2334, %v2330
      %v2339 = vpack.c.bf16 %v2335, %v2331
      %v2340 = vpack.c.bf16 %v2336, %v2332
      %v2341 = vld [vmem:[%s11] sm:$0xf]
      %v2342 = vld [vmem:[%s11 + $0x4] sm:$0xf]
      %v2343 = vld [vmem:[%s11 + $0x8] sm:$0xf]
      %v2344 = vld [vmem:[%s11 + $0xc] sm:$0xf]
      %v2345 = vld [vmem:[%s11 + $0x10] sm:$0xf]
      %v2346 = vld [vmem:[%s11 + $0x14] sm:$0xf]
      %v2347 = vld [vmem:[%s11 + $0x18] sm:$0xf]
      %v2348 = vld [vmem:[%s11 + $0x1c] sm:$0xf]
      %v2349 = vld [vmem:[%s11 + $0x20] sm:$0xf]
      %v2350 = vld [vmem:[%s11 + $0x24] sm:$0xf]
      %v2351 = vld [vmem:[%s11 + $0x28] sm:$0xf]
      %v2352 = vld [vmem:[%s11 + $0x2c] sm:$0xf]
      %v2353 = vld [vmem:[%s11 + $0x30] sm:$0xf]
      %v2354 = vld [vmem:[%s11 + $0x34] sm:$0xf]
      %v2355 = vld [vmem:[%s11 + $0x38] sm:$0xf]
      %v2356 = vld [vmem:[%s11 + $0x3c] sm:$0xf]
      %v2357 = vld [vmem:[%s11 + $0x40] sm:$0xf]
      %v2358 = vld [vmem:[%s11 + $0x44] sm:$0xf]
      %v2359 = vld [vmem:[%s11 + $0x48] sm:$0xf]
      %v2360 = vld [vmem:[%s11 + $0x4c] sm:$0xf]
      %v2361 = vld [vmem:[%s11 + $0x50] sm:$0xf]
      %v2362 = vld [vmem:[%s11 + $0x54] sm:$0xf]
      %v2363 = vld [vmem:[%s11 + $0x58] sm:$0xf]
      %v2364 = vld [vmem:[%s11 + $0x5c] sm:$0xf]
      %v2365 = vld [vmem:[%s11 + $0x60] sm:$0xf]
      %v2366 = vld [vmem:[%s11 + $0x64] sm:$0xf]
      %v2367 = vld [vmem:[%s11 + $0x68] sm:$0xf]
      %v2368 = vld [vmem:[%s11 + $0x6c] sm:$0xf]
      %v2369 = vld [vmem:[%s11 + $0x70] sm:$0xf]
      %v2370 = vld [vmem:[%s11 + $0x74] sm:$0xf]
      %v2371 = vld [vmem:[%s11 + $0x78] sm:$0xf]
      %v2372 = vld [vmem:[%s11 + $0x7c] sm:$0xf]
      %v2373 = vld [vmem:[%s11 + $0x80] sm:$0xf]
      %v2374 = vld [vmem:[%s11 + $0x84] sm:$0xf]
      %v2375 = vld [vmem:[%s11 + $0x88] sm:$0xf]
      %v2376 = vld [vmem:[%s11 + $0x8c] sm:$0xf]
      %v2377 = vld [vmem:[%s11 + $0x90] sm:$0xf]
      %v2378 = vld [vmem:[%s11 + $0x94] sm:$0xf]
      %v2379 = vld [vmem:[%s11 + $0x98] sm:$0xf]
      %v2380 = vld [vmem:[%s11 + $0x9c] sm:$0xf]
      %v2381 = vld [vmem:[%s11 + $0xa0] sm:$0xf]
      %v2382 = vld [vmem:[%s11 + $0xa4] sm:$0xf]
      %v2383 = vld [vmem:[%s11 + $0xa8] sm:$0xf]
      %v2384 = vld [vmem:[%s11 + $0xac] sm:$0xf]
      %v2385 = vld [vmem:[%s11 + $0xb0] sm:$0xf]
      %v2386 = vld [vmem:[%s11 + $0xb4] sm:$0xf]
      %v2387 = vld [vmem:[%s11 + $0xb8] sm:$0xf]
      %v2388 = vld [vmem:[%s11 + $0xbc] sm:$0xf]
      %v2389 = vld [vmem:[%s11 + $0xc0] sm:$0xf]
      %v2390 = vld [vmem:[%s11 + $0xc4] sm:$0xf]
      %v2391 = vld [vmem:[%s11 + $0xc8] sm:$0xf]
      %v2392 = vld [vmem:[%s11 + $0xcc] sm:$0xf]
      %v2393 = vld [vmem:[%s11 + $0xd0] sm:$0xf]
      %v2394 = vld [vmem:[%s11 + $0xd4] sm:$0xf]
      %v2395 = vld [vmem:[%s11 + $0xd8] sm:$0xf]
      %v2396 = vld [vmem:[%s11 + $0xdc] sm:$0xf]
      %v2397 = vld [vmem:[%s11 + $0xe0] sm:$0xf]
      %v2398 = vld [vmem:[%s11 + $0xe4] sm:$0xf]
      %v2399 = vld [vmem:[%s11 + $0xe8] sm:$0xf]
      %v2400 = vld [vmem:[%s11 + $0xec] sm:$0xf]
      %v2401 = vld [vmem:[%s11 + $0xf0] sm:$0xf]
      %v2402 = vld [vmem:[%s11 + $0xf4] sm:$0xf]
      %v2403 = vld [vmem:[%s11 + $0xf8] sm:$0xf]
      %v2404 = vld [vmem:[%s11 + $0xfc] sm:$0xf]
      %v2405 = vld [vmem:[%s12] sm:$0x1]
      %v2407 = vlaneseq
      %v2408 = vshrl.u32 %v2407, 7
      %v2409 = vsub.s32 0, %v2408
      %v2410 = vrot.slane %v2405, %v2409
      %v2476 = vunpack.c.l.b16 %v2341
      %v2477 = vunpack.c.l.b16 %v2342
      %v2478 = vunpack.c.l.b16 %v2343
      %v2479 = vunpack.c.l.b16 %v2344
      %v2480 = vunpack.c.l.b16 %v2345
      %v2481 = vunpack.c.l.b16 %v2346
      %v2482 = vunpack.c.l.b16 %v2347
      %v2483 = vunpack.c.l.b16 %v2348
      %v2484 = vunpack.c.l.b16 %v2349
      %v2485 = vunpack.c.l.b16 %v2350
      %v2486 = vunpack.c.l.b16 %v2351
      %v2487 = vunpack.c.l.b16 %v2352
      %v2488 = vunpack.c.l.b16 %v2353
      %v2489 = vunpack.c.l.b16 %v2354
      %v2490 = vunpack.c.l.b16 %v2355
      %v2491 = vunpack.c.l.b16 %v2356
      %v2492 = vunpack.c.l.b16 %v2357
      %v2493 = vunpack.c.l.b16 %v2358
      %v2494 = vunpack.c.l.b16 %v2359
      %v2495 = vunpack.c.l.b16 %v2360
      %v2496 = vunpack.c.l.b16 %v2361
      %v2497 = vunpack.c.l.b16 %v2362
      %v2498 = vunpack.c.l.b16 %v2363
      %v2499 = vunpack.c.l.b16 %v2364
      %v2500 = vunpack.c.l.b16 %v2365
      %v2501 = vunpack.c.l.b16 %v2366
      %v2502 = vunpack.c.l.b16 %v2367
      %v2503 = vunpack.c.l.b16 %v2368
      %v2504 = vunpack.c.l.b16 %v2369
      %v2505 = vunpack.c.l.b16 %v2370
      %v2506 = vunpack.c.l.b16 %v2371
      %v2507 = vunpack.c.l.b16 %v2372
      %v2508 = vunpack.c.l.b16 %v2373
      %v2509 = vunpack.c.l.b16 %v2374
      %v2510 = vunpack.c.l.b16 %v2375
      %v2511 = vunpack.c.l.b16 %v2376
      %v2512 = vunpack.c.l.b16 %v2377
      %v2513 = vunpack.c.l.b16 %v2378
      %v2514 = vunpack.c.l.b16 %v2379
      %v2515 = vunpack.c.l.b16 %v2380
      %v2516 = vunpack.c.l.b16 %v2381
      %v2517 = vunpack.c.l.b16 %v2382
      %v2518 = vunpack.c.l.b16 %v2383
      %v2519 = vunpack.c.l.b16 %v2384
      %v2520 = vunpack.c.l.b16 %v2385
      %v2521 = vunpack.c.l.b16 %v2386
      %v2522 = vunpack.c.l.b16 %v2387
      %v2523 = vunpack.c.l.b16 %v2388
      %v2524 = vunpack.c.l.b16 %v2389
      %v2525 = vunpack.c.l.b16 %v2390
      %v2526 = vunpack.c.l.b16 %v2391
      %v2527 = vunpack.c.l.b16 %v2392
      %v2528 = vunpack.c.l.b16 %v2393
      %v2529 = vunpack.c.l.b16 %v2394
      %v2530 = vunpack.c.l.b16 %v2395
      %v2531 = vunpack.c.l.b16 %v2396
      %v2532 = vunpack.c.l.b16 %v2397
      %v2533 = vunpack.c.l.b16 %v2398
      %v2534 = vunpack.c.l.b16 %v2399
      %v2535 = vunpack.c.l.b16 %v2400
      %v2536 = vunpack.c.l.b16 %v2401
      %v2537 = vunpack.c.l.b16 %v2402
      %v2538 = vunpack.c.l.b16 %v2403
      %v2539 = vunpack.c.l.b16 %v2404
      %v2540 = vpack.c.b16 %v2477, %v2476
      %v2541 = vpack.c.b16 %v2479, %v2478
      %v2542 = vpack.c.b16 %v2481, %v2480
      %v2543 = vpack.c.b16 %v2483, %v2482
      %v2544 = vpack.c.b16 %v2485, %v2484
      %v2545 = vpack.c.b16 %v2487, %v2486
      %v2546 = vpack.c.b16 %v2489, %v2488
      %v2547 = vpack.c.b16 %v2491, %v2490
      %v2548 = vpack.c.b16 %v2493, %v2492
      %v2549 = vpack.c.b16 %v2495, %v2494
      %v2550 = vpack.c.b16 %v2497, %v2496
      %v2551 = vpack.c.b16 %v2499, %v2498
      %v2552 = vpack.c.b16 %v2501, %v2500
      %v2553 = vpack.c.b16 %v2503, %v2502
      %v2554 = vpack.c.b16 %v2505, %v2504
      %v2555 = vpack.c.b16 %v2507, %v2506
      %v2556 = vpack.c.b16 %v2509, %v2508
      %v2557 = vpack.c.b16 %v2511, %v2510
      %v2558 = vpack.c.b16 %v2513, %v2512
      %v2559 = vpack.c.b16 %v2515, %v2514
      %v2560 = vpack.c.b16 %v2517, %v2516
      %v2561 = vpack.c.b16 %v2519, %v2518
      %v2562 = vpack.c.b16 %v2521, %v2520
      %v2563 = vpack.c.b16 %v2523, %v2522
      %v2564 = vpack.c.b16 %v2525, %v2524
      %v2565 = vpack.c.b16 %v2527, %v2526
      %v2566 = vpack.c.b16 %v2529, %v2528
      %v2567 = vpack.c.b16 %v2531, %v2530
      %v2568 = vpack.c.b16 %v2533, %v2532
      %v2569 = vpack.c.b16 %v2535, %v2534
      %v2570 = vpack.c.b16 %v2537, %v2536
      %v2571 = vpack.c.b16 %v2539, %v2538
      %2604 = vmatprep.subr.bf16.mxu0 0
      %2605 = vmatpush1.bf16.msra.mxu0 %v2547
      %2606 = vmatprep.subr.bf16.mxu0 0
      %2607 = vmatpush1.bf16.msra.mxu0 %v2546
      %2608 = vmatprep.subr.bf16.mxu0 0
      %2609 = vmatpush1.bf16.msra.mxu0 %v2545
      %2610 = vmatprep.subr.bf16.mxu0 0
      %2611 = vmatpush1.bf16.msra.mxu0 %v2544
      %2612 = vmatprep.subr.bf16.mxu0 0
      %2613 = vmatpush1.bf16.msra.mxu0 %v2543
      %2614 = vmatprep.subr.bf16.mxu0 0
      %2615 = vmatpush1.bf16.msra.mxu0 %v2542
      %2616 = vmatprep.subr.bf16.mxu0 0
      %2617 = vmatpush1.bf16.msra.mxu0 %v2541
      %2618 = vmatprep.subr.bf16.mxu0 0
      %2619 = vmatpush1.bf16.msra.mxu0 %v2540
      %2620 = vmatprep.subr.bf16.mxu0 0
      %2621 = vmatpush2.bf16.msra.mxu0 %v2555
      %2622 = vmatprep.subr.bf16.mxu0 0
      %2623 = vmatpush2.bf16.msra.mxu0 %v2554
      %2624 = vmatprep.subr.bf16.mxu0 0
      %2625 = vmatpush2.bf16.msra.mxu0 %v2553
      %2626 = vmatprep.subr.bf16.mxu0 0
      %2627 = vmatpush2.bf16.msra.mxu0 %v2552
      %2628 = vmatprep.subr.bf16.mxu0 0
      %2629 = vmatpush2.bf16.msra.mxu0 %v2551
      %2630 = vmatprep.subr.bf16.mxu0 0
      %2631 = vmatpush2.bf16.msra.mxu0 %v2550
      %2632 = vmatprep.subr.bf16.mxu0 0
      %2633 = vmatpush2.bf16.msra.mxu0 %v2549
      %2634 = vmatprep.subr.bf16.mxu0 0
      %2635 = vmatpush2.bf16.msra.mxu0 %v2548
      %2636 = vmatprep.mubr.bf16.mxu0 %v2338
      %2637 = vmatmul.mubr.bf16.gmra.mxu0 %v2337
      %v2638 = vpop.f32.mrf.mxu0
      %v2639 = vadd.f32 %v2410, %v2638
      %v2640 = vpop.f32.mrf.mxu0
      %v2641 = vpop.f32.mrf.mxu0
      %v2642 = vadd.f32 %v2410, %v2641
      %v2643 = vpop.f32.mrf.mxu0
      %2644 = vdwg.mxu0
      %2645 = vmatprep.subr.bf16.mxu0 0
      %2646 = vmatpush1.bf16.msra.mxu0 %v2563
      %2647 = vmatprep.subr.bf16.mxu0 0
      %2648 = vmatpush1.bf16.msra.mxu0 %v2562
      %2649 = vmatprep.subr.bf16.mxu0 0
      %2650 = vmatpush1.bf16.msra.mxu0 %v2561
      %2651 = vmatprep.subr.bf16.mxu0 0
      %2652 = vmatpush1.bf16.msra.mxu0 %v2560
      %2653 = vmatprep.subr.bf16.mxu0 0
      %2654 = vmatpush1.bf16.msra.mxu0 %v2559
      %2655 = vmatprep.subr.bf16.mxu0 0
      %2656 = vmatpush1.bf16.msra.mxu0 %v2558
      %2657 = vmatprep.subr.bf16.mxu0 0
      %2658 = vmatpush1.bf16.msra.mxu0 %v2557
      %2659 = vmatprep.subr.bf16.mxu0 0
      %2660 = vmatpush1.bf16.msra.mxu0 %v2556
      %2661 = vmatprep.subr.bf16.mxu0 0
      %2662 = vmatpush2.bf16.msra.mxu0 %v2571
      %2663 = vmatprep.subr.bf16.mxu0 0
      %2664 = vmatpush2.bf16.msra.mxu0 %v2570
      %2665 = vmatprep.subr.bf16.mxu0 0
      %2666 = vmatpush2.bf16.msra.mxu0 %v2569
      %2667 = vmatprep.subr.bf16.mxu0 0
      %2668 = vmatpush2.bf16.msra.mxu0 %v2568
      %2669 = vmatprep.subr.bf16.mxu0 0
      %2670 = vmatpush2.bf16.msra.mxu0 %v2567
      %2671 = vmatprep.subr.bf16.mxu0 0
      %2672 = vmatpush2.bf16.msra.mxu0 %v2566
      %2673 = vmatprep.subr.bf16.mxu0 0
      %2674 = vmatpush2.bf16.msra.mxu0 %v2565
      %2675 = vmatprep.subr.bf16.mxu0 0
      %2676 = vmatpush2.bf16.msra.mxu0 %v2564
      %2677 = vmatprep.mubr.bf16.mxu0 %v2340
      %2678 = vmatmul.mubr.bf16.gmra.mxu0 %v2339
      %v2679 = vpop.f32.mrf.mxu0
      %v2680 = vadd.f32 %v2639, %v2679
      %v2681 = vpop.f32.mrf.mxu0
      %v2682 = vpop.f32.mrf.mxu0
      %v2683 = vadd.f32 %v2642, %v2682
      %v2684 = vpop.f32.mrf.mxu0
      %2685 = vdwg.mxu0
      %v2686 = vadd.f32 %v1922, %v2680
      %v2687 = vadd.f32 %v1923, %v2683
      %s2688 = scalar_lea.vmem %s1, 1
      %v2689 = vld [vmem:[%s2688] sm:$0x1]
      %s2690 = scalar_lea.vmem %s2, 1
      %v2691 = vld [vmem:[%s2690] sm:$0x1]
      %2692 = vadd.xlane.f32.xlu0 %v2686
      %v2693 = vpop.xlane.xlu0 %2692
      %2694 = vadd.xlane.f32.xlu0 %v2687
      %v2695 = vpop.xlane.xlu0 %2694
      %v2696 = vmul.f32 %v2693, %v452
      %v2697 = vmul.f32 %v2695, %v452
      %v2698 = vsub.f32 %v2686, %v2696
      %v2699 = vsub.f32 %v2687, %v2697
      %v2700 = vmul.f32 %v2698, %v2698
      %v2701 = vmul.f32 %v2699, %v2699
      %2702 = vadd.xlane.f32.xlu0 %v2700
      %v2703 = vpop.xlane.xlu0 %2702
      %2704 = vadd.xlane.f32.xlu0 %v2701
      %v2705 = vpop.xlane.xlu0 %2704
      %v2706 = vmul.f32 %v2703, %v452
      %v2707 = vmul.f32 %v2705, %v452
      %v2708 = vadd.f32 %v2706, 1e-05
      %v2709 = vadd.f32 %v2707, 1e-05
      %v2710 = vrsqrt.pop %v2708
      %v2711 = vrsqrt.pop %v2709
      %v2712 = vmul.f32 %v2698, %v2710
      %v2713 = vmul.f32 %v2699, %v2711
      %v2715 = vlaneseq
      %v2716 = vshrl.u32 %v2715, 7
      %v2717 = vsub.s32 0, %v2716
      %v2718 = vrot.slane %v2689, %v2717
      %v2720 = vmul.f32 %v2712, %v2718
      %v2721 = vmul.f32 %v2713, %v2718
      %v2723 = vlaneseq
      %v2724 = vshrl.u32 %v2723, 7
      %v2725 = vsub.s32 0, %v2724
      %v2726 = vrot.slane %v2691, %v2725
      %v2728 = vadd.f32 %v2720, %v2726
      %v2729 = vadd.f32 %v2721, %v2726
      %v2730 = vpack.c.bf16 %v2729, %v2728
      %s2731 = scalar_lea.vmem %s3, 192
      %v2732 = vld [vmem:[%s2731] sm:$0xff]
      %v2733 = vld [vmem:[%s2731 + $0x8] sm:$0xf]
      %v2734 = vld [vmem:[%s2731 + $0xc] sm:$0xff]
      %v2735 = vld [vmem:[%s2731 + $0x14] sm:$0xf]
      %v2736 = vld [vmem:[%s2731 + $0x18] sm:$0xff]
      %v2737 = vld [vmem:[%s2731 + $0x20] sm:$0xf]
      %v2738 = vld [vmem:[%s2731 + $0x24] sm:$0xff]
      %v2739 = vld [vmem:[%s2731 + $0x2c] sm:$0xf]
      %v2740 = vld [vmem:[%s2731 + $0x30] sm:$0xff]
      %v2741 = vld [vmem:[%s2731 + $0x38] sm:$0xf]
      %v2742 = vld [vmem:[%s2731 + $0x3c] sm:$0xff]
      %v2743 = vld [vmem:[%s2731 + $0x44] sm:$0xf]
      %v2744 = vld [vmem:[%s2731 + $0x48] sm:$0xff]
      %v2745 = vld [vmem:[%s2731 + $0x50] sm:$0xf]
      %v2746 = vld [vmem:[%s2731 + $0x54] sm:$0xff]
      %v2747 = vld [vmem:[%s2731 + $0x5c] sm:$0xf]
      %v2748 = vld [vmem:[%s2731 + $0x60] sm:$0xff]
      %v2749 = vld [vmem:[%s2731 + $0x68] sm:$0xf]
      %v2750 = vld [vmem:[%s2731 + $0x6c] sm:$0xff]
      %v2751 = vld [vmem:[%s2731 + $0x74] sm:$0xf]
      %v2752 = vld [vmem:[%s2731 + $0x78] sm:$0xff]
      %v2753 = vld [vmem:[%s2731 + $0x80] sm:$0xf]
      %v2754 = vld [vmem:[%s2731 + $0x84] sm:$0xff]
      %v2755 = vld [vmem:[%s2731 + $0x8c] sm:$0xf]
      %v2756 = vld [vmem:[%s2731 + $0x90] sm:$0xff]
      %v2757 = vld [vmem:[%s2731 + $0x98] sm:$0xf]
      %v2758 = vld [vmem:[%s2731 + $0x9c] sm:$0xff]
      %v2759 = vld [vmem:[%s2731 + $0xa4] sm:$0xf]
      %v2760 = vld [vmem:[%s2731 + $0xa8] sm:$0xff]
      %v2761 = vld [vmem:[%s2731 + $0xb0] sm:$0xf]
      %v2762 = vld [vmem:[%s2731 + $0xb4] sm:$0xff]
      %v2763 = vld [vmem:[%s2731 + $0xbc] sm:$0xf]
      %s2764 = scalar_lea.vmem %s4, 3
      %v2765 = vld [vmem:[%s2764] sm:$0x7]
      %v2767 = vlaneseq
      %v2768 = vshrl.u32 %v2767, 7
      %v2769 = vsub.s32 0, %v2768
      %v2770 = vrot.slane %v2765, %v2769
      %v2771 = vlaneseq
      %v2772 = vshrl.u32 %v2771, 7
      %v2773 = vsub.s32 1, %v2772
      %v2774 = vrot.slane %v2765, %v2773
      %v2775 = vlaneseq
      %v2776 = vshrl.u32 %v2775, 7
      %v2777 = vsub.s32 2, %v2776
      %v2778 = vrot.slane %v2765, %v2777
      %v2814 = vunpack.c.l.b16 %v2732
      %v2815 = vunpack.c.h.b16 %v2732
      %v2816 = vunpack.c.l.b16 %v2733
      %v2817 = vunpack.c.l.b16 %v2734
      %v2818 = vunpack.c.h.b16 %v2734
      %v2819 = vunpack.c.l.b16 %v2735
      %v2820 = vunpack.c.l.b16 %v2736
      %v2821 = vunpack.c.h.b16 %v2736
      %v2822 = vunpack.c.l.b16 %v2737
      %v2823 = vunpack.c.l.b16 %v2738
      %v2824 = vunpack.c.h.b16 %v2738
      %v2825 = vunpack.c.l.b16 %v2739
      %v2826 = vunpack.c.l.b16 %v2740
      %v2827 = vunpack.c.h.b16 %v2740
      %v2828 = vunpack.c.l.b16 %v2741
      %v2829 = vunpack.c.l.b16 %v2742
      %v2830 = vunpack.c.h.b16 %v2742
      %v2831 = vunpack.c.l.b16 %v2743
      %v2832 = vunpack.c.l.b16 %v2744
      %v2833 = vunpack.c.h.b16 %v2744
      %v2834 = vunpack.c.l.b16 %v2745
      %v2835 = vunpack.c.l.b16 %v2746
      %v2836 = vunpack.c.h.b16 %v2746
      %v2837 = vunpack.c.l.b16 %v2747
      %v2838 = vunpack.c.l.b16 %v2748
      %v2839 = vunpack.c.h.b16 %v2748
      %v2840 = vunpack.c.l.b16 %v2749
      %v2841 = vunpack.c.l.b16 %v2750
      %v2842 = vunpack.c.h.b16 %v2750
      %v2843 = vunpack.c.l.b16 %v2751
      %v2844 = vunpack.c.l.b16 %v2752
      %v2845 = vunpack.c.h.b16 %v2752
      %v2846 = vunpack.c.l.b16 %v2753
      %v2847 = vunpack.c.l.b16 %v2754
      %v2848 = vunpack.c.h.b16 %v2754
      %v2849 = vunpack.c.l.b16 %v2755
      %v2850 = vunpack.c.l.b16 %v2756
      %v2851 = vunpack.c.h.b16 %v2756
      %v2852 = vunpack.c.l.b16 %v2757
      %v2853 = vunpack.c.l.b16 %v2758
      %v2854 = vunpack.c.h.b16 %v2758
      %v2855 = vunpack.c.l.b16 %v2759
      %v2856 = vunpack.c.l.b16 %v2760
      %v2857 = vunpack.c.h.b16 %v2760
      %v2858 = vunpack.c.l.b16 %v2761
      %v2859 = vunpack.c.l.b16 %v2762
      %v2860 = vunpack.c.h.b16 %v2762
      %v2861 = vunpack.c.l.b16 %v2763
      %v2862 = vpack.c.b16 %v2817, %v2814
      %v2863 = vpack.c.b16 %v2818, %v2815
      %v2864 = vpack.c.b16 %v2819, %v2816
      %v2865 = vpack.c.b16 %v2823, %v2820
      %v2866 = vpack.c.b16 %v2824, %v2821
      %v2867 = vpack.c.b16 %v2825, %v2822
      %v2868 = vpack.c.b16 %v2829, %v2826
      %v2869 = vpack.c.b16 %v2830, %v2827
      %v2870 = vpack.c.b16 %v2831, %v2828
      %v2871 = vpack.c.b16 %v2835, %v2832
      %v2872 = vpack.c.b16 %v2836, %v2833
      %v2873 = vpack.c.b16 %v2837, %v2834
      %v2874 = vpack.c.b16 %v2841, %v2838
      %v2875 = vpack.c.b16 %v2842, %v2839
      %v2876 = vpack.c.b16 %v2843, %v2840
      %v2877 = vpack.c.b16 %v2847, %v2844
      %v2878 = vpack.c.b16 %v2848, %v2845
      %v2879 = vpack.c.b16 %v2849, %v2846
      %v2880 = vpack.c.b16 %v2853, %v2850
      %v2881 = vpack.c.b16 %v2854, %v2851
      %v2882 = vpack.c.b16 %v2855, %v2852
      %v2883 = vpack.c.b16 %v2859, %v2856
      %v2884 = vpack.c.b16 %v2860, %v2857
      %v2885 = vpack.c.b16 %v2861, %v2858
      %2910 = vmatprep.subr.bf16.mxu0 %v2884
      %2911 = vmatpush1.bf16.msra.mxu0 %v2883
      %2912 = vmatprep.subr.bf16.mxu0 %v2881
      %2913 = vmatpush1.bf16.msra.mxu0 %v2880
      %2914 = vmatprep.subr.bf16.mxu0 %v2878
      %2915 = vmatpush1.bf16.msra.mxu0 %v2877
      %2916 = vmatprep.subr.bf16.mxu0 %v2875
      %2917 = vmatpush1.bf16.msra.mxu0 %v2874
      %2918 = vmatprep.subr.bf16.mxu0 %v2872
      %2919 = vmatpush1.bf16.msra.mxu0 %v2871
      %2920 = vmatprep.subr.bf16.mxu0 %v2869
      %2921 = vmatpush1.bf16.msra.mxu0 %v2868
      %2922 = vmatprep.subr.bf16.mxu0 %v2866
      %2923 = vmatpush1.bf16.msra.mxu0 %v2865
      %2924 = vmatprep.subr.bf16.mxu0 %v2863
      %2925 = vmatpush1.bf16.msra.mxu0 %v2862
      %2926 = vmatprep.subr.bf16.mxu0 0
      %2927 = vmatpush2.bf16.msra.mxu0 0
      %2928 = vmatprep.subr.bf16.mxu0 0
      %2929 = vmatpush2.bf16.msra.mxu0 0
      %2930 = vmatprep.subr.bf16.mxu0 0
      %2931 = vmatpush2.bf16.msra.mxu0 0
      %2932 = vmatprep.subr.bf16.mxu0 0
      %2933 = vmatpush2.bf16.msra.mxu0 0
      %2934 = vmatprep.subr.bf16.mxu0 0
      %2935 = vmatpush2.bf16.msra.mxu0 0
      %2936 = vmatprep.subr.bf16.mxu0 0
      %2937 = vmatpush2.bf16.msra.mxu0 0
      %2938 = vmatprep.subr.bf16.mxu0 0
      %2939 = vmatpush2.bf16.msra.mxu0 0
      %2940 = vmatprep.subr.bf16.mxu0 0
      %2941 = vmatpush2.bf16.msra.mxu0 0
      %2942 = vmatprep.mubr.bf16.mxu0 0
      %2943 = vmatmul.mubr.bf16.gmra.mxu0 %v2730
      %v2944 = vpop.f32.mrf.mxu0
      %v2945 = vadd.f32 %v2770, %v2944
      %v2946 = vpop.f32.mrf.mxu0
      %v2947 = vadd.f32 %v2774, %v2946
      %v2948 = vpop.f32.mrf.mxu0
      %v2949 = vadd.f32 %v2770, %v2948
      %v2950 = vpop.f32.mrf.mxu0
      %v2951 = vadd.f32 %v2774, %v2950
      %2952 = vdwg.mxu0
      %2953 = vmatprep.subr.bf16.mxu0 0
      %2954 = vmatpush1.bf16.msra.mxu0 %v2885
      %2955 = vmatprep.subr.bf16.mxu0 0
      %2956 = vmatpush1.bf16.msra.mxu0 %v2882
      %2957 = vmatprep.subr.bf16.mxu0 0
      %2958 = vmatpush1.bf16.msra.mxu0 %v2879
      %2959 = vmatprep.subr.bf16.mxu0 0
      %2960 = vmatpush1.bf16.msra.mxu0 %v2876
      %2961 = vmatprep.subr.bf16.mxu0 0
      %2962 = vmatpush1.bf16.msra.mxu0 %v2873
      %2963 = vmatprep.subr.bf16.mxu0 0
      %2964 = vmatpush1.bf16.msra.mxu0 %v2870
      %2965 = vmatprep.subr.bf16.mxu0 0
      %2966 = vmatpush1.bf16.msra.mxu0 %v2867
      %2967 = vmatprep.subr.bf16.mxu0 0
      %2968 = vmatpush1.bf16.msra.mxu0 %v2864
      %2969 = vmatprep.subr.bf16.mxu0 0
      %2970 = vmatpush2.bf16.msra.mxu0 0
      %2971 = vmatprep.subr.bf16.mxu0 0
      %2972 = vmatpush2.bf16.msra.mxu0 0
      %2973 = vmatprep.subr.bf16.mxu0 0
      %2974 = vmatpush2.bf16.msra.mxu0 0
      %2975 = vmatprep.subr.bf16.mxu0 0
      %2976 = vmatpush2.bf16.msra.mxu0 0
      %2977 = vmatprep.subr.bf16.mxu0 0
      %2978 = vmatpush2.bf16.msra.mxu0 0
      %2979 = vmatprep.subr.bf16.mxu0 0
      %2980 = vmatpush2.bf16.msra.mxu0 0
      %2981 = vmatprep.subr.bf16.mxu0 0
      %2982 = vmatpush2.bf16.msra.mxu0 0
      %2983 = vmatprep.subr.bf16.mxu0 0
      %2984 = vmatpush2.bf16.msra.mxu0 0
      %2985 = vmatprep.mubr.bf16.mxu0 0
      %2986 = vmatmul.mubr.bf16.gmra.mxu0 %v2730
      %v2987 = vpop.f32.mrf.mxu0
      %v2988 = vadd.f32 %v2778, %v2987
      %v2989 = vpop.f32.mrf.mxu0
      %v2990 = vpop.f32.mrf.mxu0
      %v2991 = vadd.f32 %v2778, %v2990
      %v2992 = vpop.f32.mrf.mxu0
      %2993 = vdwg.mxu0
      %v2994 = vpack.c.bf16 %v2949, %v2945
      %v2995 = vpack.c.bf16 %v2951, %v2947
      %v2996 = vpack.c.bf16 %v2991, %v2988
      %v2998 = vsel %vm752, %v2994, 0
      %v3001 = vsel %vm752, %v2995, 0
      %3003 = vmatprep.subr.bf16.mxu0 0
      %3004 = vmatpush1.bf16.xpose.msra.mxu0 0
      %3005 = vmatprep.subr.bf16.mxu0 0
      %3006 = vmatpush1.bf16.xpose.msra.mxu0 0
      %3007 = vmatprep.subr.bf16.mxu0 0
      %3008 = vmatpush1.bf16.xpose.msra.mxu0 0
      %3009 = vmatprep.subr.bf16.mxu0 0
      %3010 = vmatpush1.bf16.xpose.msra.mxu0 0
      %3011 = vmatprep.subr.bf16.mxu0 0
      %3012 = vmatpush1.bf16.xpose.msra.mxu0 0
      %3013 = vmatprep.subr.bf16.mxu0 0
      %3014 = vmatpush1.bf16.xpose.msra.mxu0 0
      %3015 = vmatprep.subr.bf16.mxu0 0
      %3016 = vmatpush1.bf16.xpose.msra.mxu0 0
      %3017 = vmatprep.subr.bf16.mxu0 0
      %3018 = vmatpush1.bf16.xpose.msra.mxu0 %v3001
      %3019 = vmatprep.subr.bf16.mxu0 0
      %3020 = vmatpush2.bf16.xpose.msra.mxu0 0
      %3021 = vmatprep.subr.bf16.mxu0 0
      %3022 = vmatpush2.bf16.xpose.msra.mxu0 0
      %3023 = vmatprep.subr.bf16.mxu0 0
      %3024 = vmatpush2.bf16.xpose.msra.mxu0 0
      %3025 = vmatprep.subr.bf16.mxu0 0
      %3026 = vmatpush2.bf16.xpose.msra.mxu0 0
      %3027 = vmatprep.subr.bf16.mxu0 0
      %3028 = vmatpush2.bf16.xpose.msra.mxu0 0
      %3029 = vmatprep.subr.bf16.mxu0 0
      %3030 = vmatpush2.bf16.xpose.msra.mxu0 0
      %3031 = vmatprep.subr.bf16.mxu0 0
      %3032 = vmatpush2.bf16.xpose.msra.mxu0 0
      %3033 = vmatprep.subr.bf16.mxu0 0
      %3034 = vmatpush2.bf16.xpose.msra.mxu0 0
      %3035 = vmatprep.mubr.bf16.mxu0 0
      %3036 = vmatmul.mubr.bf16.gmra.mxu0 %v2998
      %v3037 = vpop.f32.mrf.mxu0
      %v3038 = vadd.f32 0.0, %v3037
      %v3039 = vpop.f32.mrf.mxu0
      %v3040 = vpop.f32.mrf.mxu0
      %v3041 = vadd.f32 0.0, %v3040
      %v3042 = vpop.f32.mrf.mxu0
      %3043 = vdwg.mxu0
      %v3044 = vmul.f32 %v3038, 0.25
      %v3045 = vmul.f32 %v3041, 0.25
      %v3046 = vsel %vm752, %v3044, -inf
      %3047 = vmax.xlane.f32.xlu0 %v3046
      %v3048 = vpop.xlane.xlu0 %3047
      %v3049 = vsel %vm752, %v3045, -inf
      %3050 = vmax.xlane.f32.xlu0 %v3049
      %v3051 = vpop.xlane.xlu0 %3050
      %v3052 = vsub.f32 %v3044, %v3048
      %v3053 = vsub.f32 %v3045, %v3051
      %v3054 = vmul.f32 %v3052, 1.442695
      %v3055 = vpow.pop %v3054
      %v3056 = vmul.f32 %v3053, 1.442695
      %v3057 = vpow.pop %v3056
      %v3058 = vsel %vm752, %v3055, 0.0
      %3059 = vadd.xlane.f32.xlu0 %v3058
      %v3060 = vpop.xlane.xlu0 %3059
      %v3061 = vsel %vm752, %v3057, 0.0
      %3062 = vadd.xlane.f32.xlu0 %v3061
      %v3063 = vpop.xlane.xlu0 %3062
      %v3064 = vrcp.pop %v3060
      %v3065 = vrcp.pop %v3063
      %v3066 = vmul.f32 %v3055, %v3064
      %v3067 = vmul.f32 %v3057, %v3065
      %v3068 = vpack.c.bf16 %v3067, %v3066
      %v3070 = vsel %vm752, %v3068, 0
      %3072 = vmatprep.subr.bf16.mxu0 0
      %3073 = vmatpush1.bf16.msra.mxu0 0
      %3074 = vmatprep.subr.bf16.mxu0 0
      %3075 = vmatpush1.bf16.msra.mxu0 0
      %3076 = vmatprep.subr.bf16.mxu0 0
      %3077 = vmatpush1.bf16.msra.mxu0 0
      %3078 = vmatprep.subr.bf16.mxu0 0
      %3079 = vmatpush1.bf16.msra.mxu0 0
      %3080 = vmatprep.subr.bf16.mxu0 0
      %3081 = vmatpush1.bf16.msra.mxu0 0
      %3082 = vmatprep.subr.bf16.mxu0 0
      %3083 = vmatpush1.bf16.msra.mxu0 0
      %3084 = vmatprep.subr.bf16.mxu0 0
      %3085 = vmatpush1.bf16.msra.mxu0 0
      %3086 = vmatprep.subr.bf16.mxu0 0
      %3087 = vmatpush1.bf16.msra.mxu0 %v2996
      %3088 = vmatprep.subr.bf16.mxu0 0
      %3089 = vmatpush2.bf16.msra.mxu0 0
      %3090 = vmatprep.subr.bf16.mxu0 0
      %3091 = vmatpush2.bf16.msra.mxu0 0
      %3092 = vmatprep.subr.bf16.mxu0 0
      %3093 = vmatpush2.bf16.msra.mxu0 0
      %3094 = vmatprep.subr.bf16.mxu0 0
      %3095 = vmatpush2.bf16.msra.mxu0 0
      %3096 = vmatprep.subr.bf16.mxu0 0
      %3097 = vmatpush2.bf16.msra.mxu0 0
      %3098 = vmatprep.subr.bf16.mxu0 0
      %3099 = vmatpush2.bf16.msra.mxu0 0
      %3100 = vmatprep.subr.bf16.mxu0 0
      %3101 = vmatpush2.bf16.msra.mxu0 0
      %3102 = vmatprep.subr.bf16.mxu0 0
      %3103 = vmatpush2.bf16.msra.mxu0 0
      %3104 = vmatprep.mubr.bf16.mxu0 0
      %3105 = vmatmul.mubr.bf16.gmra.mxu0 %v3070
      %v3106 = vpop.f32.mrf.mxu0
      %v3107 = vadd.f32 0.0, %v3106
      %v3108 = vpop.f32.mrf.mxu0
      %v3109 = vpop.f32.mrf.mxu0
      %v3110 = vadd.f32 0.0, %v3109
      %v3111 = vpop.f32.mrf.mxu0
      %3112 = vdwg.mxu0
      %3114 = vrot.lane.b32.xlu0 %v2994, 112
      %v3115 = vpop.permute.xlu0 %3114
      %3117 = vrot.lane.b32.xlu0 %v2995, 112
      %v3118 = vpop.permute.xlu0 %3117
      %v3120 = vsel %vm752, %v3115, 0
      %v3123 = vsel %vm752, %v3118, 0
      %3125 = vmatprep.subr.bf16.mxu0 0
      %3126 = vmatpush1.bf16.xpose.msra.mxu0 0
      %3127 = vmatprep.subr.bf16.mxu0 0
      %3128 = vmatpush1.bf16.xpose.msra.mxu0 0
      %3129 = vmatprep.subr.bf16.mxu0 0
      %3130 = vmatpush1.bf16.xpose.msra.mxu0 0
      %3131 = vmatprep.subr.bf16.mxu0 0
      %3132 = vmatpush1.bf16.xpose.msra.mxu0 0
      %3133 = vmatprep.subr.bf16.mxu0 0
      %3134 = vmatpush1.bf16.xpose.msra.mxu0 0
      %3135 = vmatprep.subr.bf16.mxu0 0
      %3136 = vmatpush1.bf16.xpose.msra.mxu0 0
      %3137 = vmatprep.subr.bf16.mxu0 0
      %3138 = vmatpush1.bf16.xpose.msra.mxu0 0
      %3139 = vmatprep.subr.bf16.mxu0 0
      %3140 = vmatpush1.bf16.xpose.msra.mxu0 %v3123
      %3141 = vmatprep.subr.bf16.mxu0 0
      %3142 = vmatpush2.bf16.xpose.msra.mxu0 0
      %3143 = vmatprep.subr.bf16.mxu0 0
      %3144 = vmatpush2.bf16.xpose.msra.mxu0 0
      %3145 = vmatprep.subr.bf16.mxu0 0
      %3146 = vmatpush2.bf16.xpose.msra.mxu0 0
      %3147 = vmatprep.subr.bf16.mxu0 0
      %3148 = vmatpush2.bf16.xpose.msra.mxu0 0
      %3149 = vmatprep.subr.bf16.mxu0 0
      %3150 = vmatpush2.bf16.xpose.msra.mxu0 0
      %3151 = vmatprep.subr.bf16.mxu0 0
      %3152 = vmatpush2.bf16.xpose.msra.mxu0 0
      %3153 = vmatprep.subr.bf16.mxu0 0
      %3154 = vmatpush2.bf16.xpose.msra.mxu0 0
      %3155 = vmatprep.subr.bf16.mxu0 0
      %3156 = vmatpush2.bf16.xpose.msra.mxu0 0
      %3157 = vmatprep.mubr.bf16.mxu0 0
      %3158 = vmatmul.mubr.bf16.gmra.mxu0 %v3120
      %v3159 = vpop.f32.mrf.mxu0
      %v3160 = vadd.f32 0.0, %v3159
      %v3161 = vpop.f32.mrf.mxu0
      %v3162 = vpop.f32.mrf.mxu0
      %v3163 = vadd.f32 0.0, %v3162
      %v3164 = vpop.f32.mrf.mxu0
      %3165 = vdwg.mxu0
      %v3166 = vmul.f32 %v3160, 0.25
      %v3167 = vmul.f32 %v3163, 0.25
      %v3168 = vsel %vm752, %v3166, -inf
      %3169 = vmax.xlane.f32.xlu0 %v3168
      %v3170 = vpop.xlane.xlu0 %3169
      %v3171 = vsel %vm752, %v3167, -inf
      %3172 = vmax.xlane.f32.xlu0 %v3171
      %v3173 = vpop.xlane.xlu0 %3172
      %v3174 = vsub.f32 %v3166, %v3170
      %v3175 = vsub.f32 %v3167, %v3173
      %v3176 = vmul.f32 %v3174, 1.442695
      %v3177 = vpow.pop %v3176
      %v3178 = vmul.f32 %v3175, 1.442695
      %v3179 = vpow.pop %v3178
      %v3180 = vsel %vm752, %v3177, 0.0
      %3181 = vadd.xlane.f32.xlu0 %v3180
      %v3182 = vpop.xlane.xlu0 %3181
      %v3183 = vsel %vm752, %v3179, 0.0
      %3184 = vadd.xlane.f32.xlu0 %v3183
      %v3185 = vpop.xlane.xlu0 %3184
      %v3186 = vrcp.pop %v3182
      %v3187 = vrcp.pop %v3185
      %v3188 = vmul.f32 %v3177, %v3186
      %v3189 = vmul.f32 %v3179, %v3187
      %v3190 = vpack.c.bf16 %v3189, %v3188
      %3192 = vrot.lane.b32.xlu0 %v2996, 112
      %v3193 = vpop.permute.xlu0 %3192
      %v3196 = vsel %vm752, %v3190, 0
      %3198 = vmatprep.subr.bf16.mxu0 0
      %3199 = vmatpush1.bf16.msra.mxu0 0
      %3200 = vmatprep.subr.bf16.mxu0 0
      %3201 = vmatpush1.bf16.msra.mxu0 0
      %3202 = vmatprep.subr.bf16.mxu0 0
      %3203 = vmatpush1.bf16.msra.mxu0 0
      %3204 = vmatprep.subr.bf16.mxu0 0
      %3205 = vmatpush1.bf16.msra.mxu0 0
      %3206 = vmatprep.subr.bf16.mxu0 0
      %3207 = vmatpush1.bf16.msra.mxu0 0
      %3208 = vmatprep.subr.bf16.mxu0 0
      %3209 = vmatpush1.bf16.msra.mxu0 0
      %3210 = vmatprep.subr.bf16.mxu0 0
      %3211 = vmatpush1.bf16.msra.mxu0 0
      %3212 = vmatprep.subr.bf16.mxu0 0
      %3213 = vmatpush1.bf16.msra.mxu0 %v3193
      %3214 = vmatprep.subr.bf16.mxu0 0
      %3215 = vmatpush2.bf16.msra.mxu0 0
      %3216 = vmatprep.subr.bf16.mxu0 0
      %3217 = vmatpush2.bf16.msra.mxu0 0
      %3218 = vmatprep.subr.bf16.mxu0 0
      %3219 = vmatpush2.bf16.msra.mxu0 0
      %3220 = vmatprep.subr.bf16.mxu0 0
      %3221 = vmatpush2.bf16.msra.mxu0 0
      %3222 = vmatprep.subr.bf16.mxu0 0
      %3223 = vmatpush2.bf16.msra.mxu0 0
      %3224 = vmatprep.subr.bf16.mxu0 0
      %3225 = vmatpush2.bf16.msra.mxu0 0
      %3226 = vmatprep.subr.bf16.mxu0 0
      %3227 = vmatpush2.bf16.msra.mxu0 0
      %3228 = vmatprep.subr.bf16.mxu0 0
      %3229 = vmatpush2.bf16.msra.mxu0 0
      %3230 = vmatprep.mubr.bf16.mxu0 0
      %3231 = vmatmul.mubr.bf16.gmra.mxu0 %v3196
      %v3232 = vpop.f32.mrf.mxu0
      %v3233 = vadd.f32 0.0, %v3232
      %v3234 = vpop.f32.mrf.mxu0
      %v3235 = vpop.f32.mrf.mxu0
      %v3236 = vadd.f32 0.0, %v3235
      %v3237 = vpop.f32.mrf.mxu0
      %3238 = vdwg.mxu0
      %3239 = vrot.lane.b32.xlu0 %v2994, 96
      %v3240 = vpop.permute.xlu0 %3239
      %3241 = vrot.lane.b32.xlu0 %v2995, 96
      %v3242 = vpop.permute.xlu0 %3241
      %v3244 = vsel %vm752, %v3240, 0
      %v3247 = vsel %vm752, %v3242, 0
      %3249 = vmatprep.subr.bf16.mxu0 0
      %3250 = vmatpush1.bf16.xpose.msra.mxu0 0
      %3251 = vmatprep.subr.bf16.mxu0 0
      %3252 = vmatpush1.bf16.xpose.msra.mxu0 0
      %3253 = vmatprep.subr.bf16.mxu0 0
      %3254 = vmatpush1.bf16.xpose.msra.mxu0 0
      %3255 = vmatprep.subr.bf16.mxu0 0
      %3256 = vmatpush1.bf16.xpose.msra.mxu0 0
      %3257 = vmatprep.subr.bf16.mxu0 0
      %3258 = vmatpush1.bf16.xpose.msra.mxu0 0
      %3259 = vmatprep.subr.bf16.mxu0 0
      %3260 = vmatpush1.bf16.xpose.msra.mxu0 0
      %3261 = vmatprep.subr.bf16.mxu0 0
      %3262 = vmatpush1.bf16.xpose.msra.mxu0 0
      %3263 = vmatprep.subr.bf16.mxu0 0
      %3264 = vmatpush1.bf16.xpose.msra.mxu0 %v3247
      %3265 = vmatprep.subr.bf16.mxu0 0
      %3266 = vmatpush2.bf16.xpose.msra.mxu0 0
      %3267 = vmatprep.subr.bf16.mxu0 0
      %3268 = vmatpush2.bf16.xpose.msra.mxu0 0
      %3269 = vmatprep.subr.bf16.mxu0 0
      %3270 = vmatpush2.bf16.xpose.msra.mxu0 0
      %3271 = vmatprep.subr.bf16.mxu0 0
      %3272 = vmatpush2.bf16.xpose.msra.mxu0 0
      %3273 = vmatprep.subr.bf16.mxu0 0
      %3274 = vmatpush2.bf16.xpose.msra.mxu0 0
      %3275 = vmatprep.subr.bf16.mxu0 0
      %3276 = vmatpush2.bf16.xpose.msra.mxu0 0
      %3277 = vmatprep.subr.bf16.mxu0 0
      %3278 = vmatpush2.bf16.xpose.msra.mxu0 0
      %3279 = vmatprep.subr.bf16.mxu0 0
      %3280 = vmatpush2.bf16.xpose.msra.mxu0 0
      %3281 = vmatprep.mubr.bf16.mxu0 0
      %3282 = vmatmul.mubr.bf16.gmra.mxu0 %v3244
      %v3283 = vpop.f32.mrf.mxu0
      %v3284 = vadd.f32 0.0, %v3283
      %v3285 = vpop.f32.mrf.mxu0
      %v3286 = vpop.f32.mrf.mxu0
      %v3287 = vadd.f32 0.0, %v3286
      %v3288 = vpop.f32.mrf.mxu0
      %3289 = vdwg.mxu0
      %v3290 = vmul.f32 %v3284, 0.25
      %v3291 = vmul.f32 %v3287, 0.25
      %v3292 = vsel %vm752, %v3290, -inf
      %3293 = vmax.xlane.f32.xlu0 %v3292
      %v3294 = vpop.xlane.xlu0 %3293
      %v3295 = vsel %vm752, %v3291, -inf
      %3296 = vmax.xlane.f32.xlu0 %v3295
      %v3297 = vpop.xlane.xlu0 %3296
      %v3298 = vsub.f32 %v3290, %v3294
      %v3299 = vsub.f32 %v3291, %v3297
      %v3300 = vmul.f32 %v3298, 1.442695
      %v3301 = vpow.pop %v3300
      %v3302 = vmul.f32 %v3299, 1.442695
      %v3303 = vpow.pop %v3302
      %v3304 = vsel %vm752, %v3301, 0.0
      %3305 = vadd.xlane.f32.xlu0 %v3304
      %v3306 = vpop.xlane.xlu0 %3305
      %v3307 = vsel %vm752, %v3303, 0.0
      %3308 = vadd.xlane.f32.xlu0 %v3307
      %v3309 = vpop.xlane.xlu0 %3308
      %v3310 = vrcp.pop %v3306
      %v3311 = vrcp.pop %v3309
      %v3312 = vmul.f32 %v3301, %v3310
      %v3313 = vmul.f32 %v3303, %v3311
      %v3314 = vpack.c.bf16 %v3313, %v3312
      %3315 = vrot.lane.b32.xlu0 %v2996, 96
      %v3316 = vpop.permute.xlu0 %3315
      %v3319 = vsel %vm752, %v3314, 0
      %3321 = vmatprep.subr.bf16.mxu0 0
      %3322 = vmatpush1.bf16.msra.mxu0 0
      %3323 = vmatprep.subr.bf16.mxu0 0
      %3324 = vmatpush1.bf16.msra.mxu0 0
      %3325 = vmatprep.subr.bf16.mxu0 0
      %3326 = vmatpush1.bf16.msra.mxu0 0
      %3327 = vmatprep.subr.bf16.mxu0 0
      %3328 = vmatpush1.bf16.msra.mxu0 0
      %3329 = vmatprep.subr.bf16.mxu0 0
      %3330 = vmatpush1.bf16.msra.mxu0 0
      %3331 = vmatprep.subr.bf16.mxu0 0
      %3332 = vmatpush1.bf16.msra.mxu0 0
      %3333 = vmatprep.subr.bf16.mxu0 0
      %3334 = vmatpush1.bf16.msra.mxu0 0
      %3335 = vmatprep.subr.bf16.mxu0 0
      %3336 = vmatpush1.bf16.msra.mxu0 %v3316
      %3337 = vmatprep.subr.bf16.mxu0 0
      %3338 = vmatpush2.bf16.msra.mxu0 0
      %3339 = vmatprep.subr.bf16.mxu0 0
      %3340 = vmatpush2.bf16.msra.mxu0 0
      %3341 = vmatprep.subr.bf16.mxu0 0
      %3342 = vmatpush2.bf16.msra.mxu0 0
      %3343 = vmatprep.subr.bf16.mxu0 0
      %3344 = vmatpush2.bf16.msra.mxu0 0
      %3345 = vmatprep.subr.bf16.mxu0 0
      %3346 = vmatpush2.bf16.msra.mxu0 0
      %3347 = vmatprep.subr.bf16.mxu0 0
      %3348 = vmatpush2.bf16.msra.mxu0 0
      %3349 = vmatprep.subr.bf16.mxu0 0
      %3350 = vmatpush2.bf16.msra.mxu0 0
      %3351 = vmatprep.subr.bf16.mxu0 0
      %3352 = vmatpush2.bf16.msra.mxu0 0
      %3353 = vmatprep.mubr.bf16.mxu0 0
      %3354 = vmatmul.mubr.bf16.gmra.mxu0 %v3319
      %v3355 = vpop.f32.mrf.mxu0
      %v3356 = vadd.f32 0.0, %v3355
      %v3357 = vpop.f32.mrf.mxu0
      %v3358 = vpop.f32.mrf.mxu0
      %v3359 = vadd.f32 0.0, %v3358
      %v3360 = vpop.f32.mrf.mxu0
      %3361 = vdwg.mxu0
      %3362 = vrot.lane.b32.xlu0 %v2994, 80
      %v3363 = vpop.permute.xlu0 %3362
      %3364 = vrot.lane.b32.xlu0 %v2995, 80
      %v3365 = vpop.permute.xlu0 %3364
      %v3367 = vsel %vm752, %v3363, 0
      %v3370 = vsel %vm752, %v3365, 0
      %3372 = vmatprep.subr.bf16.mxu0 0
      %3373 = vmatpush1.bf16.xpose.msra.mxu0 0
      %3374 = vmatprep.subr.bf16.mxu0 0
      %3375 = vmatpush1.bf16.xpose.msra.mxu0 0
      %3376 = vmatprep.subr.bf16.mxu0 0
      %3377 = vmatpush1.bf16.xpose.msra.mxu0 0
      %3378 = vmatprep.subr.bf16.mxu0 0
      %3379 = vmatpush1.bf16.xpose.msra.mxu0 0
      %3380 = vmatprep.subr.bf16.mxu0 0
      %3381 = vmatpush1.bf16.xpose.msra.mxu0 0
      %3382 = vmatprep.subr.bf16.mxu0 0
      %3383 = vmatpush1.bf16.xpose.msra.mxu0 0
      %3384 = vmatprep.subr.bf16.mxu0 0
      %3385 = vmatpush1.bf16.xpose.msra.mxu0 0
      %3386 = vmatprep.subr.bf16.mxu0 0
      %3387 = vmatpush1.bf16.xpose.msra.mxu0 %v3370
      %3388 = vmatprep.subr.bf16.mxu0 0
      %3389 = vmatpush2.bf16.xpose.msra.mxu0 0
      %3390 = vmatprep.subr.bf16.mxu0 0
      %3391 = vmatpush2.bf16.xpose.msra.mxu0 0
      %3392 = vmatprep.subr.bf16.mxu0 0
      %3393 = vmatpush2.bf16.xpose.msra.mxu0 0
      %3394 = vmatprep.subr.bf16.mxu0 0
      %3395 = vmatpush2.bf16.xpose.msra.mxu0 0
      %3396 = vmatprep.subr.bf16.mxu0 0
      %3397 = vmatpush2.bf16.xpose.msra.mxu0 0
      %3398 = vmatprep.subr.bf16.mxu0 0
      %3399 = vmatpush2.bf16.xpose.msra.mxu0 0
      %3400 = vmatprep.subr.bf16.mxu0 0
      %3401 = vmatpush2.bf16.xpose.msra.mxu0 0
      %3402 = vmatprep.subr.bf16.mxu0 0
      %3403 = vmatpush2.bf16.xpose.msra.mxu0 0
      %3404 = vmatprep.mubr.bf16.mxu0 0
      %3405 = vmatmul.mubr.bf16.gmra.mxu0 %v3367
      %v3406 = vpop.f32.mrf.mxu0
      %v3407 = vadd.f32 0.0, %v3406
      %v3408 = vpop.f32.mrf.mxu0
      %v3409 = vpop.f32.mrf.mxu0
      %v3410 = vadd.f32 0.0, %v3409
      %v3411 = vpop.f32.mrf.mxu0
      %3412 = vdwg.mxu0
      %v3413 = vmul.f32 %v3407, 0.25
      %v3414 = vmul.f32 %v3410, 0.25
      %v3415 = vsel %vm752, %v3413, -inf
      %3416 = vmax.xlane.f32.xlu0 %v3415
      %v3417 = vpop.xlane.xlu0 %3416
      %v3418 = vsel %vm752, %v3414, -inf
      %3419 = vmax.xlane.f32.xlu0 %v3418
      %v3420 = vpop.xlane.xlu0 %3419
      %v3421 = vsub.f32 %v3413, %v3417
      %v3422 = vsub.f32 %v3414, %v3420
      %v3423 = vmul.f32 %v3421, 1.442695
      %v3424 = vpow.pop %v3423
      %v3425 = vmul.f32 %v3422, 1.442695
      %v3426 = vpow.pop %v3425
      %v3427 = vsel %vm752, %v3424, 0.0
      %3428 = vadd.xlane.f32.xlu0 %v3427
      %v3429 = vpop.xlane.xlu0 %3428
      %v3430 = vsel %vm752, %v3426, 0.0
      %3431 = vadd.xlane.f32.xlu0 %v3430
      %v3432 = vpop.xlane.xlu0 %3431
      %v3433 = vrcp.pop %v3429
      %v3434 = vrcp.pop %v3432
      %v3435 = vmul.f32 %v3424, %v3433
      %v3436 = vmul.f32 %v3426, %v3434
      %v3437 = vpack.c.bf16 %v3436, %v3435
      %3438 = vrot.lane.b32.xlu0 %v2996, 80
      %v3439 = vpop.permute.xlu0 %3438
      %v3442 = vsel %vm752, %v3437, 0
      %3444 = vmatprep.subr.bf16.mxu0 0
      %3445 = vmatpush1.bf16.msra.mxu0 0
      %3446 = vmatprep.subr.bf16.mxu0 0
      %3447 = vmatpush1.bf16.msra.mxu0 0
      %3448 = vmatprep.subr.bf16.mxu0 0
      %3449 = vmatpush1.bf16.msra.mxu0 0
      %3450 = vmatprep.subr.bf16.mxu0 0
      %3451 = vmatpush1.bf16.msra.mxu0 0
      %3452 = vmatprep.subr.bf16.mxu0 0
      %3453 = vmatpush1.bf16.msra.mxu0 0
      %3454 = vmatprep.subr.bf16.mxu0 0
      %3455 = vmatpush1.bf16.msra.mxu0 0
      %3456 = vmatprep.subr.bf16.mxu0 0
      %3457 = vmatpush1.bf16.msra.mxu0 0
      %3458 = vmatprep.subr.bf16.mxu0 0
      %3459 = vmatpush1.bf16.msra.mxu0 %v3439
      %3460 = vmatprep.subr.bf16.mxu0 0
      %3461 = vmatpush2.bf16.msra.mxu0 0
      %3462 = vmatprep.subr.bf16.mxu0 0
      %3463 = vmatpush2.bf16.msra.mxu0 0
      %3464 = vmatprep.subr.bf16.mxu0 0
      %3465 = vmatpush2.bf16.msra.mxu0 0
      %3466 = vmatprep.subr.bf16.mxu0 0
      %3467 = vmatpush2.bf16.msra.mxu0 0
      %3468 = vmatprep.subr.bf16.mxu0 0
      %3469 = vmatpush2.bf16.msra.mxu0 0
      %3470 = vmatprep.subr.bf16.mxu0 0
      %3471 = vmatpush2.bf16.msra.mxu0 0
      %3472 = vmatprep.subr.bf16.mxu0 0
      %3473 = vmatpush2.bf16.msra.mxu0 0
      %3474 = vmatprep.subr.bf16.mxu0 0
      %3475 = vmatpush2.bf16.msra.mxu0 0
      %3476 = vmatprep.mubr.bf16.mxu0 0
      %3477 = vmatmul.mubr.bf16.gmra.mxu0 %v3442
      %v3478 = vpop.f32.mrf.mxu0
      %v3479 = vadd.f32 0.0, %v3478
      %v3480 = vpop.f32.mrf.mxu0
      %v3481 = vpop.f32.mrf.mxu0
      %v3482 = vadd.f32 0.0, %v3481
      %v3483 = vpop.f32.mrf.mxu0
      %3484 = vdwg.mxu0
      %3485 = vrot.lane.b32.xlu0 %v2994, 64
      %v3486 = vpop.permute.xlu0 %3485
      %3487 = vrot.lane.b32.xlu0 %v2995, 64
      %v3488 = vpop.permute.xlu0 %3487
      %v3490 = vsel %vm752, %v3486, 0
      %v3493 = vsel %vm752, %v3488, 0
      %3495 = vmatprep.subr.bf16.mxu0 0
      %3496 = vmatpush1.bf16.xpose.msra.mxu0 0
      %3497 = vmatprep.subr.bf16.mxu0 0
      %3498 = vmatpush1.bf16.xpose.msra.mxu0 0
      %3499 = vmatprep.subr.bf16.mxu0 0
      %3500 = vmatpush1.bf16.xpose.msra.mxu0 0
      %3501 = vmatprep.subr.bf16.mxu0 0
      %3502 = vmatpush1.bf16.xpose.msra.mxu0 0
      %3503 = vmatprep.subr.bf16.mxu0 0
      %3504 = vmatpush1.bf16.xpose.msra.mxu0 0
      %3505 = vmatprep.subr.bf16.mxu0 0
      %3506 = vmatpush1.bf16.xpose.msra.mxu0 0
      %3507 = vmatprep.subr.bf16.mxu0 0
      %3508 = vmatpush1.bf16.xpose.msra.mxu0 0
      %3509 = vmatprep.subr.bf16.mxu0 0
      %3510 = vmatpush1.bf16.xpose.msra.mxu0 %v3493
      %3511 = vmatprep.subr.bf16.mxu0 0
      %3512 = vmatpush2.bf16.xpose.msra.mxu0 0
      %3513 = vmatprep.subr.bf16.mxu0 0
      %3514 = vmatpush2.bf16.xpose.msra.mxu0 0
      %3515 = vmatprep.subr.bf16.mxu0 0
      %3516 = vmatpush2.bf16.xpose.msra.mxu0 0
      %3517 = vmatprep.subr.bf16.mxu0 0
      %3518 = vmatpush2.bf16.xpose.msra.mxu0 0
      %3519 = vmatprep.subr.bf16.mxu0 0
      %3520 = vmatpush2.bf16.xpose.msra.mxu0 0
      %3521 = vmatprep.subr.bf16.mxu0 0
      %3522 = vmatpush2.bf16.xpose.msra.mxu0 0
      %3523 = vmatprep.subr.bf16.mxu0 0
      %3524 = vmatpush2.bf16.xpose.msra.mxu0 0
      %3525 = vmatprep.subr.bf16.mxu0 0
      %3526 = vmatpush2.bf16.xpose.msra.mxu0 0
      %3527 = vmatprep.mubr.bf16.mxu0 0
      %3528 = vmatmul.mubr.bf16.gmra.mxu0 %v3490
      %v3529 = vpop.f32.mrf.mxu0
      %v3530 = vadd.f32 0.0, %v3529
      %v3531 = vpop.f32.mrf.mxu0
      %v3532 = vpop.f32.mrf.mxu0
      %v3533 = vadd.f32 0.0, %v3532
      %v3534 = vpop.f32.mrf.mxu0
      %3535 = vdwg.mxu0
      %v3536 = vmul.f32 %v3530, 0.25
      %v3537 = vmul.f32 %v3533, 0.25
      %v3538 = vsel %vm752, %v3536, -inf
      %3539 = vmax.xlane.f32.xlu0 %v3538
      %v3540 = vpop.xlane.xlu0 %3539
      %v3541 = vsel %vm752, %v3537, -inf
      %3542 = vmax.xlane.f32.xlu0 %v3541
      %v3543 = vpop.xlane.xlu0 %3542
      %v3544 = vsub.f32 %v3536, %v3540
      %v3545 = vsub.f32 %v3537, %v3543
      %v3546 = vmul.f32 %v3544, 1.442695
      %v3547 = vpow.pop %v3546
      %v3548 = vmul.f32 %v3545, 1.442695
      %v3549 = vpow.pop %v3548
      %v3550 = vsel %vm752, %v3547, 0.0
      %3551 = vadd.xlane.f32.xlu0 %v3550
      %v3552 = vpop.xlane.xlu0 %3551
      %v3553 = vsel %vm752, %v3549, 0.0
      %3554 = vadd.xlane.f32.xlu0 %v3553
      %v3555 = vpop.xlane.xlu0 %3554
      %v3556 = vrcp.pop %v3552
      %v3557 = vrcp.pop %v3555
      %v3558 = vmul.f32 %v3547, %v3556
      %v3559 = vmul.f32 %v3549, %v3557
      %v3560 = vpack.c.bf16 %v3559, %v3558
      %3561 = vrot.lane.b32.xlu0 %v2996, 64
      %v3562 = vpop.permute.xlu0 %3561
      %v3565 = vsel %vm752, %v3560, 0
      %3567 = vmatprep.subr.bf16.mxu0 0
      %3568 = vmatpush1.bf16.msra.mxu0 0
      %3569 = vmatprep.subr.bf16.mxu0 0
      %3570 = vmatpush1.bf16.msra.mxu0 0
      %3571 = vmatprep.subr.bf16.mxu0 0
      %3572 = vmatpush1.bf16.msra.mxu0 0
      %3573 = vmatprep.subr.bf16.mxu0 0
      %3574 = vmatpush1.bf16.msra.mxu0 0
      %3575 = vmatprep.subr.bf16.mxu0 0
      %3576 = vmatpush1.bf16.msra.mxu0 0
      %3577 = vmatprep.subr.bf16.mxu0 0
      %3578 = vmatpush1.bf16.msra.mxu0 0
      %3579 = vmatprep.subr.bf16.mxu0 0
      %3580 = vmatpush1.bf16.msra.mxu0 0
      %3581 = vmatprep.subr.bf16.mxu0 0
      %3582 = vmatpush1.bf16.msra.mxu0 %v3562
      %3583 = vmatprep.subr.bf16.mxu0 0
      %3584 = vmatpush2.bf16.msra.mxu0 0
      %3585 = vmatprep.subr.bf16.mxu0 0
      %3586 = vmatpush2.bf16.msra.mxu0 0
      %3587 = vmatprep.subr.bf16.mxu0 0
      %3588 = vmatpush2.bf16.msra.mxu0 0
      %3589 = vmatprep.subr.bf16.mxu0 0
      %3590 = vmatpush2.bf16.msra.mxu0 0
      %3591 = vmatprep.subr.bf16.mxu0 0
      %3592 = vmatpush2.bf16.msra.mxu0 0
      %3593 = vmatprep.subr.bf16.mxu0 0
      %3594 = vmatpush2.bf16.msra.mxu0 0
      %3595 = vmatprep.subr.bf16.mxu0 0
      %3596 = vmatpush2.bf16.msra.mxu0 0
      %3597 = vmatprep.subr.bf16.mxu0 0
      %3598 = vmatpush2.bf16.msra.mxu0 0
      %3599 = vmatprep.mubr.bf16.mxu0 0
      %3600 = vmatmul.mubr.bf16.gmra.mxu0 %v3565
      %v3601 = vpop.f32.mrf.mxu0
      %v3602 = vadd.f32 0.0, %v3601
      %v3603 = vpop.f32.mrf.mxu0
      %v3604 = vpop.f32.mrf.mxu0
      %v3605 = vadd.f32 0.0, %v3604
      %v3606 = vpop.f32.mrf.mxu0
      %3607 = vdwg.mxu0
      %3608 = vrot.lane.b32.xlu0 %v2994, 48
      %v3609 = vpop.permute.xlu0 %3608
      %3610 = vrot.lane.b32.xlu0 %v2995, 48
      %v3611 = vpop.permute.xlu0 %3610
      %v3613 = vsel %vm752, %v3609, 0
      %v3616 = vsel %vm752, %v3611, 0
      %3618 = vmatprep.subr.bf16.mxu0 0
      %3619 = vmatpush1.bf16.xpose.msra.mxu0 0
      %3620 = vmatprep.subr.bf16.mxu0 0
      %3621 = vmatpush1.bf16.xpose.msra.mxu0 0
      %3622 = vmatprep.subr.bf16.mxu0 0
      %3623 = vmatpush1.bf16.xpose.msra.mxu0 0
      %3624 = vmatprep.subr.bf16.mxu0 0
      %3625 = vmatpush1.bf16.xpose.msra.mxu0 0
      %3626 = vmatprep.subr.bf16.mxu0 0
      %3627 = vmatpush1.bf16.xpose.msra.mxu0 0
      %3628 = vmatprep.subr.bf16.mxu0 0
      %3629 = vmatpush1.bf16.xpose.msra.mxu0 0
      %3630 = vmatprep.subr.bf16.mxu0 0
      %3631 = vmatpush1.bf16.xpose.msra.mxu0 0
      %3632 = vmatprep.subr.bf16.mxu0 0
      %3633 = vmatpush1.bf16.xpose.msra.mxu0 %v3616
      %3634 = vmatprep.subr.bf16.mxu0 0
      %3635 = vmatpush2.bf16.xpose.msra.mxu0 0
      %3636 = vmatprep.subr.bf16.mxu0 0
      %3637 = vmatpush2.bf16.xpose.msra.mxu0 0
      %3638 = vmatprep.subr.bf16.mxu0 0
      %3639 = vmatpush2.bf16.xpose.msra.mxu0 0
      %3640 = vmatprep.subr.bf16.mxu0 0
      %3641 = vmatpush2.bf16.xpose.msra.mxu0 0
      %3642 = vmatprep.subr.bf16.mxu0 0
      %3643 = vmatpush2.bf16.xpose.msra.mxu0 0
      %3644 = vmatprep.subr.bf16.mxu0 0
      %3645 = vmatpush2.bf16.xpose.msra.mxu0 0
      %3646 = vmatprep.subr.bf16.mxu0 0
      %3647 = vmatpush2.bf16.xpose.msra.mxu0 0
      %3648 = vmatprep.subr.bf16.mxu0 0
      %3649 = vmatpush2.bf16.xpose.msra.mxu0 0
      %3650 = vmatprep.mubr.bf16.mxu0 0
      %3651 = vmatmul.mubr.bf16.gmra.mxu0 %v3613
      %v3652 = vpop.f32.mrf.mxu0
      %v3653 = vadd.f32 0.0, %v3652
      %v3654 = vpop.f32.mrf.mxu0
      %v3655 = vpop.f32.mrf.mxu0
      %v3656 = vadd.f32 0.0, %v3655
      %v3657 = vpop.f32.mrf.mxu0
      %3658 = vdwg.mxu0
      %v3659 = vmul.f32 %v3653, 0.25
      %v3660 = vmul.f32 %v3656, 0.25
      %v3661 = vsel %vm752, %v3659, -inf
      %3662 = vmax.xlane.f32.xlu0 %v3661
      %v3663 = vpop.xlane.xlu0 %3662
      %v3664 = vsel %vm752, %v3660, -inf
      %3665 = vmax.xlane.f32.xlu0 %v3664
      %v3666 = vpop.xlane.xlu0 %3665
      %v3667 = vsub.f32 %v3659, %v3663
      %v3668 = vsub.f32 %v3660, %v3666
      %v3669 = vmul.f32 %v3667, 1.442695
      %v3670 = vpow.pop %v3669
      %v3671 = vmul.f32 %v3668, 1.442695
      %v3672 = vpow.pop %v3671
      %v3673 = vsel %vm752, %v3670, 0.0
      %3674 = vadd.xlane.f32.xlu0 %v3673
      %v3675 = vpop.xlane.xlu0 %3674
      %v3676 = vsel %vm752, %v3672, 0.0
      %3677 = vadd.xlane.f32.xlu0 %v3676
      %v3678 = vpop.xlane.xlu0 %3677
      %v3679 = vrcp.pop %v3675
      %v3680 = vrcp.pop %v3678
      %v3681 = vmul.f32 %v3670, %v3679
      %v3682 = vmul.f32 %v3672, %v3680
      %v3683 = vpack.c.bf16 %v3682, %v3681
      %3684 = vrot.lane.b32.xlu0 %v2996, 48
      %v3685 = vpop.permute.xlu0 %3684
      %v3688 = vsel %vm752, %v3683, 0
      %3690 = vmatprep.subr.bf16.mxu0 0
      %3691 = vmatpush1.bf16.msra.mxu0 0
      %3692 = vmatprep.subr.bf16.mxu0 0
      %3693 = vmatpush1.bf16.msra.mxu0 0
      %3694 = vmatprep.subr.bf16.mxu0 0
      %3695 = vmatpush1.bf16.msra.mxu0 0
      %3696 = vmatprep.subr.bf16.mxu0 0
      %3697 = vmatpush1.bf16.msra.mxu0 0
      %3698 = vmatprep.subr.bf16.mxu0 0
      %3699 = vmatpush1.bf16.msra.mxu0 0
      %3700 = vmatprep.subr.bf16.mxu0 0
      %3701 = vmatpush1.bf16.msra.mxu0 0
      %3702 = vmatprep.subr.bf16.mxu0 0
      %3703 = vmatpush1.bf16.msra.mxu0 0
      %3704 = vmatprep.subr.bf16.mxu0 0
      %3705 = vmatpush1.bf16.msra.mxu0 %v3685
      %3706 = vmatprep.subr.bf16.mxu0 0
      %3707 = vmatpush2.bf16.msra.mxu0 0
      %3708 = vmatprep.subr.bf16.mxu0 0
      %3709 = vmatpush2.bf16.msra.mxu0 0
      %3710 = vmatprep.subr.bf16.mxu0 0
      %3711 = vmatpush2.bf16.msra.mxu0 0
      %3712 = vmatprep.subr.bf16.mxu0 0
      %3713 = vmatpush2.bf16.msra.mxu0 0
      %3714 = vmatprep.subr.bf16.mxu0 0
      %3715 = vmatpush2.bf16.msra.mxu0 0
      %3716 = vmatprep.subr.bf16.mxu0 0
      %3717 = vmatpush2.bf16.msra.mxu0 0
      %3718 = vmatprep.subr.bf16.mxu0 0
      %3719 = vmatpush2.bf16.msra.mxu0 0
      %3720 = vmatprep.subr.bf16.mxu0 0
      %3721 = vmatpush2.bf16.msra.mxu0 0
      %3722 = vmatprep.mubr.bf16.mxu0 0
      %3723 = vmatmul.mubr.bf16.gmra.mxu0 %v3688
      %v3724 = vpop.f32.mrf.mxu0
      %v3725 = vadd.f32 0.0, %v3724
      %v3726 = vpop.f32.mrf.mxu0
      %v3727 = vpop.f32.mrf.mxu0
      %v3728 = vadd.f32 0.0, %v3727
      %v3729 = vpop.f32.mrf.mxu0
      %3730 = vdwg.mxu0
      %3731 = vrot.lane.b32.xlu0 %v2994, 32
      %v3732 = vpop.permute.xlu0 %3731
      %3733 = vrot.lane.b32.xlu0 %v2995, 32
      %v3734 = vpop.permute.xlu0 %3733
      %v3736 = vsel %vm752, %v3732, 0
      %v3739 = vsel %vm752, %v3734, 0
      %3741 = vmatprep.subr.bf16.mxu0 0
      %3742 = vmatpush1.bf16.xpose.msra.mxu0 0
      %3743 = vmatprep.subr.bf16.mxu0 0
      %3744 = vmatpush1.bf16.xpose.msra.mxu0 0
      %3745 = vmatprep.subr.bf16.mxu0 0
      %3746 = vmatpush1.bf16.xpose.msra.mxu0 0
      %3747 = vmatprep.subr.bf16.mxu0 0
      %3748 = vmatpush1.bf16.xpose.msra.mxu0 0
      %3749 = vmatprep.subr.bf16.mxu0 0
      %3750 = vmatpush1.bf16.xpose.msra.mxu0 0
      %3751 = vmatprep.subr.bf16.mxu0 0
      %3752 = vmatpush1.bf16.xpose.msra.mxu0 0
      %3753 = vmatprep.subr.bf16.mxu0 0
      %3754 = vmatpush1.bf16.xpose.msra.mxu0 0
      %3755 = vmatprep.subr.bf16.mxu0 0
      %3756 = vmatpush1.bf16.xpose.msra.mxu0 %v3739
      %3757 = vmatprep.subr.bf16.mxu0 0
      %3758 = vmatpush2.bf16.xpose.msra.mxu0 0
      %3759 = vmatprep.subr.bf16.mxu0 0
      %3760 = vmatpush2.bf16.xpose.msra.mxu0 0
      %3761 = vmatprep.subr.bf16.mxu0 0
      %3762 = vmatpush2.bf16.xpose.msra.mxu0 0
      %3763 = vmatprep.subr.bf16.mxu0 0
      %3764 = vmatpush2.bf16.xpose.msra.mxu0 0
      %3765 = vmatprep.subr.bf16.mxu0 0
      %3766 = vmatpush2.bf16.xpose.msra.mxu0 0
      %3767 = vmatprep.subr.bf16.mxu0 0
      %3768 = vmatpush2.bf16.xpose.msra.mxu0 0
      %3769 = vmatprep.subr.bf16.mxu0 0
      %3770 = vmatpush2.bf16.xpose.msra.mxu0 0
      %3771 = vmatprep.subr.bf16.mxu0 0
      %3772 = vmatpush2.bf16.xpose.msra.mxu0 0
      %3773 = vmatprep.mubr.bf16.mxu0 0
      %3774 = vmatmul.mubr.bf16.gmra.mxu0 %v3736
      %v3775 = vpop.f32.mrf.mxu0
      %v3776 = vadd.f32 0.0, %v3775
      %v3777 = vpop.f32.mrf.mxu0
      %v3778 = vpop.f32.mrf.mxu0
      %v3779 = vadd.f32 0.0, %v3778
      %v3780 = vpop.f32.mrf.mxu0
      %3781 = vdwg.mxu0
      %v3782 = vmul.f32 %v3776, 0.25
      %v3783 = vmul.f32 %v3779, 0.25
      %v3784 = vsel %vm752, %v3782, -inf
      %3785 = vmax.xlane.f32.xlu0 %v3784
      %v3786 = vpop.xlane.xlu0 %3785
      %v3787 = vsel %vm752, %v3783, -inf
      %3788 = vmax.xlane.f32.xlu0 %v3787
      %v3789 = vpop.xlane.xlu0 %3788
      %v3790 = vsub.f32 %v3782, %v3786
      %v3791 = vsub.f32 %v3783, %v3789
      %v3792 = vmul.f32 %v3790, 1.442695
      %v3793 = vpow.pop %v3792
      %v3794 = vmul.f32 %v3791, 1.442695
      %v3795 = vpow.pop %v3794
      %v3796 = vsel %vm752, %v3793, 0.0
      %3797 = vadd.xlane.f32.xlu0 %v3796
      %v3798 = vpop.xlane.xlu0 %3797
      %v3799 = vsel %vm752, %v3795, 0.0
      %3800 = vadd.xlane.f32.xlu0 %v3799
      %v3801 = vpop.xlane.xlu0 %3800
      %v3802 = vrcp.pop %v3798
      %v3803 = vrcp.pop %v3801
      %v3804 = vmul.f32 %v3793, %v3802
      %v3805 = vmul.f32 %v3795, %v3803
      %v3806 = vpack.c.bf16 %v3805, %v3804
      %3807 = vrot.lane.b32.xlu0 %v2996, 32
      %v3808 = vpop.permute.xlu0 %3807
      %v3811 = vsel %vm752, %v3806, 0
      %3813 = vmatprep.subr.bf16.mxu0 0
      %3814 = vmatpush1.bf16.msra.mxu0 0
      %3815 = vmatprep.subr.bf16.mxu0 0
      %3816 = vmatpush1.bf16.msra.mxu0 0
      %3817 = vmatprep.subr.bf16.mxu0 0
      %3818 = vmatpush1.bf16.msra.mxu0 0
      %3819 = vmatprep.subr.bf16.mxu0 0
      %3820 = vmatpush1.bf16.msra.mxu0 0
      %3821 = vmatprep.subr.bf16.mxu0 0
      %3822 = vmatpush1.bf16.msra.mxu0 0
      %3823 = vmatprep.subr.bf16.mxu0 0
      %3824 = vmatpush1.bf16.msra.mxu0 0
      %3825 = vmatprep.subr.bf16.mxu0 0
      %3826 = vmatpush1.bf16.msra.mxu0 0
      %3827 = vmatprep.subr.bf16.mxu0 0
      %3828 = vmatpush1.bf16.msra.mxu0 %v3808
      %3829 = vmatprep.subr.bf16.mxu0 0
      %3830 = vmatpush2.bf16.msra.mxu0 0
      %3831 = vmatprep.subr.bf16.mxu0 0
      %3832 = vmatpush2.bf16.msra.mxu0 0
      %3833 = vmatprep.subr.bf16.mxu0 0
      %3834 = vmatpush2.bf16.msra.mxu0 0
      %3835 = vmatprep.subr.bf16.mxu0 0
      %3836 = vmatpush2.bf16.msra.mxu0 0
      %3837 = vmatprep.subr.bf16.mxu0 0
      %3838 = vmatpush2.bf16.msra.mxu0 0
      %3839 = vmatprep.subr.bf16.mxu0 0
      %3840 = vmatpush2.bf16.msra.mxu0 0
      %3841 = vmatprep.subr.bf16.mxu0 0
      %3842 = vmatpush2.bf16.msra.mxu0 0
      %3843 = vmatprep.subr.bf16.mxu0 0
      %3844 = vmatpush2.bf16.msra.mxu0 0
      %3845 = vmatprep.mubr.bf16.mxu0 0
      %3846 = vmatmul.mubr.bf16.gmra.mxu0 %v3811
      %v3847 = vpop.f32.mrf.mxu0
      %v3848 = vadd.f32 0.0, %v3847
      %v3849 = vpop.f32.mrf.mxu0
      %v3850 = vpop.f32.mrf.mxu0
      %v3851 = vadd.f32 0.0, %v3850
      %v3852 = vpop.f32.mrf.mxu0
      %3853 = vdwg.mxu0
      %3854 = vrot.lane.b32.xlu0 %v2994, 16
      %v3855 = vpop.permute.xlu0 %3854
      %3856 = vrot.lane.b32.xlu0 %v2995, 16
      %v3857 = vpop.permute.xlu0 %3856
      %v3859 = vsel %vm752, %v3855, 0
      %v3862 = vsel %vm752, %v3857, 0
      %3864 = vmatprep.subr.bf16.mxu0 0
      %3865 = vmatpush1.bf16.xpose.msra.mxu0 0
      %3866 = vmatprep.subr.bf16.mxu0 0
      %3867 = vmatpush1.bf16.xpose.msra.mxu0 0
      %3868 = vmatprep.subr.bf16.mxu0 0
      %3869 = vmatpush1.bf16.xpose.msra.mxu0 0
      %3870 = vmatprep.subr.bf16.mxu0 0
      %3871 = vmatpush1.bf16.xpose.msra.mxu0 0
      %3872 = vmatprep.subr.bf16.mxu0 0
      %3873 = vmatpush1.bf16.xpose.msra.mxu0 0
      %3874 = vmatprep.subr.bf16.mxu0 0
      %3875 = vmatpush1.bf16.xpose.msra.mxu0 0
      %3876 = vmatprep.subr.bf16.mxu0 0
      %3877 = vmatpush1.bf16.xpose.msra.mxu0 0
      %3878 = vmatprep.subr.bf16.mxu0 0
      %3879 = vmatpush1.bf16.xpose.msra.mxu0 %v3862
      %3880 = vmatprep.subr.bf16.mxu0 0
      %3881 = vmatpush2.bf16.xpose.msra.mxu0 0
      %3882 = vmatprep.subr.bf16.mxu0 0
      %3883 = vmatpush2.bf16.xpose.msra.mxu0 0
      %3884 = vmatprep.subr.bf16.mxu0 0
      %3885 = vmatpush2.bf16.xpose.msra.mxu0 0
      %3886 = vmatprep.subr.bf16.mxu0 0
      %3887 = vmatpush2.bf16.xpose.msra.mxu0 0
      %3888 = vmatprep.subr.bf16.mxu0 0
      %3889 = vmatpush2.bf16.xpose.msra.mxu0 0
      %3890 = vmatprep.subr.bf16.mxu0 0
      %3891 = vmatpush2.bf16.xpose.msra.mxu0 0
      %3892 = vmatprep.subr.bf16.mxu0 0
      %3893 = vmatpush2.bf16.xpose.msra.mxu0 0
      %3894 = vmatprep.subr.bf16.mxu0 0
      %3895 = vmatpush2.bf16.xpose.msra.mxu0 0
      %3896 = vmatprep.mubr.bf16.mxu0 0
      %3897 = vmatmul.mubr.bf16.gmra.mxu0 %v3859
      %v3898 = vpop.f32.mrf.mxu0
      %v3899 = vadd.f32 0.0, %v3898
      %v3900 = vpop.f32.mrf.mxu0
      %v3901 = vpop.f32.mrf.mxu0
      %v3902 = vadd.f32 0.0, %v3901
      %v3903 = vpop.f32.mrf.mxu0
      %3904 = vdwg.mxu0
      %v3905 = vmul.f32 %v3899, 0.25
      %v3906 = vmul.f32 %v3902, 0.25
      %v3907 = vsel %vm752, %v3905, -inf
      %3908 = vmax.xlane.f32.xlu0 %v3907
      %v3909 = vpop.xlane.xlu0 %3908
      %v3910 = vsel %vm752, %v3906, -inf
      %3911 = vmax.xlane.f32.xlu0 %v3910
      %v3912 = vpop.xlane.xlu0 %3911
      %v3913 = vsub.f32 %v3905, %v3909
      %v3914 = vsub.f32 %v3906, %v3912
      %v3915 = vmul.f32 %v3913, 1.442695
      %v3916 = vpow.pop %v3915
      %v3917 = vmul.f32 %v3914, 1.442695
      %v3918 = vpow.pop %v3917
      %v3919 = vsel %vm752, %v3916, 0.0
      %3920 = vadd.xlane.f32.xlu0 %v3919
      %v3921 = vpop.xlane.xlu0 %3920
      %v3922 = vsel %vm752, %v3918, 0.0
      %3923 = vadd.xlane.f32.xlu0 %v3922
      %v3924 = vpop.xlane.xlu0 %3923
      %v3925 = vrcp.pop %v3921
      %v3926 = vrcp.pop %v3924
      %v3927 = vmul.f32 %v3916, %v3925
      %v3928 = vmul.f32 %v3918, %v3926
      %v3929 = vpack.c.bf16 %v3928, %v3927
      %3930 = vrot.lane.b32.xlu0 %v2996, 16
      %v3931 = vpop.permute.xlu0 %3930
      %v3934 = vsel %vm752, %v3929, 0
      %3936 = vmatprep.subr.bf16.mxu0 0
      %3937 = vmatpush1.bf16.msra.mxu0 0
      %3938 = vmatprep.subr.bf16.mxu0 0
      %3939 = vmatpush1.bf16.msra.mxu0 0
      %3940 = vmatprep.subr.bf16.mxu0 0
      %3941 = vmatpush1.bf16.msra.mxu0 0
      %3942 = vmatprep.subr.bf16.mxu0 0
      %3943 = vmatpush1.bf16.msra.mxu0 0
      %3944 = vmatprep.subr.bf16.mxu0 0
      %3945 = vmatpush1.bf16.msra.mxu0 0
      %3946 = vmatprep.subr.bf16.mxu0 0
      %3947 = vmatpush1.bf16.msra.mxu0 0
      %3948 = vmatprep.subr.bf16.mxu0 0
      %3949 = vmatpush1.bf16.msra.mxu0 0
      %3950 = vmatprep.subr.bf16.mxu0 0
      %3951 = vmatpush1.bf16.msra.mxu0 %v3931
      %3952 = vmatprep.subr.bf16.mxu0 0
      %3953 = vmatpush2.bf16.msra.mxu0 0
      %3954 = vmatprep.subr.bf16.mxu0 0
      %3955 = vmatpush2.bf16.msra.mxu0 0
      %3956 = vmatprep.subr.bf16.mxu0 0
      %3957 = vmatpush2.bf16.msra.mxu0 0
      %3958 = vmatprep.subr.bf16.mxu0 0
      %3959 = vmatpush2.bf16.msra.mxu0 0
      %3960 = vmatprep.subr.bf16.mxu0 0
      %3961 = vmatpush2.bf16.msra.mxu0 0
      %3962 = vmatprep.subr.bf16.mxu0 0
      %3963 = vmatpush2.bf16.msra.mxu0 0
      %3964 = vmatprep.subr.bf16.mxu0 0
      %3965 = vmatpush2.bf16.msra.mxu0 0
      %3966 = vmatprep.subr.bf16.mxu0 0
      %3967 = vmatpush2.bf16.msra.mxu0 0
      %3968 = vmatprep.mubr.bf16.mxu0 0
      %3969 = vmatmul.mubr.bf16.gmra.mxu0 %v3934
      %v3970 = vpop.f32.mrf.mxu0
      %v3971 = vadd.f32 0.0, %v3970
      %v3972 = vpop.f32.mrf.mxu0
      %v3973 = vpop.f32.mrf.mxu0
      %v3974 = vadd.f32 0.0, %v3973
      %v3975 = vpop.f32.mrf.mxu0
      %3976 = vdwg.mxu0
      %3979 = vrot.lane.b32.xlu0 %v3233, 16
      %v3980 = vpop.permute.xlu0 %3979
      %3981 = vrot.lane.b32.xlu0 %v3236, 16
      %v3982 = vpop.permute.xlu0 %3981
      %3987 = vrot.lane.b32.xlu0 %v3356, 32
      %v3988 = vpop.permute.xlu0 %3987
      %3989 = vrot.lane.b32.xlu0 %v3359, 32
      %v3990 = vpop.permute.xlu0 %3989
      %3995 = vrot.lane.b32.xlu0 %v3479, 48
      %v3996 = vpop.permute.xlu0 %3995
      %3997 = vrot.lane.b32.xlu0 %v3482, 48
      %v3998 = vpop.permute.xlu0 %3997
      %4003 = vrot.lane.b32.xlu0 %v3602, 64
      %v4004 = vpop.permute.xlu0 %4003
      %4005 = vrot.lane.b32.xlu0 %v3605, 64
      %v4006 = vpop.permute.xlu0 %4005
      %4011 = vrot.lane.b32.xlu0 %v3725, 80
      %v4012 = vpop.permute.xlu0 %4011
      %4013 = vrot.lane.b32.xlu0 %v3728, 80
      %v4014 = vpop.permute.xlu0 %4013
      %4019 = vrot.lane.b32.xlu0 %v3848, 96
      %v4020 = vpop.permute.xlu0 %4019
      %4021 = vrot.lane.b32.xlu0 %v3851, 96
      %v4022 = vpop.permute.xlu0 %4021
      %4027 = vrot.lane.b32.xlu0 %v3971, 112
      %v4028 = vpop.permute.xlu0 %4027
      %4029 = vrot.lane.b32.xlu0 %v3974, 112
      %v4030 = vpop.permute.xlu0 %4029
      %v4033 = vsel %vm752, %v3107, %v3980
      %v4034 = vsel %vm752, %v3110, %v3982
      %v4035 = vsel %vm1791, %v4033, %v3988
      %v4036 = vsel %vm1791, %v4034, %v3990
      %v4037 = vsel %vm1794, %v4035, %v3996
      %v4038 = vsel %vm1794, %v4036, %v3998
      %v4039 = vsel %vm1797, %v4037, %v4004
      %v4040 = vsel %vm1797, %v4038, %v4006
      %v4041 = vsel %vm1800, %v4039, %v4012
      %v4042 = vsel %vm1800, %v4040, %v4014
      %v4043 = vsel %vm1803, %v4041, %v4020
      %v4044 = vsel %vm1803, %v4042, %v4022
      %v4045 = vsel %vm1806, %v4043, %v4028
      %v4046 = vsel %vm1806, %v4044, %v4030
      %v4047 = vpack.c.bf16 %v4046, %v4045
      %s4048 = scalar_lea.vmem %s5, 64
      %v4049 = vld [vmem:[%s4048] sm:$0xf]
      %v4050 = vld [vmem:[%s4048 + $0x4] sm:$0xf]
      %v4051 = vld [vmem:[%s4048 + $0x8] sm:$0xf]
      %v4052 = vld [vmem:[%s4048 + $0xc] sm:$0xf]
      %v4053 = vld [vmem:[%s4048 + $0x10] sm:$0xf]
      %v4054 = vld [vmem:[%s4048 + $0x14] sm:$0xf]
      %v4055 = vld [vmem:[%s4048 + $0x18] sm:$0xf]
      %v4056 = vld [vmem:[%s4048 + $0x1c] sm:$0xf]
      %v4057 = vld [vmem:[%s4048 + $0x20] sm:$0xf]
      %v4058 = vld [vmem:[%s4048 + $0x24] sm:$0xf]
      %v4059 = vld [vmem:[%s4048 + $0x28] sm:$0xf]
      %v4060 = vld [vmem:[%s4048 + $0x2c] sm:$0xf]
      %v4061 = vld [vmem:[%s4048 + $0x30] sm:$0xf]
      %v4062 = vld [vmem:[%s4048 + $0x34] sm:$0xf]
      %v4063 = vld [vmem:[%s4048 + $0x38] sm:$0xf]
      %v4064 = vld [vmem:[%s4048 + $0x3c] sm:$0xf]
      %s4065 = scalar_lea.vmem %s6, 1
      %v4066 = vld [vmem:[%s4065] sm:$0x1]
      %v4068 = vlaneseq
      %v4069 = vshrl.u32 %v4068, 7
      %v4070 = vsub.s32 0, %v4069
      %v4071 = vrot.slane %v4066, %v4070
      %v4089 = vunpack.c.l.b16 %v4049
      %v4090 = vunpack.c.l.b16 %v4050
      %v4091 = vunpack.c.l.b16 %v4051
      %v4092 = vunpack.c.l.b16 %v4052
      %v4093 = vunpack.c.l.b16 %v4053
      %v4094 = vunpack.c.l.b16 %v4054
      %v4095 = vunpack.c.l.b16 %v4055
      %v4096 = vunpack.c.l.b16 %v4056
      %v4097 = vunpack.c.l.b16 %v4057
      %v4098 = vunpack.c.l.b16 %v4058
      %v4099 = vunpack.c.l.b16 %v4059
      %v4100 = vunpack.c.l.b16 %v4060
      %v4101 = vunpack.c.l.b16 %v4061
      %v4102 = vunpack.c.l.b16 %v4062
      %v4103 = vunpack.c.l.b16 %v4063
      %v4104 = vunpack.c.l.b16 %v4064
      %v4105 = vpack.c.b16 %v4090, %v4089
      %v4106 = vpack.c.b16 %v4092, %v4091
      %v4107 = vpack.c.b16 %v4094, %v4093
      %v4108 = vpack.c.b16 %v4096, %v4095
      %v4109 = vpack.c.b16 %v4098, %v4097
      %v4110 = vpack.c.b16 %v4100, %v4099
      %v4111 = vpack.c.b16 %v4102, %v4101
      %v4112 = vpack.c.b16 %v4104, %v4103
      %4121 = vmatprep.subr.bf16.mxu0 0
      %4122 = vmatpush1.bf16.msra.mxu0 %v4112
      %4123 = vmatprep.subr.bf16.mxu0 0
      %4124 = vmatpush1.bf16.msra.mxu0 %v4111
      %4125 = vmatprep.subr.bf16.mxu0 0
      %4126 = vmatpush1.bf16.msra.mxu0 %v4110
      %4127 = vmatprep.subr.bf16.mxu0 0
      %4128 = vmatpush1.bf16.msra.mxu0 %v4109
      %4129 = vmatprep.subr.bf16.mxu0 0
      %4130 = vmatpush1.bf16.msra.mxu0 %v4108
      %4131 = vmatprep.subr.bf16.mxu0 0
      %4132 = vmatpush1.bf16.msra.mxu0 %v4107
      %4133 = vmatprep.subr.bf16.mxu0 0
      %4134 = vmatpush1.bf16.msra.mxu0 %v4106
      %4135 = vmatprep.subr.bf16.mxu0 0
      %4136 = vmatpush1.bf16.msra.mxu0 %v4105
      %4137 = vmatprep.subr.bf16.mxu0 0
      %4138 = vmatpush2.bf16.msra.mxu0 0
      %4139 = vmatprep.subr.bf16.mxu0 0
      %4140 = vmatpush2.bf16.msra.mxu0 0
      %4141 = vmatprep.subr.bf16.mxu0 0
      %4142 = vmatpush2.bf16.msra.mxu0 0
      %4143 = vmatprep.subr.bf16.mxu0 0
      %4144 = vmatpush2.bf16.msra.mxu0 0
      %4145 = vmatprep.subr.bf16.mxu0 0
      %4146 = vmatpush2.bf16.msra.mxu0 0
      %4147 = vmatprep.subr.bf16.mxu0 0
      %4148 = vmatpush2.bf16.msra.mxu0 0
      %4149 = vmatprep.subr.bf16.mxu0 0
      %4150 = vmatpush2.bf16.msra.mxu0 0
      %4151 = vmatprep.subr.bf16.mxu0 0
      %4152 = vmatpush2.bf16.msra.mxu0 0
      %4153 = vmatprep.mubr.bf16.mxu0 0
      %4154 = vmatmul.mubr.bf16.gmra.mxu0 %v4047
      %v4155 = vpop.f32.mrf.mxu0
      %v4156 = vadd.f32 %v4071, %v4155
      %v4157 = vpop.f32.mrf.mxu0
      %v4158 = vpop.f32.mrf.mxu0
      %v4159 = vadd.f32 %v4071, %v4158
      %v4160 = vpop.f32.mrf.mxu0
      %4161 = vdwg.mxu0
      %v4162 = vadd.f32 %v2686, %v4156
      %v4163 = vadd.f32 %v2687, %v4159
      %s4164 = scalar_lea.vmem %s7, 1
      %v4165 = vld [vmem:[%s4164] sm:$0x1]
      %s4166 = scalar_lea.vmem %s8, 1
      %v4167 = vld [vmem:[%s4166] sm:$0x1]
      %4168 = vadd.xlane.f32.xlu0 %v4162
      %v4169 = vpop.xlane.xlu0 %4168
      %4170 = vadd.xlane.f32.xlu0 %v4163
      %v4171 = vpop.xlane.xlu0 %4170
      %v4172 = vmul.f32 %v4169, %v452
      %v4173 = vmul.f32 %v4171, %v452
      %v4174 = vsub.f32 %v4162, %v4172
      %v4175 = vsub.f32 %v4163, %v4173
      %v4176 = vmul.f32 %v4174, %v4174
      %v4177 = vmul.f32 %v4175, %v4175
      %4178 = vadd.xlane.f32.xlu0 %v4176
      %v4179 = vpop.xlane.xlu0 %4178
      %4180 = vadd.xlane.f32.xlu0 %v4177
      %v4181 = vpop.xlane.xlu0 %4180
      %v4182 = vmul.f32 %v4179, %v452
      %v4183 = vmul.f32 %v4181, %v452
      %v4184 = vadd.f32 %v4182, 1e-05
      %v4185 = vadd.f32 %v4183, 1e-05
      %v4186 = vrsqrt.pop %v4184
      %v4187 = vrsqrt.pop %v4185
      %v4188 = vmul.f32 %v4174, %v4186
      %v4189 = vmul.f32 %v4175, %v4187
      %v4191 = vlaneseq
      %v4192 = vshrl.u32 %v4191, 7
      %v4193 = vsub.s32 0, %v4192
      %v4194 = vrot.slane %v4165, %v4193
      %v4196 = vmul.f32 %v4188, %v4194
      %v4197 = vmul.f32 %v4189, %v4194
      %v4199 = vlaneseq
      %v4200 = vshrl.u32 %v4199, 7
      %v4201 = vsub.s32 0, %v4200
      %v4202 = vrot.slane %v4167, %v4201
      %v4204 = vadd.f32 %v4196, %v4202
      %v4205 = vadd.f32 %v4197, %v4202
      %v4206 = vpack.c.bf16 %v4205, %v4204
      %s4207 = scalar_lea.vmem %s9, 256
      %v4208 = vld [vmem:[%s4207] sm:$0xff]
      %v4209 = vld [vmem:[%s4207 + $0x8] sm:$0xff]
      %v4210 = vld [vmem:[%s4207 + $0x10] sm:$0xff]
      %v4211 = vld [vmem:[%s4207 + $0x18] sm:$0xff]
      %v4212 = vld [vmem:[%s4207 + $0x20] sm:$0xff]
      %v4213 = vld [vmem:[%s4207 + $0x28] sm:$0xff]
      %v4214 = vld [vmem:[%s4207 + $0x30] sm:$0xff]
      %v4215 = vld [vmem:[%s4207 + $0x38] sm:$0xff]
      %v4216 = vld [vmem:[%s4207 + $0x40] sm:$0xff]
      %v4217 = vld [vmem:[%s4207 + $0x48] sm:$0xff]
      %v4218 = vld [vmem:[%s4207 + $0x50] sm:$0xff]
      %v4219 = vld [vmem:[%s4207 + $0x58] sm:$0xff]
      %v4220 = vld [vmem:[%s4207 + $0x60] sm:$0xff]
      %v4221 = vld [vmem:[%s4207 + $0x68] sm:$0xff]
      %v4222 = vld [vmem:[%s4207 + $0x70] sm:$0xff]
      %v4223 = vld [vmem:[%s4207 + $0x78] sm:$0xff]
      %v4224 = vld [vmem:[%s4207 + $0x80] sm:$0xff]
      %v4225 = vld [vmem:[%s4207 + $0x88] sm:$0xff]
      %v4226 = vld [vmem:[%s4207 + $0x90] sm:$0xff]
      %v4227 = vld [vmem:[%s4207 + $0x98] sm:$0xff]
      %v4228 = vld [vmem:[%s4207 + $0xa0] sm:$0xff]
      %v4229 = vld [vmem:[%s4207 + $0xa8] sm:$0xff]
      %v4230 = vld [vmem:[%s4207 + $0xb0] sm:$0xff]
      %v4231 = vld [vmem:[%s4207 + $0xb8] sm:$0xff]
      %v4232 = vld [vmem:[%s4207 + $0xc0] sm:$0xff]
      %v4233 = vld [vmem:[%s4207 + $0xc8] sm:$0xff]
      %v4234 = vld [vmem:[%s4207 + $0xd0] sm:$0xff]
      %v4235 = vld [vmem:[%s4207 + $0xd8] sm:$0xff]
      %v4236 = vld [vmem:[%s4207 + $0xe0] sm:$0xff]
      %v4237 = vld [vmem:[%s4207 + $0xe8] sm:$0xff]
      %v4238 = vld [vmem:[%s4207 + $0xf0] sm:$0xff]
      %v4239 = vld [vmem:[%s4207 + $0xf8] sm:$0xff]
      %s4240 = scalar_lea.vmem %s10, 4
      %v4241 = vld [vmem:[%s4240] sm:$0xf]
      %v4243 = vlaneseq
      %v4244 = vshrl.u32 %v4243, 7
      %v4245 = vsub.s32 0, %v4244
      %v4246 = vrot.slane %v4241, %v4245
      %v4247 = vlaneseq
      %v4248 = vshrl.u32 %v4247, 7
      %v4249 = vsub.s32 1, %v4248
      %v4250 = vrot.slane %v4241, %v4249
      %v4251 = vlaneseq
      %v4252 = vshrl.u32 %v4251, 7
      %v4253 = vsub.s32 2, %v4252
      %v4254 = vrot.slane %v4241, %v4253
      %v4255 = vlaneseq
      %v4256 = vshrl.u32 %v4255, 7
      %v4257 = vsub.s32 3, %v4256
      %v4258 = vrot.slane %v4241, %v4257
      %v4295 = vunpack.c.l.b16 %v4208
      %v4296 = vunpack.c.h.b16 %v4208
      %v4297 = vunpack.c.l.b16 %v4209
      %v4298 = vunpack.c.h.b16 %v4209
      %v4299 = vunpack.c.l.b16 %v4210
      %v4300 = vunpack.c.h.b16 %v4210
      %v4301 = vunpack.c.l.b16 %v4211
      %v4302 = vunpack.c.h.b16 %v4211
      %v4303 = vunpack.c.l.b16 %v4212
      %v4304 = vunpack.c.h.b16 %v4212
      %v4305 = vunpack.c.l.b16 %v4213
      %v4306 = vunpack.c.h.b16 %v4213
      %v4307 = vunpack.c.l.b16 %v4214
      %v4308 = vunpack.c.h.b16 %v4214
      %v4309 = vunpack.c.l.b16 %v4215
      %v4310 = vunpack.c.h.b16 %v4215
      %v4311 = vunpack.c.l.b16 %v4216
      %v4312 = vunpack.c.h.b16 %v4216
      %v4313 = vunpack.c.l.b16 %v4217
      %v4314 = vunpack.c.h.b16 %v4217
      %v4315 = vunpack.c.l.b16 %v4218
      %v4316 = vunpack.c.h.b16 %v4218
      %v4317 = vunpack.c.l.b16 %v4219
      %v4318 = vunpack.c.h.b16 %v4219
      %v4319 = vunpack.c.l.b16 %v4220
      %v4320 = vunpack.c.h.b16 %v4220
      %v4321 = vunpack.c.l.b16 %v4221
      %v4322 = vunpack.c.h.b16 %v4221
      %v4323 = vunpack.c.l.b16 %v4222
      %v4324 = vunpack.c.h.b16 %v4222
      %v4325 = vunpack.c.l.b16 %v4223
      %v4326 = vunpack.c.h.b16 %v4223
      %v4327 = vunpack.c.l.b16 %v4224
      %v4328 = vunpack.c.h.b16 %v4224
      %v4329 = vunpack.c.l.b16 %v4225
      %v4330 = vunpack.c.h.b16 %v4225
      %v4331 = vunpack.c.l.b16 %v4226
      %v4332 = vunpack.c.h.b16 %v4226
      %v4333 = vunpack.c.l.b16 %v4227
      %v4334 = vunpack.c.h.b16 %v4227
      %v4335 = vunpack.c.l.b16 %v4228
      %v4336 = vunpack.c.h.b16 %v4228
      %v4337 = vunpack.c.l.b16 %v4229
      %v4338 = vunpack.c.h.b16 %v4229
      %v4339 = vunpack.c.l.b16 %v4230
      %v4340 = vunpack.c.h.b16 %v4230
      %v4341 = vunpack.c.l.b16 %v4231
      %v4342 = vunpack.c.h.b16 %v4231
      %v4343 = vunpack.c.l.b16 %v4232
      %v4344 = vunpack.c.h.b16 %v4232
      %v4345 = vunpack.c.l.b16 %v4233
      %v4346 = vunpack.c.h.b16 %v4233
      %v4347 = vunpack.c.l.b16 %v4234
      %v4348 = vunpack.c.h.b16 %v4234
      %v4349 = vunpack.c.l.b16 %v4235
      %v4350 = vunpack.c.h.b16 %v4235
      %v4351 = vunpack.c.l.b16 %v4236
      %v4352 = vunpack.c.h.b16 %v4236
      %v4353 = vunpack.c.l.b16 %v4237
      %v4354 = vunpack.c.h.b16 %v4237
      %v4355 = vunpack.c.l.b16 %v4238
      %v4356 = vunpack.c.h.b16 %v4238
      %v4357 = vunpack.c.l.b16 %v4239
      %v4358 = vunpack.c.h.b16 %v4239
      %v4359 = vpack.c.b16 %v4299, %v4295
      %v4360 = vpack.c.b16 %v4300, %v4296
      %v4361 = vpack.c.b16 %v4301, %v4297
      %v4362 = vpack.c.b16 %v4302, %v4298
      %v4363 = vpack.c.b16 %v4307, %v4303
      %v4364 = vpack.c.b16 %v4308, %v4304
      %v4365 = vpack.c.b16 %v4309, %v4305
      %v4366 = vpack.c.b16 %v4310, %v4306
      %v4367 = vpack.c.b16 %v4315, %v4311
      %v4368 = vpack.c.b16 %v4316, %v4312
      %v4369 = vpack.c.b16 %v4317, %v4313
      %v4370 = vpack.c.b16 %v4318, %v4314
      %v4371 = vpack.c.b16 %v4323, %v4319
      %v4372 = vpack.c.b16 %v4324, %v4320
      %v4373 = vpack.c.b16 %v4325, %v4321
      %v4374 = vpack.c.b16 %v4326, %v4322
      %v4375 = vpack.c.b16 %v4331, %v4327
      %v4376 = vpack.c.b16 %v4332, %v4328
      %v4377 = vpack.c.b16 %v4333, %v4329
      %v4378 = vpack.c.b16 %v4334, %v4330
      %v4379 = vpack.c.b16 %v4339, %v4335
      %v4380 = vpack.c.b16 %v4340, %v4336
      %v4381 = vpack.c.b16 %v4341, %v4337
      %v4382 = vpack.c.b16 %v4342, %v4338
      %v4383 = vpack.c.b16 %v4347, %v4343
      %v4384 = vpack.c.b16 %v4348, %v4344
      %v4385 = vpack.c.b16 %v4349, %v4345
      %v4386 = vpack.c.b16 %v4350, %v4346
      %v4387 = vpack.c.b16 %v4355, %v4351
      %v4388 = vpack.c.b16 %v4356, %v4352
      %v4389 = vpack.c.b16 %v4357, %v4353
      %v4390 = vpack.c.b16 %v4358, %v4354
      %4423 = vmatprep.subr.bf16.mxu0 %v4388
      %4424 = vmatpush1.bf16.msra.mxu0 %v4387
      %4425 = vmatprep.subr.bf16.mxu0 %v4384
      %4426 = vmatpush1.bf16.msra.mxu0 %v4383
      %4427 = vmatprep.subr.bf16.mxu0 %v4380
      %4428 = vmatpush1.bf16.msra.mxu0 %v4379
      %4429 = vmatprep.subr.bf16.mxu0 %v4376
      %4430 = vmatpush1.bf16.msra.mxu0 %v4375
      %4431 = vmatprep.subr.bf16.mxu0 %v4372
      %4432 = vmatpush1.bf16.msra.mxu0 %v4371
      %4433 = vmatprep.subr.bf16.mxu0 %v4368
      %4434 = vmatpush1.bf16.msra.mxu0 %v4367
      %4435 = vmatprep.subr.bf16.mxu0 %v4364
      %4436 = vmatpush1.bf16.msra.mxu0 %v4363
      %4437 = vmatprep.subr.bf16.mxu0 %v4360
      %4438 = vmatpush1.bf16.msra.mxu0 %v4359
      %4439 = vmatprep.subr.bf16.mxu0 0
      %4440 = vmatpush2.bf16.msra.mxu0 0
      %4441 = vmatprep.subr.bf16.mxu0 0
      %4442 = vmatpush2.bf16.msra.mxu0 0
      %4443 = vmatprep.subr.bf16.mxu0 0
      %4444 = vmatpush2.bf16.msra.mxu0 0
      %4445 = vmatprep.subr.bf16.mxu0 0
      %4446 = vmatpush2.bf16.msra.mxu0 0
      %4447 = vmatprep.subr.bf16.mxu0 0
      %4448 = vmatpush2.bf16.msra.mxu0 0
      %4449 = vmatprep.subr.bf16.mxu0 0
      %4450 = vmatpush2.bf16.msra.mxu0 0
      %4451 = vmatprep.subr.bf16.mxu0 0
      %4452 = vmatpush2.bf16.msra.mxu0 0
      %4453 = vmatprep.subr.bf16.mxu0 0
      %4454 = vmatpush2.bf16.msra.mxu0 0
      %4455 = vmatprep.mubr.bf16.mxu0 0
      %4456 = vmatmul.mubr.bf16.gmra.mxu0 %v4206
      %v4457 = vpop.f32.mrf.mxu0
      %v4458 = vadd.f32 %v4246, %v4457
      %v4459 = vpop.f32.mrf.mxu0
      %v4460 = vadd.f32 %v4250, %v4459
      %v4461 = vpop.f32.mrf.mxu0
      %v4462 = vadd.f32 %v4246, %v4461
      %v4463 = vpop.f32.mrf.mxu0
      %v4464 = vadd.f32 %v4250, %v4463
      %4465 = vdwg.mxu0
      %4466 = vmatprep.subr.bf16.mxu0 %v4390
      %4467 = vmatpush1.bf16.msra.mxu0 %v4389
      %4468 = vmatprep.subr.bf16.mxu0 %v4386
      %4469 = vmatpush1.bf16.msra.mxu0 %v4385
      %4470 = vmatprep.subr.bf16.mxu0 %v4382
      %4471 = vmatpush1.bf16.msra.mxu0 %v4381
      %4472 = vmatprep.subr.bf16.mxu0 %v4378
      %4473 = vmatpush1.bf16.msra.mxu0 %v4377
      %4474 = vmatprep.subr.bf16.mxu0 %v4374
      %4475 = vmatpush1.bf16.msra.mxu0 %v4373
      %4476 = vmatprep.subr.bf16.mxu0 %v4370
      %4477 = vmatpush1.bf16.msra.mxu0 %v4369
      %4478 = vmatprep.subr.bf16.mxu0 %v4366
      %4479 = vmatpush1.bf16.msra.mxu0 %v4365
      %4480 = vmatprep.subr.bf16.mxu0 %v4362
      %4481 = vmatpush1.bf16.msra.mxu0 %v4361
      %4482 = vmatprep.subr.bf16.mxu0 0
      %4483 = vmatpush2.bf16.msra.mxu0 0
      %4484 = vmatprep.subr.bf16.mxu0 0
      %4485 = vmatpush2.bf16.msra.mxu0 0
      %4486 = vmatprep.subr.bf16.mxu0 0
      %4487 = vmatpush2.bf16.msra.mxu0 0
      %4488 = vmatprep.subr.bf16.mxu0 0
      %4489 = vmatpush2.bf16.msra.mxu0 0
      %4490 = vmatprep.subr.bf16.mxu0 0
      %4491 = vmatpush2.bf16.msra.mxu0 0
      %4492 = vmatprep.subr.bf16.mxu0 0
      %4493 = vmatpush2.bf16.msra.mxu0 0
      %4494 = vmatprep.subr.bf16.mxu0 0
      %4495 = vmatpush2.bf16.msra.mxu0 0
      %4496 = vmatprep.subr.bf16.mxu0 0
      %4497 = vmatpush2.bf16.msra.mxu0 0
      %4498 = vmatprep.mubr.bf16.mxu0 0
      %4499 = vmatmul.mubr.bf16.gmra.mxu0 %v4206
      %v4500 = vpop.f32.mrf.mxu0
      %v4501 = vadd.f32 %v4254, %v4500
      %v4502 = vpop.f32.mrf.mxu0
      %v4503 = vadd.f32 %v4258, %v4502
      %v4504 = vpop.f32.mrf.mxu0
      %v4505 = vadd.f32 %v4254, %v4504
      %v4506 = vpop.f32.mrf.mxu0
      %v4507 = vadd.f32 %v4258, %v4506
      %4508 = vdwg.mxu0
      %v4509 = vmul.f32 %v4458, %v4458
      %v4510 = vmul.f32 %v4460, %v4460
      %v4511 = vmul.f32 %v4501, %v4501
      %v4512 = vmul.f32 %v4503, %v4503
      %v4513 = vmul.f32 %v4462, %v4462
      %v4514 = vmul.f32 %v4464, %v4464
      %v4515 = vmul.f32 %v4505, %v4505
      %v4516 = vmul.f32 %v4507, %v4507
      %v4517 = vmul.f32 %v4458, %v4509
      %v4518 = vmul.f32 %v4460, %v4510
      %v4519 = vmul.f32 %v4501, %v4511
      %v4520 = vmul.f32 %v4503, %v4512
      %v4521 = vmul.f32 %v4462, %v4513
      %v4522 = vmul.f32 %v4464, %v4514
      %v4523 = vmul.f32 %v4505, %v4515
      %v4524 = vmul.f32 %v4507, %v4516
      %v4525 = vmul.f32 %v4517, 0.044715
      %v4526 = vmul.f32 %v4518, 0.044715
      %v4527 = vmul.f32 %v4519, 0.044715
      %v4528 = vmul.f32 %v4520, 0.044715
      %v4529 = vmul.f32 %v4521, 0.044715
      %v4530 = vmul.f32 %v4522, 0.044715
      %v4531 = vmul.f32 %v4523, 0.044715
      %v4532 = vmul.f32 %v4524, 0.044715
      %v4533 = vadd.f32 %v4458, %v4525
      %v4534 = vadd.f32 %v4460, %v4526
      %v4535 = vadd.f32 %v4501, %v4527
      %v4536 = vadd.f32 %v4503, %v4528
      %v4537 = vadd.f32 %v4462, %v4529
      %v4538 = vadd.f32 %v4464, %v4530
      %v4539 = vadd.f32 %v4505, %v4531
      %v4540 = vadd.f32 %v4507, %v4532
      %v4541 = vmul.f32 %v4533, 0.7978846
      %v4542 = vmul.f32 %v4534, 0.7978846
      %v4543 = vmul.f32 %v4535, 0.7978846
      %v4544 = vmul.f32 %v4536, 0.7978846
      %v4545 = vmul.f32 %v4537, 0.7978846
      %v4546 = vmul.f32 %v4538, 0.7978846
      %v4547 = vmul.f32 %v4539, 0.7978846
      %v4548 = vmul.f32 %v4540, 0.7978846
      %v4549 = vtanh.pop %v4541
      %v4550 = vtanh.pop %v4542
      %v4551 = vtanh.pop %v4543
      %v4552 = vtanh.pop %v4544
      %v4553 = vtanh.pop %v4545
      %v4554 = vtanh.pop %v4546
      %v4555 = vtanh.pop %v4547
      %v4556 = vtanh.pop %v4548
      %v4557 = vadd.f32 %v4549, 1.0
      %v4558 = vadd.f32 %v4550, 1.0
      %v4559 = vadd.f32 %v4551, 1.0
      %v4560 = vadd.f32 %v4552, 1.0
      %v4561 = vadd.f32 %v4553, 1.0
      %v4562 = vadd.f32 %v4554, 1.0
      %v4563 = vadd.f32 %v4555, 1.0
      %v4564 = vadd.f32 %v4556, 1.0
      %v4565 = vmul.f32 %v4557, 0.5
      %v4566 = vmul.f32 %v4558, 0.5
      %v4567 = vmul.f32 %v4559, 0.5
      %v4568 = vmul.f32 %v4560, 0.5
      %v4569 = vmul.f32 %v4561, 0.5
      %v4570 = vmul.f32 %v4562, 0.5
      %v4571 = vmul.f32 %v4563, 0.5
      %v4572 = vmul.f32 %v4564, 0.5
      %v4573 = vmul.f32 %v4458, %v4565
      %v4574 = vmul.f32 %v4460, %v4566
      %v4575 = vmul.f32 %v4501, %v4567
      %v4576 = vmul.f32 %v4503, %v4568
      %v4577 = vmul.f32 %v4462, %v4569
      %v4578 = vmul.f32 %v4464, %v4570
      %v4579 = vmul.f32 %v4505, %v4571
      %v4580 = vmul.f32 %v4507, %v4572
      %v4581 = vpack.c.bf16 %v4577, %v4573
      %v4582 = vpack.c.bf16 %v4578, %v4574
      %v4583 = vpack.c.bf16 %v4579, %v4575
      %v4584 = vpack.c.bf16 %v4580, %v4576
      %s4585 = scalar_lea.vmem %s11, 256
      %v4586 = vld [vmem:[%s4585] sm:$0xf]
      %v4587 = vld [vmem:[%s4585 + $0x4] sm:$0xf]
      %v4588 = vld [vmem:[%s4585 + $0x8] sm:$0xf]
      %v4589 = vld [vmem:[%s4585 + $0xc] sm:$0xf]
      %v4590 = vld [vmem:[%s4585 + $0x10] sm:$0xf]
      %v4591 = vld [vmem:[%s4585 + $0x14] sm:$0xf]
      %v4592 = vld [vmem:[%s4585 + $0x18] sm:$0xf]
      %v4593 = vld [vmem:[%s4585 + $0x1c] sm:$0xf]
      %v4594 = vld [vmem:[%s4585 + $0x20] sm:$0xf]
      %v4595 = vld [vmem:[%s4585 + $0x24] sm:$0xf]
      %v4596 = vld [vmem:[%s4585 + $0x28] sm:$0xf]
      %v4597 = vld [vmem:[%s4585 + $0x2c] sm:$0xf]
      %v4598 = vld [vmem:[%s4585 + $0x30] sm:$0xf]
      %v4599 = vld [vmem:[%s4585 + $0x34] sm:$0xf]
      %v4600 = vld [vmem:[%s4585 + $0x38] sm:$0xf]
      %v4601 = vld [vmem:[%s4585 + $0x3c] sm:$0xf]
      %v4602 = vld [vmem:[%s4585 + $0x40] sm:$0xf]
      %v4603 = vld [vmem:[%s4585 + $0x44] sm:$0xf]
      %v4604 = vld [vmem:[%s4585 + $0x48] sm:$0xf]
      %v4605 = vld [vmem:[%s4585 + $0x4c] sm:$0xf]
      %v4606 = vld [vmem:[%s4585 + $0x50] sm:$0xf]
      %v4607 = vld [vmem:[%s4585 + $0x54] sm:$0xf]
      %v4608 = vld [vmem:[%s4585 + $0x58] sm:$0xf]
      %v4609 = vld [vmem:[%s4585 + $0x5c] sm:$0xf]
      %v4610 = vld [vmem:[%s4585 + $0x60] sm:$0xf]
      %v4611 = vld [vmem:[%s4585 + $0x64] sm:$0xf]
      %v4612 = vld [vmem:[%s4585 + $0x68] sm:$0xf]
      %v4613 = vld [vmem:[%s4585 + $0x6c] sm:$0xf]
      %v4614 = vld [vmem:[%s4585 + $0x70] sm:$0xf]
      %v4615 = vld [vmem:[%s4585 + $0x74] sm:$0xf]
      %v4616 = vld [vmem:[%s4585 + $0x78] sm:$0xf]
      %v4617 = vld [vmem:[%s4585 + $0x7c] sm:$0xf]
      %v4618 = vld [vmem:[%s4585 + $0x80] sm:$0xf]
      %v4619 = vld [vmem:[%s4585 + $0x84] sm:$0xf]
      %v4620 = vld [vmem:[%s4585 + $0x88] sm:$0xf]
      %v4621 = vld [vmem:[%s4585 + $0x8c] sm:$0xf]
      %v4622 = vld [vmem:[%s4585 + $0x90] sm:$0xf]
      %v4623 = vld [vmem:[%s4585 + $0x94] sm:$0xf]
      %v4624 = vld [vmem:[%s4585 + $0x98] sm:$0xf]
      %v4625 = vld [vmem:[%s4585 + $0x9c] sm:$0xf]
      %v4626 = vld [vmem:[%s4585 + $0xa0] sm:$0xf]
      %v4627 = vld [vmem:[%s4585 + $0xa4] sm:$0xf]
      %v4628 = vld [vmem:[%s4585 + $0xa8] sm:$0xf]
      %v4629 = vld [vmem:[%s4585 + $0xac] sm:$0xf]
      %v4630 = vld [vmem:[%s4585 + $0xb0] sm:$0xf]
      %v4631 = vld [vmem:[%s4585 + $0xb4] sm:$0xf]
      %v4632 = vld [vmem:[%s4585 + $0xb8] sm:$0xf]
      %v4633 = vld [vmem:[%s4585 + $0xbc] sm:$0xf]
      %v4634 = vld [vmem:[%s4585 + $0xc0] sm:$0xf]
      %v4635 = vld [vmem:[%s4585 + $0xc4] sm:$0xf]
      %v4636 = vld [vmem:[%s4585 + $0xc8] sm:$0xf]
      %v4637 = vld [vmem:[%s4585 + $0xcc] sm:$0xf]
      %v4638 = vld [vmem:[%s4585 + $0xd0] sm:$0xf]
      %v4639 = vld [vmem:[%s4585 + $0xd4] sm:$0xf]
      %v4640 = vld [vmem:[%s4585 + $0xd8] sm:$0xf]
      %v4641 = vld [vmem:[%s4585 + $0xdc] sm:$0xf]
      %v4642 = vld [vmem:[%s4585 + $0xe0] sm:$0xf]
      %v4643 = vld [vmem:[%s4585 + $0xe4] sm:$0xf]
      %v4644 = vld [vmem:[%s4585 + $0xe8] sm:$0xf]
      %v4645 = vld [vmem:[%s4585 + $0xec] sm:$0xf]
      %v4646 = vld [vmem:[%s4585 + $0xf0] sm:$0xf]
      %v4647 = vld [vmem:[%s4585 + $0xf4] sm:$0xf]
      %v4648 = vld [vmem:[%s4585 + $0xf8] sm:$0xf]
      %v4649 = vld [vmem:[%s4585 + $0xfc] sm:$0xf]
      %s4650 = scalar_lea.vmem %s12, 1
      %v4651 = vld [vmem:[%s4650] sm:$0x1]
      %v4653 = vlaneseq
      %v4654 = vshrl.u32 %v4653, 7
      %v4655 = vsub.s32 0, %v4654
      %v4656 = vrot.slane %v4651, %v4655
      %v4722 = vunpack.c.l.b16 %v4586
      %v4723 = vunpack.c.l.b16 %v4587
      %v4724 = vunpack.c.l.b16 %v4588
      %v4725 = vunpack.c.l.b16 %v4589
      %v4726 = vunpack.c.l.b16 %v4590
      %v4727 = vunpack.c.l.b16 %v4591
      %v4728 = vunpack.c.l.b16 %v4592
      %v4729 = vunpack.c.l.b16 %v4593
      %v4730 = vunpack.c.l.b16 %v4594
      %v4731 = vunpack.c.l.b16 %v4595
      %v4732 = vunpack.c.l.b16 %v4596
      %v4733 = vunpack.c.l.b16 %v4597
      %v4734 = vunpack.c.l.b16 %v4598
      %v4735 = vunpack.c.l.b16 %v4599
      %v4736 = vunpack.c.l.b16 %v4600
      %v4737 = vunpack.c.l.b16 %v4601
      %v4738 = vunpack.c.l.b16 %v4602
      %v4739 = vunpack.c.l.b16 %v4603
      %v4740 = vunpack.c.l.b16 %v4604
      %v4741 = vunpack.c.l.b16 %v4605
      %v4742 = vunpack.c.l.b16 %v4606
      %v4743 = vunpack.c.l.b16 %v4607
      %v4744 = vunpack.c.l.b16 %v4608
      %v4745 = vunpack.c.l.b16 %v4609
      %v4746 = vunpack.c.l.b16 %v4610
      %v4747 = vunpack.c.l.b16 %v4611
      %v4748 = vunpack.c.l.b16 %v4612
      %v4749 = vunpack.c.l.b16 %v4613
      %v4750 = vunpack.c.l.b16 %v4614
      %v4751 = vunpack.c.l.b16 %v4615
      %v4752 = vunpack.c.l.b16 %v4616
      %v4753 = vunpack.c.l.b16 %v4617
      %v4754 = vunpack.c.l.b16 %v4618
      %v4755 = vunpack.c.l.b16 %v4619
      %v4756 = vunpack.c.l.b16 %v4620
      %v4757 = vunpack.c.l.b16 %v4621
      %v4758 = vunpack.c.l.b16 %v4622
      %v4759 = vunpack.c.l.b16 %v4623
      %v4760 = vunpack.c.l.b16 %v4624
      %v4761 = vunpack.c.l.b16 %v4625
      %v4762 = vunpack.c.l.b16 %v4626
      %v4763 = vunpack.c.l.b16 %v4627
      %v4764 = vunpack.c.l.b16 %v4628
      %v4765 = vunpack.c.l.b16 %v4629
      %v4766 = vunpack.c.l.b16 %v4630
      %v4767 = vunpack.c.l.b16 %v4631
      %v4768 = vunpack.c.l.b16 %v4632
      %v4769 = vunpack.c.l.b16 %v4633
      %v4770 = vunpack.c.l.b16 %v4634
      %v4771 = vunpack.c.l.b16 %v4635
      %v4772 = vunpack.c.l.b16 %v4636
      %v4773 = vunpack.c.l.b16 %v4637
      %v4774 = vunpack.c.l.b16 %v4638
      %v4775 = vunpack.c.l.b16 %v4639
      %v4776 = vunpack.c.l.b16 %v4640
      %v4777 = vunpack.c.l.b16 %v4641
      %v4778 = vunpack.c.l.b16 %v4642
      %v4779 = vunpack.c.l.b16 %v4643
      %v4780 = vunpack.c.l.b16 %v4644
      %v4781 = vunpack.c.l.b16 %v4645
      %v4782 = vunpack.c.l.b16 %v4646
      %v4783 = vunpack.c.l.b16 %v4647
      %v4784 = vunpack.c.l.b16 %v4648
      %v4785 = vunpack.c.l.b16 %v4649
      %v4786 = vpack.c.b16 %v4723, %v4722
      %v4787 = vpack.c.b16 %v4725, %v4724
      %v4788 = vpack.c.b16 %v4727, %v4726
      %v4789 = vpack.c.b16 %v4729, %v4728
      %v4790 = vpack.c.b16 %v4731, %v4730
      %v4791 = vpack.c.b16 %v4733, %v4732
      %v4792 = vpack.c.b16 %v4735, %v4734
      %v4793 = vpack.c.b16 %v4737, %v4736
      %v4794 = vpack.c.b16 %v4739, %v4738
      %v4795 = vpack.c.b16 %v4741, %v4740
      %v4796 = vpack.c.b16 %v4743, %v4742
      %v4797 = vpack.c.b16 %v4745, %v4744
      %v4798 = vpack.c.b16 %v4747, %v4746
      %v4799 = vpack.c.b16 %v4749, %v4748
      %v4800 = vpack.c.b16 %v4751, %v4750
      %v4801 = vpack.c.b16 %v4753, %v4752
      %v4802 = vpack.c.b16 %v4755, %v4754
      %v4803 = vpack.c.b16 %v4757, %v4756
      %v4804 = vpack.c.b16 %v4759, %v4758
      %v4805 = vpack.c.b16 %v4761, %v4760
      %v4806 = vpack.c.b16 %v4763, %v4762
      %v4807 = vpack.c.b16 %v4765, %v4764
      %v4808 = vpack.c.b16 %v4767, %v4766
      %v4809 = vpack.c.b16 %v4769, %v4768
      %v4810 = vpack.c.b16 %v4771, %v4770
      %v4811 = vpack.c.b16 %v4773, %v4772
      %v4812 = vpack.c.b16 %v4775, %v4774
      %v4813 = vpack.c.b16 %v4777, %v4776
      %v4814 = vpack.c.b16 %v4779, %v4778
      %v4815 = vpack.c.b16 %v4781, %v4780
      %v4816 = vpack.c.b16 %v4783, %v4782
      %v4817 = vpack.c.b16 %v4785, %v4784
      %4850 = vmatprep.subr.bf16.mxu0 0
      %4851 = vmatpush1.bf16.msra.mxu0 %v4793
      %4852 = vmatprep.subr.bf16.mxu0 0
      %4853 = vmatpush1.bf16.msra.mxu0 %v4792
      %4854 = vmatprep.subr.bf16.mxu0 0
      %4855 = vmatpush1.bf16.msra.mxu0 %v4791
      %4856 = vmatprep.subr.bf16.mxu0 0
      %4857 = vmatpush1.bf16.msra.mxu0 %v4790
      %4858 = vmatprep.subr.bf16.mxu0 0
      %4859 = vmatpush1.bf16.msra.mxu0 %v4789
      %4860 = vmatprep.subr.bf16.mxu0 0
      %4861 = vmatpush1.bf16.msra.mxu0 %v4788
      %4862 = vmatprep.subr.bf16.mxu0 0
      %4863 = vmatpush1.bf16.msra.mxu0 %v4787
      %4864 = vmatprep.subr.bf16.mxu0 0
      %4865 = vmatpush1.bf16.msra.mxu0 %v4786
      %4866 = vmatprep.subr.bf16.mxu0 0
      %4867 = vmatpush2.bf16.msra.mxu0 %v4801
      %4868 = vmatprep.subr.bf16.mxu0 0
      %4869 = vmatpush2.bf16.msra.mxu0 %v4800
      %4870 = vmatprep.subr.bf16.mxu0 0
      %4871 = vmatpush2.bf16.msra.mxu0 %v4799
      %4872 = vmatprep.subr.bf16.mxu0 0
      %4873 = vmatpush2.bf16.msra.mxu0 %v4798
      %4874 = vmatprep.subr.bf16.mxu0 0
      %4875 = vmatpush2.bf16.msra.mxu0 %v4797
      %4876 = vmatprep.subr.bf16.mxu0 0
      %4877 = vmatpush2.bf16.msra.mxu0 %v4796
      %4878 = vmatprep.subr.bf16.mxu0 0
      %4879 = vmatpush2.bf16.msra.mxu0 %v4795
      %4880 = vmatprep.subr.bf16.mxu0 0
      %4881 = vmatpush2.bf16.msra.mxu0 %v4794
      %4882 = vmatprep.mubr.bf16.mxu0 %v4582
      %4883 = vmatmul.mubr.bf16.gmra.mxu0 %v4581
      %v4884 = vpop.f32.mrf.mxu0
      %v4885 = vadd.f32 %v4656, %v4884
      %v4886 = vpop.f32.mrf.mxu0
      %v4887 = vpop.f32.mrf.mxu0
      %v4888 = vadd.f32 %v4656, %v4887
      %v4889 = vpop.f32.mrf.mxu0
      %4890 = vdwg.mxu0
      %4891 = vmatprep.subr.bf16.mxu0 0
      %4892 = vmatpush1.bf16.msra.mxu0 %v4809
      %4893 = vmatprep.subr.bf16.mxu0 0
      %4894 = vmatpush1.bf16.msra.mxu0 %v4808
      %4895 = vmatprep.subr.bf16.mxu0 0
      %4896 = vmatpush1.bf16.msra.mxu0 %v4807
      %4897 = vmatprep.subr.bf16.mxu0 0
      %4898 = vmatpush1.bf16.msra.mxu0 %v4806
      %4899 = vmatprep.subr.bf16.mxu0 0
      %4900 = vmatpush1.bf16.msra.mxu0 %v4805
      %4901 = vmatprep.subr.bf16.mxu0 0
      %4902 = vmatpush1.bf16.msra.mxu0 %v4804
      %4903 = vmatprep.subr.bf16.mxu0 0
      %4904 = vmatpush1.bf16.msra.mxu0 %v4803
      %4905 = vmatprep.subr.bf16.mxu0 0
      %4906 = vmatpush1.bf16.msra.mxu0 %v4802
      %4907 = vmatprep.subr.bf16.mxu0 0
      %4908 = vmatpush2.bf16.msra.mxu0 %v4817
      %4909 = vmatprep.subr.bf16.mxu0 0
      %4910 = vmatpush2.bf16.msra.mxu0 %v4816
      %4911 = vmatprep.subr.bf16.mxu0 0
      %4912 = vmatpush2.bf16.msra.mxu0 %v4815
      %4913 = vmatprep.subr.bf16.mxu0 0
      %4914 = vmatpush2.bf16.msra.mxu0 %v4814
      %4915 = vmatprep.subr.bf16.mxu0 0
      %4916 = vmatpush2.bf16.msra.mxu0 %v4813
      %4917 = vmatprep.subr.bf16.mxu0 0
      %4918 = vmatpush2.bf16.msra.mxu0 %v4812
      %4919 = vmatprep.subr.bf16.mxu0 0
      %4920 = vmatpush2.bf16.msra.mxu0 %v4811
      %4921 = vmatprep.subr.bf16.mxu0 0
      %4922 = vmatpush2.bf16.msra.mxu0 %v4810
      %4923 = vmatprep.mubr.bf16.mxu0 %v4584
      %4924 = vmatmul.mubr.bf16.gmra.mxu0 %v4583
      %v4925 = vpop.f32.mrf.mxu0
      %v4926 = vadd.f32 %v4885, %v4925
      %v4927 = vpop.f32.mrf.mxu0
      %v4928 = vpop.f32.mrf.mxu0
      %v4929 = vadd.f32 %v4888, %v4928
      %v4930 = vpop.f32.mrf.mxu0
      %4931 = vdwg.mxu0
      %v4932 = vadd.f32 %v4162, %v4926
      %v4933 = vadd.f32 %v4163, %v4929
      %v4934 = vpack.c.bf16 %v4933, %v4932
      %v4936 = vunpack.c.l.b16 %v4934
      %v4937 = vunpack.c.h.b16 %v4934
      %v4938 = vpack.c.b16 %v4936, %v4936
      %v4939 = vpack.c.b16 %v4937, %v4937
      %4942 = vst [vmem:[%s440] sm:$0xf] %v4938
      %4943 = vst [vmem:[%s440 + $0x4] sm:$0xf] %v4939
      %p4944 = scmp.lt.s32.totalorder %s24, 1
      %s4945 = scalar_select %p4944, %s24, 1
      %s4946 = smul.addr %s4945, 2
      %s4947 = smul.addr %s4946, 4
      %s4948 = scalar_lea.vmem %s13, %s4947
      // Predicated region
      $region73: #{_lambda_.4} parent=71 // pred_check
        %p4949 = pneg %p320
      $region74: #{_lambda_.4} parent=71 // pred_check_branch
        %4951 = sbr.rel (%p4949) target = $region76
      $region75: #{_lambda_.4} parent=71 // pred_region
        _
      $region76: #{_lambda_.4} parent=71 // pred_fallthru
        _
    $region72: #{_lambda_.4} parent=5 // pred_fallthru
      _
    %p4952 = scmp.le.s32.totalorder 2, %s19
    // Predicated region
    $region77: #{_lambda_.4} parent=5 // pred_check
      %p4953 = pneg %p4952
    $region78: #{_lambda_.4} parent=5 // pred_check_branch
      %4955 = sbr.rel (%p4953) target = $region80
    $region79: #{_lambda_.4} parent=5 // pred_region
      %s4956 = ssub.s32 %s19, 2
      // Predicated region
      $region81: #{_lambda_.4} parent=79 // pred_check
        %p4957 = pneg %p326
      $region82: #{_lambda_.4} parent=79 // pred_check_branch
        %4959 = sbr.rel (%p4957) target = $region84
      $region83: #{_lambda_.4} parent=79 // pred_region
        %p4960 = scmp.lt.s32.totalorder %s25, 1
        %s4961 = scalar_select %p4960, %s25, 1
        %s4962 = smul.addr %s4961, 2
        %s4963 = smul.addr %s4962, 4
        %s4964 = scalar_lea.vmem %s13, %s4963
      $region84: #{_lambda_.4} parent=79 // pred_fallthru
        _
    $region80: #{_lambda_.4} parent=5 // pred_fallthru
      _
  $region6: #{_lambda_.4} parent=0 // loop_footer
    %s23 = sadd.s32 1, %s19
  $region7: #{_lambda_.4} parent=0 // loop_footer_branch
    %18 = sbr.rel target = $region3
  $region8: #{_lambda_.4} parent=0 // loop_exit
    _

</llo_original>
